<compile_context>
chip_gen: v7x
topology: tpu7x:2x2x1
jax: 0.10.0
libtpu: 0.0.40
codegen_flags: <defaults>
</compile_context>

<pallas_src>
import functools

import numpy as np

import jax
import jax.numpy as jnp
from jax.experimental import pallas as pl
from jax.experimental.pallas import tpu as pltpu


_GROUPS = ((0, 0), (0, 1), (1, 0), (1, 1))
_HIDDEN = 256
_FLAT = 2048          # 8 * 8 * 32 conv2 output features per image


def _round_up(x, m):
    return ((x + m - 1) // m) * m


# ----------------------------------------------------------------------------
# Kernel 1: fused conv1 + conv2 (IM images per grid step)
# ----------------------------------------------------------------------------
def _conv_kernel(r8_ref, w1_ref, b1_ref, w2_ref, b2_ref, out_ref, s_ref, *, im):
    m = im * 64

    # ---- conv1: single (im*64, 1024) x (1024, 64) GEMM ---------------------
    # The 4 residue-8 tap groups are folded along K; each piece is 256 lanes
    # (native 128-lane multiples) so the concat is an aligned vreg placement.
    # Output 64 lanes pack (4 output parities x 16 channels).
    lhs1 = jnp.concatenate(
        [r8_ref[:, iq:iq + 8, jq:jq + 8, :].reshape(m, 256)
         for (iq, jq) in _GROUPS], axis=-1)                     # (m, 1024) bf16
    acc1 = jnp.dot(lhs1, w1_ref[...], preferred_element_type=jnp.float32)
    y1 = jnp.maximum(acc1 + b1_ref[...], 0.0).astype(jnp.bfloat16)

    # ---- scatter parity blocks into the zero-padded conv2 input scratch ----
    # s_ref[b, m, n, 16*(2*sr+sc)+c] == relu(conv1)[b, 2m - sr, 2n - sc, c]
    # (out-of-range == 0).  Zero EVERY step: the scratch does not carry state
    # across steps, so the "parallel" grid axis is safe under megacore.
    s_ref[...] = jnp.zeros_like(s_ref)
    for par, (ohr, owr) in enumerate(_GROUPS):
        blk = y1[:, 16 * par:16 * (par + 1)].reshape(im, 8, 8, 16)
        s_ref[:, ohr:ohr + 8, owr:owr + 8, 16 * par:16 * (par + 1)] = blk

    # ---- conv2: 4 accumulated (im*64, 64) x (64, 32) GEMMs ------------------
    acc2 = jnp.zeros((m, 32), jnp.float32)
    for gd, (di, dj) in enumerate(_GROUPS):
        patch = s_ref[:, di:di + 8, dj:dj + 8, :].reshape(m, 64)   # bf16
        acc2 += jnp.dot(patch, w2_ref[gd], preferred_element_type=jnp.float32)
    acc2 = jnp.maximum(acc2 + b2_ref[...], 0.0)
    out_ref[...] = acc2.astype(out_ref.dtype)        # rows = (img, p*8+q)


def conv_features(params, r8, *, im):
    """r8: (Bp, 9, 9, 256) bf16 residue-8 slab -> (Bp*64, 32) bf16 features."""
    bp = r8.shape[0]
    flops = bp * (2 * 64 * 1024 * 64 + 2 * 64 * 256 * 32)
    bytes_accessed = (r8.size * 2 + (1024 * 64 + 4 * 64 * 32) * 2
                      + (64 + 32) * 4 + bp * 64 * 32 * 2)
    return pl.pallas_call(
        functools.partial(_conv_kernel, im=im),
        out_shape=jax.ShapeDtypeStruct((bp * 64, 32), jnp.bfloat16),
        grid=(bp // im,),
        in_specs=[
            pl.BlockSpec((im, 9, 9, 256), lambda b: (b, 0, 0, 0)),
            pl.BlockSpec((1024, 64), lambda b: (0, 0)),    # conv1 (resident)
            pl.BlockSpec((1, 64), lambda b: (0, 0)),
            pl.BlockSpec((4, 64, 32), lambda b: (0, 0, 0)),  # conv2 (resident)
            pl.BlockSpec((1, 32), lambda b: (0, 0)),
        ],
        out_specs=pl.BlockSpec((im * 64, 32), lambda b: (b, 0)),
        scratch_shapes=[pltpu.VMEM((im, 9, 9, 64), jnp.bfloat16)],
        compiler_params=pltpu.CompilerParams(
            dimension_semantics=("parallel",)),
        cost_estimate=pl.CostEstimate(flops=flops, transcendentals=0,
                                      bytes_accessed=bytes_accessed),
    )(r8, params["w1"], params["b1"], params["w2"], params["b2"])


# ----------------------------------------------------------------------------
# Kernel 2: fused fc + critic/actor head (M-tiled over batch)
# ----------------------------------------------------------------------------
def _head_kernel(x_ref, wfc_ref, bfc_ref, wh_ref, bh_ref,
                 value_ref, logdist_ref, action_ref, *, num_actions):
    # fc + ReLU (bf16 MXU operands, f32 accumulation / elementwise)
    h = jnp.dot(x_ref[...], wfc_ref[...], preferred_element_type=jnp.float32)
    h = jnp.maximum(h + bfc_ref[...], 0.0)
    # critic_linear and dist.linear as ONE lane-packed GEMM:
    # col 0 = value, cols 1..num_actions = raw logits
    head = jnp.dot(h.astype(jnp.bfloat16), wh_ref[...],
                   preferred_element_type=jnp.float32) + bh_ref[...]
    value_ref[...] = head[:, 0:1]
    logits = head[:, 1:1 + num_actions]
    # Categorical(logits=x).logits == log_softmax(x)   (all in f32)
    m = jnp.max(logits, axis=-1, keepdims=True)
    lse = jnp.log(jnp.sum(jnp.exp(logits - m), axis=-1, keepdims=True)) + m
    logdist_ref[...] = logits - lse
    # deterministic dist.mode(): first index attaining the max (torch.argmax)
    idx = jax.lax.broadcasted_iota(jnp.int32, logits.shape, 1)
    cand = jnp.where(logits == m, idx, jnp.int32(num_actions))
    action_ref[...] = jnp.min(cand, axis=-1, keepdims=True).astype(jnp.int32)


def head_forward(params, flat, *, tm):
    bp = flat.shape[0]
    A = params["wh"].shape[1] - 1
    flops = bp * (2 * _FLAT * _HIDDEN + 2 * _HIDDEN * (1 + A))
    bytes_accessed = (flat.size * 2 + (_FLAT * _HIDDEN + _HIDDEN * (1 + A)) * 2
                      + (_HIDDEN + 1 + A) * 4 + bp * (1 + A + 1) * 4)
    return pl.pallas_call(
        functools.partial(_head_kernel, num_actions=A),
        out_shape=(
            jax.ShapeDtypeStruct((bp, 1), jnp.float32),   # value
            jax.ShapeDtypeStruct((bp, A), jnp.float32),   # action_log_dist
            jax.ShapeDtypeStruct((bp, 1), jnp.int32),     # action
        ),
        grid=(bp // tm,),
        in_specs=[
            pl.BlockSpec((tm, _FLAT), lambda i: (i, 0)),
            pl.BlockSpec((_FLAT, _HIDDEN), lambda i: (0, 0)),   # fc (resident)
            pl.BlockSpec((1, _HIDDEN), lambda i: (0, 0)),
            pl.BlockSpec((_HIDDEN, 1 + A), lambda i: (0, 0)),   # head (resident)
            pl.BlockSpec((1, 1 + A), lambda i: (0, 0)),
        ],
        out_specs=(
            pl.BlockSpec((tm, 1), lambda i: (i, 0)),
            pl.BlockSpec((tm, A), lambda i: (i, 0)),
            pl.BlockSpec((tm, 1), lambda i: (i, 0)),
        ),
        compiler_params=pltpu.CompilerParams(
            dimension_semantics=("parallel",)),
        cost_estimate=pl.CostEstimate(flops=flops, transcendentals=bp * (A + 1),
                                      bytes_accessed=bytes_accessed),
    )(flat, params["wfc"], params["bfc"], params["wh"], params["bh"])


# ----------------------------------------------------------------------------
# Policy.act (deterministic) forward
# ----------------------------------------------------------------------------
def policy_act(params, x_nchw):
    B, C, H, W = x_nchw.shape
    assert (C, H, W) == (3, 64, 64)

    im = 16 if B >= 16 else 8                 # conv images per grid step
    bp = _round_up(B, im)                     # pad batch (no divisibility assert)

    # NHWC bf16 slab; TF-SAME pad (2,2) for conv1; H/W 68->72 (residue-8
    # blocking) and Cin 3->4 (GEMM K = 8*8*4 = 256).  Pure layout plumbing in
    # bf16 (halves the XLA relayout traffic); padded batch rows are zeros.
    x = jnp.transpose(x_nchw, (0, 2, 3, 1)).astype(jnp.bfloat16)
    xp = jnp.pad(x, ((0, bp - B), (2, 6), (2, 6), (0, 1)))
    r8 = xp.reshape(bp, 9, 8, 9, 8, 4).transpose(0, 1, 3, 2, 4, 5)
    r8 = r8.reshape(bp, 9, 9, 256)

    feats = conv_features(params, r8, im=im)      # (bp*64, 32) bf16
    flat = feats.reshape(bp, _FLAT)               # free row-major reshape in HBM

    tm = max(t for t in (512, 256, 128, 64, 32, 16, 8) if bp % t == 0)
    value, action_log_dist, action = head_forward(params, flat, tm=tm)
    return value[:B], action[:B], action_log_dist[:B]


# ----------------------------------------------------------------------------
# Parameters: PyTorch-layout weights -> kernel-layout weights (init-time only)
# ----------------------------------------------------------------------------
def make_torch_params(key, num_actions, hidden=_HIDDEN):
    """PyTorch-layout params (conv OIHW, linear (out, in)).  Scaled-normal init
    stands in for orthogonal/xavier; the kernel consumes any torch weights."""
    ks = jax.random.split(key, 5)

    def w(k, shape, fan_in, gain=1.0):
        return (gain / np.sqrt(fan_in)) * jax.random.normal(k, shape, jnp.float32)

    return {
        "conv1_w": w(ks[0], (16, 3, 8, 8), 3 * 8 * 8),
        "conv1_b": jnp.zeros((16,), jnp.float32),
        "conv2_w": w(ks[1], (32, 16, 4, 4), 16 * 4 * 4),
        "conv2_b": jnp.zeros((32,), jnp.float32),
        "fc_w": w(ks[2], (hidden, _FLAT), _FLAT, gain=np.sqrt(2.0)),
        "fc_b": jnp.zeros((hidden,), jnp.float32),
        "v_w": w(ks[3], (1, hidden), hidden),
        "v_b": jnp.zeros((1,), jnp.float32),
        "a_w": w(ks[4], (num_actions, hidden), hidden, gain=0.01),
        "a_b": jnp.zeros((num_actions,), jnp.float32),
    }


def convert_params(tp):
    """Fold TF-SAME padding / residue blocking / NCHW flatten into weights."""
    # conv1 -> (1024 = (tap-group, ir, jr, c), 64 = (parity, cout))
    w1 = np.asarray(tp["conv1_w"], np.float32)
    w1p = np.zeros((16, 4, 8, 8), np.float32)
    w1p[:, :3] = w1                                          # pad Cin 3 -> 4
    w1c = np.zeros((4, 256, 64), np.float32)
    for ohr in (0, 1):
        for owr in (0, 1):
            par = 2 * ohr + owr
            pk = np.zeros((16, 4, 16, 16), np.float32)
            pk[:, :, 4 * ohr:4 * ohr + 8, 4 * owr:4 * owr + 8] = w1p
            for iq in (0, 1):
                for jq in (0, 1):
                    g = 2 * iq + jq
                    blk = pk[:, :, 8 * iq:8 * iq + 8, 8 * jq:8 * jq + 8]
                    w1c[g, :, 16 * par:16 * par + 16] = (
                        blk.transpose(2, 3, 1, 0).reshape(256, 16))
    w1c = w1c.reshape(1024, 64)                              # single-GEMM layout
    b1c = np.tile(np.asarray(tp["conv1_b"], np.float32), 4)

    # conv2 -> (4 window-groups, 64 = (src-parity, cin), 32 = cout)
    w2 = np.asarray(tp["conv2_w"], np.float32)
    w2c = np.zeros((4, 64, 32), np.float32)
    for di in (0, 1):
        for dj in (0, 1):
            gd = 2 * di + dj
            for sr in (0, 1):
                for sc in (0, 1):
                    i2 = 2 * di + 1 - sr
                    j2 = 2 * dj + 1 - sc
                    r0 = 16 * (2 * sr + sc)
                    w2c[gd, r0:r0 + 16, :] = w2[:, :, i2, j2].T

    # fc: permute rows so it consumes the kernel's (p, q, c2) flatten order
    fc_w = np.asarray(tp["fc_w"], np.float32)                # (256, 2048) NCHW-in
    wfc = fc_w.reshape(_HIDDEN, 32, 8, 8).transpose(2, 3, 1, 0).reshape(_FLAT, _HIDDEN)

    # head: concat critic (col 0) and dist.linear (cols 1..A)
    wh = np.concatenate([np.asarray(tp["v_w"], np.float32).T,
                         np.asarray(tp["a_w"], np.float32).T], axis=1)
    bh = np.concatenate([np.asarray(tp["v_b"], np.float32),
                         np.asarray(tp["a_b"], np.float32)])

    return {
        "w1": jnp.asarray(w1c, jnp.bfloat16),
        "b1": jnp.asarray(b1c, jnp.float32).reshape(1, 64),
        "w2": jnp.asarray(w2c, jnp.bfloat16),
        "b2": jnp.asarray(tp["conv2_b"], jnp.float32).reshape(1, 32),
        "wfc": jnp.asarray(wfc, jnp.bfloat16),
        "bfc": jnp.asarray(tp["fc_b"], jnp.float32).reshape(1, _HIDDEN),
        "wh": jnp.asarray(wh, jnp.bfloat16),
        "bh": jnp.asarray(bh, jnp.float32).reshape(1, -1),
    }


# ----------------------------------------------------------------------------
# Plain-JAX reference of the PyTorch forward (for validation only)
# ----------------------------------------------------------------------------
def reference_forward(tp, x_nchw):
    dn = ("NCHW", "OIHW", "NCHW")
    x = x_nchw.astype(jnp.float32)
    y = jax.lax.conv_general_dilated(x, tp["conv1_w"], (4, 4),
                                     [(2, 2), (2, 2)], dimension_numbers=dn)
    y = jax.nn.relu(y + tp["conv1_b"][None, :, None, None])
    y = jax.lax.conv_general_dilated(y, tp["conv2_w"], (2, 2),
                                     [(1, 1), (1, 1)], dimension_numbers=dn)
    y = jax.nn.relu(y + tp["conv2_b"][None, :, None, None])
    flat = y.reshape(y.shape[0], -1)
    hidden = jax.nn.relu(flat @ tp["fc_w"].T + tp["fc_b"])
    value = hidden @ tp["v_w"].T + tp["v_b"]
    logits = hidden @ tp["a_w"].T + tp["a_b"]
    return value, jax.nn.log_softmax(logits, axis=-1)


if __name__ == "__main__":
    key = jax.random.PRNGKey(0)
    k_in, k_par = jax.random.split(key)

    B, num_actions = 2, 15
    # obs_shape = (3, 64, 64) so conv2's output flattens to 2048 (matches fc)
    obs = jax.random.uniform(k_in, (B, 3, 64, 64), dtype=jnp.float32)

    torch_params = make_torch_params(k_par, num_actions)
    params = convert_params(torch_params)

    value, action, action_log_dist = jax.jit(policy_act)(params, obs)
    jax.block_until_ready((value, action, action_log_dist))

    # shape / dtype contract of Policy.act
    assert value.shape == (B, 1) and value.dtype == jnp.float32
    assert action.shape == (B, 1) and action.dtype == jnp.int32
    assert action_log_dist.shape == (B, num_actions)
    # log_softmax rows sum to ~1 in prob space
    assert bool(jnp.all(jnp.abs(jnp.sum(jnp.exp(action_log_dist), -1) - 1.0) < 1e-4))
    # deterministic action == argmax of the returned log-distribution
    assert bool(jnp.all(action[:, 0] == jnp.argmax(action_log_dist, axis=-1)))

    # cross-check against the plain-JAX reference of the PyTorch module
    ref_value, ref_logdist = reference_forward(torch_params, obs)
    assert bool(jnp.all(jnp.abs(value - ref_value) < 2e-2))
    assert bool(jnp.all(jnp.abs(action_log_dist - ref_logdist) < 2e-2))

    print("KERNEL_OK")
</pallas_src>

<mosaic_0001>
module attributes {stable_mosaic.version = 11 : i64} {
  func.func @_conv_kernel(%arg0: i32, %arg1: memref<8x9x9x256xbf16, #tpu.memory_space<vmem>>, %arg2: memref<1024x64xbf16, #tpu.memory_space<vmem>>, %arg3: memref<1x64xf32, #tpu.memory_space<vmem>>, %arg4: memref<4x64x32xbf16, #tpu.memory_space<vmem>>, %arg5: memref<1x32xf32, #tpu.memory_space<vmem>>, %arg6: memref<512x32xbf16, #tpu.memory_space<vmem>>, %arg7: memref<8x9x9x64xbf16, #tpu.memory_space<vmem>>) attributes {dimension_semantics = [#tpu.dimension_semantics<parallel>], iteration_bounds = array<i64: 1>, scalar_prefetch = 0 : i64, scratch_operands = 1 : i64, tpu.core_type = #tpu.core_type<tc>, window_params = [{transform_indices = @transform_0, window_bounds = array<i64: 8, 9, 9, 256>}, {pipeline_mode = #tpu.pipeline_mode<synchronous>, transform_indices = @transform_1, window_bounds = array<i64: 1024, 64>}, {pipeline_mode = #tpu.pipeline_mode<synchronous>, transform_indices = @transform_2, window_bounds = array<i64: 1, 64>}, {pipeline_mode = #tpu.pipeline_mode<synchronous>, transform_indices = @transform_3, window_bounds = array<i64: 4, 64, 32>}, {pipeline_mode = #tpu.pipeline_mode<synchronous>, transform_indices = @transform_4, window_bounds = array<i64: 1, 32>}, {transform_indices = @transform_5, window_bounds = array<i64: 512, 32>}]} {
    %c0 = arith.constant 0 : index
    %c0_0 = arith.constant 0 : index
    %c0_1 = arith.constant 0 : index
    %c0_2 = arith.constant 0 : index
    %0 = vector.load %arg1[%c0, %c0_0, %c0_1, %c0_2] : memref<8x9x9x256xbf16, #tpu.memory_space<vmem>>, vector<8x8x8x256xbf16>
    %1 = vector.shape_cast %0 : vector<8x8x8x256xbf16> to vector<512x256xbf16>
    %c0_3 = arith.constant 0 : index
    %c0_4 = arith.constant 0 : index
    %c1 = arith.constant 1 : index
    %c0_5 = arith.constant 0 : index
    %2 = vector.load %arg1[%c0_3, %c0_4, %c1, %c0_5] : memref<8x9x9x256xbf16, #tpu.memory_space<vmem>>, vector<8x8x8x256xbf16>
    %3 = vector.shape_cast %2 : vector<8x8x8x256xbf16> to vector<512x256xbf16>
    %c0_6 = arith.constant 0 : index
    %c1_7 = arith.constant 1 : index
    %c0_8 = arith.constant 0 : index
    %c0_9 = arith.constant 0 : index
    %4 = vector.load %arg1[%c0_6, %c1_7, %c0_8, %c0_9] : memref<8x9x9x256xbf16, #tpu.memory_space<vmem>>, vector<8x8x8x256xbf16>
    %5 = vector.shape_cast %4 : vector<8x8x8x256xbf16> to vector<512x256xbf16>
    %c0_10 = arith.constant 0 : index
    %c1_11 = arith.constant 1 : index
    %c1_12 = arith.constant 1 : index
    %c0_13 = arith.constant 0 : index
    %6 = vector.load %arg1[%c0_10, %c1_11, %c1_12, %c0_13] : memref<8x9x9x256xbf16, #tpu.memory_space<vmem>>, vector<8x8x8x256xbf16>
    %7 = vector.shape_cast %6 : vector<8x8x8x256xbf16> to vector<512x256xbf16>
    %8 = tpu.concatenate %1, %3, %5, %7 in 1 : vector<512x256xbf16>, vector<512x256xbf16>, vector<512x256xbf16>, vector<512x256xbf16> -> vector<512x1024xbf16>
    %c0_14 = arith.constant 0 : index
    %c0_15 = arith.constant 0 : index
    %9 = vector.load %arg2[%c0_14, %c0_15] : memref<1024x64xbf16, #tpu.memory_space<vmem>>, vector<1024x64xbf16>
    %cst = arith.constant dense<0.000000e+00> : vector<512x64xf32>
    %10 = tpu.matmul %8, %9, %cst {dimension_numbers = #tpu.dot_dimension_numbers<[1], [0], [0], [1], [0, 0, 1, 1], [], []>} : vector<512x1024xbf16>, vector<1024x64xbf16>, vector<512x64xf32> -> vector<512x64xf32>
    %c0_16 = arith.constant 0 : index
    %c0_17 = arith.constant 0 : index
    %11 = vector.load %arg3[%c0_16, %c0_17] : memref<1x64xf32, #tpu.memory_space<vmem>>, vector<1x64xf32>
    %12 = vector.broadcast %11 : vector<1x64xf32> to vector<512x64xf32>
    %13 = arith.addf %10, %12 : vector<512x64xf32>
    %cst_18 = arith.constant 0.000000e+00 : f32
    %14 = vector.broadcast %cst_18 : f32 to vector<512x64xf32>
    %15 = arith.maximumf %13, %14 : vector<512x64xf32>
    %16 = arith.truncf %15 : vector<512x64xf32> to vector<512x64xbf16>
    %cst_19 = arith.constant 0.000000e+00 : bf16
    %17 = vector.broadcast %cst_19 : bf16 to vector<8x9x9x64xbf16>
    %c0_20 = arith.constant 0 : index
    %c0_21 = arith.constant 0 : index
    %c0_22 = arith.constant 0 : index
    %c0_23 = arith.constant 0 : index
    %18 = vector.load %arg7[%c0_20, %c0_21, %c0_22, %c0_23] : memref<8x9x9x64xbf16, #tpu.memory_space<vmem>>, vector<8x9x9x64xbf16>
    tpu.vector_store %arg7[%c0_20, %c0_21, %c0_22, %c0_23], %17 {strides = array<i32>} : memref<8x9x9x64xbf16, #tpu.memory_space<vmem>>, vector<8x9x9x64xbf16>,
    %19 = vector.extract_strided_slice %16 {offsets = [0, 0], sizes = [512, 16], strides = [1, 1]} : vector<512x64xbf16> to vector<512x16xbf16>
    %20 = vector.shape_cast %19 : vector<512x16xbf16> to vector<8x8x8x16xbf16>
    %c0_24 = arith.constant 0 : index
    %c0_25 = arith.constant 0 : index
    %c0_26 = arith.constant 0 : index
    %c0_27 = arith.constant 0 : index
    %21 = vector.load %arg7[%c0_24, %c0_25, %c0_26, %c0_27] : memref<8x9x9x64xbf16, #tpu.memory_space<vmem>>, vector<8x8x8x16xbf16>
    tpu.vector_store %arg7[%c0_24, %c0_25, %c0_26, %c0_27], %20 {strides = array<i32>} : memref<8x9x9x64xbf16, #tpu.memory_space<vmem>>, vector<8x8x8x16xbf16>,
    %22 = vector.extract_strided_slice %16 {offsets = [0, 16], sizes = [512, 16], strides = [1, 1]} : vector<512x64xbf16> to vector<512x16xbf16>
    %23 = vector.shape_cast %22 : vector<512x16xbf16> to vector<8x8x8x16xbf16>
    %c0_28 = arith.constant 0 : index
    %c0_29 = arith.constant 0 : index
    %c1_30 = arith.constant 1 : index
    %c16 = arith.constant 16 : index
    %24 = vector.load %arg7[%c0_28, %c0_29, %c1_30, %c16] : memref<8x9x9x64xbf16, #tpu.memory_space<vmem>>, vector<8x8x8x16xbf16>
    tpu.vector_store %arg7[%c0_28, %c0_29, %c1_30, %c16], %23 {strides = array<i32>} : memref<8x9x9x64xbf16, #tpu.memory_space<vmem>>, vector<8x8x8x16xbf16>,
    %25 = vector.extract_strided_slice %16 {offsets = [0, 32], sizes = [512, 16], strides = [1, 1]} : vector<512x64xbf16> to vector<512x16xbf16>
    %26 = vector.shape_cast %25 : vector<512x16xbf16> to vector<8x8x8x16xbf16>
    %c0_31 = arith.constant 0 : index
    %c1_32 = arith.constant 1 : index
    %c0_33 = arith.constant 0 : index
    %c32 = arith.constant 32 : index
    %27 = vector.load %arg7[%c0_31, %c1_32, %c0_33, %c32] : memref<8x9x9x64xbf16, #tpu.memory_space<vmem>>, vector<8x8x8x16xbf16>
    tpu.vector_store %arg7[%c0_31, %c1_32, %c0_33, %c32], %26 {strides = array<i32>} : memref<8x9x9x64xbf16, #tpu.memory_space<vmem>>, vector<8x8x8x16xbf16>,
    %28 = vector.extract_strided_slice %16 {offsets = [0, 48], sizes = [512, 16], strides = [1, 1]} : vector<512x64xbf16> to vector<512x16xbf16>
    %29 = vector.shape_cast %28 : vector<512x16xbf16> to vector<8x8x8x16xbf16>
    %c0_34 = arith.constant 0 : index
    %c1_35 = arith.constant 1 : index
    %c1_36 = arith.constant 1 : index
    %c48 = arith.constant 48 : index
    %30 = vector.load %arg7[%c0_34, %c1_35, %c1_36, %c48] : memref<8x9x9x64xbf16, #tpu.memory_space<vmem>>, vector<8x8x8x16xbf16>
    tpu.vector_store %arg7[%c0_34, %c1_35, %c1_36, %c48], %29 {strides = array<i32>} : memref<8x9x9x64xbf16, #tpu.memory_space<vmem>>, vector<8x8x8x16xbf16>,
    %cst_37 = arith.constant 0.000000e+00 : f32
    %31 = vector.broadcast %cst_37 : f32 to vector<512x32xf32>
    %c0_38 = arith.constant 0 : index
    %c0_39 = arith.constant 0 : index
    %c0_40 = arith.constant 0 : index
    %c0_41 = arith.constant 0 : index
    %32 = vector.load %arg7[%c0_38, %c0_39, %c0_40, %c0_41] : memref<8x9x9x64xbf16, #tpu.memory_space<vmem>>, vector<8x8x8x64xbf16>
    %33 = vector.shape_cast %32 : vector<8x8x8x64xbf16> to vector<512x64xbf16>
    %c0_42 = arith.constant 0 : index
    %c0_43 = arith.constant 0 : index
    %c0_44 = arith.constant 0 : index
    %34 = vector.load %arg4[%c0_42, %c0_43, %c0_44] : memref<4x64x32xbf16, #tpu.memory_space<vmem>>, vector<1x64x32xbf16>
    %35 = vector.shape_cast %34 : vector<1x64x32xbf16> to vector<64x32xbf16>
    %cst_45 = arith.constant dense<0.000000e+00> : vector<512x32xf32>
    %36 = tpu.matmul %33, %35, %cst_45 {dimension_numbers = #tpu.dot_dimension_numbers<[1], [0], [0], [1], [0, 0, 1, 1], [], []>} : vector<512x64xbf16>, vector<64x32xbf16>, vector<512x32xf32> -> vector<512x32xf32>
    %37 = arith.addf %31, %36 : vector<512x32xf32>
    %c0_46 = arith.constant 0 : index
    %c0_47 = arith.constant 0 : index
    %c1_48 = arith.constant 1 : index
    %c0_49 = arith.constant 0 : index
    %38 = vector.load %arg7[%c0_46, %c0_47, %c1_48, %c0_49] : memref<8x9x9x64xbf16, #tpu.memory_space<vmem>>, vector<8x8x8x64xbf16>
    %39 = vector.shape_cast %38 : vector<8x8x8x64xbf16> to vector<512x64xbf16>
    %c1_50 = arith.constant 1 : index
    %c0_51 = arith.constant 0 : index
    %c0_52 = arith.constant 0 : index
    %40 = vector.load %arg4[%c1_50, %c0_51, %c0_52] : memref<4x64x32xbf16, #tpu.memory_space<vmem>>, vector<1x64x32xbf16>
    %41 = vector.shape_cast %40 : vector<1x64x32xbf16> to vector<64x32xbf16>
    %cst_53 = arith.constant dense<0.000000e+00> : vector<512x32xf32>
    %42 = tpu.matmul %39, %41, %cst_53 {dimension_numbers = #tpu.dot_dimension_numbers<[1], [0], [0], [1], [0, 0, 1, 1], [], []>} : vector<512x64xbf16>, vector<64x32xbf16>, vector<512x32xf32> -> vector<512x32xf32>
    %43 = arith.addf %37, %42 : vector<512x32xf32>
    %c0_54 = arith.constant 0 : index
    %c1_55 = arith.constant 1 : index
    %c0_56 = arith.constant 0 : index
    %c0_57 = arith.constant 0 : index
    %44 = vector.load %arg7[%c0_54, %c1_55, %c0_56, %c0_57] : memref<8x9x9x64xbf16, #tpu.memory_space<vmem>>, vector<8x8x8x64xbf16>
    %45 = vector.shape_cast %44 : vector<8x8x8x64xbf16> to vector<512x64xbf16>
    %c2 = arith.constant 2 : index
    %c0_58 = arith.constant 0 : index
    %c0_59 = arith.constant 0 : index
    %46 = vector.load %arg4[%c2, %c0_58, %c0_59] : memref<4x64x32xbf16, #tpu.memory_space<vmem>>, vector<1x64x32xbf16>
    %47 = vector.shape_cast %46 : vector<1x64x32xbf16> to vector<64x32xbf16>
    %cst_60 = arith.constant dense<0.000000e+00> : vector<512x32xf32>
    %48 = tpu.matmul %45, %47, %cst_60 {dimension_numbers = #tpu.dot_dimension_numbers<[1], [0], [0], [1], [0, 0, 1, 1], [], []>} : vector<512x64xbf16>, vector<64x32xbf16>, vector<512x32xf32> -> vector<512x32xf32>
    %49 = arith.addf %43, %48 : vector<512x32xf32>
    %c0_61 = arith.constant 0 : index
    %c1_62 = arith.constant 1 : index
    %c1_63 = arith.constant 1 : index
    %c0_64 = arith.constant 0 : index
    %50 = vector.load %arg7[%c0_61, %c1_62, %c1_63, %c0_64] : memref<8x9x9x64xbf16, #tpu.memory_space<vmem>>, vector<8x8x8x64xbf16>
    %51 = vector.shape_cast %50 : vector<8x8x8x64xbf16> to vector<512x64xbf16>
    %c3 = arith.constant 3 : index
    %c0_65 = arith.constant 0 : index
    %c0_66 = arith.constant 0 : index
    %52 = vector.load %arg4[%c3, %c0_65, %c0_66] : memref<4x64x32xbf16, #tpu.memory_space<vmem>>, vector<1x64x32xbf16>
    %53 = vector.shape_cast %52 : vector<1x64x32xbf16> to vector<64x32xbf16>
    %cst_67 = arith.constant dense<0.000000e+00> : vector<512x32xf32>
    %54 = tpu.matmul %51, %53, %cst_67 {dimension_numbers = #tpu.dot_dimension_numbers<[1], [0], [0], [1], [0, 0, 1, 1], [], []>} : vector<512x64xbf16>, vector<64x32xbf16>, vector<512x32xf32> -> vector<512x32xf32>
    %55 = arith.addf %49, %54 : vector<512x32xf32>
    %c0_68 = arith.constant 0 : index
    %c0_69 = arith.constant 0 : index
    %56 = vector.load %arg5[%c0_68, %c0_69] : memref<1x32xf32, #tpu.memory_space<vmem>>, vector<1x32xf32>
    %57 = vector.broadcast %56 : vector<1x32xf32> to vector<512x32xf32>
    %58 = arith.addf %55, %57 : vector<512x32xf32>
    %cst_70 = arith.constant 0.000000e+00 : f32
    %59 = vector.broadcast %cst_70 : f32 to vector<512x32xf32>
    %60 = arith.maximumf %58, %59 : vector<512x32xf32>
    %61 = arith.truncf %60 : vector<512x32xf32> to vector<512x32xbf16>
    %c0_71 = arith.constant 0 : index
    %c0_72 = arith.constant 0 : index
    %62 = vector.load %arg6[%c0_71, %c0_72] : memref<512x32xbf16, #tpu.memory_space<vmem>>, vector<512x32xbf16>
    tpu.vector_store %arg6[%c0_71, %c0_72], %61 {strides = array<i32>} : memref<512x32xbf16, #tpu.memory_space<vmem>>, vector<512x32xbf16>,
    return
  }
  func.func @transform_0(%arg0: i32) -> (i32, i32, i32, i32) {
    %c0_i32 = arith.constant 0 : i32
    %c0_i32_0 = arith.constant 0 : i32
    %c0_i32_1 = arith.constant 0 : i32
    %c0_i32_2 = arith.constant 0 : i32
    return %arg0, %c0_i32, %c0_i32_0, %c0_i32_1 : i32, i32, i32, i32
  }
  func.func @transform_1(%arg0: i32) -> (i32, i32) {
    %c0_i32 = arith.constant 0 : i32
    %c0_i32_0 = arith.constant 0 : i32
    %c0_i32_1 = arith.constant 0 : i32
    return %c0_i32, %c0_i32_0 : i32, i32
  }
  func.func @transform_2(%arg0: i32) -> (i32, i32) {
    %c0_i32 = arith.constant 0 : i32
    %c0_i32_0 = arith.constant 0 : i32
    %c0_i32_1 = arith.constant 0 : i32
    return %c0_i32, %c0_i32_0 : i32, i32
  }
  func.func @transform_3(%arg0: i32) -> (i32, i32, i32) {
    %c0_i32 = arith.constant 0 : i32
    %c0_i32_0 = arith.constant 0 : i32
    %c0_i32_1 = arith.constant 0 : i32
    %c0_i32_2 = arith.constant 0 : i32
    return %c0_i32, %c0_i32_0, %c0_i32_1 : i32, i32, i32
  }
  func.func @transform_4(%arg0: i32) -> (i32, i32) {
    %c0_i32 = arith.constant 0 : i32
    %c0_i32_0 = arith.constant 0 : i32
    %c0_i32_1 = arith.constant 0 : i32
    return %c0_i32, %c0_i32_0 : i32, i32
  }
  func.func @transform_5(%arg0: i32) -> (i32, i32) {
    %c0_i32 = arith.constant 0 : i32
    %c0_i32_0 = arith.constant 0 : i32
    return %arg0, %c0_i32 : i32, i32
  }
}

module attributes {stable_mosaic.version = 11 : i64} {
  func.func @_head_kernel(%arg0: i32, %arg1: memref<8x2048xbf16, #tpu.memory_space<vmem>>, %arg2: memref<2048x256xbf16, #tpu.memory_space<vmem>>, %arg3: memref<1x256xf32, #tpu.memory_space<vmem>>, %arg4: memref<256x16xbf16, #tpu.memory_space<vmem>>, %arg5: memref<1x16xf32, #tpu.memory_space<vmem>>, %arg6: memref<8x1xf32, #tpu.memory_space<vmem>>, %arg7: memref<8x15xf32, #tpu.memory_space<vmem>>, %arg8: memref<8x1xi32, #tpu.memory_space<vmem>>) attributes {dimension_semantics = [#tpu.dimension_semantics<parallel>], iteration_bounds = array<i64: 1>, scalar_prefetch = 0 : i64, scratch_operands = 0 : i64, tpu.core_type = #tpu.core_type<tc>, window_params = [{transform_indices = @transform_0, window_bounds = array<i64: 8, 2048>}, {pipeline_mode = #tpu.pipeline_mode<synchronous>, transform_indices = @transform_1, window_bounds = array<i64: 2048, 256>}, {pipeline_mode = #tpu.pipeline_mode<synchronous>, transform_indices = @transform_2, window_bounds = array<i64: 1, 256>}, {pipeline_mode = #tpu.pipeline_mode<synchronous>, transform_indices = @transform_3, window_bounds = array<i64: 256, 16>}, {pipeline_mode = #tpu.pipeline_mode<synchronous>, transform_indices = @transform_4, window_bounds = array<i64: 1, 16>}, {transform_indices = @transform_5, window_bounds = array<i64: 8, 1>}, {transform_indices = @transform_6, window_bounds = array<i64: 8, 15>}, {transform_indices = @transform_7, window_bounds = array<i64: 8, 1>}]} {
    %c0 = arith.constant 0 : index
    %c0_0 = arith.constant 0 : index
    %0 = vector.load %arg1[%c0, %c0_0] : memref<8x2048xbf16, #tpu.memory_space<vmem>>, vector<8x2048xbf16>
    %c0_1 = arith.constant 0 : index
    %c0_2 = arith.constant 0 : index
    %1 = vector.load %arg2[%c0_1, %c0_2] : memref<2048x256xbf16, #tpu.memory_space<vmem>>, vector<2048x256xbf16>
    %cst = arith.constant dense<0.000000e+00> : vector<8x256xf32>
    %2 = tpu.matmul %0, %1, %cst {dimension_numbers = #tpu.dot_dimension_numbers<[1], [0], [0], [1], [0, 0, 1, 1], [], []>} : vector<8x2048xbf16>, vector<2048x256xbf16>, vector<8x256xf32> -> vector<8x256xf32>
    %c0_3 = arith.constant 0 : index
    %c0_4 = arith.constant 0 : index
    %3 = vector.load %arg3[%c0_3, %c0_4] : memref<1x256xf32, #tpu.memory_space<vmem>>, vector<1x256xf32>
    %4 = vector.broadcast %3 : vector<1x256xf32> to vector<8x256xf32>
    %5 = arith.addf %2, %4 : vector<8x256xf32>
    %cst_5 = arith.constant 0.000000e+00 : f32
    %6 = vector.broadcast %cst_5 : f32 to vector<8x256xf32>
    %7 = arith.maximumf %5, %6 : vector<8x256xf32>
    %8 = arith.truncf %7 : vector<8x256xf32> to vector<8x256xbf16>
    %c0_6 = arith.constant 0 : index
    %c0_7 = arith.constant 0 : index
    %9 = vector.load %arg4[%c0_6, %c0_7] : memref<256x16xbf16, #tpu.memory_space<vmem>>, vector<256x16xbf16>
    %cst_8 = arith.constant dense<0.000000e+00> : vector<8x16xf32>
    %10 = tpu.matmul %8, %9, %cst_8 {dimension_numbers = #tpu.dot_dimension_numbers<[1], [0], [0], [1], [0, 0, 1, 1], [], []>} : vector<8x256xbf16>, vector<256x16xbf16>, vector<8x16xf32> -> vector<8x16xf32>
    %c0_9 = arith.constant 0 : index
    %c0_10 = arith.constant 0 : index
    %11 = vector.load %arg5[%c0_9, %c0_10] : memref<1x16xf32, #tpu.memory_space<vmem>>, vector<1x16xf32>
    %12 = vector.broadcast %11 : vector<1x16xf32> to vector<8x16xf32>
    %13 = arith.addf %10, %12 : vector<8x16xf32>
    %14 = vector.extract_strided_slice %13 {offsets = [0, 0], sizes = [8, 1], strides = [1, 1]} : vector<8x16xf32> to vector<8x1xf32>
    %c0_11 = arith.constant 0 : index
    %c0_12 = arith.constant 0 : index
    %15 = vector.load %arg6[%c0_11, %c0_12] : memref<8x1xf32, #tpu.memory_space<vmem>>, vector<8x1xf32>
    tpu.vector_store %arg6[%c0_11, %c0_12], %14 {strides = array<i32>} : memref<8x1xf32, #tpu.memory_space<vmem>>, vector<8x1xf32>,
    %16 = vector.extract_strided_slice %13 {offsets = [0, 1], sizes = [8, 15], strides = [1, 1]} : vector<8x16xf32> to vector<8x15xf32>
    %cst_13 = arith.constant dense<0xFF800000> : vector<8xf32>
    %17 = vector.multi_reduction <maximumf>, %16, %cst_13 [1] : vector<8x15xf32> to vector<8xf32>
    %18 = vector.shape_cast %17 : vector<8xf32> to vector<8x1xf32>
    %19 = vector.broadcast %18 : vector<8x1xf32> to vector<8x15xf32>
    %20 = arith.subf %16, %19 : vector<8x15xf32>
    %21 = math.exp %20 : vector<8x15xf32>
    %cst_14 = arith.constant dense<0.000000e+00> : vector<8xf32>
    %22 = vector.multi_reduction <add>, %21, %cst_14 [1] : vector<8x15xf32> to vector<8xf32>
    %23 = vector.shape_cast %22 : vector<8xf32> to vector<8x1xf32>
    %24 = math.log %23 : vector<8x1xf32>
    %25 = arith.addf %24, %18 : vector<8x1xf32>
    %26 = vector.broadcast %25 : vector<8x1xf32> to vector<8x15xf32>
    %27 = arith.subf %16, %26 : vector<8x15xf32>
    %c0_15 = arith.constant 0 : index
    %c0_16 = arith.constant 0 : index
    %28 = vector.load %arg7[%c0_15, %c0_16] : memref<8x15xf32, #tpu.memory_space<vmem>>, vector<8x15xf32>
    tpu.vector_store %arg7[%c0_15, %c0_16], %27 {strides = array<i32>} : memref<8x15xf32, #tpu.memory_space<vmem>>, vector<8x15xf32>,
    %29 = tpu.iota {dimensions = array<i32: 1>} : vector<8x15xi32>
    %30 = vector.broadcast %18 : vector<8x1xf32> to vector<8x15xf32>
    %31 = arith.cmpf oeq, %16, %30 : vector<8x15xf32>
    %c15_i32 = arith.constant 15 : i32
    %32 = vector.broadcast %c15_i32 : i32 to vector<8x15xi32>
    %33 = arith.select %31, %29, %32 : vector<8x15xi1>, vector<8x15xi32>
    %cst_17 = arith.constant dense<2147483647> : vector<8xi32>
    %34 = vector.multi_reduction <minsi>, %33, %cst_17 [1] : vector<8x15xi32> to vector<8xi32>
    %35 = vector.shape_cast %34 : vector<8xi32> to vector<8x1xi32>
    %c0_18 = arith.constant 0 : index
    %c0_19 = arith.constant 0 : index
    %36 = vector.load %arg8[%c0_18, %c0_19] : memref<8x1xi32, #tpu.memory_space<vmem>>, vector<8x1xi32>
    tpu.vector_store %arg8[%c0_18, %c0_19], %35 {strides = array<i32>} : memref<8x1xi32, #tpu.memory_space<vmem>>, vector<8x1xi32>,
    return
  }
  func.func @transform_0(%arg0: i32) -> (i32, i32) {
    %c0_i32 = arith.constant 0 : i32
    %c0_i32_0 = arith.constant 0 : i32
    return %arg0, %c0_i32 : i32, i32
  }
  func.func @transform_1(%arg0: i32) -> (i32, i32) {
    %c0_i32 = arith.constant 0 : i32
    %c0_i32_0 = arith.constant 0 : i32
    %c0_i32_1 = arith.constant 0 : i32
    return %c0_i32, %c0_i32_0 : i32, i32
  }
  func.func @transform_2(%arg0: i32) -> (i32, i32) {
    %c0_i32 = arith.constant 0 : i32
    %c0_i32_0 = arith.constant 0 : i32
    %c0_i32_1 = arith.constant 0 : i32
    return %c0_i32, %c0_i32_0 : i32, i32
  }
  func.func @transform_3(%arg0: i32) -> (i32, i32) {
    %c0_i32 = arith.constant 0 : i32
    %c0_i32_0 = arith.constant 0 : i32
    %c0_i32_1 = arith.constant 0 : i32
    return %c0_i32, %c0_i32_0 : i32, i32
  }
  func.func @transform_4(%arg0: i32) -> (i32, i32) {
    %c0_i32 = arith.constant 0 : i32
    %c0_i32_0 = arith.constant 0 : i32
    %c0_i32_1 = arith.constant 0 : i32
    return %c0_i32, %c0_i32_0 : i32, i32
  }
  func.func @transform_5(%arg0: i32) -> (i32, i32) {
    %c0_i32 = arith.constant 0 : i32
    %c0_i32_0 = arith.constant 0 : i32
    return %arg0, %c0_i32 : i32, i32
  }
  func.func @transform_6(%arg0: i32) -> (i32, i32) {
    %c0_i32 = arith.constant 0 : i32
    %c0_i32_0 = arith.constant 0 : i32
    return %arg0, %c0_i32 : i32, i32
  }
  func.func @transform_7(%arg0: i32) -> (i32, i32) {
    %c0_i32 = arith.constant 0 : i32
    %c0_i32_0 = arith.constant 0 : i32
    return %arg0, %c0_i32 : i32, i32
  }
}

</mosaic_0001>

<llo_original>
// kernel: policy_act.3
$region0: #{policy_act.3}
  #allocation0 [shape = 'u32[]', space=smem, size = 0x4, offset = 0x4, fixed_abs, tag = 'smem constant byte address 0x4 - core index']
  #allocation1 [shape = 'u32[144,128]{1,0:T(1,128)}', space=vmem, size = 0x12000, scoped, tag = 'internal scratch']
  %s0 = inlined_call_operand.vmem [shape: bf16[8,2048], index: 0, kind: input, shape index: {}]
  %s1 = inlined_call_operand.vmem [shape: bf16[2048,256], index: 1, kind: input, shape index: {}]
  %s2 = inlined_call_operand.vmem [shape: f32[1,256], index: 2, kind: input, shape index: {}]
  %s3 = inlined_call_operand.vmem [shape: bf16[256,16], index: 3, kind: input, shape index: {}]
  %s4 = inlined_call_operand.vmem [shape: f32[1,16], index: 4, kind: input, shape index: {}]
  %s5 = inlined_call_operand.vmem [shape: f32[8,1], index: 5, kind: output, shape index: {0}]
  %s6 = inlined_call_operand.vmem [shape: f32[8,15], index: 6, kind: output, shape index: {1}]
  %s7 = inlined_call_operand.vmem [shape: s32[8,1], index: 7, kind: output, shape index: {2}]
  %8 = xla_tuple %s5, %s6, %s7
  %s9 = sld [smem:[#allocation0]]
  $region46: #{policy_act.3} parent=0
    _
  %s11 = ssub.s32 1, %s9
  %s12 = scalar_select 0, %s11, %s9
  // Predicated region
  $region2: #{policy_act.3} parent=0 // pred_check
    _
  $region3: #{policy_act.3} parent=0 // pred_check_branch
    %14 = sbr.rel (0) target = $region5
  $region4: #{policy_act.3} parent=0 // pred_region
    _
  $region5: #{policy_act.3} parent=0 // pred_fallthru
    _
  // Predicated region
  $region6: #{policy_act.3} parent=0 // pred_check
    _
  $region7: #{policy_act.3} parent=0 // pred_check_branch
    %16 = sbr.rel (0) target = $region9
  $region8: #{policy_act.3} parent=0 // pred_region
    _
  $region9: #{policy_act.3} parent=0 // pred_fallthru
    _
  // Predicated region
  $region10: #{policy_act.3} parent=0 // pred_check
    _
  $region11: #{policy_act.3} parent=0 // pred_check_branch
    %18 = sbr.rel (0) target = $region13
  $region12: #{policy_act.3} parent=0 // pred_region
    _
  $region13: #{policy_act.3} parent=0 // pred_fallthru
    _
  // Predicated region
  $region14: #{policy_act.3} parent=0 // pred_check
    _
  $region15: #{policy_act.3} parent=0 // pred_check_branch
    %20 = sbr.rel (0) target = $region17
  $region16: #{policy_act.3} parent=0 // pred_region
    _
  $region17: #{policy_act.3} parent=0 // pred_fallthru
    _
  // Predicated region
  $region18: #{policy_act.3} parent=0 // pred_check
    _
  $region19: #{policy_act.3} parent=0 // pred_check_branch
    %22 = sbr.rel (0) target = $region21
  $region20: #{policy_act.3} parent=0 // pred_region
    _
  $region21: #{policy_act.3} parent=0 // pred_fallthru
    _
  %v24 = vld [vmem:[%s0] sm:$0xff]
  %v25 = vld [vmem:[%s0 + $0x8] sm:$0xff]
  %v26 = vld [vmem:[%s0 + $0x10] sm:$0xff]
  %v27 = vld [vmem:[%s0 + $0x18] sm:$0xff]
  %v28 = vld [vmem:[%s0 + $0x20] sm:$0xff]
  %v29 = vld [vmem:[%s0 + $0x28] sm:$0xff]
  %v30 = vld [vmem:[%s0 + $0x30] sm:$0xff]
  %v31 = vld [vmem:[%s0 + $0x38] sm:$0xff]
  %v32 = vld [vmem:[%s1] sm:$0xff]
  %v33 = vld [vmem:[%s1 + $0x8] sm:$0xff]
  %v34 = vld [vmem:[%s1 + $0x10] sm:$0xff]
  %v35 = vld [vmem:[%s1 + $0x18] sm:$0xff]
  %v36 = vld [vmem:[%s1 + $0x20] sm:$0xff]
  %v37 = vld [vmem:[%s1 + $0x28] sm:$0xff]
  %v38 = vld [vmem:[%s1 + $0x30] sm:$0xff]
  %v39 = vld [vmem:[%s1 + $0x38] sm:$0xff]
  %v40 = vld [vmem:[%s1 + $0x40] sm:$0xff]
  %v41 = vld [vmem:[%s1 + $0x48] sm:$0xff]
  %v42 = vld [vmem:[%s1 + $0x50] sm:$0xff]
  %v43 = vld [vmem:[%s1 + $0x58] sm:$0xff]
  %v44 = vld [vmem:[%s1 + $0x60] sm:$0xff]
  %v45 = vld [vmem:[%s1 + $0x68] sm:$0xff]
  %v46 = vld [vmem:[%s1 + $0x70] sm:$0xff]
  %v47 = vld [vmem:[%s1 + $0x78] sm:$0xff]
  %v48 = vld [vmem:[%s1 + $0x80] sm:$0xff]
  %v49 = vld [vmem:[%s1 + $0x88] sm:$0xff]
  %v50 = vld [vmem:[%s1 + $0x90] sm:$0xff]
  %v51 = vld [vmem:[%s1 + $0x98] sm:$0xff]
  %v52 = vld [vmem:[%s1 + $0xa0] sm:$0xff]
  %v53 = vld [vmem:[%s1 + $0xa8] sm:$0xff]
  %v54 = vld [vmem:[%s1 + $0xb0] sm:$0xff]
  %v55 = vld [vmem:[%s1 + $0xb8] sm:$0xff]
  %v56 = vld [vmem:[%s1 + $0xc0] sm:$0xff]
  %v57 = vld [vmem:[%s1 + $0xc8] sm:$0xff]
  %v58 = vld [vmem:[%s1 + $0xd0] sm:$0xff]
  %v59 = vld [vmem:[%s1 + $0xd8] sm:$0xff]
  %v60 = vld [vmem:[%s1 + $0xe0] sm:$0xff]
  %v61 = vld [vmem:[%s1 + $0xe8] sm:$0xff]
  %v62 = vld [vmem:[%s1 + $0xf0] sm:$0xff]
  %v63 = vld [vmem:[%s1 + $0xf8] sm:$0xff]
  %v64 = vld [vmem:[%s1 + $0x100] sm:$0xff]
  %v65 = vld [vmem:[%s1 + $0x108] sm:$0xff]
  %v66 = vld [vmem:[%s1 + $0x110] sm:$0xff]
  %v67 = vld [vmem:[%s1 + $0x118] sm:$0xff]
  %v68 = vld [vmem:[%s1 + $0x120] sm:$0xff]
  %v69 = vld [vmem:[%s1 + $0x128] sm:$0xff]
  %v70 = vld [vmem:[%s1 + $0x130] sm:$0xff]
  %v71 = vld [vmem:[%s1 + $0x138] sm:$0xff]
  %v72 = vld [vmem:[%s1 + $0x140] sm:$0xff]
  %v73 = vld [vmem:[%s1 + $0x148] sm:$0xff]
  %v74 = vld [vmem:[%s1 + $0x150] sm:$0xff]
  %v75 = vld [vmem:[%s1 + $0x158] sm:$0xff]
  %v76 = vld [vmem:[%s1 + $0x160] sm:$0xff]
  %v77 = vld [vmem:[%s1 + $0x168] sm:$0xff]
  %v78 = vld [vmem:[%s1 + $0x170] sm:$0xff]
  %v79 = vld [vmem:[%s1 + $0x178] sm:$0xff]
  %v80 = vld [vmem:[%s1 + $0x180] sm:$0xff]
  %v81 = vld [vmem:[%s1 + $0x188] sm:$0xff]
  %v82 = vld [vmem:[%s1 + $0x190] sm:$0xff]
  %v83 = vld [vmem:[%s1 + $0x198] sm:$0xff]
  %v84 = vld [vmem:[%s1 + $0x1a0] sm:$0xff]
  %v85 = vld [vmem:[%s1 + $0x1a8] sm:$0xff]
  %v86 = vld [vmem:[%s1 + $0x1b0] sm:$0xff]
  %v87 = vld [vmem:[%s1 + $0x1b8] sm:$0xff]
  %v88 = vld [vmem:[%s1 + $0x1c0] sm:$0xff]
  %v89 = vld [vmem:[%s1 + $0x1c8] sm:$0xff]
  %v90 = vld [vmem:[%s1 + $0x1d0] sm:$0xff]
  %v91 = vld [vmem:[%s1 + $0x1d8] sm:$0xff]
  %v92 = vld [vmem:[%s1 + $0x1e0] sm:$0xff]
  %v93 = vld [vmem:[%s1 + $0x1e8] sm:$0xff]
  %v94 = vld [vmem:[%s1 + $0x1f0] sm:$0xff]
  %v95 = vld [vmem:[%s1 + $0x1f8] sm:$0xff]
  %v96 = vld [vmem:[%s1 + $0x200] sm:$0xff]
  %v97 = vld [vmem:[%s1 + $0x208] sm:$0xff]
  %v98 = vld [vmem:[%s1 + $0x210] sm:$0xff]
  %v99 = vld [vmem:[%s1 + $0x218] sm:$0xff]
  %v100 = vld [vmem:[%s1 + $0x220] sm:$0xff]
  %v101 = vld [vmem:[%s1 + $0x228] sm:$0xff]
  %v102 = vld [vmem:[%s1 + $0x230] sm:$0xff]
  %v103 = vld [vmem:[%s1 + $0x238] sm:$0xff]
  %v104 = vld [vmem:[%s1 + $0x240] sm:$0xff]
  %v105 = vld [vmem:[%s1 + $0x248] sm:$0xff]
  %v106 = vld [vmem:[%s1 + $0x250] sm:$0xff]
  %v107 = vld [vmem:[%s1 + $0x258] sm:$0xff]
  %v108 = vld [vmem:[%s1 + $0x260] sm:$0xff]
  %v109 = vld [vmem:[%s1 + $0x268] sm:$0xff]
  %v110 = vld [vmem:[%s1 + $0x270] sm:$0xff]
  %v111 = vld [vmem:[%s1 + $0x278] sm:$0xff]
  %v112 = vld [vmem:[%s1 + $0x280] sm:$0xff]
  %v113 = vld [vmem:[%s1 + $0x288] sm:$0xff]
  %v114 = vld [vmem:[%s1 + $0x290] sm:$0xff]
  %v115 = vld [vmem:[%s1 + $0x298] sm:$0xff]
  %v116 = vld [vmem:[%s1 + $0x2a0] sm:$0xff]
  %v117 = vld [vmem:[%s1 + $0x2a8] sm:$0xff]
  %v118 = vld [vmem:[%s1 + $0x2b0] sm:$0xff]
  %v119 = vld [vmem:[%s1 + $0x2b8] sm:$0xff]
  %v120 = vld [vmem:[%s1 + $0x2c0] sm:$0xff]
  %v121 = vld [vmem:[%s1 + $0x2c8] sm:$0xff]
  %v122 = vld [vmem:[%s1 + $0x2d0] sm:$0xff]
  %v123 = vld [vmem:[%s1 + $0x2d8] sm:$0xff]
  %v124 = vld [vmem:[%s1 + $0x2e0] sm:$0xff]
  %v125 = vld [vmem:[%s1 + $0x2e8] sm:$0xff]
  %v126 = vld [vmem:[%s1 + $0x2f0] sm:$0xff]
  %v127 = vld [vmem:[%s1 + $0x2f8] sm:$0xff]
  %v128 = vld [vmem:[%s1 + $0x300] sm:$0xff]
  %v129 = vld [vmem:[%s1 + $0x308] sm:$0xff]
  %v130 = vld [vmem:[%s1 + $0x310] sm:$0xff]
  %v131 = vld [vmem:[%s1 + $0x318] sm:$0xff]
  %v132 = vld [vmem:[%s1 + $0x320] sm:$0xff]
  %v133 = vld [vmem:[%s1 + $0x328] sm:$0xff]
  %v134 = vld [vmem:[%s1 + $0x330] sm:$0xff]
  %v135 = vld [vmem:[%s1 + $0x338] sm:$0xff]
  %v136 = vld [vmem:[%s1 + $0x340] sm:$0xff]
  %v137 = vld [vmem:[%s1 + $0x348] sm:$0xff]
  %v138 = vld [vmem:[%s1 + $0x350] sm:$0xff]
  %v139 = vld [vmem:[%s1 + $0x358] sm:$0xff]
  %v140 = vld [vmem:[%s1 + $0x360] sm:$0xff]
  %v141 = vld [vmem:[%s1 + $0x368] sm:$0xff]
  %v142 = vld [vmem:[%s1 + $0x370] sm:$0xff]
  %v143 = vld [vmem:[%s1 + $0x378] sm:$0xff]
  %v144 = vld [vmem:[%s1 + $0x380] sm:$0xff]
  %v145 = vld [vmem:[%s1 + $0x388] sm:$0xff]
  %v146 = vld [vmem:[%s1 + $0x390] sm:$0xff]
  %v147 = vld [vmem:[%s1 + $0x398] sm:$0xff]
  %v148 = vld [vmem:[%s1 + $0x3a0] sm:$0xff]
  %v149 = vld [vmem:[%s1 + $0x3a8] sm:$0xff]
  %v150 = vld [vmem:[%s1 + $0x3b0] sm:$0xff]
  %v151 = vld [vmem:[%s1 + $0x3b8] sm:$0xff]
  %v152 = vld [vmem:[%s1 + $0x3c0] sm:$0xff]
  %v153 = vld [vmem:[%s1 + $0x3c8] sm:$0xff]
  %v154 = vld [vmem:[%s1 + $0x3d0] sm:$0xff]
  %v155 = vld [vmem:[%s1 + $0x3d8] sm:$0xff]
  %v156 = vld [vmem:[%s1 + $0x3e0] sm:$0xff]
  %v157 = vld [vmem:[%s1 + $0x3e8] sm:$0xff]
  %v158 = vld [vmem:[%s1 + $0x3f0] sm:$0xff]
  %v159 = vld [vmem:[%s1 + $0x3f8] sm:$0xff]
  %v160 = vld [vmem:[%s1 + $0x400] sm:$0xff]
  %v161 = vld [vmem:[%s1 + $0x408] sm:$0xff]
  %v162 = vld [vmem:[%s1 + $0x410] sm:$0xff]
  %v163 = vld [vmem:[%s1 + $0x418] sm:$0xff]
  %v164 = vld [vmem:[%s1 + $0x420] sm:$0xff]
  %v165 = vld [vmem:[%s1 + $0x428] sm:$0xff]
  %v166 = vld [vmem:[%s1 + $0x430] sm:$0xff]
  %v167 = vld [vmem:[%s1 + $0x438] sm:$0xff]
  %v168 = vld [vmem:[%s1 + $0x440] sm:$0xff]
  %v169 = vld [vmem:[%s1 + $0x448] sm:$0xff]
  %v170 = vld [vmem:[%s1 + $0x450] sm:$0xff]
  %v171 = vld [vmem:[%s1 + $0x458] sm:$0xff]
  %v172 = vld [vmem:[%s1 + $0x460] sm:$0xff]
  %v173 = vld [vmem:[%s1 + $0x468] sm:$0xff]
  %v174 = vld [vmem:[%s1 + $0x470] sm:$0xff]
  %v175 = vld [vmem:[%s1 + $0x478] sm:$0xff]
  %v176 = vld [vmem:[%s1 + $0x480] sm:$0xff]
  %v177 = vld [vmem:[%s1 + $0x488] sm:$0xff]
  %v178 = vld [vmem:[%s1 + $0x490] sm:$0xff]
  %v179 = vld [vmem:[%s1 + $0x498] sm:$0xff]
  %v180 = vld [vmem:[%s1 + $0x4a0] sm:$0xff]
  %v181 = vld [vmem:[%s1 + $0x4a8] sm:$0xff]
  %v182 = vld [vmem:[%s1 + $0x4b0] sm:$0xff]
  %v183 = vld [vmem:[%s1 + $0x4b8] sm:$0xff]
  %v184 = vld [vmem:[%s1 + $0x4c0] sm:$0xff]
  %v185 = vld [vmem:[%s1 + $0x4c8] sm:$0xff]
  %v186 = vld [vmem:[%s1 + $0x4d0] sm:$0xff]
  %v187 = vld [vmem:[%s1 + $0x4d8] sm:$0xff]
  %v188 = vld [vmem:[%s1 + $0x4e0] sm:$0xff]
  %v189 = vld [vmem:[%s1 + $0x4e8] sm:$0xff]
  %v190 = vld [vmem:[%s1 + $0x4f0] sm:$0xff]
  %v191 = vld [vmem:[%s1 + $0x4f8] sm:$0xff]
  %v192 = vld [vmem:[%s1 + $0x500] sm:$0xff]
  %v193 = vld [vmem:[%s1 + $0x508] sm:$0xff]
  %v194 = vld [vmem:[%s1 + $0x510] sm:$0xff]
  %v195 = vld [vmem:[%s1 + $0x518] sm:$0xff]
  %v196 = vld [vmem:[%s1 + $0x520] sm:$0xff]
  %v197 = vld [vmem:[%s1 + $0x528] sm:$0xff]
  %v198 = vld [vmem:[%s1 + $0x530] sm:$0xff]
  %v199 = vld [vmem:[%s1 + $0x538] sm:$0xff]
  %v200 = vld [vmem:[%s1 + $0x540] sm:$0xff]
  %v201 = vld [vmem:[%s1 + $0x548] sm:$0xff]
  %v202 = vld [vmem:[%s1 + $0x550] sm:$0xff]
  %v203 = vld [vmem:[%s1 + $0x558] sm:$0xff]
  %v204 = vld [vmem:[%s1 + $0x560] sm:$0xff]
  %v205 = vld [vmem:[%s1 + $0x568] sm:$0xff]
  %v206 = vld [vmem:[%s1 + $0x570] sm:$0xff]
  %v207 = vld [vmem:[%s1 + $0x578] sm:$0xff]
  %v208 = vld [vmem:[%s1 + $0x580] sm:$0xff]
  %v209 = vld [vmem:[%s1 + $0x588] sm:$0xff]
  %v210 = vld [vmem:[%s1 + $0x590] sm:$0xff]
  %v211 = vld [vmem:[%s1 + $0x598] sm:$0xff]
  %v212 = vld [vmem:[%s1 + $0x5a0] sm:$0xff]
  %v213 = vld [vmem:[%s1 + $0x5a8] sm:$0xff]
  %v214 = vld [vmem:[%s1 + $0x5b0] sm:$0xff]
  %v215 = vld [vmem:[%s1 + $0x5b8] sm:$0xff]
  %v216 = vld [vmem:[%s1 + $0x5c0] sm:$0xff]
  %v217 = vld [vmem:[%s1 + $0x5c8] sm:$0xff]
  %v218 = vld [vmem:[%s1 + $0x5d0] sm:$0xff]
  %v219 = vld [vmem:[%s1 + $0x5d8] sm:$0xff]
  %v220 = vld [vmem:[%s1 + $0x5e0] sm:$0xff]
  %v221 = vld [vmem:[%s1 + $0x5e8] sm:$0xff]
  %v222 = vld [vmem:[%s1 + $0x5f0] sm:$0xff]
  %v223 = vld [vmem:[%s1 + $0x5f8] sm:$0xff]
  %v224 = vld [vmem:[%s1 + $0x600] sm:$0xff]
  %v225 = vld [vmem:[%s1 + $0x608] sm:$0xff]
  %v226 = vld [vmem:[%s1 + $0x610] sm:$0xff]
  %v227 = vld [vmem:[%s1 + $0x618] sm:$0xff]
  %v228 = vld [vmem:[%s1 + $0x620] sm:$0xff]
  %v229 = vld [vmem:[%s1 + $0x628] sm:$0xff]
  %v230 = vld [vmem:[%s1 + $0x630] sm:$0xff]
  %v231 = vld [vmem:[%s1 + $0x638] sm:$0xff]
  %v232 = vld [vmem:[%s1 + $0x640] sm:$0xff]
  %v233 = vld [vmem:[%s1 + $0x648] sm:$0xff]
  %v234 = vld [vmem:[%s1 + $0x650] sm:$0xff]
  %v235 = vld [vmem:[%s1 + $0x658] sm:$0xff]
  %v236 = vld [vmem:[%s1 + $0x660] sm:$0xff]
  %v237 = vld [vmem:[%s1 + $0x668] sm:$0xff]
  %v238 = vld [vmem:[%s1 + $0x670] sm:$0xff]
  %v239 = vld [vmem:[%s1 + $0x678] sm:$0xff]
  %v240 = vld [vmem:[%s1 + $0x680] sm:$0xff]
  %v241 = vld [vmem:[%s1 + $0x688] sm:$0xff]
  %v242 = vld [vmem:[%s1 + $0x690] sm:$0xff]
  %v243 = vld [vmem:[%s1 + $0x698] sm:$0xff]
  %v244 = vld [vmem:[%s1 + $0x6a0] sm:$0xff]
  %v245 = vld [vmem:[%s1 + $0x6a8] sm:$0xff]
  %v246 = vld [vmem:[%s1 + $0x6b0] sm:$0xff]
  %v247 = vld [vmem:[%s1 + $0x6b8] sm:$0xff]
  %v248 = vld [vmem:[%s1 + $0x6c0] sm:$0xff]
  %v249 = vld [vmem:[%s1 + $0x6c8] sm:$0xff]
  %v250 = vld [vmem:[%s1 + $0x6d0] sm:$0xff]
  %v251 = vld [vmem:[%s1 + $0x6d8] sm:$0xff]
  %v252 = vld [vmem:[%s1 + $0x6e0] sm:$0xff]
  %v253 = vld [vmem:[%s1 + $0x6e8] sm:$0xff]
  %v254 = vld [vmem:[%s1 + $0x6f0] sm:$0xff]
  %v255 = vld [vmem:[%s1 + $0x6f8] sm:$0xff]
  %v256 = vld [vmem:[%s1 + $0x700] sm:$0xff]
  %v257 = vld [vmem:[%s1 + $0x708] sm:$0xff]
  %v258 = vld [vmem:[%s1 + $0x710] sm:$0xff]
  %v259 = vld [vmem:[%s1 + $0x718] sm:$0xff]
  %v260 = vld [vmem:[%s1 + $0x720] sm:$0xff]
  %v261 = vld [vmem:[%s1 + $0x728] sm:$0xff]
  %v262 = vld [vmem:[%s1 + $0x730] sm:$0xff]
  %v263 = vld [vmem:[%s1 + $0x738] sm:$0xff]
  %v264 = vld [vmem:[%s1 + $0x740] sm:$0xff]
  %v265 = vld [vmem:[%s1 + $0x748] sm:$0xff]
  %v266 = vld [vmem:[%s1 + $0x750] sm:$0xff]
  %v267 = vld [vmem:[%s1 + $0x758] sm:$0xff]
  %v268 = vld [vmem:[%s1 + $0x760] sm:$0xff]
  %v269 = vld [vmem:[%s1 + $0x768] sm:$0xff]
  %v270 = vld [vmem:[%s1 + $0x770] sm:$0xff]
  %v271 = vld [vmem:[%s1 + $0x778] sm:$0xff]
  %v272 = vld [vmem:[%s1 + $0x780] sm:$0xff]
  %v273 = vld [vmem:[%s1 + $0x788] sm:$0xff]
  %v274 = vld [vmem:[%s1 + $0x790] sm:$0xff]
  %v275 = vld [vmem:[%s1 + $0x798] sm:$0xff]
  %v276 = vld [vmem:[%s1 + $0x7a0] sm:$0xff]
  %v277 = vld [vmem:[%s1 + $0x7a8] sm:$0xff]
  %v278 = vld [vmem:[%s1 + $0x7b0] sm:$0xff]
  %v279 = vld [vmem:[%s1 + $0x7b8] sm:$0xff]
  %v280 = vld [vmem:[%s1 + $0x7c0] sm:$0xff]
  %v281 = vld [vmem:[%s1 + $0x7c8] sm:$0xff]
  %v282 = vld [vmem:[%s1 + $0x7d0] sm:$0xff]
  %v283 = vld [vmem:[%s1 + $0x7d8] sm:$0xff]
  %v284 = vld [vmem:[%s1 + $0x7e0] sm:$0xff]
  %v285 = vld [vmem:[%s1 + $0x7e8] sm:$0xff]
  %v286 = vld [vmem:[%s1 + $0x7f0] sm:$0xff]
  %v287 = vld [vmem:[%s1 + $0x7f8] sm:$0xff]
  %v288 = vld [vmem:[%s2] sm:$0x3]
  %v290 = vlaneseq
  %v291 = vshrl.u32 %v290, 7
  %v292 = vsub.s32 0, %v291
  %v293 = vrot.slane %v288, %v292
  %v294 = vlaneseq
  %v295 = vshrl.u32 %v294, 7
  %v296 = vsub.s32 1, %v295
  %v297 = vrot.slane %v288, %v296
  %v308 = vunpack.c.l.b16 %v24
  %v309 = vunpack.c.h.b16 %v24
  %v310 = vunpack.c.l.b16 %v25
  %v311 = vunpack.c.h.b16 %v25
  %v312 = vunpack.c.l.b16 %v26
  %v313 = vunpack.c.h.b16 %v26
  %v314 = vunpack.c.l.b16 %v27
  %v315 = vunpack.c.h.b16 %v27
  %v316 = vunpack.c.l.b16 %v28
  %v317 = vunpack.c.h.b16 %v28
  %v318 = vunpack.c.l.b16 %v29
  %v319 = vunpack.c.h.b16 %v29
  %v320 = vunpack.c.l.b16 %v30
  %v321 = vunpack.c.h.b16 %v30
  %v322 = vunpack.c.l.b16 %v31
  %v323 = vunpack.c.h.b16 %v31
  %v324 = vpack.c.b16 %v308, %v308
  %v325 = vpack.c.b16 %v309, %v309
  %v326 = vpack.c.b16 %v310, %v310
  %v327 = vpack.c.b16 %v311, %v311
  %v328 = vpack.c.b16 %v312, %v312
  %v329 = vpack.c.b16 %v313, %v313
  %v330 = vpack.c.b16 %v314, %v314
  %v331 = vpack.c.b16 %v315, %v315
  %v332 = vpack.c.b16 %v316, %v316
  %v333 = vpack.c.b16 %v317, %v317
  %v334 = vpack.c.b16 %v318, %v318
  %v335 = vpack.c.b16 %v319, %v319
  %v336 = vpack.c.b16 %v320, %v320
  %v337 = vpack.c.b16 %v321, %v321
  %v338 = vpack.c.b16 %v322, %v322
  %v339 = vpack.c.b16 %v323, %v323
  %v612 = vunpack.c.l.b16 %v32
  %v613 = vunpack.c.h.b16 %v32
  %v614 = vunpack.c.l.b16 %v33
  %v615 = vunpack.c.h.b16 %v33
  %v616 = vunpack.c.l.b16 %v34
  %v617 = vunpack.c.h.b16 %v34
  %v618 = vunpack.c.l.b16 %v35
  %v619 = vunpack.c.h.b16 %v35
  %v620 = vunpack.c.l.b16 %v36
  %v621 = vunpack.c.h.b16 %v36
  %v622 = vunpack.c.l.b16 %v37
  %v623 = vunpack.c.h.b16 %v37
  %v624 = vunpack.c.l.b16 %v38
  %v625 = vunpack.c.h.b16 %v38
  %v626 = vunpack.c.l.b16 %v39
  %v627 = vunpack.c.h.b16 %v39
  %v628 = vunpack.c.l.b16 %v40
  %v629 = vunpack.c.h.b16 %v40
  %v630 = vunpack.c.l.b16 %v41
  %v631 = vunpack.c.h.b16 %v41
  %v632 = vunpack.c.l.b16 %v42
  %v633 = vunpack.c.h.b16 %v42
  %v634 = vunpack.c.l.b16 %v43
  %v635 = vunpack.c.h.b16 %v43
  %v636 = vunpack.c.l.b16 %v44
  %v637 = vunpack.c.h.b16 %v44
  %v638 = vunpack.c.l.b16 %v45
  %v639 = vunpack.c.h.b16 %v45
  %v640 = vunpack.c.l.b16 %v46
  %v641 = vunpack.c.h.b16 %v46
  %v642 = vunpack.c.l.b16 %v47
  %v643 = vunpack.c.h.b16 %v47
  %v644 = vunpack.c.l.b16 %v48
  %v645 = vunpack.c.h.b16 %v48
  %v646 = vunpack.c.l.b16 %v49
  %v647 = vunpack.c.h.b16 %v49
  %v648 = vunpack.c.l.b16 %v50
  %v649 = vunpack.c.h.b16 %v50
  %v650 = vunpack.c.l.b16 %v51
  %v651 = vunpack.c.h.b16 %v51
  %v652 = vunpack.c.l.b16 %v52
  %v653 = vunpack.c.h.b16 %v52
  %v654 = vunpack.c.l.b16 %v53
  %v655 = vunpack.c.h.b16 %v53
  %v656 = vunpack.c.l.b16 %v54
  %v657 = vunpack.c.h.b16 %v54
  %v658 = vunpack.c.l.b16 %v55
  %v659 = vunpack.c.h.b16 %v55
  %v660 = vunpack.c.l.b16 %v56
  %v661 = vunpack.c.h.b16 %v56
  %v662 = vunpack.c.l.b16 %v57
  %v663 = vunpack.c.h.b16 %v57
  %v664 = vunpack.c.l.b16 %v58
  %v665 = vunpack.c.h.b16 %v58
  %v666 = vunpack.c.l.b16 %v59
  %v667 = vunpack.c.h.b16 %v59
  %v668 = vunpack.c.l.b16 %v60
  %v669 = vunpack.c.h.b16 %v60
  %v670 = vunpack.c.l.b16 %v61
  %v671 = vunpack.c.h.b16 %v61
  %v672 = vunpack.c.l.b16 %v62
  %v673 = vunpack.c.h.b16 %v62
  %v674 = vunpack.c.l.b16 %v63
  %v675 = vunpack.c.h.b16 %v63
  %v676 = vunpack.c.l.b16 %v64
  %v677 = vunpack.c.h.b16 %v64
  %v678 = vunpack.c.l.b16 %v65
  %v679 = vunpack.c.h.b16 %v65
  %v680 = vunpack.c.l.b16 %v66
  %v681 = vunpack.c.h.b16 %v66
  %v682 = vunpack.c.l.b16 %v67
  %v683 = vunpack.c.h.b16 %v67
  %v684 = vunpack.c.l.b16 %v68
  %v685 = vunpack.c.h.b16 %v68
  %v686 = vunpack.c.l.b16 %v69
  %v687 = vunpack.c.h.b16 %v69
  %v688 = vunpack.c.l.b16 %v70
  %v689 = vunpack.c.h.b16 %v70
  %v690 = vunpack.c.l.b16 %v71
  %v691 = vunpack.c.h.b16 %v71
  %v692 = vunpack.c.l.b16 %v72
  %v693 = vunpack.c.h.b16 %v72
  %v694 = vunpack.c.l.b16 %v73
  %v695 = vunpack.c.h.b16 %v73
  %v696 = vunpack.c.l.b16 %v74
  %v697 = vunpack.c.h.b16 %v74
  %v698 = vunpack.c.l.b16 %v75
  %v699 = vunpack.c.h.b16 %v75
  %v700 = vunpack.c.l.b16 %v76
  %v701 = vunpack.c.h.b16 %v76
  %v702 = vunpack.c.l.b16 %v77
  %v703 = vunpack.c.h.b16 %v77
  %v704 = vunpack.c.l.b16 %v78
  %v705 = vunpack.c.h.b16 %v78
  %v706 = vunpack.c.l.b16 %v79
  %v707 = vunpack.c.h.b16 %v79
  %v708 = vunpack.c.l.b16 %v80
  %v709 = vunpack.c.h.b16 %v80
  %v710 = vunpack.c.l.b16 %v81
  %v711 = vunpack.c.h.b16 %v81
  %v712 = vunpack.c.l.b16 %v82
  %v713 = vunpack.c.h.b16 %v82
  %v714 = vunpack.c.l.b16 %v83
  %v715 = vunpack.c.h.b16 %v83
  %v716 = vunpack.c.l.b16 %v84
  %v717 = vunpack.c.h.b16 %v84
  %v718 = vunpack.c.l.b16 %v85
  %v719 = vunpack.c.h.b16 %v85
  %v720 = vunpack.c.l.b16 %v86
  %v721 = vunpack.c.h.b16 %v86
  %v722 = vunpack.c.l.b16 %v87
  %v723 = vunpack.c.h.b16 %v87
  %v724 = vunpack.c.l.b16 %v88
  %v725 = vunpack.c.h.b16 %v88
  %v726 = vunpack.c.l.b16 %v89
  %v727 = vunpack.c.h.b16 %v89
  %v728 = vunpack.c.l.b16 %v90
  %v729 = vunpack.c.h.b16 %v90
  %v730 = vunpack.c.l.b16 %v91
  %v731 = vunpack.c.h.b16 %v91
  %v732 = vunpack.c.l.b16 %v92
  %v733 = vunpack.c.h.b16 %v92
  %v734 = vunpack.c.l.b16 %v93
  %v735 = vunpack.c.h.b16 %v93
  %v736 = vunpack.c.l.b16 %v94
  %v737 = vunpack.c.h.b16 %v94
  %v738 = vunpack.c.l.b16 %v95
  %v739 = vunpack.c.h.b16 %v95
  %v740 = vunpack.c.l.b16 %v96
  %v741 = vunpack.c.h.b16 %v96
  %v742 = vunpack.c.l.b16 %v97
  %v743 = vunpack.c.h.b16 %v97
  %v744 = vunpack.c.l.b16 %v98
  %v745 = vunpack.c.h.b16 %v98
  %v746 = vunpack.c.l.b16 %v99
  %v747 = vunpack.c.h.b16 %v99
  %v748 = vunpack.c.l.b16 %v100
  %v749 = vunpack.c.h.b16 %v100
  %v750 = vunpack.c.l.b16 %v101
  %v751 = vunpack.c.h.b16 %v101
  %v752 = vunpack.c.l.b16 %v102
  %v753 = vunpack.c.h.b16 %v102
  %v754 = vunpack.c.l.b16 %v103
  %v755 = vunpack.c.h.b16 %v103
  %v756 = vunpack.c.l.b16 %v104
  %v757 = vunpack.c.h.b16 %v104
  %v758 = vunpack.c.l.b16 %v105
  %v759 = vunpack.c.h.b16 %v105
  %v760 = vunpack.c.l.b16 %v106
  %v761 = vunpack.c.h.b16 %v106
  %v762 = vunpack.c.l.b16 %v107
  %v763 = vunpack.c.h.b16 %v107
  %v764 = vunpack.c.l.b16 %v108
  %v765 = vunpack.c.h.b16 %v108
  %v766 = vunpack.c.l.b16 %v109
  %v767 = vunpack.c.h.b16 %v109
  %v768 = vunpack.c.l.b16 %v110
  %v769 = vunpack.c.h.b16 %v110
  %v770 = vunpack.c.l.b16 %v111
  %v771 = vunpack.c.h.b16 %v111
  %v772 = vunpack.c.l.b16 %v112
  %v773 = vunpack.c.h.b16 %v112
  %v774 = vunpack.c.l.b16 %v113
  %v775 = vunpack.c.h.b16 %v113
  %v776 = vunpack.c.l.b16 %v114
  %v777 = vunpack.c.h.b16 %v114
  %v778 = vunpack.c.l.b16 %v115
  %v779 = vunpack.c.h.b16 %v115
  %v780 = vunpack.c.l.b16 %v116
  %v781 = vunpack.c.h.b16 %v116
  %v782 = vunpack.c.l.b16 %v117
  %v783 = vunpack.c.h.b16 %v117
  %v784 = vunpack.c.l.b16 %v118
  %v785 = vunpack.c.h.b16 %v118
  %v786 = vunpack.c.l.b16 %v119
  %v787 = vunpack.c.h.b16 %v119
  %v788 = vunpack.c.l.b16 %v120
  %v789 = vunpack.c.h.b16 %v120
  %v790 = vunpack.c.l.b16 %v121
  %v791 = vunpack.c.h.b16 %v121
  %v792 = vunpack.c.l.b16 %v122
  %v793 = vunpack.c.h.b16 %v122
  %v794 = vunpack.c.l.b16 %v123
  %v795 = vunpack.c.h.b16 %v123
  %v796 = vunpack.c.l.b16 %v124
  %v797 = vunpack.c.h.b16 %v124
  %v798 = vunpack.c.l.b16 %v125
  %v799 = vunpack.c.h.b16 %v125
  %v800 = vunpack.c.l.b16 %v126
  %v801 = vunpack.c.h.b16 %v126
  %v802 = vunpack.c.l.b16 %v127
  %v803 = vunpack.c.h.b16 %v127
  %v804 = vunpack.c.l.b16 %v128
  %v805 = vunpack.c.h.b16 %v128
  %v806 = vunpack.c.l.b16 %v129
  %v807 = vunpack.c.h.b16 %v129
  %v808 = vunpack.c.l.b16 %v130
  %v809 = vunpack.c.h.b16 %v130
  %v810 = vunpack.c.l.b16 %v131
  %v811 = vunpack.c.h.b16 %v131
  %v812 = vunpack.c.l.b16 %v132
  %v813 = vunpack.c.h.b16 %v132
  %v814 = vunpack.c.l.b16 %v133
  %v815 = vunpack.c.h.b16 %v133
  %v816 = vunpack.c.l.b16 %v134
  %v817 = vunpack.c.h.b16 %v134
  %v818 = vunpack.c.l.b16 %v135
  %v819 = vunpack.c.h.b16 %v135
  %v820 = vunpack.c.l.b16 %v136
  %v821 = vunpack.c.h.b16 %v136
  %v822 = vunpack.c.l.b16 %v137
  %v823 = vunpack.c.h.b16 %v137
  %v824 = vunpack.c.l.b16 %v138
  %v825 = vunpack.c.h.b16 %v138
  %v826 = vunpack.c.l.b16 %v139
  %v827 = vunpack.c.h.b16 %v139
  %v828 = vunpack.c.l.b16 %v140
  %v829 = vunpack.c.h.b16 %v140
  %v830 = vunpack.c.l.b16 %v141
  %v831 = vunpack.c.h.b16 %v141
  %v832 = vunpack.c.l.b16 %v142
  %v833 = vunpack.c.h.b16 %v142
  %v834 = vunpack.c.l.b16 %v143
  %v835 = vunpack.c.h.b16 %v143
  %v836 = vunpack.c.l.b16 %v144
  %v837 = vunpack.c.h.b16 %v144
  %v838 = vunpack.c.l.b16 %v145
  %v839 = vunpack.c.h.b16 %v145
  %v840 = vunpack.c.l.b16 %v146
  %v841 = vunpack.c.h.b16 %v146
  %v842 = vunpack.c.l.b16 %v147
  %v843 = vunpack.c.h.b16 %v147
  %v844 = vunpack.c.l.b16 %v148
  %v845 = vunpack.c.h.b16 %v148
  %v846 = vunpack.c.l.b16 %v149
  %v847 = vunpack.c.h.b16 %v149
  %v848 = vunpack.c.l.b16 %v150
  %v849 = vunpack.c.h.b16 %v150
  %v850 = vunpack.c.l.b16 %v151
  %v851 = vunpack.c.h.b16 %v151
  %v852 = vunpack.c.l.b16 %v152
  %v853 = vunpack.c.h.b16 %v152
  %v854 = vunpack.c.l.b16 %v153
  %v855 = vunpack.c.h.b16 %v153
  %v856 = vunpack.c.l.b16 %v154
  %v857 = vunpack.c.h.b16 %v154
  %v858 = vunpack.c.l.b16 %v155
  %v859 = vunpack.c.h.b16 %v155
  %v860 = vunpack.c.l.b16 %v156
  %v861 = vunpack.c.h.b16 %v156
  %v862 = vunpack.c.l.b16 %v157
  %v863 = vunpack.c.h.b16 %v157
  %v864 = vunpack.c.l.b16 %v158
  %v865 = vunpack.c.h.b16 %v158
  %v866 = vunpack.c.l.b16 %v159
  %v867 = vunpack.c.h.b16 %v159
  %v868 = vunpack.c.l.b16 %v160
  %v869 = vunpack.c.h.b16 %v160
  %v870 = vunpack.c.l.b16 %v161
  %v871 = vunpack.c.h.b16 %v161
  %v872 = vunpack.c.l.b16 %v162
  %v873 = vunpack.c.h.b16 %v162
  %v874 = vunpack.c.l.b16 %v163
  %v875 = vunpack.c.h.b16 %v163
  %v876 = vunpack.c.l.b16 %v164
  %v877 = vunpack.c.h.b16 %v164
  %v878 = vunpack.c.l.b16 %v165
  %v879 = vunpack.c.h.b16 %v165
  %v880 = vunpack.c.l.b16 %v166
  %v881 = vunpack.c.h.b16 %v166
  %v882 = vunpack.c.l.b16 %v167
  %v883 = vunpack.c.h.b16 %v167
  %v884 = vunpack.c.l.b16 %v168
  %v885 = vunpack.c.h.b16 %v168
  %v886 = vunpack.c.l.b16 %v169
  %v887 = vunpack.c.h.b16 %v169
  %v888 = vunpack.c.l.b16 %v170
  %v889 = vunpack.c.h.b16 %v170
  %v890 = vunpack.c.l.b16 %v171
  %v891 = vunpack.c.h.b16 %v171
  %v892 = vunpack.c.l.b16 %v172
  %v893 = vunpack.c.h.b16 %v172
  %v894 = vunpack.c.l.b16 %v173
  %v895 = vunpack.c.h.b16 %v173
  %v896 = vunpack.c.l.b16 %v174
  %v897 = vunpack.c.h.b16 %v174
  %v898 = vunpack.c.l.b16 %v175
  %v899 = vunpack.c.h.b16 %v175
  %v900 = vunpack.c.l.b16 %v176
  %v901 = vunpack.c.h.b16 %v176
  %v902 = vunpack.c.l.b16 %v177
  %v903 = vunpack.c.h.b16 %v177
  %v904 = vunpack.c.l.b16 %v178
  %v905 = vunpack.c.h.b16 %v178
  %v906 = vunpack.c.l.b16 %v179
  %v907 = vunpack.c.h.b16 %v179
  %v908 = vunpack.c.l.b16 %v180
  %v909 = vunpack.c.h.b16 %v180
  %v910 = vunpack.c.l.b16 %v181
  %v911 = vunpack.c.h.b16 %v181
  %v912 = vunpack.c.l.b16 %v182
  %v913 = vunpack.c.h.b16 %v182
  %v914 = vunpack.c.l.b16 %v183
  %v915 = vunpack.c.h.b16 %v183
  %v916 = vunpack.c.l.b16 %v184
  %v917 = vunpack.c.h.b16 %v184
  %v918 = vunpack.c.l.b16 %v185
  %v919 = vunpack.c.h.b16 %v185
  %v920 = vunpack.c.l.b16 %v186
  %v921 = vunpack.c.h.b16 %v186
  %v922 = vunpack.c.l.b16 %v187
  %v923 = vunpack.c.h.b16 %v187
  %v924 = vunpack.c.l.b16 %v188
  %v925 = vunpack.c.h.b16 %v188
  %v926 = vunpack.c.l.b16 %v189
  %v927 = vunpack.c.h.b16 %v189
  %v928 = vunpack.c.l.b16 %v190
  %v929 = vunpack.c.h.b16 %v190
  %v930 = vunpack.c.l.b16 %v191
  %v931 = vunpack.c.h.b16 %v191
  %v932 = vunpack.c.l.b16 %v192
  %v933 = vunpack.c.h.b16 %v192
  %v934 = vunpack.c.l.b16 %v193
  %v935 = vunpack.c.h.b16 %v193
  %v936 = vunpack.c.l.b16 %v194
  %v937 = vunpack.c.h.b16 %v194
  %v938 = vunpack.c.l.b16 %v195
  %v939 = vunpack.c.h.b16 %v195
  %v940 = vunpack.c.l.b16 %v196
  %v941 = vunpack.c.h.b16 %v196
  %v942 = vunpack.c.l.b16 %v197
  %v943 = vunpack.c.h.b16 %v197
  %v944 = vunpack.c.l.b16 %v198
  %v945 = vunpack.c.h.b16 %v198
  %v946 = vunpack.c.l.b16 %v199
  %v947 = vunpack.c.h.b16 %v199
  %v948 = vunpack.c.l.b16 %v200
  %v949 = vunpack.c.h.b16 %v200
  %v950 = vunpack.c.l.b16 %v201
  %v951 = vunpack.c.h.b16 %v201
  %v952 = vunpack.c.l.b16 %v202
  %v953 = vunpack.c.h.b16 %v202
  %v954 = vunpack.c.l.b16 %v203
  %v955 = vunpack.c.h.b16 %v203
  %v956 = vunpack.c.l.b16 %v204
  %v957 = vunpack.c.h.b16 %v204
  %v958 = vunpack.c.l.b16 %v205
  %v959 = vunpack.c.h.b16 %v205
  %v960 = vunpack.c.l.b16 %v206
  %v961 = vunpack.c.h.b16 %v206
  %v962 = vunpack.c.l.b16 %v207
  %v963 = vunpack.c.h.b16 %v207
  %v964 = vunpack.c.l.b16 %v208
  %v965 = vunpack.c.h.b16 %v208
  %v966 = vunpack.c.l.b16 %v209
  %v967 = vunpack.c.h.b16 %v209
  %v968 = vunpack.c.l.b16 %v210
  %v969 = vunpack.c.h.b16 %v210
  %v970 = vunpack.c.l.b16 %v211
  %v971 = vunpack.c.h.b16 %v211
  %v972 = vunpack.c.l.b16 %v212
  %v973 = vunpack.c.h.b16 %v212
  %v974 = vunpack.c.l.b16 %v213
  %v975 = vunpack.c.h.b16 %v213
  %v976 = vunpack.c.l.b16 %v214
  %v977 = vunpack.c.h.b16 %v214
  %v978 = vunpack.c.l.b16 %v215
  %v979 = vunpack.c.h.b16 %v215
  %v980 = vunpack.c.l.b16 %v216
  %v981 = vunpack.c.h.b16 %v216
  %v982 = vunpack.c.l.b16 %v217
  %v983 = vunpack.c.h.b16 %v217
  %v984 = vunpack.c.l.b16 %v218
  %v985 = vunpack.c.h.b16 %v218
  %v986 = vunpack.c.l.b16 %v219
  %v987 = vunpack.c.h.b16 %v219
  %v988 = vunpack.c.l.b16 %v220
  %v989 = vunpack.c.h.b16 %v220
  %v990 = vunpack.c.l.b16 %v221
  %v991 = vunpack.c.h.b16 %v221
  %v992 = vunpack.c.l.b16 %v222
  %v993 = vunpack.c.h.b16 %v222
  %v994 = vunpack.c.l.b16 %v223
  %v995 = vunpack.c.h.b16 %v223
  %v996 = vunpack.c.l.b16 %v224
  %v997 = vunpack.c.h.b16 %v224
  %v998 = vunpack.c.l.b16 %v225
  %v999 = vunpack.c.h.b16 %v225
  %v1000 = vunpack.c.l.b16 %v226
  %v1001 = vunpack.c.h.b16 %v226
  %v1002 = vunpack.c.l.b16 %v227
  %v1003 = vunpack.c.h.b16 %v227
  %v1004 = vunpack.c.l.b16 %v228
  %v1005 = vunpack.c.h.b16 %v228
  %v1006 = vunpack.c.l.b16 %v229
  %v1007 = vunpack.c.h.b16 %v229
  %v1008 = vunpack.c.l.b16 %v230
  %v1009 = vunpack.c.h.b16 %v230
  %v1010 = vunpack.c.l.b16 %v231
  %v1011 = vunpack.c.h.b16 %v231
  %v1012 = vunpack.c.l.b16 %v232
  %v1013 = vunpack.c.h.b16 %v232
  %v1014 = vunpack.c.l.b16 %v233
  %v1015 = vunpack.c.h.b16 %v233
  %v1016 = vunpack.c.l.b16 %v234
  %v1017 = vunpack.c.h.b16 %v234
  %v1018 = vunpack.c.l.b16 %v235
  %v1019 = vunpack.c.h.b16 %v235
  %v1020 = vunpack.c.l.b16 %v236
  %v1021 = vunpack.c.h.b16 %v236
  %v1022 = vunpack.c.l.b16 %v237
  %v1023 = vunpack.c.h.b16 %v237
  %v1024 = vunpack.c.l.b16 %v238
  %v1025 = vunpack.c.h.b16 %v238
  %v1026 = vunpack.c.l.b16 %v239
  %v1027 = vunpack.c.h.b16 %v239
  %v1028 = vunpack.c.l.b16 %v240
  %v1029 = vunpack.c.h.b16 %v240
  %v1030 = vunpack.c.l.b16 %v241
  %v1031 = vunpack.c.h.b16 %v241
  %v1032 = vunpack.c.l.b16 %v242
  %v1033 = vunpack.c.h.b16 %v242
  %v1034 = vunpack.c.l.b16 %v243
  %v1035 = vunpack.c.h.b16 %v243
  %v1036 = vunpack.c.l.b16 %v244
  %v1037 = vunpack.c.h.b16 %v244
  %v1038 = vunpack.c.l.b16 %v245
  %v1039 = vunpack.c.h.b16 %v245
  %v1040 = vunpack.c.l.b16 %v246
  %v1041 = vunpack.c.h.b16 %v246
  %v1042 = vunpack.c.l.b16 %v247
  %v1043 = vunpack.c.h.b16 %v247
  %v1044 = vunpack.c.l.b16 %v248
  %v1045 = vunpack.c.h.b16 %v248
  %v1046 = vunpack.c.l.b16 %v249
  %v1047 = vunpack.c.h.b16 %v249
  %v1048 = vunpack.c.l.b16 %v250
  %v1049 = vunpack.c.h.b16 %v250
  %v1050 = vunpack.c.l.b16 %v251
  %v1051 = vunpack.c.h.b16 %v251
  %v1052 = vunpack.c.l.b16 %v252
  %v1053 = vunpack.c.h.b16 %v252
  %v1054 = vunpack.c.l.b16 %v253
  %v1055 = vunpack.c.h.b16 %v253
  %v1056 = vunpack.c.l.b16 %v254
  %v1057 = vunpack.c.h.b16 %v254
  %v1058 = vunpack.c.l.b16 %v255
  %v1059 = vunpack.c.h.b16 %v255
  %v1060 = vunpack.c.l.b16 %v256
  %v1061 = vunpack.c.h.b16 %v256
  %v1062 = vunpack.c.l.b16 %v257
  %v1063 = vunpack.c.h.b16 %v257
  %v1064 = vunpack.c.l.b16 %v258
  %v1065 = vunpack.c.h.b16 %v258
  %v1066 = vunpack.c.l.b16 %v259
  %v1067 = vunpack.c.h.b16 %v259
  %v1068 = vunpack.c.l.b16 %v260
  %v1069 = vunpack.c.h.b16 %v260
  %v1070 = vunpack.c.l.b16 %v261
  %v1071 = vunpack.c.h.b16 %v261
  %v1072 = vunpack.c.l.b16 %v262
  %v1073 = vunpack.c.h.b16 %v262
  %v1074 = vunpack.c.l.b16 %v263
  %v1075 = vunpack.c.h.b16 %v263
  %v1076 = vunpack.c.l.b16 %v264
  %v1077 = vunpack.c.h.b16 %v264
  %v1078 = vunpack.c.l.b16 %v265
  %v1079 = vunpack.c.h.b16 %v265
  %v1080 = vunpack.c.l.b16 %v266
  %v1081 = vunpack.c.h.b16 %v266
  %v1082 = vunpack.c.l.b16 %v267
  %v1083 = vunpack.c.h.b16 %v267
  %v1084 = vunpack.c.l.b16 %v268
  %v1085 = vunpack.c.h.b16 %v268
  %v1086 = vunpack.c.l.b16 %v269
  %v1087 = vunpack.c.h.b16 %v269
  %v1088 = vunpack.c.l.b16 %v270
  %v1089 = vunpack.c.h.b16 %v270
  %v1090 = vunpack.c.l.b16 %v271
  %v1091 = vunpack.c.h.b16 %v271
  %v1092 = vunpack.c.l.b16 %v272
  %v1093 = vunpack.c.h.b16 %v272
  %v1094 = vunpack.c.l.b16 %v273
  %v1095 = vunpack.c.h.b16 %v273
  %v1096 = vunpack.c.l.b16 %v274
  %v1097 = vunpack.c.h.b16 %v274
  %v1098 = vunpack.c.l.b16 %v275
  %v1099 = vunpack.c.h.b16 %v275
  %v1100 = vunpack.c.l.b16 %v276
  %v1101 = vunpack.c.h.b16 %v276
  %v1102 = vunpack.c.l.b16 %v277
  %v1103 = vunpack.c.h.b16 %v277
  %v1104 = vunpack.c.l.b16 %v278
  %v1105 = vunpack.c.h.b16 %v278
  %v1106 = vunpack.c.l.b16 %v279
  %v1107 = vunpack.c.h.b16 %v279
  %v1108 = vunpack.c.l.b16 %v280
  %v1109 = vunpack.c.h.b16 %v280
  %v1110 = vunpack.c.l.b16 %v281
  %v1111 = vunpack.c.h.b16 %v281
  %v1112 = vunpack.c.l.b16 %v282
  %v1113 = vunpack.c.h.b16 %v282
  %v1114 = vunpack.c.l.b16 %v283
  %v1115 = vunpack.c.h.b16 %v283
  %v1116 = vunpack.c.l.b16 %v284
  %v1117 = vunpack.c.h.b16 %v284
  %v1118 = vunpack.c.l.b16 %v285
  %v1119 = vunpack.c.h.b16 %v285
  %v1120 = vunpack.c.l.b16 %v286
  %v1121 = vunpack.c.h.b16 %v286
  %v1122 = vunpack.c.l.b16 %v287
  %v1123 = vunpack.c.h.b16 %v287
  %v1124 = vpack.c.b16 %v614, %v612
  %v1125 = vpack.c.b16 %v615, %v613
  %v1126 = vpack.c.b16 %v618, %v616
  %v1127 = vpack.c.b16 %v619, %v617
  %v1128 = vpack.c.b16 %v622, %v620
  %v1129 = vpack.c.b16 %v623, %v621
  %v1130 = vpack.c.b16 %v626, %v624
  %v1131 = vpack.c.b16 %v627, %v625
  %v1132 = vpack.c.b16 %v630, %v628
  %v1133 = vpack.c.b16 %v631, %v629
  %v1134 = vpack.c.b16 %v634, %v632
  %v1135 = vpack.c.b16 %v635, %v633
  %v1136 = vpack.c.b16 %v638, %v636
  %v1137 = vpack.c.b16 %v639, %v637
  %v1138 = vpack.c.b16 %v642, %v640
  %v1139 = vpack.c.b16 %v643, %v641
  %v1140 = vpack.c.b16 %v646, %v644
  %v1141 = vpack.c.b16 %v647, %v645
  %v1142 = vpack.c.b16 %v650, %v648
  %v1143 = vpack.c.b16 %v651, %v649
  %v1144 = vpack.c.b16 %v654, %v652
  %v1145 = vpack.c.b16 %v655, %v653
  %v1146 = vpack.c.b16 %v658, %v656
  %v1147 = vpack.c.b16 %v659, %v657
  %v1148 = vpack.c.b16 %v662, %v660
  %v1149 = vpack.c.b16 %v663, %v661
  %v1150 = vpack.c.b16 %v666, %v664
  %v1151 = vpack.c.b16 %v667, %v665
  %v1152 = vpack.c.b16 %v670, %v668
  %v1153 = vpack.c.b16 %v671, %v669
  %v1154 = vpack.c.b16 %v674, %v672
  %v1155 = vpack.c.b16 %v675, %v673
  %v1156 = vpack.c.b16 %v678, %v676
  %v1157 = vpack.c.b16 %v679, %v677
  %v1158 = vpack.c.b16 %v682, %v680
  %v1159 = vpack.c.b16 %v683, %v681
  %v1160 = vpack.c.b16 %v686, %v684
  %v1161 = vpack.c.b16 %v687, %v685
  %v1162 = vpack.c.b16 %v690, %v688
  %v1163 = vpack.c.b16 %v691, %v689
  %v1164 = vpack.c.b16 %v694, %v692
  %v1165 = vpack.c.b16 %v695, %v693
  %v1166 = vpack.c.b16 %v698, %v696
  %v1167 = vpack.c.b16 %v699, %v697
  %v1168 = vpack.c.b16 %v702, %v700
  %v1169 = vpack.c.b16 %v703, %v701
  %v1170 = vpack.c.b16 %v706, %v704
  %v1171 = vpack.c.b16 %v707, %v705
  %v1172 = vpack.c.b16 %v710, %v708
  %v1173 = vpack.c.b16 %v711, %v709
  %v1174 = vpack.c.b16 %v714, %v712
  %v1175 = vpack.c.b16 %v715, %v713
  %v1176 = vpack.c.b16 %v718, %v716
  %v1177 = vpack.c.b16 %v719, %v717
  %v1178 = vpack.c.b16 %v722, %v720
  %v1179 = vpack.c.b16 %v723, %v721
  %v1180 = vpack.c.b16 %v726, %v724
  %v1181 = vpack.c.b16 %v727, %v725
  %v1182 = vpack.c.b16 %v730, %v728
  %v1183 = vpack.c.b16 %v731, %v729
  %v1184 = vpack.c.b16 %v734, %v732
  %v1185 = vpack.c.b16 %v735, %v733
  %v1186 = vpack.c.b16 %v738, %v736
  %v1187 = vpack.c.b16 %v739, %v737
  %v1188 = vpack.c.b16 %v742, %v740
  %v1189 = vpack.c.b16 %v743, %v741
  %v1190 = vpack.c.b16 %v746, %v744
  %v1191 = vpack.c.b16 %v747, %v745
  %v1192 = vpack.c.b16 %v750, %v748
  %v1193 = vpack.c.b16 %v751, %v749
  %v1194 = vpack.c.b16 %v754, %v752
  %v1195 = vpack.c.b16 %v755, %v753
  %v1196 = vpack.c.b16 %v758, %v756
  %v1197 = vpack.c.b16 %v759, %v757
  %v1198 = vpack.c.b16 %v762, %v760
  %v1199 = vpack.c.b16 %v763, %v761
  %v1200 = vpack.c.b16 %v766, %v764
  %v1201 = vpack.c.b16 %v767, %v765
  %v1202 = vpack.c.b16 %v770, %v768
  %v1203 = vpack.c.b16 %v771, %v769
  %v1204 = vpack.c.b16 %v774, %v772
  %v1205 = vpack.c.b16 %v775, %v773
  %v1206 = vpack.c.b16 %v778, %v776
  %v1207 = vpack.c.b16 %v779, %v777
  %v1208 = vpack.c.b16 %v782, %v780
  %v1209 = vpack.c.b16 %v783, %v781
  %v1210 = vpack.c.b16 %v786, %v784
  %v1211 = vpack.c.b16 %v787, %v785
  %v1212 = vpack.c.b16 %v790, %v788
  %v1213 = vpack.c.b16 %v791, %v789
  %v1214 = vpack.c.b16 %v794, %v792
  %v1215 = vpack.c.b16 %v795, %v793
  %v1216 = vpack.c.b16 %v798, %v796
  %v1217 = vpack.c.b16 %v799, %v797
  %v1218 = vpack.c.b16 %v802, %v800
  %v1219 = vpack.c.b16 %v803, %v801
  %v1220 = vpack.c.b16 %v806, %v804
  %v1221 = vpack.c.b16 %v807, %v805
  %v1222 = vpack.c.b16 %v810, %v808
  %v1223 = vpack.c.b16 %v811, %v809
  %v1224 = vpack.c.b16 %v814, %v812
  %v1225 = vpack.c.b16 %v815, %v813
  %v1226 = vpack.c.b16 %v818, %v816
  %v1227 = vpack.c.b16 %v819, %v817
  %v1228 = vpack.c.b16 %v822, %v820
  %v1229 = vpack.c.b16 %v823, %v821
  %v1230 = vpack.c.b16 %v826, %v824
  %v1231 = vpack.c.b16 %v827, %v825
  %v1232 = vpack.c.b16 %v830, %v828
  %v1233 = vpack.c.b16 %v831, %v829
  %v1234 = vpack.c.b16 %v834, %v832
  %v1235 = vpack.c.b16 %v835, %v833
  %v1236 = vpack.c.b16 %v838, %v836
  %v1237 = vpack.c.b16 %v839, %v837
  %v1238 = vpack.c.b16 %v842, %v840
  %v1239 = vpack.c.b16 %v843, %v841
  %v1240 = vpack.c.b16 %v846, %v844
  %v1241 = vpack.c.b16 %v847, %v845
  %v1242 = vpack.c.b16 %v850, %v848
  %v1243 = vpack.c.b16 %v851, %v849
  %v1244 = vpack.c.b16 %v854, %v852
  %v1245 = vpack.c.b16 %v855, %v853
  %v1246 = vpack.c.b16 %v858, %v856
  %v1247 = vpack.c.b16 %v859, %v857
  %v1248 = vpack.c.b16 %v862, %v860
  %v1249 = vpack.c.b16 %v863, %v861
  %v1250 = vpack.c.b16 %v866, %v864
  %v1251 = vpack.c.b16 %v867, %v865
  %v1252 = vpack.c.b16 %v870, %v868
  %v1253 = vpack.c.b16 %v871, %v869
  %v1254 = vpack.c.b16 %v874, %v872
  %v1255 = vpack.c.b16 %v875, %v873
  %v1256 = vpack.c.b16 %v878, %v876
  %v1257 = vpack.c.b16 %v879, %v877
  %v1258 = vpack.c.b16 %v882, %v880
  %v1259 = vpack.c.b16 %v883, %v881
  %v1260 = vpack.c.b16 %v886, %v884
  %v1261 = vpack.c.b16 %v887, %v885
  %v1262 = vpack.c.b16 %v890, %v888
  %v1263 = vpack.c.b16 %v891, %v889
  %v1264 = vpack.c.b16 %v894, %v892
  %v1265 = vpack.c.b16 %v895, %v893
  %v1266 = vpack.c.b16 %v898, %v896
  %v1267 = vpack.c.b16 %v899, %v897
  %v1268 = vpack.c.b16 %v902, %v900
  %v1269 = vpack.c.b16 %v903, %v901
  %v1270 = vpack.c.b16 %v906, %v904
  %v1271 = vpack.c.b16 %v907, %v905
  %v1272 = vpack.c.b16 %v910, %v908
  %v1273 = vpack.c.b16 %v911, %v909
  %v1274 = vpack.c.b16 %v914, %v912
  %v1275 = vpack.c.b16 %v915, %v913
  %v1276 = vpack.c.b16 %v918, %v916
  %v1277 = vpack.c.b16 %v919, %v917
  %v1278 = vpack.c.b16 %v922, %v920
  %v1279 = vpack.c.b16 %v923, %v921
  %v1280 = vpack.c.b16 %v926, %v924
  %v1281 = vpack.c.b16 %v927, %v925
  %v1282 = vpack.c.b16 %v930, %v928
  %v1283 = vpack.c.b16 %v931, %v929
  %v1284 = vpack.c.b16 %v934, %v932
  %v1285 = vpack.c.b16 %v935, %v933
  %v1286 = vpack.c.b16 %v938, %v936
  %v1287 = vpack.c.b16 %v939, %v937
  %v1288 = vpack.c.b16 %v942, %v940
  %v1289 = vpack.c.b16 %v943, %v941
  %v1290 = vpack.c.b16 %v946, %v944
  %v1291 = vpack.c.b16 %v947, %v945
  %v1292 = vpack.c.b16 %v950, %v948
  %v1293 = vpack.c.b16 %v951, %v949
  %v1294 = vpack.c.b16 %v954, %v952
  %v1295 = vpack.c.b16 %v955, %v953
  %v1296 = vpack.c.b16 %v958, %v956
  %v1297 = vpack.c.b16 %v959, %v957
  %v1298 = vpack.c.b16 %v962, %v960
  %v1299 = vpack.c.b16 %v963, %v961
  %v1300 = vpack.c.b16 %v966, %v964
  %v1301 = vpack.c.b16 %v967, %v965
  %v1302 = vpack.c.b16 %v970, %v968
  %v1303 = vpack.c.b16 %v971, %v969
  %v1304 = vpack.c.b16 %v974, %v972
  %v1305 = vpack.c.b16 %v975, %v973
  %v1306 = vpack.c.b16 %v978, %v976
  %v1307 = vpack.c.b16 %v979, %v977
  %v1308 = vpack.c.b16 %v982, %v980
  %v1309 = vpack.c.b16 %v983, %v981
  %v1310 = vpack.c.b16 %v986, %v984
  %v1311 = vpack.c.b16 %v987, %v985
  %v1312 = vpack.c.b16 %v990, %v988
  %v1313 = vpack.c.b16 %v991, %v989
  %v1314 = vpack.c.b16 %v994, %v992
  %v1315 = vpack.c.b16 %v995, %v993
  %v1316 = vpack.c.b16 %v998, %v996
  %v1317 = vpack.c.b16 %v999, %v997
  %v1318 = vpack.c.b16 %v1002, %v1000
  %v1319 = vpack.c.b16 %v1003, %v1001
  %v1320 = vpack.c.b16 %v1006, %v1004
  %v1321 = vpack.c.b16 %v1007, %v1005
  %v1322 = vpack.c.b16 %v1010, %v1008
  %v1323 = vpack.c.b16 %v1011, %v1009
  %v1324 = vpack.c.b16 %v1014, %v1012
  %v1325 = vpack.c.b16 %v1015, %v1013
  %v1326 = vpack.c.b16 %v1018, %v1016
  %v1327 = vpack.c.b16 %v1019, %v1017
  %v1328 = vpack.c.b16 %v1022, %v1020
  %v1329 = vpack.c.b16 %v1023, %v1021
  %v1330 = vpack.c.b16 %v1026, %v1024
  %v1331 = vpack.c.b16 %v1027, %v1025
  %v1332 = vpack.c.b16 %v1030, %v1028
  %v1333 = vpack.c.b16 %v1031, %v1029
  %v1334 = vpack.c.b16 %v1034, %v1032
  %v1335 = vpack.c.b16 %v1035, %v1033
  %v1336 = vpack.c.b16 %v1038, %v1036
  %v1337 = vpack.c.b16 %v1039, %v1037
  %v1338 = vpack.c.b16 %v1042, %v1040
  %v1339 = vpack.c.b16 %v1043, %v1041
  %v1340 = vpack.c.b16 %v1046, %v1044
  %v1341 = vpack.c.b16 %v1047, %v1045
  %v1342 = vpack.c.b16 %v1050, %v1048
  %v1343 = vpack.c.b16 %v1051, %v1049
  %v1344 = vpack.c.b16 %v1054, %v1052
  %v1345 = vpack.c.b16 %v1055, %v1053
  %v1346 = vpack.c.b16 %v1058, %v1056
  %v1347 = vpack.c.b16 %v1059, %v1057
  %v1348 = vpack.c.b16 %v1062, %v1060
  %v1349 = vpack.c.b16 %v1063, %v1061
  %v1350 = vpack.c.b16 %v1066, %v1064
  %v1351 = vpack.c.b16 %v1067, %v1065
  %v1352 = vpack.c.b16 %v1070, %v1068
  %v1353 = vpack.c.b16 %v1071, %v1069
  %v1354 = vpack.c.b16 %v1074, %v1072
  %v1355 = vpack.c.b16 %v1075, %v1073
  %v1356 = vpack.c.b16 %v1078, %v1076
  %v1357 = vpack.c.b16 %v1079, %v1077
  %v1358 = vpack.c.b16 %v1082, %v1080
  %v1359 = vpack.c.b16 %v1083, %v1081
  %v1360 = vpack.c.b16 %v1086, %v1084
  %v1361 = vpack.c.b16 %v1087, %v1085
  %v1362 = vpack.c.b16 %v1090, %v1088
  %v1363 = vpack.c.b16 %v1091, %v1089
  %v1364 = vpack.c.b16 %v1094, %v1092
  %v1365 = vpack.c.b16 %v1095, %v1093
  %v1366 = vpack.c.b16 %v1098, %v1096
  %v1367 = vpack.c.b16 %v1099, %v1097
  %v1368 = vpack.c.b16 %v1102, %v1100
  %v1369 = vpack.c.b16 %v1103, %v1101
  %v1370 = vpack.c.b16 %v1106, %v1104
  %v1371 = vpack.c.b16 %v1107, %v1105
  %v1372 = vpack.c.b16 %v1110, %v1108
  %v1373 = vpack.c.b16 %v1111, %v1109
  %v1374 = vpack.c.b16 %v1114, %v1112
  %v1375 = vpack.c.b16 %v1115, %v1113
  %v1376 = vpack.c.b16 %v1118, %v1116
  %v1377 = vpack.c.b16 %v1119, %v1117
  %v1378 = vpack.c.b16 %v1122, %v1120
  %v1379 = vpack.c.b16 %v1123, %v1121
  %1636 = vmatprep.subr.bf16.mxu0 %v1125
  %1637 = vmatpush1.bf16.msra.mxu0 %v1124
  %1638 = vmatprep.subr.bf16.mxu0 %v1127
  %1639 = vmatpush1.bf16.msra.mxu0 %v1126
  %1640 = vmatprep.subr.bf16.mxu0 %v1129
  %1641 = vmatpush1.bf16.msra.mxu0 %v1128
  %1642 = vmatprep.subr.bf16.mxu0 %v1131
  %1643 = vmatpush1.bf16.msra.mxu0 %v1130
  %1644 = vmatprep.subr.bf16.mxu0 %v1133
  %1645 = vmatpush1.bf16.msra.mxu0 %v1132
  %1646 = vmatprep.subr.bf16.mxu0 %v1135
  %1647 = vmatpush1.bf16.msra.mxu0 %v1134
  %1648 = vmatprep.subr.bf16.mxu0 %v1137
  %1649 = vmatpush1.bf16.msra.mxu0 %v1136
  %1650 = vmatprep.subr.bf16.mxu0 %v1139
  %1651 = vmatpush1.bf16.msra.mxu0 %v1138
  %1652 = vmatprep.subr.bf16.mxu0 %v1141
  %1653 = vmatpush1.bf16.msra.mxu0 %v1140
  %1654 = vmatprep.subr.bf16.mxu0 %v1143
  %1655 = vmatpush1.bf16.msra.mxu0 %v1142
  %1656 = vmatprep.subr.bf16.mxu0 %v1145
  %1657 = vmatpush1.bf16.msra.mxu0 %v1144
  %1658 = vmatprep.subr.bf16.mxu0 %v1147
  %1659 = vmatpush1.bf16.msra.mxu0 %v1146
  %1660 = vmatprep.subr.bf16.mxu0 %v1149
  %1661 = vmatpush1.bf16.msra.mxu0 %v1148
  %1662 = vmatprep.subr.bf16.mxu0 %v1151
  %1663 = vmatpush1.bf16.msra.mxu0 %v1150
  %1664 = vmatprep.subr.bf16.mxu0 %v1153
  %1665 = vmatpush1.bf16.msra.mxu0 %v1152
  %1666 = vmatprep.subr.bf16.mxu0 %v1155
  %1667 = vmatpush1.bf16.msra.mxu0 %v1154
  %1668 = vmatprep.mubr.bf16.mxu0 %v325
  %1669 = vmatmul.mubr.bf16.gmra.mrb[0].mxu0 %v324
  %v1670 = vpop.f32.mrb[0].mxu0
  %v1671 = vadd.f32 %v293, %v1670
  %v1672 = vpop.f32.mrb[0].mxu0
  %v1673 = vadd.f32 %v297, %v1672
  %v1674 = vpop.f32.mrb[0].mxu0
  %v1675 = vpop.f32.mrb[0].mxu0
  %1676 = vdwg.mxu0
  %1677 = vmatprep.subr.bf16.mxu0 %v1157
  %1678 = vmatpush1.bf16.msra.mxu0 %v1156
  %1679 = vmatprep.subr.bf16.mxu0 %v1159
  %1680 = vmatpush1.bf16.msra.mxu0 %v1158
  %1681 = vmatprep.subr.bf16.mxu0 %v1161
  %1682 = vmatpush1.bf16.msra.mxu0 %v1160
  %1683 = vmatprep.subr.bf16.mxu0 %v1163
  %1684 = vmatpush1.bf16.msra.mxu0 %v1162
  %1685 = vmatprep.subr.bf16.mxu0 %v1165
  %1686 = vmatpush1.bf16.msra.mxu0 %v1164
  %1687 = vmatprep.subr.bf16.mxu0 %v1167
  %1688 = vmatpush1.bf16.msra.mxu0 %v1166
  %1689 = vmatprep.subr.bf16.mxu0 %v1169
  %1690 = vmatpush1.bf16.msra.mxu0 %v1168
  %1691 = vmatprep.subr.bf16.mxu0 %v1171
  %1692 = vmatpush1.bf16.msra.mxu0 %v1170
  %1693 = vmatprep.subr.bf16.mxu0 %v1173
  %1694 = vmatpush1.bf16.msra.mxu0 %v1172
  %1695 = vmatprep.subr.bf16.mxu0 %v1175
  %1696 = vmatpush1.bf16.msra.mxu0 %v1174
  %1697 = vmatprep.subr.bf16.mxu0 %v1177
  %1698 = vmatpush1.bf16.msra.mxu0 %v1176
  %1699 = vmatprep.subr.bf16.mxu0 %v1179
  %1700 = vmatpush1.bf16.msra.mxu0 %v1178
  %1701 = vmatprep.subr.bf16.mxu0 %v1181
  %1702 = vmatpush1.bf16.msra.mxu0 %v1180
  %1703 = vmatprep.subr.bf16.mxu0 %v1183
  %1704 = vmatpush1.bf16.msra.mxu0 %v1182
  %1705 = vmatprep.subr.bf16.mxu0 %v1185
  %1706 = vmatpush1.bf16.msra.mxu0 %v1184
  %1707 = vmatprep.subr.bf16.mxu0 %v1187
  %1708 = vmatpush1.bf16.msra.mxu0 %v1186
  %1709 = vmatprep.mubr.bf16.mxu0 %v327
  %1710 = vmatmul.mubr.bf16.gmra.mrb[0].mxu0 %v326
  %v1711 = vpop.f32.mrb[0].mxu0
  %v1712 = vadd.f32 %v1671, %v1711
  %v1713 = vpop.f32.mrb[0].mxu0
  %v1714 = vadd.f32 %v1673, %v1713
  %v1715 = vpop.f32.mrb[0].mxu0
  %v1716 = vpop.f32.mrb[0].mxu0
  %1717 = vdwg.mxu0
  %1718 = vmatprep.subr.bf16.mxu0 %v1189
  %1719 = vmatpush1.bf16.msra.mxu0 %v1188
  %1720 = vmatprep.subr.bf16.mxu0 %v1191
  %1721 = vmatpush1.bf16.msra.mxu0 %v1190
  %1722 = vmatprep.subr.bf16.mxu0 %v1193
  %1723 = vmatpush1.bf16.msra.mxu0 %v1192
  %1724 = vmatprep.subr.bf16.mxu0 %v1195
  %1725 = vmatpush1.bf16.msra.mxu0 %v1194
  %1726 = vmatprep.subr.bf16.mxu0 %v1197
  %1727 = vmatpush1.bf16.msra.mxu0 %v1196
  %1728 = vmatprep.subr.bf16.mxu0 %v1199
  %1729 = vmatpush1.bf16.msra.mxu0 %v1198
  %1730 = vmatprep.subr.bf16.mxu0 %v1201
  %1731 = vmatpush1.bf16.msra.mxu0 %v1200
  %1732 = vmatprep.subr.bf16.mxu0 %v1203
  %1733 = vmatpush1.bf16.msra.mxu0 %v1202
  %1734 = vmatprep.subr.bf16.mxu0 %v1205
  %1735 = vmatpush1.bf16.msra.mxu0 %v1204
  %1736 = vmatprep.subr.bf16.mxu0 %v1207
  %1737 = vmatpush1.bf16.msra.mxu0 %v1206
  %1738 = vmatprep.subr.bf16.mxu0 %v1209
  %1739 = vmatpush1.bf16.msra.mxu0 %v1208
  %1740 = vmatprep.subr.bf16.mxu0 %v1211
  %1741 = vmatpush1.bf16.msra.mxu0 %v1210
  %1742 = vmatprep.subr.bf16.mxu0 %v1213
  %1743 = vmatpush1.bf16.msra.mxu0 %v1212
  %1744 = vmatprep.subr.bf16.mxu0 %v1215
  %1745 = vmatpush1.bf16.msra.mxu0 %v1214
  %1746 = vmatprep.subr.bf16.mxu0 %v1217
  %1747 = vmatpush1.bf16.msra.mxu0 %v1216
  %1748 = vmatprep.subr.bf16.mxu0 %v1219
  %1749 = vmatpush1.bf16.msra.mxu0 %v1218
  %1750 = vmatprep.mubr.bf16.mxu0 %v329
  %1751 = vmatmul.mubr.bf16.gmra.mrb[0].mxu0 %v328
  %v1752 = vpop.f32.mrb[0].mxu0
  %v1753 = vadd.f32 %v1712, %v1752
  %v1754 = vpop.f32.mrb[0].mxu0
  %v1755 = vadd.f32 %v1714, %v1754
  %v1756 = vpop.f32.mrb[0].mxu0
  %v1757 = vpop.f32.mrb[0].mxu0
  %1758 = vdwg.mxu0
  %1759 = vmatprep.subr.bf16.mxu0 %v1221
  %1760 = vmatpush1.bf16.msra.mxu0 %v1220
  %1761 = vmatprep.subr.bf16.mxu0 %v1223
  %1762 = vmatpush1.bf16.msra.mxu0 %v1222
  %1763 = vmatprep.subr.bf16.mxu0 %v1225
  %1764 = vmatpush1.bf16.msra.mxu0 %v1224
  %1765 = vmatprep.subr.bf16.mxu0 %v1227
  %1766 = vmatpush1.bf16.msra.mxu0 %v1226
  %1767 = vmatprep.subr.bf16.mxu0 %v1229
  %1768 = vmatpush1.bf16.msra.mxu0 %v1228
  %1769 = vmatprep.subr.bf16.mxu0 %v1231
  %1770 = vmatpush1.bf16.msra.mxu0 %v1230
  %1771 = vmatprep.subr.bf16.mxu0 %v1233
  %1772 = vmatpush1.bf16.msra.mxu0 %v1232
  %1773 = vmatprep.subr.bf16.mxu0 %v1235
  %1774 = vmatpush1.bf16.msra.mxu0 %v1234
  %1775 = vmatprep.subr.bf16.mxu0 %v1237
  %1776 = vmatpush1.bf16.msra.mxu0 %v1236
  %1777 = vmatprep.subr.bf16.mxu0 %v1239
  %1778 = vmatpush1.bf16.msra.mxu0 %v1238
  %1779 = vmatprep.subr.bf16.mxu0 %v1241
  %1780 = vmatpush1.bf16.msra.mxu0 %v1240
  %1781 = vmatprep.subr.bf16.mxu0 %v1243
  %1782 = vmatpush1.bf16.msra.mxu0 %v1242
  %1783 = vmatprep.subr.bf16.mxu0 %v1245
  %1784 = vmatpush1.bf16.msra.mxu0 %v1244
  %1785 = vmatprep.subr.bf16.mxu0 %v1247
  %1786 = vmatpush1.bf16.msra.mxu0 %v1246
  %1787 = vmatprep.subr.bf16.mxu0 %v1249
  %1788 = vmatpush1.bf16.msra.mxu0 %v1248
  %1789 = vmatprep.subr.bf16.mxu0 %v1251
  %1790 = vmatpush1.bf16.msra.mxu0 %v1250
  %1791 = vmatprep.mubr.bf16.mxu0 %v331
  %1792 = vmatmul.mubr.bf16.gmra.mrb[0].mxu0 %v330
  %v1793 = vpop.f32.mrb[0].mxu0
  %v1794 = vadd.f32 %v1753, %v1793
  %v1795 = vpop.f32.mrb[0].mxu0
  %v1796 = vadd.f32 %v1755, %v1795
  %v1797 = vpop.f32.mrb[0].mxu0
  %v1798 = vpop.f32.mrb[0].mxu0
  %1799 = vdwg.mxu0
  %1800 = vmatprep.subr.bf16.mxu0 %v1253
  %1801 = vmatpush1.bf16.msra.mxu0 %v1252
  %1802 = vmatprep.subr.bf16.mxu0 %v1255
  %1803 = vmatpush1.bf16.msra.mxu0 %v1254
  %1804 = vmatprep.subr.bf16.mxu0 %v1257
  %1805 = vmatpush1.bf16.msra.mxu0 %v1256
  %1806 = vmatprep.subr.bf16.mxu0 %v1259
  %1807 = vmatpush1.bf16.msra.mxu0 %v1258
  %1808 = vmatprep.subr.bf16.mxu0 %v1261
  %1809 = vmatpush1.bf16.msra.mxu0 %v1260
  %1810 = vmatprep.subr.bf16.mxu0 %v1263
  %1811 = vmatpush1.bf16.msra.mxu0 %v1262
  %1812 = vmatprep.subr.bf16.mxu0 %v1265
  %1813 = vmatpush1.bf16.msra.mxu0 %v1264
  %1814 = vmatprep.subr.bf16.mxu0 %v1267
  %1815 = vmatpush1.bf16.msra.mxu0 %v1266
  %1816 = vmatprep.subr.bf16.mxu0 %v1269
  %1817 = vmatpush1.bf16.msra.mxu0 %v1268
  %1818 = vmatprep.subr.bf16.mxu0 %v1271
  %1819 = vmatpush1.bf16.msra.mxu0 %v1270
  %1820 = vmatprep.subr.bf16.mxu0 %v1273
  %1821 = vmatpush1.bf16.msra.mxu0 %v1272
  %1822 = vmatprep.subr.bf16.mxu0 %v1275
  %1823 = vmatpush1.bf16.msra.mxu0 %v1274
  %1824 = vmatprep.subr.bf16.mxu0 %v1277
  %1825 = vmatpush1.bf16.msra.mxu0 %v1276
  %1826 = vmatprep.subr.bf16.mxu0 %v1279
  %1827 = vmatpush1.bf16.msra.mxu0 %v1278
  %1828 = vmatprep.subr.bf16.mxu0 %v1281
  %1829 = vmatpush1.bf16.msra.mxu0 %v1280
  %1830 = vmatprep.subr.bf16.mxu0 %v1283
  %1831 = vmatpush1.bf16.msra.mxu0 %v1282
  %1832 = vmatprep.mubr.bf16.mxu0 %v333
  %1833 = vmatmul.mubr.bf16.gmra.mrb[0].mxu0 %v332
  %v1834 = vpop.f32.mrb[0].mxu0
  %v1835 = vadd.f32 %v1794, %v1834
  %v1836 = vpop.f32.mrb[0].mxu0
  %v1837 = vadd.f32 %v1796, %v1836
  %v1838 = vpop.f32.mrb[0].mxu0
  %v1839 = vpop.f32.mrb[0].mxu0
  %1840 = vdwg.mxu0
  %1841 = vmatprep.subr.bf16.mxu0 %v1285
  %1842 = vmatpush1.bf16.msra.mxu0 %v1284
  %1843 = vmatprep.subr.bf16.mxu0 %v1287
  %1844 = vmatpush1.bf16.msra.mxu0 %v1286
  %1845 = vmatprep.subr.bf16.mxu0 %v1289
  %1846 = vmatpush1.bf16.msra.mxu0 %v1288
  %1847 = vmatprep.subr.bf16.mxu0 %v1291
  %1848 = vmatpush1.bf16.msra.mxu0 %v1290
  %1849 = vmatprep.subr.bf16.mxu0 %v1293
  %1850 = vmatpush1.bf16.msra.mxu0 %v1292
  %1851 = vmatprep.subr.bf16.mxu0 %v1295
  %1852 = vmatpush1.bf16.msra.mxu0 %v1294
  %1853 = vmatprep.subr.bf16.mxu0 %v1297
  %1854 = vmatpush1.bf16.msra.mxu0 %v1296
  %1855 = vmatprep.subr.bf16.mxu0 %v1299
  %1856 = vmatpush1.bf16.msra.mxu0 %v1298
  %1857 = vmatprep.subr.bf16.mxu0 %v1301
  %1858 = vmatpush1.bf16.msra.mxu0 %v1300
  %1859 = vmatprep.subr.bf16.mxu0 %v1303
  %1860 = vmatpush1.bf16.msra.mxu0 %v1302
  %1861 = vmatprep.subr.bf16.mxu0 %v1305
  %1862 = vmatpush1.bf16.msra.mxu0 %v1304
  %1863 = vmatprep.subr.bf16.mxu0 %v1307
  %1864 = vmatpush1.bf16.msra.mxu0 %v1306
  %1865 = vmatprep.subr.bf16.mxu0 %v1309
  %1866 = vmatpush1.bf16.msra.mxu0 %v1308
  %1867 = vmatprep.subr.bf16.mxu0 %v1311
  %1868 = vmatpush1.bf16.msra.mxu0 %v1310
  %1869 = vmatprep.subr.bf16.mxu0 %v1313
  %1870 = vmatpush1.bf16.msra.mxu0 %v1312
  %1871 = vmatprep.subr.bf16.mxu0 %v1315
  %1872 = vmatpush1.bf16.msra.mxu0 %v1314
  %1873 = vmatprep.mubr.bf16.mxu0 %v335
  %1874 = vmatmul.mubr.bf16.gmra.mrb[0].mxu0 %v334
  %v1875 = vpop.f32.mrb[0].mxu0
  %v1876 = vadd.f32 %v1835, %v1875
  %v1877 = vpop.f32.mrb[0].mxu0
  %v1878 = vadd.f32 %v1837, %v1877
  %v1879 = vpop.f32.mrb[0].mxu0
  %v1880 = vpop.f32.mrb[0].mxu0
  %1881 = vdwg.mxu0
  %1882 = vmatprep.subr.bf16.mxu0 %v1317
  %1883 = vmatpush1.bf16.msra.mxu0 %v1316
  %1884 = vmatprep.subr.bf16.mxu0 %v1319
  %1885 = vmatpush1.bf16.msra.mxu0 %v1318
  %1886 = vmatprep.subr.bf16.mxu0 %v1321
  %1887 = vmatpush1.bf16.msra.mxu0 %v1320
  %1888 = vmatprep.subr.bf16.mxu0 %v1323
  %1889 = vmatpush1.bf16.msra.mxu0 %v1322
  %1890 = vmatprep.subr.bf16.mxu0 %v1325
  %1891 = vmatpush1.bf16.msra.mxu0 %v1324
  %1892 = vmatprep.subr.bf16.mxu0 %v1327
  %1893 = vmatpush1.bf16.msra.mxu0 %v1326
  %1894 = vmatprep.subr.bf16.mxu0 %v1329
  %1895 = vmatpush1.bf16.msra.mxu0 %v1328
  %1896 = vmatprep.subr.bf16.mxu0 %v1331
  %1897 = vmatpush1.bf16.msra.mxu0 %v1330
  %1898 = vmatprep.subr.bf16.mxu0 %v1333
  %1899 = vmatpush1.bf16.msra.mxu0 %v1332
  %1900 = vmatprep.subr.bf16.mxu0 %v1335
  %1901 = vmatpush1.bf16.msra.mxu0 %v1334
  %1902 = vmatprep.subr.bf16.mxu0 %v1337
  %1903 = vmatpush1.bf16.msra.mxu0 %v1336
  %1904 = vmatprep.subr.bf16.mxu0 %v1339
  %1905 = vmatpush1.bf16.msra.mxu0 %v1338
  %1906 = vmatprep.subr.bf16.mxu0 %v1341
  %1907 = vmatpush1.bf16.msra.mxu0 %v1340
  %1908 = vmatprep.subr.bf16.mxu0 %v1343
  %1909 = vmatpush1.bf16.msra.mxu0 %v1342
  %1910 = vmatprep.subr.bf16.mxu0 %v1345
  %1911 = vmatpush1.bf16.msra.mxu0 %v1344
  %1912 = vmatprep.subr.bf16.mxu0 %v1347
  %1913 = vmatpush1.bf16.msra.mxu0 %v1346
  %1914 = vmatprep.mubr.bf16.mxu0 %v337
  %1915 = vmatmul.mubr.bf16.gmra.mrb[0].mxu0 %v336
  %v1916 = vpop.f32.mrb[0].mxu0
  %v1917 = vadd.f32 %v1876, %v1916
  %v1918 = vpop.f32.mrb[0].mxu0
  %v1919 = vadd.f32 %v1878, %v1918
  %v1920 = vpop.f32.mrb[0].mxu0
  %v1921 = vpop.f32.mrb[0].mxu0
  %1922 = vdwg.mxu0
  %1923 = vmatprep.subr.bf16.mxu0 %v1349
  %1924 = vmatpush1.bf16.msra.mxu0 %v1348
  %1925 = vmatprep.subr.bf16.mxu0 %v1351
  %1926 = vmatpush1.bf16.msra.mxu0 %v1350
  %1927 = vmatprep.subr.bf16.mxu0 %v1353
  %1928 = vmatpush1.bf16.msra.mxu0 %v1352
  %1929 = vmatprep.subr.bf16.mxu0 %v1355
  %1930 = vmatpush1.bf16.msra.mxu0 %v1354
  %1931 = vmatprep.subr.bf16.mxu0 %v1357
  %1932 = vmatpush1.bf16.msra.mxu0 %v1356
  %1933 = vmatprep.subr.bf16.mxu0 %v1359
  %1934 = vmatpush1.bf16.msra.mxu0 %v1358
  %1935 = vmatprep.subr.bf16.mxu0 %v1361
  %1936 = vmatpush1.bf16.msra.mxu0 %v1360
  %1937 = vmatprep.subr.bf16.mxu0 %v1363
  %1938 = vmatpush1.bf16.msra.mxu0 %v1362
  %1939 = vmatprep.subr.bf16.mxu0 %v1365
  %1940 = vmatpush1.bf16.msra.mxu0 %v1364
  %1941 = vmatprep.subr.bf16.mxu0 %v1367
  %1942 = vmatpush1.bf16.msra.mxu0 %v1366
  %1943 = vmatprep.subr.bf16.mxu0 %v1369
  %1944 = vmatpush1.bf16.msra.mxu0 %v1368
  %1945 = vmatprep.subr.bf16.mxu0 %v1371
  %1946 = vmatpush1.bf16.msra.mxu0 %v1370
  %1947 = vmatprep.subr.bf16.mxu0 %v1373
  %1948 = vmatpush1.bf16.msra.mxu0 %v1372
  %1949 = vmatprep.subr.bf16.mxu0 %v1375
  %1950 = vmatpush1.bf16.msra.mxu0 %v1374
  %1951 = vmatprep.subr.bf16.mxu0 %v1377
  %1952 = vmatpush1.bf16.msra.mxu0 %v1376
  %1953 = vmatprep.subr.bf16.mxu0 %v1379
  %1954 = vmatpush1.bf16.msra.mxu0 %v1378
  %1955 = vmatprep.mubr.bf16.mxu0 %v339
  %1956 = vmatmul.mubr.bf16.gmra.mrb[0].mxu0 %v338
  %v1957 = vpop.f32.mrb[0].mxu0
  %v1958 = vadd.f32 %v1917, %v1957
  %v1959 = vpop.f32.mrb[0].mxu0
  %v1960 = vadd.f32 %v1919, %v1959
  %v1961 = vpop.f32.mrb[0].mxu0
  %v1962 = vpop.f32.mrb[0].mxu0
  %1963 = vdwg.mxu0
  %v1964 = vmax.f32 %v1958, 0.0
  %v1965 = vmax.f32 %v1960, 0.0
  %v1966 = vpack.c.bf16 %v1964, %v1964
  %v1967 = vpack.c.bf16 %v1965, %v1965
  %v1968 = vld [vmem:[%s3] sm:$0xf]
  %v1969 = vld [vmem:[%s3 + $0x4] sm:$0xf]
  %v1970 = vld [vmem:[%s3 + $0x8] sm:$0xf]
  %v1971 = vld [vmem:[%s3 + $0xc] sm:$0xf]
  %v1972 = vld [vmem:[%s3 + $0x10] sm:$0xf]
  %v1973 = vld [vmem:[%s3 + $0x14] sm:$0xf]
  %v1974 = vld [vmem:[%s3 + $0x18] sm:$0xf]
  %v1975 = vld [vmem:[%s3 + $0x1c] sm:$0xf]
  %v1976 = vld [vmem:[%s3 + $0x20] sm:$0xf]
  %v1977 = vld [vmem:[%s3 + $0x24] sm:$0xf]
  %v1978 = vld [vmem:[%s3 + $0x28] sm:$0xf]
  %v1979 = vld [vmem:[%s3 + $0x2c] sm:$0xf]
  %v1980 = vld [vmem:[%s3 + $0x30] sm:$0xf]
  %v1981 = vld [vmem:[%s3 + $0x34] sm:$0xf]
  %v1982 = vld [vmem:[%s3 + $0x38] sm:$0xf]
  %v1983 = vld [vmem:[%s3 + $0x3c] sm:$0xf]
  %v1984 = vld [vmem:[%s3 + $0x40] sm:$0xf]
  %v1985 = vld [vmem:[%s3 + $0x44] sm:$0xf]
  %v1986 = vld [vmem:[%s3 + $0x48] sm:$0xf]
  %v1987 = vld [vmem:[%s3 + $0x4c] sm:$0xf]
  %v1988 = vld [vmem:[%s3 + $0x50] sm:$0xf]
  %v1989 = vld [vmem:[%s3 + $0x54] sm:$0xf]
  %v1990 = vld [vmem:[%s3 + $0x58] sm:$0xf]
  %v1991 = vld [vmem:[%s3 + $0x5c] sm:$0xf]
  %v1992 = vld [vmem:[%s3 + $0x60] sm:$0xf]
  %v1993 = vld [vmem:[%s3 + $0x64] sm:$0xf]
  %v1994 = vld [vmem:[%s3 + $0x68] sm:$0xf]
  %v1995 = vld [vmem:[%s3 + $0x6c] sm:$0xf]
  %v1996 = vld [vmem:[%s3 + $0x70] sm:$0xf]
  %v1997 = vld [vmem:[%s3 + $0x74] sm:$0xf]
  %v1998 = vld [vmem:[%s3 + $0x78] sm:$0xf]
  %v1999 = vld [vmem:[%s3 + $0x7c] sm:$0xf]
  %v2000 = vld [vmem:[%s4] sm:$0x1]
  %v2002 = vlaneseq
  %v2003 = vshrl.u32 %v2002, 7
  %v2004 = vsub.s32 0, %v2003
  %v2005 = vrot.slane %v2000, %v2004
  %v2039 = vunpack.c.l.b16 %v1968
  %v2040 = vunpack.c.l.b16 %v1969
  %v2041 = vunpack.c.l.b16 %v1970
  %v2042 = vunpack.c.l.b16 %v1971
  %v2043 = vunpack.c.l.b16 %v1972
  %v2044 = vunpack.c.l.b16 %v1973
  %v2045 = vunpack.c.l.b16 %v1974
  %v2046 = vunpack.c.l.b16 %v1975
  %v2047 = vunpack.c.l.b16 %v1976
  %v2048 = vunpack.c.l.b16 %v1977
  %v2049 = vunpack.c.l.b16 %v1978
  %v2050 = vunpack.c.l.b16 %v1979
  %v2051 = vunpack.c.l.b16 %v1980
  %v2052 = vunpack.c.l.b16 %v1981
  %v2053 = vunpack.c.l.b16 %v1982
  %v2054 = vunpack.c.l.b16 %v1983
  %v2055 = vunpack.c.l.b16 %v1984
  %v2056 = vunpack.c.l.b16 %v1985
  %v2057 = vunpack.c.l.b16 %v1986
  %v2058 = vunpack.c.l.b16 %v1987
  %v2059 = vunpack.c.l.b16 %v1988
  %v2060 = vunpack.c.l.b16 %v1989
  %v2061 = vunpack.c.l.b16 %v1990
  %v2062 = vunpack.c.l.b16 %v1991
  %v2063 = vunpack.c.l.b16 %v1992
  %v2064 = vunpack.c.l.b16 %v1993
  %v2065 = vunpack.c.l.b16 %v1994
  %v2066 = vunpack.c.l.b16 %v1995
  %v2067 = vunpack.c.l.b16 %v1996
  %v2068 = vunpack.c.l.b16 %v1997
  %v2069 = vunpack.c.l.b16 %v1998
  %v2070 = vunpack.c.l.b16 %v1999
  %v2071 = vpack.c.b16 %v2040, %v2039
  %v2072 = vpack.c.b16 %v2042, %v2041
  %v2073 = vpack.c.b16 %v2044, %v2043
  %v2074 = vpack.c.b16 %v2046, %v2045
  %v2075 = vpack.c.b16 %v2048, %v2047
  %v2076 = vpack.c.b16 %v2050, %v2049
  %v2077 = vpack.c.b16 %v2052, %v2051
  %v2078 = vpack.c.b16 %v2054, %v2053
  %v2079 = vpack.c.b16 %v2056, %v2055
  %v2080 = vpack.c.b16 %v2058, %v2057
  %v2081 = vpack.c.b16 %v2060, %v2059
  %v2082 = vpack.c.b16 %v2062, %v2061
  %v2083 = vpack.c.b16 %v2064, %v2063
  %v2084 = vpack.c.b16 %v2066, %v2065
  %v2085 = vpack.c.b16 %v2068, %v2067
  %v2086 = vpack.c.b16 %v2070, %v2069
  %2103 = vmatprep.subr.bf16.mxu0 0
  %2104 = vmatpush1.bf16.msra.mxu0 %v2071
  %2105 = vmatprep.subr.bf16.mxu0 0
  %2106 = vmatpush1.bf16.msra.mxu0 %v2072
  %2107 = vmatprep.subr.bf16.mxu0 0
  %2108 = vmatpush1.bf16.msra.mxu0 %v2073
  %2109 = vmatprep.subr.bf16.mxu0 0
  %2110 = vmatpush1.bf16.msra.mxu0 %v2074
  %2111 = vmatprep.subr.bf16.mxu0 0
  %2112 = vmatpush1.bf16.msra.mxu0 %v2075
  %2113 = vmatprep.subr.bf16.mxu0 0
  %2114 = vmatpush1.bf16.msra.mxu0 %v2076
  %2115 = vmatprep.subr.bf16.mxu0 0
  %2116 = vmatpush1.bf16.msra.mxu0 %v2077
  %2117 = vmatprep.subr.bf16.mxu0 0
  %2118 = vmatpush1.bf16.msra.mxu0 %v2078
  %2119 = vmatprep.subr.bf16.mxu0 0
  %2120 = vmatpush1.bf16.msra.mxu0 %v2079
  %2121 = vmatprep.subr.bf16.mxu0 0
  %2122 = vmatpush1.bf16.msra.mxu0 %v2080
  %2123 = vmatprep.subr.bf16.mxu0 0
  %2124 = vmatpush1.bf16.msra.mxu0 %v2081
  %2125 = vmatprep.subr.bf16.mxu0 0
  %2126 = vmatpush1.bf16.msra.mxu0 %v2082
  %2127 = vmatprep.subr.bf16.mxu0 0
  %2128 = vmatpush1.bf16.msra.mxu0 %v2083
  %2129 = vmatprep.subr.bf16.mxu0 0
  %2130 = vmatpush1.bf16.msra.mxu0 %v2084
  %2131 = vmatprep.subr.bf16.mxu0 0
  %2132 = vmatpush1.bf16.msra.mxu0 %v2085
  %2133 = vmatprep.subr.bf16.mxu0 0
  %2134 = vmatpush1.bf16.msra.mxu0 %v2086
  %2135 = vmatprep.mubr.bf16.mxu0 %v1967
  %2136 = vmatmul.mubr.bf16.gmra.mrb[0].mxu0 %v1966
  %v2137 = vpop.f32.mrb[0].mxu0
  %v2138 = vadd.f32 %v2005, %v2137
  %v2139 = vpop.f32.mrb[0].mxu0
  %v2140 = vpop.f32.mrb[0].mxu0
  %v2141 = vpop.f32.mrb[0].mxu0
  %2142 = vdwg.mxu0
  %vm2143 = vcmask 7168
  %2144 = vst.msk [vmem:[%s5] sm:$0xff] %vm2143, %v2138
  %vm2145 = vcmask 130056
  %v2146 = vsel %vm2145, %v2138, -inf
  %2147 = vmax.xlane.f32.xlu0 %v2146
  %v2148 = vpop.xlane.xlu0 %2147
  %v2149 = vsub.f32 %v2138, %v2148
  %v2150 = vmul.f32 %v2149, 1.442695
  %v2151 = vpow.pop %v2150
  %2153 = vrot.lane.b32.xlu0 %v2151, 127
  %v2154 = vpop.permute.xlu0 %2153
  %vm2156 = vcmask 121856
  %v2157 = vsel %vm2156, %v2154, 0.0
  %2158 = vadd.xlane.f32.xlu0 %v2157
  %v2159 = vpop.xlane.xlu0 %2158
  %v2160 = vlog2.pop %v2159
  %v2161 = vmul.f32 %v2160, 0.6931472
  %v2162 = vadd.f32 %v2161, %v2148
  %v2163 = vsub.f32 %v2138, %v2162
  %2165 = vrot.lane.b32.xlu0 %v2163, 127
  %v2166 = vpop.permute.xlu0 %2165
  %2168 = vst.msk [vmem:[%s6] sm:$0xff] %vm2156, %v2166
  %v2169 = vlaneseq
  %v2170 = vand.u32 %v2169, 127
  %vm2171 = vcmp.eq.f32.partialorder %v2138, %v2148
  %2172 = vrot.lane.b32.xlu0 %v2170, 1
  %v2173 = vpop.permute.xlu0 %2172
  %v2174 = vsel %vm2171, %v2173, 15
  %v2175 = vsel %vm2145, %v2174, 2147483647
  %v2176 = vand.u32 %v2175, 65535
  %v2177 = vshra.s32 %v2175, 16
  %v2178 = vcvt.s32.f32 %v2176
  %v2179 = vcvt.s32.f32 %v2177
  %2180 = vmin.xlane.f32.xlu0 %v2179
  %v2181 = vpop.xlane.xlu0 %2180
  %vm2182 = vcmp.eq.f32.partialorder %v2179, %v2181
  %v2183 = vsel %vm2182, %v2178, inf
  %2184 = vmin.xlane.f32.xlu0 %v2183
  %v2185 = vpop.xlane.xlu0 %2184
  %v2186 = vcvt.f32.s32 %v2185
  %v2187 = vcvt.f32.s32 %v2181
  %v2188 = vshll.u32 %v2187, 16
  %v2189 = vadd.s32 %v2188, %v2186
  %2190 = vst.msk [vmem:[%s7] sm:$0xff] %vm2143, %v2189
  // Predicated region
  $region22: #{policy_act.3} parent=0 // pred_check
    _
  $region23: #{policy_act.3} parent=0 // pred_check_branch
    %2192 = sbr.rel (0) target = $region25
  $region24: #{policy_act.3} parent=0 // pred_region
    _
  $region25: #{policy_act.3} parent=0 // pred_fallthru
    _
  // Predicated region
  $region26: #{policy_act.3} parent=0 // pred_check
    _
  $region27: #{policy_act.3} parent=0 // pred_check_branch
    %2194 = sbr.rel (0) target = $region29
  $region28: #{policy_act.3} parent=0 // pred_region
    _
  $region29: #{policy_act.3} parent=0 // pred_fallthru
    _
  // Predicated region
  $region30: #{policy_act.3} parent=0 // pred_check
    _
  $region31: #{policy_act.3} parent=0 // pred_check_branch
    %2196 = sbr.rel (0) target = $region33
  $region32: #{policy_act.3} parent=0 // pred_region
    _
  $region33: #{policy_act.3} parent=0 // pred_fallthru
    _
  // Predicated region
  $region34: #{policy_act.3} parent=0 // pred_check
    _
  $region35: #{policy_act.3} parent=0 // pred_check_branch
    %2198 = sbr.rel (0) target = $region37
  $region36: #{policy_act.3} parent=0 // pred_region
    _
  $region37: #{policy_act.3} parent=0 // pred_fallthru
    _
  // Predicated region
  $region38: #{policy_act.3} parent=0 // pred_check
    _
  $region39: #{policy_act.3} parent=0 // pred_check_branch
    %2200 = sbr.rel (0) target = $region41
  $region40: #{policy_act.3} parent=0 // pred_region
    _
  $region41: #{policy_act.3} parent=0 // pred_fallthru
    _
  // Predicated region
  $region42: #{policy_act.3} parent=0 // pred_check
    _
  $region43: #{policy_act.3} parent=0 // pred_check_branch
    %2202 = sbr.rel (0) target = $region45
  $region44: #{policy_act.3} parent=0 // pred_region
    _
  $region45: #{policy_act.3} parent=0 // pred_fallthru
    _

// kernel: policy_act.2
$region0: #{policy_act.2}
  #allocation0 [shape = 'u32[]', space=smem, size = 0x4, offset = 0x4, fixed_abs, tag = 'smem constant byte address 0x4 - core index']
  #allocation1 [shape = 'u32[144,128]{1,0:T(1,128)}', space=vmem, size = 0x12000, scoped, tag = 'internal scratch']
  #allocation2 [shape = 'bf16[8,9,9,64]{3,2,1,0:T(8,128)(2,1)}', space=vmem, size = 0x48000, scoped, tag = 'scratch operand']
  %s0 = inlined_call_operand.vmem [shape: bf16[8,9,9,256], index: 0, kind: input, shape index: {}]
  %s1 = inlined_call_operand.vmem [shape: bf16[1024,64], index: 1, kind: input, shape index: {}]
  %s2 = inlined_call_operand.vmem [shape: f32[1,64], index: 2, kind: input, shape index: {}]
  %s3 = inlined_call_operand.vmem [shape: bf16[4,64,32], index: 3, kind: input, shape index: {}]
  %s4 = inlined_call_operand.vmem [shape: f32[1,32], index: 4, kind: input, shape index: {}]
  %s5 = inlined_call_operand.vmem [shape: bf16[512,32], index: 5, kind: output, shape index: {}]
  %s6 = sld [smem:[#allocation0]]
  $region30: #{policy_act.2} parent=0
    _
  %s8 = ssub.s32 1, %s6
  %s9 = scalar_select 0, %s8, %s6
  // Predicated region
  $region2: #{policy_act.2} parent=0 // pred_check
    _
  $region3: #{policy_act.2} parent=0 // pred_check_branch
    %11 = sbr.rel (0) target = $region5
  $region4: #{policy_act.2} parent=0 // pred_region
    _
  $region5: #{policy_act.2} parent=0 // pred_fallthru
    _
  // Predicated region
  $region6: #{policy_act.2} parent=0 // pred_check
    _
  $region7: #{policy_act.2} parent=0 // pred_check_branch
    %13 = sbr.rel (0) target = $region9
  $region8: #{policy_act.2} parent=0 // pred_region
    _
  $region9: #{policy_act.2} parent=0 // pred_fallthru
    _
  // Predicated region
  $region10: #{policy_act.2} parent=0 // pred_check
    _
  $region11: #{policy_act.2} parent=0 // pred_check_branch
    %15 = sbr.rel (0) target = $region13
  $region12: #{policy_act.2} parent=0 // pred_region
    _
  $region13: #{policy_act.2} parent=0 // pred_fallthru
    _
  // Predicated region
  $region14: #{policy_act.2} parent=0 // pred_check
    _
  $region15: #{policy_act.2} parent=0 // pred_check_branch
    %17 = sbr.rel (0) target = $region17
  $region16: #{policy_act.2} parent=0 // pred_region
    _
  $region17: #{policy_act.2} parent=0 // pred_fallthru
    _
  // Predicated region
  $region18: #{policy_act.2} parent=0 // pred_check
    _
  $region19: #{policy_act.2} parent=0 // pred_check_branch
    %19 = sbr.rel (0) target = $region21
  $region20: #{policy_act.2} parent=0 // pred_region
    _
  $region21: #{policy_act.2} parent=0 // pred_fallthru
    _
  %v21 = vld [vmem:[%s0] sm:$0xff]
  %v22 = vld [vmem:[%s0 + $0x10] sm:$0xff]
  %v23 = vld [vmem:[%s0 + $0x20] sm:$0xff]
  %v24 = vld [vmem:[%s0 + $0x30] sm:$0xff]
  %v25 = vld [vmem:[%s0 + $0x40] sm:$0xff]
  %v26 = vld [vmem:[%s0 + $0x50] sm:$0xff]
  %v27 = vld [vmem:[%s0 + $0x60] sm:$0xff]
  %v28 = vld [vmem:[%s0 + $0x70] sm:$0xff]
  %v29 = vld [vmem:[%s0 + $0x90] sm:$0xff]
  %v30 = vld [vmem:[%s0 + $0xa0] sm:$0xff]
  %v31 = vld [vmem:[%s0 + $0xb0] sm:$0xff]
  %v32 = vld [vmem:[%s0 + $0xc0] sm:$0xff]
  %v33 = vld [vmem:[%s0 + $0xd0] sm:$0xff]
  %v34 = vld [vmem:[%s0 + $0xe0] sm:$0xff]
  %v35 = vld [vmem:[%s0 + $0xf0] sm:$0xff]
  %v36 = vld [vmem:[%s0 + $0x100] sm:$0xff]
  %v37 = vld [vmem:[%s0 + $0x120] sm:$0xff]
  %v38 = vld [vmem:[%s0 + $0x130] sm:$0xff]
  %v39 = vld [vmem:[%s0 + $0x140] sm:$0xff]
  %v40 = vld [vmem:[%s0 + $0x150] sm:$0xff]
  %v41 = vld [vmem:[%s0 + $0x160] sm:$0xff]
  %v42 = vld [vmem:[%s0 + $0x170] sm:$0xff]
  %v43 = vld [vmem:[%s0 + $0x180] sm:$0xff]
  %v44 = vld [vmem:[%s0 + $0x190] sm:$0xff]
  %v45 = vld [vmem:[%s0 + $0x1b0] sm:$0xff]
  %v46 = vld [vmem:[%s0 + $0x1c0] sm:$0xff]
  %v47 = vld [vmem:[%s0 + $0x1d0] sm:$0xff]
  %v48 = vld [vmem:[%s0 + $0x1e0] sm:$0xff]
  %v49 = vld [vmem:[%s0 + $0x1f0] sm:$0xff]
  %v50 = vld [vmem:[%s0 + $0x200] sm:$0xff]
  %v51 = vld [vmem:[%s0 + $0x210] sm:$0xff]
  %v52 = vld [vmem:[%s0 + $0x220] sm:$0xff]
  %v53 = vld [vmem:[%s0 + $0x240] sm:$0xff]
  %v54 = vld [vmem:[%s0 + $0x250] sm:$0xff]
  %v55 = vld [vmem:[%s0 + $0x260] sm:$0xff]
  %v56 = vld [vmem:[%s0 + $0x270] sm:$0xff]
  %v57 = vld [vmem:[%s0 + $0x280] sm:$0xff]
  %v58 = vld [vmem:[%s0 + $0x290] sm:$0xff]
  %v59 = vld [vmem:[%s0 + $0x2a0] sm:$0xff]
  %v60 = vld [vmem:[%s0 + $0x2b0] sm:$0xff]
  %v61 = vld [vmem:[%s0 + $0x2d0] sm:$0xff]
  %v62 = vld [vmem:[%s0 + $0x2e0] sm:$0xff]
  %v63 = vld [vmem:[%s0 + $0x2f0] sm:$0xff]
  %v64 = vld [vmem:[%s0 + $0x300] sm:$0xff]
  %v65 = vld [vmem:[%s0 + $0x310] sm:$0xff]
  %v66 = vld [vmem:[%s0 + $0x320] sm:$0xff]
  %v67 = vld [vmem:[%s0 + $0x330] sm:$0xff]
  %v68 = vld [vmem:[%s0 + $0x340] sm:$0xff]
  %v69 = vld [vmem:[%s0 + $0x360] sm:$0xff]
  %v70 = vld [vmem:[%s0 + $0x370] sm:$0xff]
  %v71 = vld [vmem:[%s0 + $0x380] sm:$0xff]
  %v72 = vld [vmem:[%s0 + $0x390] sm:$0xff]
  %v73 = vld [vmem:[%s0 + $0x3a0] sm:$0xff]
  %v74 = vld [vmem:[%s0 + $0x3b0] sm:$0xff]
  %v75 = vld [vmem:[%s0 + $0x3c0] sm:$0xff]
  %v76 = vld [vmem:[%s0 + $0x3d0] sm:$0xff]
  %v77 = vld [vmem:[%s0 + $0x3f0] sm:$0xff]
  %v78 = vld [vmem:[%s0 + $0x400] sm:$0xff]
  %v79 = vld [vmem:[%s0 + $0x410] sm:$0xff]
  %v80 = vld [vmem:[%s0 + $0x420] sm:$0xff]
  %v81 = vld [vmem:[%s0 + $0x430] sm:$0xff]
  %v82 = vld [vmem:[%s0 + $0x440] sm:$0xff]
  %v83 = vld [vmem:[%s0 + $0x450] sm:$0xff]
  %v84 = vld [vmem:[%s0 + $0x460] sm:$0xff]
  %v85 = vld [vmem:[%s0 + $0x8] sm:$0x11]
  %v86 = vld [vmem:[%s0 + $0x18] sm:$0x11]
  %v87 = vld [vmem:[%s0 + $0x28] sm:$0x11]
  %v88 = vld [vmem:[%s0 + $0x38] sm:$0x11]
  %v89 = vld [vmem:[%s0 + $0x48] sm:$0x11]
  %v90 = vld [vmem:[%s0 + $0x58] sm:$0x11]
  %v91 = vld [vmem:[%s0 + $0x68] sm:$0x11]
  %v92 = vld [vmem:[%s0 + $0x78] sm:$0x11]
  %v93 = vld [vmem:[%s0 + $0x98] sm:$0x11]
  %v94 = vld [vmem:[%s0 + $0xa8] sm:$0x11]
  %v95 = vld [vmem:[%s0 + $0xb8] sm:$0x11]
  %v96 = vld [vmem:[%s0 + $0xc8] sm:$0x11]
  %v97 = vld [vmem:[%s0 + $0xd8] sm:$0x11]
  %v98 = vld [vmem:[%s0 + $0xe8] sm:$0x11]
  %v99 = vld [vmem:[%s0 + $0xf8] sm:$0x11]
  %v100 = vld [vmem:[%s0 + $0x108] sm:$0x11]
  %v101 = vld [vmem:[%s0 + $0x128] sm:$0x11]
  %v102 = vld [vmem:[%s0 + $0x138] sm:$0x11]
  %v103 = vld [vmem:[%s0 + $0x148] sm:$0x11]
  %v104 = vld [vmem:[%s0 + $0x158] sm:$0x11]
  %v105 = vld [vmem:[%s0 + $0x168] sm:$0x11]
  %v106 = vld [vmem:[%s0 + $0x178] sm:$0x11]
  %v107 = vld [vmem:[%s0 + $0x188] sm:$0x11]
  %v108 = vld [vmem:[%s0 + $0x198] sm:$0x11]
  %v109 = vld [vmem:[%s0 + $0x1b8] sm:$0x11]
  %v110 = vld [vmem:[%s0 + $0x1c8] sm:$0x11]
  %v111 = vld [vmem:[%s0 + $0x1d8] sm:$0x11]
  %v112 = vld [vmem:[%s0 + $0x1e8] sm:$0x11]
  %v113 = vld [vmem:[%s0 + $0x1f8] sm:$0x11]
  %v114 = vld [vmem:[%s0 + $0x208] sm:$0x11]
  %v115 = vld [vmem:[%s0 + $0x218] sm:$0x11]
  %v116 = vld [vmem:[%s0 + $0x228] sm:$0x11]
  %v117 = vld [vmem:[%s0 + $0x248] sm:$0x11]
  %v118 = vld [vmem:[%s0 + $0x258] sm:$0x11]
  %v119 = vld [vmem:[%s0 + $0x268] sm:$0x11]
  %v120 = vld [vmem:[%s0 + $0x278] sm:$0x11]
  %v121 = vld [vmem:[%s0 + $0x288] sm:$0x11]
  %v122 = vld [vmem:[%s0 + $0x298] sm:$0x11]
  %v123 = vld [vmem:[%s0 + $0x2a8] sm:$0x11]
  %v124 = vld [vmem:[%s0 + $0x2b8] sm:$0x11]
  %v125 = vld [vmem:[%s0 + $0x2d8] sm:$0x11]
  %v126 = vld [vmem:[%s0 + $0x2e8] sm:$0x11]
  %v127 = vld [vmem:[%s0 + $0x2f8] sm:$0x11]
  %v128 = vld [vmem:[%s0 + $0x308] sm:$0x11]
  %v129 = vld [vmem:[%s0 + $0x318] sm:$0x11]
  %v130 = vld [vmem:[%s0 + $0x328] sm:$0x11]
  %v131 = vld [vmem:[%s0 + $0x338] sm:$0x11]
  %v132 = vld [vmem:[%s0 + $0x348] sm:$0x11]
  %v133 = vld [vmem:[%s0 + $0x368] sm:$0x11]
  %v134 = vld [vmem:[%s0 + $0x378] sm:$0x11]
  %v135 = vld [vmem:[%s0 + $0x388] sm:$0x11]
  %v136 = vld [vmem:[%s0 + $0x398] sm:$0x11]
  %v137 = vld [vmem:[%s0 + $0x3a8] sm:$0x11]
  %v138 = vld [vmem:[%s0 + $0x3b8] sm:$0x11]
  %v139 = vld [vmem:[%s0 + $0x3c8] sm:$0x11]
  %v140 = vld [vmem:[%s0 + $0x3d8] sm:$0x11]
  %v141 = vld [vmem:[%s0 + $0x3f8] sm:$0x11]
  %v142 = vld [vmem:[%s0 + $0x408] sm:$0x11]
  %v143 = vld [vmem:[%s0 + $0x418] sm:$0x11]
  %v144 = vld [vmem:[%s0 + $0x428] sm:$0x11]
  %v145 = vld [vmem:[%s0 + $0x438] sm:$0x11]
  %v146 = vld [vmem:[%s0 + $0x448] sm:$0x11]
  %v147 = vld [vmem:[%s0 + $0x458] sm:$0x11]
  %v148 = vld [vmem:[%s0 + $0x468] sm:$0x11]
  %vm149 = vsmask.f32 3328
  %vm150 = vsmask.f32 7440
  %vm151 = vmor %vm149, %vm150
  %v153 = vshrl.u32 %v21, 16
  %v155 = vrot.slane %v153, 4
  %v156 = vshll.u32 %v21, 16
  %v158 = vrot.slane %v156, 5
  %v159 = vor.u32 %v155, %v158
  %v160 = vrot.slane %v159, 4
  %v162 = vshll.u32 %v85, 16
  %v164 = vrot.slane %v162, 5
  %v165 = vsel %vm151, %v160, %v164
  %v167 = vshrl.u32 %v22, 16
  %v169 = vrot.slane %v167, 4
  %v170 = vshll.u32 %v22, 16
  %v172 = vrot.slane %v170, 5
  %v173 = vor.u32 %v169, %v172
  %v174 = vrot.slane %v173, 4
  %v176 = vshll.u32 %v86, 16
  %v178 = vrot.slane %v176, 5
  %v179 = vsel %vm151, %v174, %v178
  %v181 = vshrl.u32 %v23, 16
  %v183 = vrot.slane %v181, 4
  %v184 = vshll.u32 %v23, 16
  %v186 = vrot.slane %v184, 5
  %v187 = vor.u32 %v183, %v186
  %v188 = vrot.slane %v187, 4
  %v190 = vshll.u32 %v87, 16
  %v192 = vrot.slane %v190, 5
  %v193 = vsel %vm151, %v188, %v192
  %v195 = vshrl.u32 %v24, 16
  %v197 = vrot.slane %v195, 4
  %v198 = vshll.u32 %v24, 16
  %v200 = vrot.slane %v198, 5
  %v201 = vor.u32 %v197, %v200
  %v202 = vrot.slane %v201, 4
  %v204 = vshll.u32 %v88, 16
  %v206 = vrot.slane %v204, 5
  %v207 = vsel %vm151, %v202, %v206
  %v209 = vshrl.u32 %v25, 16
  %v211 = vrot.slane %v209, 4
  %v212 = vshll.u32 %v25, 16
  %v214 = vrot.slane %v212, 5
  %v215 = vor.u32 %v211, %v214
  %v216 = vrot.slane %v215, 4
  %v218 = vshll.u32 %v89, 16
  %v220 = vrot.slane %v218, 5
  %v221 = vsel %vm151, %v216, %v220
  %v223 = vshrl.u32 %v26, 16
  %v225 = vrot.slane %v223, 4
  %v226 = vshll.u32 %v26, 16
  %v228 = vrot.slane %v226, 5
  %v229 = vor.u32 %v225, %v228
  %v230 = vrot.slane %v229, 4
  %v232 = vshll.u32 %v90, 16
  %v234 = vrot.slane %v232, 5
  %v235 = vsel %vm151, %v230, %v234
  %v237 = vshrl.u32 %v27, 16
  %v239 = vrot.slane %v237, 4
  %v240 = vshll.u32 %v27, 16
  %v242 = vrot.slane %v240, 5
  %v243 = vor.u32 %v239, %v242
  %v244 = vrot.slane %v243, 4
  %v246 = vshll.u32 %v91, 16
  %v248 = vrot.slane %v246, 5
  %v249 = vsel %vm151, %v244, %v248
  %v251 = vshrl.u32 %v28, 16
  %v253 = vrot.slane %v251, 4
  %v254 = vshll.u32 %v28, 16
  %v256 = vrot.slane %v254, 5
  %v257 = vor.u32 %v253, %v256
  %v258 = vrot.slane %v257, 4
  %v260 = vshll.u32 %v92, 16
  %v262 = vrot.slane %v260, 5
  %v263 = vsel %vm151, %v258, %v262
  %v265 = vshrl.u32 %v29, 16
  %v267 = vrot.slane %v265, 4
  %v268 = vshll.u32 %v29, 16
  %v270 = vrot.slane %v268, 5
  %v271 = vor.u32 %v267, %v270
  %v272 = vrot.slane %v271, 4
  %v274 = vshll.u32 %v93, 16
  %v276 = vrot.slane %v274, 5
  %v277 = vsel %vm151, %v272, %v276
  %v279 = vshrl.u32 %v30, 16
  %v281 = vrot.slane %v279, 4
  %v282 = vshll.u32 %v30, 16
  %v284 = vrot.slane %v282, 5
  %v285 = vor.u32 %v281, %v284
  %v286 = vrot.slane %v285, 4
  %v288 = vshll.u32 %v94, 16
  %v290 = vrot.slane %v288, 5
  %v291 = vsel %vm151, %v286, %v290
  %v293 = vshrl.u32 %v31, 16
  %v295 = vrot.slane %v293, 4
  %v296 = vshll.u32 %v31, 16
  %v298 = vrot.slane %v296, 5
  %v299 = vor.u32 %v295, %v298
  %v300 = vrot.slane %v299, 4
  %v302 = vshll.u32 %v95, 16
  %v304 = vrot.slane %v302, 5
  %v305 = vsel %vm151, %v300, %v304
  %v307 = vshrl.u32 %v32, 16
  %v309 = vrot.slane %v307, 4
  %v310 = vshll.u32 %v32, 16
  %v312 = vrot.slane %v310, 5
  %v313 = vor.u32 %v309, %v312
  %v314 = vrot.slane %v313, 4
  %v316 = vshll.u32 %v96, 16
  %v318 = vrot.slane %v316, 5
  %v319 = vsel %vm151, %v314, %v318
  %v321 = vshrl.u32 %v33, 16
  %v323 = vrot.slane %v321, 4
  %v324 = vshll.u32 %v33, 16
  %v326 = vrot.slane %v324, 5
  %v327 = vor.u32 %v323, %v326
  %v328 = vrot.slane %v327, 4
  %v330 = vshll.u32 %v97, 16
  %v332 = vrot.slane %v330, 5
  %v333 = vsel %vm151, %v328, %v332
  %v335 = vshrl.u32 %v34, 16
  %v337 = vrot.slane %v335, 4
  %v338 = vshll.u32 %v34, 16
  %v340 = vrot.slane %v338, 5
  %v341 = vor.u32 %v337, %v340
  %v342 = vrot.slane %v341, 4
  %v344 = vshll.u32 %v98, 16
  %v346 = vrot.slane %v344, 5
  %v347 = vsel %vm151, %v342, %v346
  %v349 = vshrl.u32 %v35, 16
  %v351 = vrot.slane %v349, 4
  %v352 = vshll.u32 %v35, 16
  %v354 = vrot.slane %v352, 5
  %v355 = vor.u32 %v351, %v354
  %v356 = vrot.slane %v355, 4
  %v358 = vshll.u32 %v99, 16
  %v360 = vrot.slane %v358, 5
  %v361 = vsel %vm151, %v356, %v360
  %v363 = vshrl.u32 %v36, 16
  %v365 = vrot.slane %v363, 4
  %v366 = vshll.u32 %v36, 16
  %v368 = vrot.slane %v366, 5
  %v369 = vor.u32 %v365, %v368
  %v370 = vrot.slane %v369, 4
  %v372 = vshll.u32 %v100, 16
  %v374 = vrot.slane %v372, 5
  %v375 = vsel %vm151, %v370, %v374
  %v377 = vshrl.u32 %v37, 16
  %v379 = vrot.slane %v377, 4
  %v380 = vshll.u32 %v37, 16
  %v382 = vrot.slane %v380, 5
  %v383 = vor.u32 %v379, %v382
  %v384 = vrot.slane %v383, 4
  %v386 = vshll.u32 %v101, 16
  %v388 = vrot.slane %v386, 5
  %v389 = vsel %vm151, %v384, %v388
  %v391 = vshrl.u32 %v38, 16
  %v393 = vrot.slane %v391, 4
  %v394 = vshll.u32 %v38, 16
  %v396 = vrot.slane %v394, 5
  %v397 = vor.u32 %v393, %v396
  %v398 = vrot.slane %v397, 4
  %v400 = vshll.u32 %v102, 16
  %v402 = vrot.slane %v400, 5
  %v403 = vsel %vm151, %v398, %v402
  %v405 = vshrl.u32 %v39, 16
  %v407 = vrot.slane %v405, 4
  %v408 = vshll.u32 %v39, 16
  %v410 = vrot.slane %v408, 5
  %v411 = vor.u32 %v407, %v410
  %v412 = vrot.slane %v411, 4
  %v414 = vshll.u32 %v103, 16
  %v416 = vrot.slane %v414, 5
  %v417 = vsel %vm151, %v412, %v416
  %v419 = vshrl.u32 %v40, 16
  %v421 = vrot.slane %v419, 4
  %v422 = vshll.u32 %v40, 16
  %v424 = vrot.slane %v422, 5
  %v425 = vor.u32 %v421, %v424
  %v426 = vrot.slane %v425, 4
  %v428 = vshll.u32 %v104, 16
  %v430 = vrot.slane %v428, 5
  %v431 = vsel %vm151, %v426, %v430
  %v433 = vshrl.u32 %v41, 16
  %v435 = vrot.slane %v433, 4
  %v436 = vshll.u32 %v41, 16
  %v438 = vrot.slane %v436, 5
  %v439 = vor.u32 %v435, %v438
  %v440 = vrot.slane %v439, 4
  %v442 = vshll.u32 %v105, 16
  %v444 = vrot.slane %v442, 5
  %v445 = vsel %vm151, %v440, %v444
  %v447 = vshrl.u32 %v42, 16
  %v449 = vrot.slane %v447, 4
  %v450 = vshll.u32 %v42, 16
  %v452 = vrot.slane %v450, 5
  %v453 = vor.u32 %v449, %v452
  %v454 = vrot.slane %v453, 4
  %v456 = vshll.u32 %v106, 16
  %v458 = vrot.slane %v456, 5
  %v459 = vsel %vm151, %v454, %v458
  %v461 = vshrl.u32 %v43, 16
  %v463 = vrot.slane %v461, 4
  %v464 = vshll.u32 %v43, 16
  %v466 = vrot.slane %v464, 5
  %v467 = vor.u32 %v463, %v466
  %v468 = vrot.slane %v467, 4
  %v470 = vshll.u32 %v107, 16
  %v472 = vrot.slane %v470, 5
  %v473 = vsel %vm151, %v468, %v472
  %v475 = vshrl.u32 %v44, 16
  %v477 = vrot.slane %v475, 4
  %v478 = vshll.u32 %v44, 16
  %v480 = vrot.slane %v478, 5
  %v481 = vor.u32 %v477, %v480
  %v482 = vrot.slane %v481, 4
  %v484 = vshll.u32 %v108, 16
  %v486 = vrot.slane %v484, 5
  %v487 = vsel %vm151, %v482, %v486
  %v489 = vshrl.u32 %v45, 16
  %v491 = vrot.slane %v489, 4
  %v492 = vshll.u32 %v45, 16
  %v494 = vrot.slane %v492, 5
  %v495 = vor.u32 %v491, %v494
  %v496 = vrot.slane %v495, 4
  %v498 = vshll.u32 %v109, 16
  %v500 = vrot.slane %v498, 5
  %v501 = vsel %vm151, %v496, %v500
  %v503 = vshrl.u32 %v46, 16
  %v505 = vrot.slane %v503, 4
  %v506 = vshll.u32 %v46, 16
  %v508 = vrot.slane %v506, 5
  %v509 = vor.u32 %v505, %v508
  %v510 = vrot.slane %v509, 4
  %v512 = vshll.u32 %v110, 16
  %v514 = vrot.slane %v512, 5
  %v515 = vsel %vm151, %v510, %v514
  %v517 = vshrl.u32 %v47, 16
  %v519 = vrot.slane %v517, 4
  %v520 = vshll.u32 %v47, 16
  %v522 = vrot.slane %v520, 5
  %v523 = vor.u32 %v519, %v522
  %v524 = vrot.slane %v523, 4
  %v526 = vshll.u32 %v111, 16
  %v528 = vrot.slane %v526, 5
  %v529 = vsel %vm151, %v524, %v528
  %v531 = vshrl.u32 %v48, 16
  %v533 = vrot.slane %v531, 4
  %v534 = vshll.u32 %v48, 16
  %v536 = vrot.slane %v534, 5
  %v537 = vor.u32 %v533, %v536
  %v538 = vrot.slane %v537, 4
  %v540 = vshll.u32 %v112, 16
  %v542 = vrot.slane %v540, 5
  %v543 = vsel %vm151, %v538, %v542
  %v545 = vshrl.u32 %v49, 16
  %v547 = vrot.slane %v545, 4
  %v548 = vshll.u32 %v49, 16
  %v550 = vrot.slane %v548, 5
  %v551 = vor.u32 %v547, %v550
  %v552 = vrot.slane %v551, 4
  %v554 = vshll.u32 %v113, 16
  %v556 = vrot.slane %v554, 5
  %v557 = vsel %vm151, %v552, %v556
  %v559 = vshrl.u32 %v50, 16
  %v561 = vrot.slane %v559, 4
  %v562 = vshll.u32 %v50, 16
  %v564 = vrot.slane %v562, 5
  %v565 = vor.u32 %v561, %v564
  %v566 = vrot.slane %v565, 4
  %v568 = vshll.u32 %v114, 16
  %v570 = vrot.slane %v568, 5
  %v571 = vsel %vm151, %v566, %v570
  %v573 = vshrl.u32 %v51, 16
  %v575 = vrot.slane %v573, 4
  %v576 = vshll.u32 %v51, 16
  %v578 = vrot.slane %v576, 5
  %v579 = vor.u32 %v575, %v578
  %v580 = vrot.slane %v579, 4
  %v582 = vshll.u32 %v115, 16
  %v584 = vrot.slane %v582, 5
  %v585 = vsel %vm151, %v580, %v584
  %v587 = vshrl.u32 %v52, 16
  %v589 = vrot.slane %v587, 4
  %v590 = vshll.u32 %v52, 16
  %v592 = vrot.slane %v590, 5
  %v593 = vor.u32 %v589, %v592
  %v594 = vrot.slane %v593, 4
  %v596 = vshll.u32 %v116, 16
  %v598 = vrot.slane %v596, 5
  %v599 = vsel %vm151, %v594, %v598
  %v601 = vshrl.u32 %v53, 16
  %v603 = vrot.slane %v601, 4
  %v604 = vshll.u32 %v53, 16
  %v606 = vrot.slane %v604, 5
  %v607 = vor.u32 %v603, %v606
  %v608 = vrot.slane %v607, 4
  %v610 = vshll.u32 %v117, 16
  %v612 = vrot.slane %v610, 5
  %v613 = vsel %vm151, %v608, %v612
  %v615 = vshrl.u32 %v54, 16
  %v617 = vrot.slane %v615, 4
  %v618 = vshll.u32 %v54, 16
  %v620 = vrot.slane %v618, 5
  %v621 = vor.u32 %v617, %v620
  %v622 = vrot.slane %v621, 4
  %v624 = vshll.u32 %v118, 16
  %v626 = vrot.slane %v624, 5
  %v627 = vsel %vm151, %v622, %v626
  %v629 = vshrl.u32 %v55, 16
  %v631 = vrot.slane %v629, 4
  %v632 = vshll.u32 %v55, 16
  %v634 = vrot.slane %v632, 5
  %v635 = vor.u32 %v631, %v634
  %v636 = vrot.slane %v635, 4
  %v638 = vshll.u32 %v119, 16
  %v640 = vrot.slane %v638, 5
  %v641 = vsel %vm151, %v636, %v640
  %v643 = vshrl.u32 %v56, 16
  %v645 = vrot.slane %v643, 4
  %v646 = vshll.u32 %v56, 16
  %v648 = vrot.slane %v646, 5
  %v649 = vor.u32 %v645, %v648
  %v650 = vrot.slane %v649, 4
  %v652 = vshll.u32 %v120, 16
  %v654 = vrot.slane %v652, 5
  %v655 = vsel %vm151, %v650, %v654
  %v657 = vshrl.u32 %v57, 16
  %v659 = vrot.slane %v657, 4
  %v660 = vshll.u32 %v57, 16
  %v662 = vrot.slane %v660, 5
  %v663 = vor.u32 %v659, %v662
  %v664 = vrot.slane %v663, 4
  %v666 = vshll.u32 %v121, 16
  %v668 = vrot.slane %v666, 5
  %v669 = vsel %vm151, %v664, %v668
  %v671 = vshrl.u32 %v58, 16
  %v673 = vrot.slane %v671, 4
  %v674 = vshll.u32 %v58, 16
  %v676 = vrot.slane %v674, 5
  %v677 = vor.u32 %v673, %v676
  %v678 = vrot.slane %v677, 4
  %v680 = vshll.u32 %v122, 16
  %v682 = vrot.slane %v680, 5
  %v683 = vsel %vm151, %v678, %v682
  %v685 = vshrl.u32 %v59, 16
  %v687 = vrot.slane %v685, 4
  %v688 = vshll.u32 %v59, 16
  %v690 = vrot.slane %v688, 5
  %v691 = vor.u32 %v687, %v690
  %v692 = vrot.slane %v691, 4
  %v694 = vshll.u32 %v123, 16
  %v696 = vrot.slane %v694, 5
  %v697 = vsel %vm151, %v692, %v696
  %v699 = vshrl.u32 %v60, 16
  %v701 = vrot.slane %v699, 4
  %v702 = vshll.u32 %v60, 16
  %v704 = vrot.slane %v702, 5
  %v705 = vor.u32 %v701, %v704
  %v706 = vrot.slane %v705, 4
  %v708 = vshll.u32 %v124, 16
  %v710 = vrot.slane %v708, 5
  %v711 = vsel %vm151, %v706, %v710
  %v713 = vshrl.u32 %v61, 16
  %v715 = vrot.slane %v713, 4
  %v716 = vshll.u32 %v61, 16
  %v718 = vrot.slane %v716, 5
  %v719 = vor.u32 %v715, %v718
  %v720 = vrot.slane %v719, 4
  %v722 = vshll.u32 %v125, 16
  %v724 = vrot.slane %v722, 5
  %v725 = vsel %vm151, %v720, %v724
  %v727 = vshrl.u32 %v62, 16
  %v729 = vrot.slane %v727, 4
  %v730 = vshll.u32 %v62, 16
  %v732 = vrot.slane %v730, 5
  %v733 = vor.u32 %v729, %v732
  %v734 = vrot.slane %v733, 4
  %v736 = vshll.u32 %v126, 16
  %v738 = vrot.slane %v736, 5
  %v739 = vsel %vm151, %v734, %v738
  %v741 = vshrl.u32 %v63, 16
  %v743 = vrot.slane %v741, 4
  %v744 = vshll.u32 %v63, 16
  %v746 = vrot.slane %v744, 5
  %v747 = vor.u32 %v743, %v746
  %v748 = vrot.slane %v747, 4
  %v750 = vshll.u32 %v127, 16
  %v752 = vrot.slane %v750, 5
  %v753 = vsel %vm151, %v748, %v752
  %v755 = vshrl.u32 %v64, 16
  %v757 = vrot.slane %v755, 4
  %v758 = vshll.u32 %v64, 16
  %v760 = vrot.slane %v758, 5
  %v761 = vor.u32 %v757, %v760
  %v762 = vrot.slane %v761, 4
  %v764 = vshll.u32 %v128, 16
  %v766 = vrot.slane %v764, 5
  %v767 = vsel %vm151, %v762, %v766
  %v769 = vshrl.u32 %v65, 16
  %v771 = vrot.slane %v769, 4
  %v772 = vshll.u32 %v65, 16
  %v774 = vrot.slane %v772, 5
  %v775 = vor.u32 %v771, %v774
  %v776 = vrot.slane %v775, 4
  %v778 = vshll.u32 %v129, 16
  %v780 = vrot.slane %v778, 5
  %v781 = vsel %vm151, %v776, %v780
  %v783 = vshrl.u32 %v66, 16
  %v785 = vrot.slane %v783, 4
  %v786 = vshll.u32 %v66, 16
  %v788 = vrot.slane %v786, 5
  %v789 = vor.u32 %v785, %v788
  %v790 = vrot.slane %v789, 4
  %v792 = vshll.u32 %v130, 16
  %v794 = vrot.slane %v792, 5
  %v795 = vsel %vm151, %v790, %v794
  %v797 = vshrl.u32 %v67, 16
  %v799 = vrot.slane %v797, 4
  %v800 = vshll.u32 %v67, 16
  %v802 = vrot.slane %v800, 5
  %v803 = vor.u32 %v799, %v802
  %v804 = vrot.slane %v803, 4
  %v806 = vshll.u32 %v131, 16
  %v808 = vrot.slane %v806, 5
  %v809 = vsel %vm151, %v804, %v808
  %v811 = vshrl.u32 %v68, 16
  %v813 = vrot.slane %v811, 4
  %v814 = vshll.u32 %v68, 16
  %v816 = vrot.slane %v814, 5
  %v817 = vor.u32 %v813, %v816
  %v818 = vrot.slane %v817, 4
  %v820 = vshll.u32 %v132, 16
  %v822 = vrot.slane %v820, 5
  %v823 = vsel %vm151, %v818, %v822
  %v825 = vshrl.u32 %v69, 16
  %v827 = vrot.slane %v825, 4
  %v828 = vshll.u32 %v69, 16
  %v830 = vrot.slane %v828, 5
  %v831 = vor.u32 %v827, %v830
  %v832 = vrot.slane %v831, 4
  %v834 = vshll.u32 %v133, 16
  %v836 = vrot.slane %v834, 5
  %v837 = vsel %vm151, %v832, %v836
  %v839 = vshrl.u32 %v70, 16
  %v841 = vrot.slane %v839, 4
  %v842 = vshll.u32 %v70, 16
  %v844 = vrot.slane %v842, 5
  %v845 = vor.u32 %v841, %v844
  %v846 = vrot.slane %v845, 4
  %v848 = vshll.u32 %v134, 16
  %v850 = vrot.slane %v848, 5
  %v851 = vsel %vm151, %v846, %v850
  %v853 = vshrl.u32 %v71, 16
  %v855 = vrot.slane %v853, 4
  %v856 = vshll.u32 %v71, 16
  %v858 = vrot.slane %v856, 5
  %v859 = vor.u32 %v855, %v858
  %v860 = vrot.slane %v859, 4
  %v862 = vshll.u32 %v135, 16
  %v864 = vrot.slane %v862, 5
  %v865 = vsel %vm151, %v860, %v864
  %v867 = vshrl.u32 %v72, 16
  %v869 = vrot.slane %v867, 4
  %v870 = vshll.u32 %v72, 16
  %v872 = vrot.slane %v870, 5
  %v873 = vor.u32 %v869, %v872
  %v874 = vrot.slane %v873, 4
  %v876 = vshll.u32 %v136, 16
  %v878 = vrot.slane %v876, 5
  %v879 = vsel %vm151, %v874, %v878
  %v881 = vshrl.u32 %v73, 16
  %v883 = vrot.slane %v881, 4
  %v884 = vshll.u32 %v73, 16
  %v886 = vrot.slane %v884, 5
  %v887 = vor.u32 %v883, %v886
  %v888 = vrot.slane %v887, 4
  %v890 = vshll.u32 %v137, 16
  %v892 = vrot.slane %v890, 5
  %v893 = vsel %vm151, %v888, %v892
  %v895 = vshrl.u32 %v74, 16
  %v897 = vrot.slane %v895, 4
  %v898 = vshll.u32 %v74, 16
  %v900 = vrot.slane %v898, 5
  %v901 = vor.u32 %v897, %v900
  %v902 = vrot.slane %v901, 4
  %v904 = vshll.u32 %v138, 16
  %v906 = vrot.slane %v904, 5
  %v907 = vsel %vm151, %v902, %v906
  %v909 = vshrl.u32 %v75, 16
  %v911 = vrot.slane %v909, 4
  %v912 = vshll.u32 %v75, 16
  %v914 = vrot.slane %v912, 5
  %v915 = vor.u32 %v911, %v914
  %v916 = vrot.slane %v915, 4
  %v918 = vshll.u32 %v139, 16
  %v920 = vrot.slane %v918, 5
  %v921 = vsel %vm151, %v916, %v920
  %v923 = vshrl.u32 %v76, 16
  %v925 = vrot.slane %v923, 4
  %v926 = vshll.u32 %v76, 16
  %v928 = vrot.slane %v926, 5
  %v929 = vor.u32 %v925, %v928
  %v930 = vrot.slane %v929, 4
  %v932 = vshll.u32 %v140, 16
  %v934 = vrot.slane %v932, 5
  %v935 = vsel %vm151, %v930, %v934
  %v937 = vshrl.u32 %v77, 16
  %v939 = vrot.slane %v937, 4
  %v940 = vshll.u32 %v77, 16
  %v942 = vrot.slane %v940, 5
  %v943 = vor.u32 %v939, %v942
  %v944 = vrot.slane %v943, 4
  %v946 = vshll.u32 %v141, 16
  %v948 = vrot.slane %v946, 5
  %v949 = vsel %vm151, %v944, %v948
  %v951 = vshrl.u32 %v78, 16
  %v953 = vrot.slane %v951, 4
  %v954 = vshll.u32 %v78, 16
  %v956 = vrot.slane %v954, 5
  %v957 = vor.u32 %v953, %v956
  %v958 = vrot.slane %v957, 4
  %v960 = vshll.u32 %v142, 16
  %v962 = vrot.slane %v960, 5
  %v963 = vsel %vm151, %v958, %v962
  %v965 = vshrl.u32 %v79, 16
  %v967 = vrot.slane %v965, 4
  %v968 = vshll.u32 %v79, 16
  %v970 = vrot.slane %v968, 5
  %v971 = vor.u32 %v967, %v970
  %v972 = vrot.slane %v971, 4
  %v974 = vshll.u32 %v143, 16
  %v976 = vrot.slane %v974, 5
  %v977 = vsel %vm151, %v972, %v976
  %v979 = vshrl.u32 %v80, 16
  %v981 = vrot.slane %v979, 4
  %v982 = vshll.u32 %v80, 16
  %v984 = vrot.slane %v982, 5
  %v985 = vor.u32 %v981, %v984
  %v986 = vrot.slane %v985, 4
  %v988 = vshll.u32 %v144, 16
  %v990 = vrot.slane %v988, 5
  %v991 = vsel %vm151, %v986, %v990
  %v993 = vshrl.u32 %v81, 16
  %v995 = vrot.slane %v993, 4
  %v996 = vshll.u32 %v81, 16
  %v998 = vrot.slane %v996, 5
  %v999 = vor.u32 %v995, %v998
  %v1000 = vrot.slane %v999, 4
  %v1002 = vshll.u32 %v145, 16
  %v1004 = vrot.slane %v1002, 5
  %v1005 = vsel %vm151, %v1000, %v1004
  %v1007 = vshrl.u32 %v82, 16
  %v1009 = vrot.slane %v1007, 4
  %v1010 = vshll.u32 %v82, 16
  %v1012 = vrot.slane %v1010, 5
  %v1013 = vor.u32 %v1009, %v1012
  %v1014 = vrot.slane %v1013, 4
  %v1016 = vshll.u32 %v146, 16
  %v1018 = vrot.slane %v1016, 5
  %v1019 = vsel %vm151, %v1014, %v1018
  %v1021 = vshrl.u32 %v83, 16
  %v1023 = vrot.slane %v1021, 4
  %v1024 = vshll.u32 %v83, 16
  %v1026 = vrot.slane %v1024, 5
  %v1027 = vor.u32 %v1023, %v1026
  %v1028 = vrot.slane %v1027, 4
  %v1030 = vshll.u32 %v147, 16
  %v1032 = vrot.slane %v1030, 5
  %v1033 = vsel %vm151, %v1028, %v1032
  %v1035 = vshrl.u32 %v84, 16
  %v1037 = vrot.slane %v1035, 4
  %v1038 = vshll.u32 %v84, 16
  %v1040 = vrot.slane %v1038, 5
  %v1041 = vor.u32 %v1037, %v1040
  %v1042 = vrot.slane %v1041, 4
  %v1044 = vshll.u32 %v148, 16
  %v1046 = vrot.slane %v1044, 5
  %v1047 = vsel %vm151, %v1042, %v1046
  %s1048 = scalar_lea.vmem %s0, 16
  %v1049 = vld [vmem:[%s1048] sm:$0xff]
  %v1050 = vld [vmem:[%s1048 + $0x10] sm:$0xff]
  %v1051 = vld [vmem:[%s1048 + $0x20] sm:$0xff]
  %v1052 = vld [vmem:[%s1048 + $0x30] sm:$0xff]
  %v1053 = vld [vmem:[%s1048 + $0x40] sm:$0xff]
  %v1054 = vld [vmem:[%s1048 + $0x50] sm:$0xff]
  %v1055 = vld [vmem:[%s1048 + $0x60] sm:$0xff]
  %v1056 = vld [vmem:[%s1048 + $0x70] sm:$0xff]
  %v1057 = vld [vmem:[%s1048 + $0x90] sm:$0xff]
  %v1058 = vld [vmem:[%s1048 + $0xa0] sm:$0xff]
  %v1059 = vld [vmem:[%s1048 + $0xb0] sm:$0xff]
  %v1060 = vld [vmem:[%s1048 + $0xc0] sm:$0xff]
  %v1061 = vld [vmem:[%s1048 + $0xd0] sm:$0xff]
  %v1062 = vld [vmem:[%s1048 + $0xe0] sm:$0xff]
  %v1063 = vld [vmem:[%s1048 + $0xf0] sm:$0xff]
  %v1064 = vld [vmem:[%s1048 + $0x100] sm:$0xff]
  %v1065 = vld [vmem:[%s1048 + $0x120] sm:$0xff]
  %v1066 = vld [vmem:[%s1048 + $0x130] sm:$0xff]
  %v1067 = vld [vmem:[%s1048 + $0x140] sm:$0xff]
  %v1068 = vld [vmem:[%s1048 + $0x150] sm:$0xff]
  %v1069 = vld [vmem:[%s1048 + $0x160] sm:$0xff]
  %v1070 = vld [vmem:[%s1048 + $0x170] sm:$0xff]
  %v1071 = vld [vmem:[%s1048 + $0x180] sm:$0xff]
  %v1072 = vld [vmem:[%s1048 + $0x190] sm:$0xff]
  %v1073 = vld [vmem:[%s1048 + $0x1b0] sm:$0xff]
  %v1074 = vld [vmem:[%s1048 + $0x1c0] sm:$0xff]
  %v1075 = vld [vmem:[%s1048 + $0x1d0] sm:$0xff]
  %v1076 = vld [vmem:[%s1048 + $0x1e0] sm:$0xff]
  %v1077 = vld [vmem:[%s1048 + $0x1f0] sm:$0xff]
  %v1078 = vld [vmem:[%s1048 + $0x200] sm:$0xff]
  %v1079 = vld [vmem:[%s1048 + $0x210] sm:$0xff]
  %v1080 = vld [vmem:[%s1048 + $0x220] sm:$0xff]
  %v1081 = vld [vmem:[%s1048 + $0x240] sm:$0xff]
  %v1082 = vld [vmem:[%s1048 + $0x250] sm:$0xff]
  %v1083 = vld [vmem:[%s1048 + $0x260] sm:$0xff]
  %v1084 = vld [vmem:[%s1048 + $0x270] sm:$0xff]
  %v1085 = vld [vmem:[%s1048 + $0x280] sm:$0xff]
  %v1086 = vld [vmem:[%s1048 + $0x290] sm:$0xff]
  %v1087 = vld [vmem:[%s1048 + $0x2a0] sm:$0xff]
  %v1088 = vld [vmem:[%s1048 + $0x2b0] sm:$0xff]
  %v1089 = vld [vmem:[%s1048 + $0x2d0] sm:$0xff]
  %v1090 = vld [vmem:[%s1048 + $0x2e0] sm:$0xff]
  %v1091 = vld [vmem:[%s1048 + $0x2f0] sm:$0xff]
  %v1092 = vld [vmem:[%s1048 + $0x300] sm:$0xff]
  %v1093 = vld [vmem:[%s1048 + $0x310] sm:$0xff]
  %v1094 = vld [vmem:[%s1048 + $0x320] sm:$0xff]
  %v1095 = vld [vmem:[%s1048 + $0x330] sm:$0xff]
  %v1096 = vld [vmem:[%s1048 + $0x340] sm:$0xff]
  %v1097 = vld [vmem:[%s1048 + $0x360] sm:$0xff]
  %v1098 = vld [vmem:[%s1048 + $0x370] sm:$0xff]
  %v1099 = vld [vmem:[%s1048 + $0x380] sm:$0xff]
  %v1100 = vld [vmem:[%s1048 + $0x390] sm:$0xff]
  %v1101 = vld [vmem:[%s1048 + $0x3a0] sm:$0xff]
  %v1102 = vld [vmem:[%s1048 + $0x3b0] sm:$0xff]
  %v1103 = vld [vmem:[%s1048 + $0x3c0] sm:$0xff]
  %v1104 = vld [vmem:[%s1048 + $0x3d0] sm:$0xff]
  %v1105 = vld [vmem:[%s1048 + $0x3f0] sm:$0xff]
  %v1106 = vld [vmem:[%s1048 + $0x400] sm:$0xff]
  %v1107 = vld [vmem:[%s1048 + $0x410] sm:$0xff]
  %v1108 = vld [vmem:[%s1048 + $0x420] sm:$0xff]
  %v1109 = vld [vmem:[%s1048 + $0x430] sm:$0xff]
  %v1110 = vld [vmem:[%s1048 + $0x440] sm:$0xff]
  %v1111 = vld [vmem:[%s1048 + $0x450] sm:$0xff]
  %v1112 = vld [vmem:[%s1048 + $0x460] sm:$0xff]
  %v1113 = vld [vmem:[%s1048 + $0x8] sm:$0x11]
  %v1114 = vld [vmem:[%s1048 + $0x18] sm:$0x11]
  %v1115 = vld [vmem:[%s1048 + $0x28] sm:$0x11]
  %v1116 = vld [vmem:[%s1048 + $0x38] sm:$0x11]
  %v1117 = vld [vmem:[%s1048 + $0x48] sm:$0x11]
  %v1118 = vld [vmem:[%s1048 + $0x58] sm:$0x11]
  %v1119 = vld [vmem:[%s1048 + $0x68] sm:$0x11]
  %v1120 = vld [vmem:[%s1048 + $0x78] sm:$0x11]
  %v1121 = vld [vmem:[%s1048 + $0x98] sm:$0x11]
  %v1122 = vld [vmem:[%s1048 + $0xa8] sm:$0x11]
  %v1123 = vld [vmem:[%s1048 + $0xb8] sm:$0x11]
  %v1124 = vld [vmem:[%s1048 + $0xc8] sm:$0x11]
  %v1125 = vld [vmem:[%s1048 + $0xd8] sm:$0x11]
  %v1126 = vld [vmem:[%s1048 + $0xe8] sm:$0x11]
  %v1127 = vld [vmem:[%s1048 + $0xf8] sm:$0x11]
  %v1128 = vld [vmem:[%s1048 + $0x108] sm:$0x11]
  %v1129 = vld [vmem:[%s1048 + $0x128] sm:$0x11]
  %v1130 = vld [vmem:[%s1048 + $0x138] sm:$0x11]
  %v1131 = vld [vmem:[%s1048 + $0x148] sm:$0x11]
  %v1132 = vld [vmem:[%s1048 + $0x158] sm:$0x11]
  %v1133 = vld [vmem:[%s1048 + $0x168] sm:$0x11]
  %v1134 = vld [vmem:[%s1048 + $0x178] sm:$0x11]
  %v1135 = vld [vmem:[%s1048 + $0x188] sm:$0x11]
  %v1136 = vld [vmem:[%s1048 + $0x198] sm:$0x11]
  %v1137 = vld [vmem:[%s1048 + $0x1b8] sm:$0x11]
  %v1138 = vld [vmem:[%s1048 + $0x1c8] sm:$0x11]
  %v1139 = vld [vmem:[%s1048 + $0x1d8] sm:$0x11]
  %v1140 = vld [vmem:[%s1048 + $0x1e8] sm:$0x11]
  %v1141 = vld [vmem:[%s1048 + $0x1f8] sm:$0x11]
  %v1142 = vld [vmem:[%s1048 + $0x208] sm:$0x11]
  %v1143 = vld [vmem:[%s1048 + $0x218] sm:$0x11]
  %v1144 = vld [vmem:[%s1048 + $0x228] sm:$0x11]
  %v1145 = vld [vmem:[%s1048 + $0x248] sm:$0x11]
  %v1146 = vld [vmem:[%s1048 + $0x258] sm:$0x11]
  %v1147 = vld [vmem:[%s1048 + $0x268] sm:$0x11]
  %v1148 = vld [vmem:[%s1048 + $0x278] sm:$0x11]
  %v1149 = vld [vmem:[%s1048 + $0x288] sm:$0x11]
  %v1150 = vld [vmem:[%s1048 + $0x298] sm:$0x11]
  %v1151 = vld [vmem:[%s1048 + $0x2a8] sm:$0x11]
  %v1152 = vld [vmem:[%s1048 + $0x2b8] sm:$0x11]
  %v1153 = vld [vmem:[%s1048 + $0x2d8] sm:$0x11]
  %v1154 = vld [vmem:[%s1048 + $0x2e8] sm:$0x11]
  %v1155 = vld [vmem:[%s1048 + $0x2f8] sm:$0x11]
  %v1156 = vld [vmem:[%s1048 + $0x308] sm:$0x11]
  %v1157 = vld [vmem:[%s1048 + $0x318] sm:$0x11]
  %v1158 = vld [vmem:[%s1048 + $0x328] sm:$0x11]
  %v1159 = vld [vmem:[%s1048 + $0x338] sm:$0x11]
  %v1160 = vld [vmem:[%s1048 + $0x348] sm:$0x11]
  %v1161 = vld [vmem:[%s1048 + $0x368] sm:$0x11]
  %v1162 = vld [vmem:[%s1048 + $0x378] sm:$0x11]
  %v1163 = vld [vmem:[%s1048 + $0x388] sm:$0x11]
  %v1164 = vld [vmem:[%s1048 + $0x398] sm:$0x11]
  %v1165 = vld [vmem:[%s1048 + $0x3a8] sm:$0x11]
  %v1166 = vld [vmem:[%s1048 + $0x3b8] sm:$0x11]
  %v1167 = vld [vmem:[%s1048 + $0x3c8] sm:$0x11]
  %v1168 = vld [vmem:[%s1048 + $0x3d8] sm:$0x11]
  %v1169 = vld [vmem:[%s1048 + $0x3f8] sm:$0x11]
  %v1170 = vld [vmem:[%s1048 + $0x408] sm:$0x11]
  %v1171 = vld [vmem:[%s1048 + $0x418] sm:$0x11]
  %v1172 = vld [vmem:[%s1048 + $0x428] sm:$0x11]
  %v1173 = vld [vmem:[%s1048 + $0x438] sm:$0x11]
  %v1174 = vld [vmem:[%s1048 + $0x448] sm:$0x11]
  %v1175 = vld [vmem:[%s1048 + $0x458] sm:$0x11]
  %v1176 = vld [vmem:[%s1048 + $0x468] sm:$0x11]
  %v1178 = vshrl.u32 %v1049, 16
  %v1180 = vrot.slane %v1178, 4
  %v1181 = vshll.u32 %v1049, 16
  %v1183 = vrot.slane %v1181, 5
  %v1184 = vor.u32 %v1180, %v1183
  %v1185 = vrot.slane %v1184, 4
  %v1187 = vshll.u32 %v1113, 16
  %v1189 = vrot.slane %v1187, 5
  %v1190 = vsel %vm151, %v1185, %v1189
  %v1192 = vshrl.u32 %v1050, 16
  %v1194 = vrot.slane %v1192, 4
  %v1195 = vshll.u32 %v1050, 16
  %v1197 = vrot.slane %v1195, 5
  %v1198 = vor.u32 %v1194, %v1197
  %v1199 = vrot.slane %v1198, 4
  %v1201 = vshll.u32 %v1114, 16
  %v1203 = vrot.slane %v1201, 5
  %v1204 = vsel %vm151, %v1199, %v1203
  %v1206 = vshrl.u32 %v1051, 16
  %v1208 = vrot.slane %v1206, 4
  %v1209 = vshll.u32 %v1051, 16
  %v1211 = vrot.slane %v1209, 5
  %v1212 = vor.u32 %v1208, %v1211
  %v1213 = vrot.slane %v1212, 4
  %v1215 = vshll.u32 %v1115, 16
  %v1217 = vrot.slane %v1215, 5
  %v1218 = vsel %vm151, %v1213, %v1217
  %v1220 = vshrl.u32 %v1052, 16
  %v1222 = vrot.slane %v1220, 4
  %v1223 = vshll.u32 %v1052, 16
  %v1225 = vrot.slane %v1223, 5
  %v1226 = vor.u32 %v1222, %v1225
  %v1227 = vrot.slane %v1226, 4
  %v1229 = vshll.u32 %v1116, 16
  %v1231 = vrot.slane %v1229, 5
  %v1232 = vsel %vm151, %v1227, %v1231
  %v1234 = vshrl.u32 %v1053, 16
  %v1236 = vrot.slane %v1234, 4
  %v1237 = vshll.u32 %v1053, 16
  %v1239 = vrot.slane %v1237, 5
  %v1240 = vor.u32 %v1236, %v1239
  %v1241 = vrot.slane %v1240, 4
  %v1243 = vshll.u32 %v1117, 16
  %v1245 = vrot.slane %v1243, 5
  %v1246 = vsel %vm151, %v1241, %v1245
  %v1248 = vshrl.u32 %v1054, 16
  %v1250 = vrot.slane %v1248, 4
  %v1251 = vshll.u32 %v1054, 16
  %v1253 = vrot.slane %v1251, 5
  %v1254 = vor.u32 %v1250, %v1253
  %v1255 = vrot.slane %v1254, 4
  %v1257 = vshll.u32 %v1118, 16
  %v1259 = vrot.slane %v1257, 5
  %v1260 = vsel %vm151, %v1255, %v1259
  %v1262 = vshrl.u32 %v1055, 16
  %v1264 = vrot.slane %v1262, 4
  %v1265 = vshll.u32 %v1055, 16
  %v1267 = vrot.slane %v1265, 5
  %v1268 = vor.u32 %v1264, %v1267
  %v1269 = vrot.slane %v1268, 4
  %v1271 = vshll.u32 %v1119, 16
  %v1273 = vrot.slane %v1271, 5
  %v1274 = vsel %vm151, %v1269, %v1273
  %v1276 = vshrl.u32 %v1056, 16
  %v1278 = vrot.slane %v1276, 4
  %v1279 = vshll.u32 %v1056, 16
  %v1281 = vrot.slane %v1279, 5
  %v1282 = vor.u32 %v1278, %v1281
  %v1283 = vrot.slane %v1282, 4
  %v1285 = vshll.u32 %v1120, 16
  %v1287 = vrot.slane %v1285, 5
  %v1288 = vsel %vm151, %v1283, %v1287
  %v1290 = vshrl.u32 %v1057, 16
  %v1292 = vrot.slane %v1290, 4
  %v1293 = vshll.u32 %v1057, 16
  %v1295 = vrot.slane %v1293, 5
  %v1296 = vor.u32 %v1292, %v1295
  %v1297 = vrot.slane %v1296, 4
  %v1299 = vshll.u32 %v1121, 16
  %v1301 = vrot.slane %v1299, 5
  %v1302 = vsel %vm151, %v1297, %v1301
  %v1304 = vshrl.u32 %v1058, 16
  %v1306 = vrot.slane %v1304, 4
  %v1307 = vshll.u32 %v1058, 16
  %v1309 = vrot.slane %v1307, 5
  %v1310 = vor.u32 %v1306, %v1309
  %v1311 = vrot.slane %v1310, 4
  %v1313 = vshll.u32 %v1122, 16
  %v1315 = vrot.slane %v1313, 5
  %v1316 = vsel %vm151, %v1311, %v1315
  %v1318 = vshrl.u32 %v1059, 16
  %v1320 = vrot.slane %v1318, 4
  %v1321 = vshll.u32 %v1059, 16
  %v1323 = vrot.slane %v1321, 5
  %v1324 = vor.u32 %v1320, %v1323
  %v1325 = vrot.slane %v1324, 4
  %v1327 = vshll.u32 %v1123, 16
  %v1329 = vrot.slane %v1327, 5
  %v1330 = vsel %vm151, %v1325, %v1329
  %v1332 = vshrl.u32 %v1060, 16
  %v1334 = vrot.slane %v1332, 4
  %v1335 = vshll.u32 %v1060, 16
  %v1337 = vrot.slane %v1335, 5
  %v1338 = vor.u32 %v1334, %v1337
  %v1339 = vrot.slane %v1338, 4
  %v1341 = vshll.u32 %v1124, 16
  %v1343 = vrot.slane %v1341, 5
  %v1344 = vsel %vm151, %v1339, %v1343
  %v1346 = vshrl.u32 %v1061, 16
  %v1348 = vrot.slane %v1346, 4
  %v1349 = vshll.u32 %v1061, 16
  %v1351 = vrot.slane %v1349, 5
  %v1352 = vor.u32 %v1348, %v1351
  %v1353 = vrot.slane %v1352, 4
  %v1355 = vshll.u32 %v1125, 16
  %v1357 = vrot.slane %v1355, 5
  %v1358 = vsel %vm151, %v1353, %v1357
  %v1360 = vshrl.u32 %v1062, 16
  %v1362 = vrot.slane %v1360, 4
  %v1363 = vshll.u32 %v1062, 16
  %v1365 = vrot.slane %v1363, 5
  %v1366 = vor.u32 %v1362, %v1365
  %v1367 = vrot.slane %v1366, 4
  %v1369 = vshll.u32 %v1126, 16
  %v1371 = vrot.slane %v1369, 5
  %v1372 = vsel %vm151, %v1367, %v1371
  %v1374 = vshrl.u32 %v1063, 16
  %v1376 = vrot.slane %v1374, 4
  %v1377 = vshll.u32 %v1063, 16
  %v1379 = vrot.slane %v1377, 5
  %v1380 = vor.u32 %v1376, %v1379
  %v1381 = vrot.slane %v1380, 4
  %v1383 = vshll.u32 %v1127, 16
  %v1385 = vrot.slane %v1383, 5
  %v1386 = vsel %vm151, %v1381, %v1385
  %v1388 = vshrl.u32 %v1064, 16
  %v1390 = vrot.slane %v1388, 4
  %v1391 = vshll.u32 %v1064, 16
  %v1393 = vrot.slane %v1391, 5
  %v1394 = vor.u32 %v1390, %v1393
  %v1395 = vrot.slane %v1394, 4
  %v1397 = vshll.u32 %v1128, 16
  %v1399 = vrot.slane %v1397, 5
  %v1400 = vsel %vm151, %v1395, %v1399
  %v1402 = vshrl.u32 %v1065, 16
  %v1404 = vrot.slane %v1402, 4
  %v1405 = vshll.u32 %v1065, 16
  %v1407 = vrot.slane %v1405, 5
  %v1408 = vor.u32 %v1404, %v1407
  %v1409 = vrot.slane %v1408, 4
  %v1411 = vshll.u32 %v1129, 16
  %v1413 = vrot.slane %v1411, 5
  %v1414 = vsel %vm151, %v1409, %v1413
  %v1416 = vshrl.u32 %v1066, 16
  %v1418 = vrot.slane %v1416, 4
  %v1419 = vshll.u32 %v1066, 16
  %v1421 = vrot.slane %v1419, 5
  %v1422 = vor.u32 %v1418, %v1421
  %v1423 = vrot.slane %v1422, 4
  %v1425 = vshll.u32 %v1130, 16
  %v1427 = vrot.slane %v1425, 5
  %v1428 = vsel %vm151, %v1423, %v1427
  %v1430 = vshrl.u32 %v1067, 16
  %v1432 = vrot.slane %v1430, 4
  %v1433 = vshll.u32 %v1067, 16
  %v1435 = vrot.slane %v1433, 5
  %v1436 = vor.u32 %v1432, %v1435
  %v1437 = vrot.slane %v1436, 4
  %v1439 = vshll.u32 %v1131, 16
  %v1441 = vrot.slane %v1439, 5
  %v1442 = vsel %vm151, %v1437, %v1441
  %v1444 = vshrl.u32 %v1068, 16
  %v1446 = vrot.slane %v1444, 4
  %v1447 = vshll.u32 %v1068, 16
  %v1449 = vrot.slane %v1447, 5
  %v1450 = vor.u32 %v1446, %v1449
  %v1451 = vrot.slane %v1450, 4
  %v1453 = vshll.u32 %v1132, 16
  %v1455 = vrot.slane %v1453, 5
  %v1456 = vsel %vm151, %v1451, %v1455
  %v1458 = vshrl.u32 %v1069, 16
  %v1460 = vrot.slane %v1458, 4
  %v1461 = vshll.u32 %v1069, 16
  %v1463 = vrot.slane %v1461, 5
  %v1464 = vor.u32 %v1460, %v1463
  %v1465 = vrot.slane %v1464, 4
  %v1467 = vshll.u32 %v1133, 16
  %v1469 = vrot.slane %v1467, 5
  %v1470 = vsel %vm151, %v1465, %v1469
  %v1472 = vshrl.u32 %v1070, 16
  %v1474 = vrot.slane %v1472, 4
  %v1475 = vshll.u32 %v1070, 16
  %v1477 = vrot.slane %v1475, 5
  %v1478 = vor.u32 %v1474, %v1477
  %v1479 = vrot.slane %v1478, 4
  %v1481 = vshll.u32 %v1134, 16
  %v1483 = vrot.slane %v1481, 5
  %v1484 = vsel %vm151, %v1479, %v1483
  %v1486 = vshrl.u32 %v1071, 16
  %v1488 = vrot.slane %v1486, 4
  %v1489 = vshll.u32 %v1071, 16
  %v1491 = vrot.slane %v1489, 5
  %v1492 = vor.u32 %v1488, %v1491
  %v1493 = vrot.slane %v1492, 4
  %v1495 = vshll.u32 %v1135, 16
  %v1497 = vrot.slane %v1495, 5
  %v1498 = vsel %vm151, %v1493, %v1497
  %v1500 = vshrl.u32 %v1072, 16
  %v1502 = vrot.slane %v1500, 4
  %v1503 = vshll.u32 %v1072, 16
  %v1505 = vrot.slane %v1503, 5
  %v1506 = vor.u32 %v1502, %v1505
  %v1507 = vrot.slane %v1506, 4
  %v1509 = vshll.u32 %v1136, 16
  %v1511 = vrot.slane %v1509, 5
  %v1512 = vsel %vm151, %v1507, %v1511
  %v1514 = vshrl.u32 %v1073, 16
  %v1516 = vrot.slane %v1514, 4
  %v1517 = vshll.u32 %v1073, 16
  %v1519 = vrot.slane %v1517, 5
  %v1520 = vor.u32 %v1516, %v1519
  %v1521 = vrot.slane %v1520, 4
  %v1523 = vshll.u32 %v1137, 16
  %v1525 = vrot.slane %v1523, 5
  %v1526 = vsel %vm151, %v1521, %v1525
  %v1528 = vshrl.u32 %v1074, 16
  %v1530 = vrot.slane %v1528, 4
  %v1531 = vshll.u32 %v1074, 16
  %v1533 = vrot.slane %v1531, 5
  %v1534 = vor.u32 %v1530, %v1533
  %v1535 = vrot.slane %v1534, 4
  %v1537 = vshll.u32 %v1138, 16
  %v1539 = vrot.slane %v1537, 5
  %v1540 = vsel %vm151, %v1535, %v1539
  %v1542 = vshrl.u32 %v1075, 16
  %v1544 = vrot.slane %v1542, 4
  %v1545 = vshll.u32 %v1075, 16
  %v1547 = vrot.slane %v1545, 5
  %v1548 = vor.u32 %v1544, %v1547
  %v1549 = vrot.slane %v1548, 4
  %v1551 = vshll.u32 %v1139, 16
  %v1553 = vrot.slane %v1551, 5
  %v1554 = vsel %vm151, %v1549, %v1553
  %v1556 = vshrl.u32 %v1076, 16
  %v1558 = vrot.slane %v1556, 4
  %v1559 = vshll.u32 %v1076, 16
  %v1561 = vrot.slane %v1559, 5
  %v1562 = vor.u32 %v1558, %v1561
  %v1563 = vrot.slane %v1562, 4
  %v1565 = vshll.u32 %v1140, 16
  %v1567 = vrot.slane %v1565, 5
  %v1568 = vsel %vm151, %v1563, %v1567
  %v1570 = vshrl.u32 %v1077, 16
  %v1572 = vrot.slane %v1570, 4
  %v1573 = vshll.u32 %v1077, 16
  %v1575 = vrot.slane %v1573, 5
  %v1576 = vor.u32 %v1572, %v1575
  %v1577 = vrot.slane %v1576, 4
  %v1579 = vshll.u32 %v1141, 16
  %v1581 = vrot.slane %v1579, 5
  %v1582 = vsel %vm151, %v1577, %v1581
  %v1584 = vshrl.u32 %v1078, 16
  %v1586 = vrot.slane %v1584, 4
  %v1587 = vshll.u32 %v1078, 16
  %v1589 = vrot.slane %v1587, 5
  %v1590 = vor.u32 %v1586, %v1589
  %v1591 = vrot.slane %v1590, 4
  %v1593 = vshll.u32 %v1142, 16
  %v1595 = vrot.slane %v1593, 5
  %v1596 = vsel %vm151, %v1591, %v1595
  %v1598 = vshrl.u32 %v1079, 16
  %v1600 = vrot.slane %v1598, 4
  %v1601 = vshll.u32 %v1079, 16
  %v1603 = vrot.slane %v1601, 5
  %v1604 = vor.u32 %v1600, %v1603
  %v1605 = vrot.slane %v1604, 4
  %v1607 = vshll.u32 %v1143, 16
  %v1609 = vrot.slane %v1607, 5
  %v1610 = vsel %vm151, %v1605, %v1609
  %v1612 = vshrl.u32 %v1080, 16
  %v1614 = vrot.slane %v1612, 4
  %v1615 = vshll.u32 %v1080, 16
  %v1617 = vrot.slane %v1615, 5
  %v1618 = vor.u32 %v1614, %v1617
  %v1619 = vrot.slane %v1618, 4
  %v1621 = vshll.u32 %v1144, 16
  %v1623 = vrot.slane %v1621, 5
  %v1624 = vsel %vm151, %v1619, %v1623
  %v1626 = vshrl.u32 %v1081, 16
  %v1628 = vrot.slane %v1626, 4
  %v1629 = vshll.u32 %v1081, 16
  %v1631 = vrot.slane %v1629, 5
  %v1632 = vor.u32 %v1628, %v1631
  %v1633 = vrot.slane %v1632, 4
  %v1635 = vshll.u32 %v1145, 16
  %v1637 = vrot.slane %v1635, 5
  %v1638 = vsel %vm151, %v1633, %v1637
  %v1640 = vshrl.u32 %v1082, 16
  %v1642 = vrot.slane %v1640, 4
  %v1643 = vshll.u32 %v1082, 16
  %v1645 = vrot.slane %v1643, 5
  %v1646 = vor.u32 %v1642, %v1645
  %v1647 = vrot.slane %v1646, 4
  %v1649 = vshll.u32 %v1146, 16
  %v1651 = vrot.slane %v1649, 5
  %v1652 = vsel %vm151, %v1647, %v1651
  %v1654 = vshrl.u32 %v1083, 16
  %v1656 = vrot.slane %v1654, 4
  %v1657 = vshll.u32 %v1083, 16
  %v1659 = vrot.slane %v1657, 5
  %v1660 = vor.u32 %v1656, %v1659
  %v1661 = vrot.slane %v1660, 4
  %v1663 = vshll.u32 %v1147, 16
  %v1665 = vrot.slane %v1663, 5
  %v1666 = vsel %vm151, %v1661, %v1665
  %v1668 = vshrl.u32 %v1084, 16
  %v1670 = vrot.slane %v1668, 4
  %v1671 = vshll.u32 %v1084, 16
  %v1673 = vrot.slane %v1671, 5
  %v1674 = vor.u32 %v1670, %v1673
  %v1675 = vrot.slane %v1674, 4
  %v1677 = vshll.u32 %v1148, 16
  %v1679 = vrot.slane %v1677, 5
  %v1680 = vsel %vm151, %v1675, %v1679
  %v1682 = vshrl.u32 %v1085, 16
  %v1684 = vrot.slane %v1682, 4
  %v1685 = vshll.u32 %v1085, 16
  %v1687 = vrot.slane %v1685, 5
  %v1688 = vor.u32 %v1684, %v1687
  %v1689 = vrot.slane %v1688, 4
  %v1691 = vshll.u32 %v1149, 16
  %v1693 = vrot.slane %v1691, 5
  %v1694 = vsel %vm151, %v1689, %v1693
  %v1696 = vshrl.u32 %v1086, 16
  %v1698 = vrot.slane %v1696, 4
  %v1699 = vshll.u32 %v1086, 16
  %v1701 = vrot.slane %v1699, 5
  %v1702 = vor.u32 %v1698, %v1701
  %v1703 = vrot.slane %v1702, 4
  %v1705 = vshll.u32 %v1150, 16
  %v1707 = vrot.slane %v1705, 5
  %v1708 = vsel %vm151, %v1703, %v1707
  %v1710 = vshrl.u32 %v1087, 16
  %v1712 = vrot.slane %v1710, 4
  %v1713 = vshll.u32 %v1087, 16
  %v1715 = vrot.slane %v1713, 5
  %v1716 = vor.u32 %v1712, %v1715
  %v1717 = vrot.slane %v1716, 4
  %v1719 = vshll.u32 %v1151, 16
  %v1721 = vrot.slane %v1719, 5
  %v1722 = vsel %vm151, %v1717, %v1721
  %v1724 = vshrl.u32 %v1088, 16
  %v1726 = vrot.slane %v1724, 4
  %v1727 = vshll.u32 %v1088, 16
  %v1729 = vrot.slane %v1727, 5
  %v1730 = vor.u32 %v1726, %v1729
  %v1731 = vrot.slane %v1730, 4
  %v1733 = vshll.u32 %v1152, 16
  %v1735 = vrot.slane %v1733, 5
  %v1736 = vsel %vm151, %v1731, %v1735
  %v1738 = vshrl.u32 %v1089, 16
  %v1740 = vrot.slane %v1738, 4
  %v1741 = vshll.u32 %v1089, 16
  %v1743 = vrot.slane %v1741, 5
  %v1744 = vor.u32 %v1740, %v1743
  %v1745 = vrot.slane %v1744, 4
  %v1747 = vshll.u32 %v1153, 16
  %v1749 = vrot.slane %v1747, 5
  %v1750 = vsel %vm151, %v1745, %v1749
  %v1752 = vshrl.u32 %v1090, 16
  %v1754 = vrot.slane %v1752, 4
  %v1755 = vshll.u32 %v1090, 16
  %v1757 = vrot.slane %v1755, 5
  %v1758 = vor.u32 %v1754, %v1757
  %v1759 = vrot.slane %v1758, 4
  %v1761 = vshll.u32 %v1154, 16
  %v1763 = vrot.slane %v1761, 5
  %v1764 = vsel %vm151, %v1759, %v1763
  %v1766 = vshrl.u32 %v1091, 16
  %v1768 = vrot.slane %v1766, 4
  %v1769 = vshll.u32 %v1091, 16
  %v1771 = vrot.slane %v1769, 5
  %v1772 = vor.u32 %v1768, %v1771
  %v1773 = vrot.slane %v1772, 4
  %v1775 = vshll.u32 %v1155, 16
  %v1777 = vrot.slane %v1775, 5
  %v1778 = vsel %vm151, %v1773, %v1777
  %v1780 = vshrl.u32 %v1092, 16
  %v1782 = vrot.slane %v1780, 4
  %v1783 = vshll.u32 %v1092, 16
  %v1785 = vrot.slane %v1783, 5
  %v1786 = vor.u32 %v1782, %v1785
  %v1787 = vrot.slane %v1786, 4
  %v1789 = vshll.u32 %v1156, 16
  %v1791 = vrot.slane %v1789, 5
  %v1792 = vsel %vm151, %v1787, %v1791
  %v1794 = vshrl.u32 %v1093, 16
  %v1796 = vrot.slane %v1794, 4
  %v1797 = vshll.u32 %v1093, 16
  %v1799 = vrot.slane %v1797, 5
  %v1800 = vor.u32 %v1796, %v1799
  %v1801 = vrot.slane %v1800, 4
  %v1803 = vshll.u32 %v1157, 16
  %v1805 = vrot.slane %v1803, 5
  %v1806 = vsel %vm151, %v1801, %v1805
  %v1808 = vshrl.u32 %v1094, 16
  %v1810 = vrot.slane %v1808, 4
  %v1811 = vshll.u32 %v1094, 16
  %v1813 = vrot.slane %v1811, 5
  %v1814 = vor.u32 %v1810, %v1813
  %v1815 = vrot.slane %v1814, 4
  %v1817 = vshll.u32 %v1158, 16
  %v1819 = vrot.slane %v1817, 5
  %v1820 = vsel %vm151, %v1815, %v1819
  %v1822 = vshrl.u32 %v1095, 16
  %v1824 = vrot.slane %v1822, 4
  %v1825 = vshll.u32 %v1095, 16
  %v1827 = vrot.slane %v1825, 5
  %v1828 = vor.u32 %v1824, %v1827
  %v1829 = vrot.slane %v1828, 4
  %v1831 = vshll.u32 %v1159, 16
  %v1833 = vrot.slane %v1831, 5
  %v1834 = vsel %vm151, %v1829, %v1833
  %v1836 = vshrl.u32 %v1096, 16
  %v1838 = vrot.slane %v1836, 4
  %v1839 = vshll.u32 %v1096, 16
  %v1841 = vrot.slane %v1839, 5
  %v1842 = vor.u32 %v1838, %v1841
  %v1843 = vrot.slane %v1842, 4
  %v1845 = vshll.u32 %v1160, 16
  %v1847 = vrot.slane %v1845, 5
  %v1848 = vsel %vm151, %v1843, %v1847
  %v1850 = vshrl.u32 %v1097, 16
  %v1852 = vrot.slane %v1850, 4
  %v1853 = vshll.u32 %v1097, 16
  %v1855 = vrot.slane %v1853, 5
  %v1856 = vor.u32 %v1852, %v1855
  %v1857 = vrot.slane %v1856, 4
  %v1859 = vshll.u32 %v1161, 16
  %v1861 = vrot.slane %v1859, 5
  %v1862 = vsel %vm151, %v1857, %v1861
  %v1864 = vshrl.u32 %v1098, 16
  %v1866 = vrot.slane %v1864, 4
  %v1867 = vshll.u32 %v1098, 16
  %v1869 = vrot.slane %v1867, 5
  %v1870 = vor.u32 %v1866, %v1869
  %v1871 = vrot.slane %v1870, 4
  %v1873 = vshll.u32 %v1162, 16
  %v1875 = vrot.slane %v1873, 5
  %v1876 = vsel %vm151, %v1871, %v1875
  %v1878 = vshrl.u32 %v1099, 16
  %v1880 = vrot.slane %v1878, 4
  %v1881 = vshll.u32 %v1099, 16
  %v1883 = vrot.slane %v1881, 5
  %v1884 = vor.u32 %v1880, %v1883
  %v1885 = vrot.slane %v1884, 4
  %v1887 = vshll.u32 %v1163, 16
  %v1889 = vrot.slane %v1887, 5
  %v1890 = vsel %vm151, %v1885, %v1889
  %v1892 = vshrl.u32 %v1100, 16
  %v1894 = vrot.slane %v1892, 4
  %v1895 = vshll.u32 %v1100, 16
  %v1897 = vrot.slane %v1895, 5
  %v1898 = vor.u32 %v1894, %v1897
  %v1899 = vrot.slane %v1898, 4
  %v1901 = vshll.u32 %v1164, 16
  %v1903 = vrot.slane %v1901, 5
  %v1904 = vsel %vm151, %v1899, %v1903
  %v1906 = vshrl.u32 %v1101, 16
  %v1908 = vrot.slane %v1906, 4
  %v1909 = vshll.u32 %v1101, 16
  %v1911 = vrot.slane %v1909, 5
  %v1912 = vor.u32 %v1908, %v1911
  %v1913 = vrot.slane %v1912, 4
  %v1915 = vshll.u32 %v1165, 16
  %v1917 = vrot.slane %v1915, 5
  %v1918 = vsel %vm151, %v1913, %v1917
  %v1920 = vshrl.u32 %v1102, 16
  %v1922 = vrot.slane %v1920, 4
  %v1923 = vshll.u32 %v1102, 16
  %v1925 = vrot.slane %v1923, 5
  %v1926 = vor.u32 %v1922, %v1925
  %v1927 = vrot.slane %v1926, 4
  %v1929 = vshll.u32 %v1166, 16
  %v1931 = vrot.slane %v1929, 5
  %v1932 = vsel %vm151, %v1927, %v1931
  %v1934 = vshrl.u32 %v1103, 16
  %v1936 = vrot.slane %v1934, 4
  %v1937 = vshll.u32 %v1103, 16
  %v1939 = vrot.slane %v1937, 5
  %v1940 = vor.u32 %v1936, %v1939
  %v1941 = vrot.slane %v1940, 4
  %v1943 = vshll.u32 %v1167, 16
  %v1945 = vrot.slane %v1943, 5
  %v1946 = vsel %vm151, %v1941, %v1945
  %v1948 = vshrl.u32 %v1104, 16
  %v1950 = vrot.slane %v1948, 4
  %v1951 = vshll.u32 %v1104, 16
  %v1953 = vrot.slane %v1951, 5
  %v1954 = vor.u32 %v1950, %v1953
  %v1955 = vrot.slane %v1954, 4
  %v1957 = vshll.u32 %v1168, 16
  %v1959 = vrot.slane %v1957, 5
  %v1960 = vsel %vm151, %v1955, %v1959
  %v1962 = vshrl.u32 %v1105, 16
  %v1964 = vrot.slane %v1962, 4
  %v1965 = vshll.u32 %v1105, 16
  %v1967 = vrot.slane %v1965, 5
  %v1968 = vor.u32 %v1964, %v1967
  %v1969 = vrot.slane %v1968, 4
  %v1971 = vshll.u32 %v1169, 16
  %v1973 = vrot.slane %v1971, 5
  %v1974 = vsel %vm151, %v1969, %v1973
  %v1976 = vshrl.u32 %v1106, 16
  %v1978 = vrot.slane %v1976, 4
  %v1979 = vshll.u32 %v1106, 16
  %v1981 = vrot.slane %v1979, 5
  %v1982 = vor.u32 %v1978, %v1981
  %v1983 = vrot.slane %v1982, 4
  %v1985 = vshll.u32 %v1170, 16
  %v1987 = vrot.slane %v1985, 5
  %v1988 = vsel %vm151, %v1983, %v1987
  %v1990 = vshrl.u32 %v1107, 16
  %v1992 = vrot.slane %v1990, 4
  %v1993 = vshll.u32 %v1107, 16
  %v1995 = vrot.slane %v1993, 5
  %v1996 = vor.u32 %v1992, %v1995
  %v1997 = vrot.slane %v1996, 4
  %v1999 = vshll.u32 %v1171, 16
  %v2001 = vrot.slane %v1999, 5
  %v2002 = vsel %vm151, %v1997, %v2001
  %v2004 = vshrl.u32 %v1108, 16
  %v2006 = vrot.slane %v2004, 4
  %v2007 = vshll.u32 %v1108, 16
  %v2009 = vrot.slane %v2007, 5
  %v2010 = vor.u32 %v2006, %v2009
  %v2011 = vrot.slane %v2010, 4
  %v2013 = vshll.u32 %v1172, 16
  %v2015 = vrot.slane %v2013, 5
  %v2016 = vsel %vm151, %v2011, %v2015
  %v2018 = vshrl.u32 %v1109, 16
  %v2020 = vrot.slane %v2018, 4
  %v2021 = vshll.u32 %v1109, 16
  %v2023 = vrot.slane %v2021, 5
  %v2024 = vor.u32 %v2020, %v2023
  %v2025 = vrot.slane %v2024, 4
  %v2027 = vshll.u32 %v1173, 16
  %v2029 = vrot.slane %v2027, 5
  %v2030 = vsel %vm151, %v2025, %v2029
  %v2032 = vshrl.u32 %v1110, 16
  %v2034 = vrot.slane %v2032, 4
  %v2035 = vshll.u32 %v1110, 16
  %v2037 = vrot.slane %v2035, 5
  %v2038 = vor.u32 %v2034, %v2037
  %v2039 = vrot.slane %v2038, 4
  %v2041 = vshll.u32 %v1174, 16
  %v2043 = vrot.slane %v2041, 5
  %v2044 = vsel %vm151, %v2039, %v2043
  %v2046 = vshrl.u32 %v1111, 16
  %v2048 = vrot.slane %v2046, 4
  %v2049 = vshll.u32 %v1111, 16
  %v2051 = vrot.slane %v2049, 5
  %v2052 = vor.u32 %v2048, %v2051
  %v2053 = vrot.slane %v2052, 4
  %v2055 = vshll.u32 %v1175, 16
  %v2057 = vrot.slane %v2055, 5
  %v2058 = vsel %vm151, %v2053, %v2057
  %v2060 = vshrl.u32 %v1112, 16
  %v2062 = vrot.slane %v2060, 4
  %v2063 = vshll.u32 %v1112, 16
  %v2065 = vrot.slane %v2063, 5
  %v2066 = vor.u32 %v2062, %v2065
  %v2067 = vrot.slane %v2066, 4
  %v2069 = vshll.u32 %v1176, 16
  %v2071 = vrot.slane %v2069, 5
  %v2072 = vsel %vm151, %v2067, %v2071
  %v2137 = vunpack.c.l.b16 %v21
  %v2138 = vunpack.c.h.b16 %v21
  %v2139 = vunpack.c.l.b16 %v22
  %v2140 = vunpack.c.h.b16 %v22
  %v2141 = vunpack.c.l.b16 %v23
  %v2142 = vunpack.c.h.b16 %v23
  %v2143 = vunpack.c.l.b16 %v24
  %v2144 = vunpack.c.h.b16 %v24
  %v2145 = vunpack.c.l.b16 %v25
  %v2146 = vunpack.c.h.b16 %v25
  %v2147 = vunpack.c.l.b16 %v26
  %v2148 = vunpack.c.h.b16 %v26
  %v2149 = vunpack.c.l.b16 %v27
  %v2150 = vunpack.c.h.b16 %v27
  %v2151 = vunpack.c.l.b16 %v28
  %v2152 = vunpack.c.h.b16 %v28
  %v2153 = vunpack.c.l.b16 %v29
  %v2154 = vunpack.c.h.b16 %v29
  %v2155 = vunpack.c.l.b16 %v30
  %v2156 = vunpack.c.h.b16 %v30
  %v2157 = vunpack.c.l.b16 %v31
  %v2158 = vunpack.c.h.b16 %v31
  %v2159 = vunpack.c.l.b16 %v32
  %v2160 = vunpack.c.h.b16 %v32
  %v2161 = vunpack.c.l.b16 %v33
  %v2162 = vunpack.c.h.b16 %v33
  %v2163 = vunpack.c.l.b16 %v34
  %v2164 = vunpack.c.h.b16 %v34
  %v2165 = vunpack.c.l.b16 %v35
  %v2166 = vunpack.c.h.b16 %v35
  %v2167 = vunpack.c.l.b16 %v36
  %v2168 = vunpack.c.h.b16 %v36
  %v2169 = vunpack.c.l.b16 %v37
  %v2170 = vunpack.c.h.b16 %v37
  %v2171 = vunpack.c.l.b16 %v38
  %v2172 = vunpack.c.h.b16 %v38
  %v2173 = vunpack.c.l.b16 %v39
  %v2174 = vunpack.c.h.b16 %v39
  %v2175 = vunpack.c.l.b16 %v40
  %v2176 = vunpack.c.h.b16 %v40
  %v2177 = vunpack.c.l.b16 %v41
  %v2178 = vunpack.c.h.b16 %v41
  %v2179 = vunpack.c.l.b16 %v42
  %v2180 = vunpack.c.h.b16 %v42
  %v2181 = vunpack.c.l.b16 %v43
  %v2182 = vunpack.c.h.b16 %v43
  %v2183 = vunpack.c.l.b16 %v44
  %v2184 = vunpack.c.h.b16 %v44
  %v2185 = vunpack.c.l.b16 %v45
  %v2186 = vunpack.c.h.b16 %v45
  %v2187 = vunpack.c.l.b16 %v46
  %v2188 = vunpack.c.h.b16 %v46
  %v2189 = vunpack.c.l.b16 %v47
  %v2190 = vunpack.c.h.b16 %v47
  %v2191 = vunpack.c.l.b16 %v48
  %v2192 = vunpack.c.h.b16 %v48
  %v2193 = vunpack.c.l.b16 %v49
  %v2194 = vunpack.c.h.b16 %v49
  %v2195 = vunpack.c.l.b16 %v50
  %v2196 = vunpack.c.h.b16 %v50
  %v2197 = vunpack.c.l.b16 %v51
  %v2198 = vunpack.c.h.b16 %v51
  %v2199 = vunpack.c.l.b16 %v52
  %v2200 = vunpack.c.h.b16 %v52
  %v2201 = vunpack.c.l.b16 %v53
  %v2202 = vunpack.c.h.b16 %v53
  %v2203 = vunpack.c.l.b16 %v54
  %v2204 = vunpack.c.h.b16 %v54
  %v2205 = vunpack.c.l.b16 %v55
  %v2206 = vunpack.c.h.b16 %v55
  %v2207 = vunpack.c.l.b16 %v56
  %v2208 = vunpack.c.h.b16 %v56
  %v2209 = vunpack.c.l.b16 %v57
  %v2210 = vunpack.c.h.b16 %v57
  %v2211 = vunpack.c.l.b16 %v58
  %v2212 = vunpack.c.h.b16 %v58
  %v2213 = vunpack.c.l.b16 %v59
  %v2214 = vunpack.c.h.b16 %v59
  %v2215 = vunpack.c.l.b16 %v60
  %v2216 = vunpack.c.h.b16 %v60
  %v2217 = vunpack.c.l.b16 %v61
  %v2218 = vunpack.c.h.b16 %v61
  %v2219 = vunpack.c.l.b16 %v62
  %v2220 = vunpack.c.h.b16 %v62
  %v2221 = vunpack.c.l.b16 %v63
  %v2222 = vunpack.c.h.b16 %v63
  %v2223 = vunpack.c.l.b16 %v64
  %v2224 = vunpack.c.h.b16 %v64
  %v2225 = vunpack.c.l.b16 %v65
  %v2226 = vunpack.c.h.b16 %v65
  %v2227 = vunpack.c.l.b16 %v66
  %v2228 = vunpack.c.h.b16 %v66
  %v2229 = vunpack.c.l.b16 %v67
  %v2230 = vunpack.c.h.b16 %v67
  %v2231 = vunpack.c.l.b16 %v68
  %v2232 = vunpack.c.h.b16 %v68
  %v2233 = vunpack.c.l.b16 %v69
  %v2234 = vunpack.c.h.b16 %v69
  %v2235 = vunpack.c.l.b16 %v70
  %v2236 = vunpack.c.h.b16 %v70
  %v2237 = vunpack.c.l.b16 %v71
  %v2238 = vunpack.c.h.b16 %v71
  %v2239 = vunpack.c.l.b16 %v72
  %v2240 = vunpack.c.h.b16 %v72
  %v2241 = vunpack.c.l.b16 %v73
  %v2242 = vunpack.c.h.b16 %v73
  %v2243 = vunpack.c.l.b16 %v74
  %v2244 = vunpack.c.h.b16 %v74
  %v2245 = vunpack.c.l.b16 %v75
  %v2246 = vunpack.c.h.b16 %v75
  %v2247 = vunpack.c.l.b16 %v76
  %v2248 = vunpack.c.h.b16 %v76
  %v2249 = vunpack.c.l.b16 %v77
  %v2250 = vunpack.c.h.b16 %v77
  %v2251 = vunpack.c.l.b16 %v78
  %v2252 = vunpack.c.h.b16 %v78
  %v2253 = vunpack.c.l.b16 %v79
  %v2254 = vunpack.c.h.b16 %v79
  %v2255 = vunpack.c.l.b16 %v80
  %v2256 = vunpack.c.h.b16 %v80
  %v2257 = vunpack.c.l.b16 %v81
  %v2258 = vunpack.c.h.b16 %v81
  %v2259 = vunpack.c.l.b16 %v82
  %v2260 = vunpack.c.h.b16 %v82
  %v2261 = vunpack.c.l.b16 %v83
  %v2262 = vunpack.c.h.b16 %v83
  %v2263 = vunpack.c.l.b16 %v84
  %v2264 = vunpack.c.h.b16 %v84
  %v2265 = vpack.c.b16 %v2139, %v2137
  %v2266 = vpack.c.b16 %v2140, %v2138
  %v2267 = vpack.c.b16 %v2143, %v2141
  %v2268 = vpack.c.b16 %v2144, %v2142
  %v2269 = vpack.c.b16 %v2147, %v2145
  %v2270 = vpack.c.b16 %v2148, %v2146
  %v2271 = vpack.c.b16 %v2151, %v2149
  %v2272 = vpack.c.b16 %v2152, %v2150
  %v2273 = vpack.c.b16 %v2155, %v2153
  %v2274 = vpack.c.b16 %v2156, %v2154
  %v2275 = vpack.c.b16 %v2159, %v2157
  %v2276 = vpack.c.b16 %v2160, %v2158
  %v2277 = vpack.c.b16 %v2163, %v2161
  %v2278 = vpack.c.b16 %v2164, %v2162
  %v2279 = vpack.c.b16 %v2167, %v2165
  %v2280 = vpack.c.b16 %v2168, %v2166
  %v2281 = vpack.c.b16 %v2171, %v2169
  %v2282 = vpack.c.b16 %v2172, %v2170
  %v2283 = vpack.c.b16 %v2175, %v2173
  %v2284 = vpack.c.b16 %v2176, %v2174
  %v2285 = vpack.c.b16 %v2179, %v2177
  %v2286 = vpack.c.b16 %v2180, %v2178
  %v2287 = vpack.c.b16 %v2183, %v2181
  %v2288 = vpack.c.b16 %v2184, %v2182
  %v2289 = vpack.c.b16 %v2187, %v2185
  %v2290 = vpack.c.b16 %v2188, %v2186
  %v2291 = vpack.c.b16 %v2191, %v2189
  %v2292 = vpack.c.b16 %v2192, %v2190
  %v2293 = vpack.c.b16 %v2195, %v2193
  %v2294 = vpack.c.b16 %v2196, %v2194
  %v2295 = vpack.c.b16 %v2199, %v2197
  %v2296 = vpack.c.b16 %v2200, %v2198
  %v2297 = vpack.c.b16 %v2203, %v2201
  %v2298 = vpack.c.b16 %v2204, %v2202
  %v2299 = vpack.c.b16 %v2207, %v2205
  %v2300 = vpack.c.b16 %v2208, %v2206
  %v2301 = vpack.c.b16 %v2211, %v2209
  %v2302 = vpack.c.b16 %v2212, %v2210
  %v2303 = vpack.c.b16 %v2215, %v2213
  %v2304 = vpack.c.b16 %v2216, %v2214
  %v2305 = vpack.c.b16 %v2219, %v2217
  %v2306 = vpack.c.b16 %v2220, %v2218
  %v2307 = vpack.c.b16 %v2223, %v2221
  %v2308 = vpack.c.b16 %v2224, %v2222
  %v2309 = vpack.c.b16 %v2227, %v2225
  %v2310 = vpack.c.b16 %v2228, %v2226
  %v2311 = vpack.c.b16 %v2231, %v2229
  %v2312 = vpack.c.b16 %v2232, %v2230
  %v2313 = vpack.c.b16 %v2235, %v2233
  %v2314 = vpack.c.b16 %v2236, %v2234
  %v2315 = vpack.c.b16 %v2239, %v2237
  %v2316 = vpack.c.b16 %v2240, %v2238
  %v2317 = vpack.c.b16 %v2243, %v2241
  %v2318 = vpack.c.b16 %v2244, %v2242
  %v2319 = vpack.c.b16 %v2247, %v2245
  %v2320 = vpack.c.b16 %v2248, %v2246
  %v2321 = vpack.c.b16 %v2251, %v2249
  %v2322 = vpack.c.b16 %v2252, %v2250
  %v2323 = vpack.c.b16 %v2255, %v2253
  %v2324 = vpack.c.b16 %v2256, %v2254
  %v2325 = vpack.c.b16 %v2259, %v2257
  %v2326 = vpack.c.b16 %v2260, %v2258
  %v2327 = vpack.c.b16 %v2263, %v2261
  %v2328 = vpack.c.b16 %v2264, %v2262
  %v2393 = vunpack.c.l.b16 %v165
  %v2394 = vunpack.c.h.b16 %v165
  %v2395 = vunpack.c.l.b16 %v179
  %v2396 = vunpack.c.h.b16 %v179
  %v2397 = vunpack.c.l.b16 %v193
  %v2398 = vunpack.c.h.b16 %v193
  %v2399 = vunpack.c.l.b16 %v207
  %v2400 = vunpack.c.h.b16 %v207
  %v2401 = vunpack.c.l.b16 %v221
  %v2402 = vunpack.c.h.b16 %v221
  %v2403 = vunpack.c.l.b16 %v235
  %v2404 = vunpack.c.h.b16 %v235
  %v2405 = vunpack.c.l.b16 %v249
  %v2406 = vunpack.c.h.b16 %v249
  %v2407 = vunpack.c.l.b16 %v263
  %v2408 = vunpack.c.h.b16 %v263
  %v2409 = vunpack.c.l.b16 %v277
  %v2410 = vunpack.c.h.b16 %v277
  %v2411 = vunpack.c.l.b16 %v291
  %v2412 = vunpack.c.h.b16 %v291
  %v2413 = vunpack.c.l.b16 %v305
  %v2414 = vunpack.c.h.b16 %v305
  %v2415 = vunpack.c.l.b16 %v319
  %v2416 = vunpack.c.h.b16 %v319
  %v2417 = vunpack.c.l.b16 %v333
  %v2418 = vunpack.c.h.b16 %v333
  %v2419 = vunpack.c.l.b16 %v347
  %v2420 = vunpack.c.h.b16 %v347
  %v2421 = vunpack.c.l.b16 %v361
  %v2422 = vunpack.c.h.b16 %v361
  %v2423 = vunpack.c.l.b16 %v375
  %v2424 = vunpack.c.h.b16 %v375
  %v2425 = vunpack.c.l.b16 %v389
  %v2426 = vunpack.c.h.b16 %v389
  %v2427 = vunpack.c.l.b16 %v403
  %v2428 = vunpack.c.h.b16 %v403
  %v2429 = vunpack.c.l.b16 %v417
  %v2430 = vunpack.c.h.b16 %v417
  %v2431 = vunpack.c.l.b16 %v431
  %v2432 = vunpack.c.h.b16 %v431
  %v2433 = vunpack.c.l.b16 %v445
  %v2434 = vunpack.c.h.b16 %v445
  %v2435 = vunpack.c.l.b16 %v459
  %v2436 = vunpack.c.h.b16 %v459
  %v2437 = vunpack.c.l.b16 %v473
  %v2438 = vunpack.c.h.b16 %v473
  %v2439 = vunpack.c.l.b16 %v487
  %v2440 = vunpack.c.h.b16 %v487
  %v2441 = vunpack.c.l.b16 %v501
  %v2442 = vunpack.c.h.b16 %v501
  %v2443 = vunpack.c.l.b16 %v515
  %v2444 = vunpack.c.h.b16 %v515
  %v2445 = vunpack.c.l.b16 %v529
  %v2446 = vunpack.c.h.b16 %v529
  %v2447 = vunpack.c.l.b16 %v543
  %v2448 = vunpack.c.h.b16 %v543
  %v2449 = vunpack.c.l.b16 %v557
  %v2450 = vunpack.c.h.b16 %v557
  %v2451 = vunpack.c.l.b16 %v571
  %v2452 = vunpack.c.h.b16 %v571
  %v2453 = vunpack.c.l.b16 %v585
  %v2454 = vunpack.c.h.b16 %v585
  %v2455 = vunpack.c.l.b16 %v599
  %v2456 = vunpack.c.h.b16 %v599
  %v2457 = vunpack.c.l.b16 %v613
  %v2458 = vunpack.c.h.b16 %v613
  %v2459 = vunpack.c.l.b16 %v627
  %v2460 = vunpack.c.h.b16 %v627
  %v2461 = vunpack.c.l.b16 %v641
  %v2462 = vunpack.c.h.b16 %v641
  %v2463 = vunpack.c.l.b16 %v655
  %v2464 = vunpack.c.h.b16 %v655
  %v2465 = vunpack.c.l.b16 %v669
  %v2466 = vunpack.c.h.b16 %v669
  %v2467 = vunpack.c.l.b16 %v683
  %v2468 = vunpack.c.h.b16 %v683
  %v2469 = vunpack.c.l.b16 %v697
  %v2470 = vunpack.c.h.b16 %v697
  %v2471 = vunpack.c.l.b16 %v711
  %v2472 = vunpack.c.h.b16 %v711
  %v2473 = vunpack.c.l.b16 %v725
  %v2474 = vunpack.c.h.b16 %v725
  %v2475 = vunpack.c.l.b16 %v739
  %v2476 = vunpack.c.h.b16 %v739
  %v2477 = vunpack.c.l.b16 %v753
  %v2478 = vunpack.c.h.b16 %v753
  %v2479 = vunpack.c.l.b16 %v767
  %v2480 = vunpack.c.h.b16 %v767
  %v2481 = vunpack.c.l.b16 %v781
  %v2482 = vunpack.c.h.b16 %v781
  %v2483 = vunpack.c.l.b16 %v795
  %v2484 = vunpack.c.h.b16 %v795
  %v2485 = vunpack.c.l.b16 %v809
  %v2486 = vunpack.c.h.b16 %v809
  %v2487 = vunpack.c.l.b16 %v823
  %v2488 = vunpack.c.h.b16 %v823
  %v2489 = vunpack.c.l.b16 %v837
  %v2490 = vunpack.c.h.b16 %v837
  %v2491 = vunpack.c.l.b16 %v851
  %v2492 = vunpack.c.h.b16 %v851
  %v2493 = vunpack.c.l.b16 %v865
  %v2494 = vunpack.c.h.b16 %v865
  %v2495 = vunpack.c.l.b16 %v879
  %v2496 = vunpack.c.h.b16 %v879
  %v2497 = vunpack.c.l.b16 %v893
  %v2498 = vunpack.c.h.b16 %v893
  %v2499 = vunpack.c.l.b16 %v907
  %v2500 = vunpack.c.h.b16 %v907
  %v2501 = vunpack.c.l.b16 %v921
  %v2502 = vunpack.c.h.b16 %v921
  %v2503 = vunpack.c.l.b16 %v935
  %v2504 = vunpack.c.h.b16 %v935
  %v2505 = vunpack.c.l.b16 %v949
  %v2506 = vunpack.c.h.b16 %v949
  %v2507 = vunpack.c.l.b16 %v963
  %v2508 = vunpack.c.h.b16 %v963
  %v2509 = vunpack.c.l.b16 %v977
  %v2510 = vunpack.c.h.b16 %v977
  %v2511 = vunpack.c.l.b16 %v991
  %v2512 = vunpack.c.h.b16 %v991
  %v2513 = vunpack.c.l.b16 %v1005
  %v2514 = vunpack.c.h.b16 %v1005
  %v2515 = vunpack.c.l.b16 %v1019
  %v2516 = vunpack.c.h.b16 %v1019
  %v2517 = vunpack.c.l.b16 %v1033
  %v2518 = vunpack.c.h.b16 %v1033
  %v2519 = vunpack.c.l.b16 %v1047
  %v2520 = vunpack.c.h.b16 %v1047
  %v2521 = vpack.c.b16 %v2395, %v2393
  %v2522 = vpack.c.b16 %v2396, %v2394
  %v2523 = vpack.c.b16 %v2399, %v2397
  %v2524 = vpack.c.b16 %v2400, %v2398
  %v2525 = vpack.c.b16 %v2403, %v2401
  %v2526 = vpack.c.b16 %v2404, %v2402
  %v2527 = vpack.c.b16 %v2407, %v2405
  %v2528 = vpack.c.b16 %v2408, %v2406
  %v2529 = vpack.c.b16 %v2411, %v2409
  %v2530 = vpack.c.b16 %v2412, %v2410
  %v2531 = vpack.c.b16 %v2415, %v2413
  %v2532 = vpack.c.b16 %v2416, %v2414
  %v2533 = vpack.c.b16 %v2419, %v2417
  %v2534 = vpack.c.b16 %v2420, %v2418
  %v2535 = vpack.c.b16 %v2423, %v2421
  %v2536 = vpack.c.b16 %v2424, %v2422
  %v2537 = vpack.c.b16 %v2427, %v2425
  %v2538 = vpack.c.b16 %v2428, %v2426
  %v2539 = vpack.c.b16 %v2431, %v2429
  %v2540 = vpack.c.b16 %v2432, %v2430
  %v2541 = vpack.c.b16 %v2435, %v2433
  %v2542 = vpack.c.b16 %v2436, %v2434
  %v2543 = vpack.c.b16 %v2439, %v2437
  %v2544 = vpack.c.b16 %v2440, %v2438
  %v2545 = vpack.c.b16 %v2443, %v2441
  %v2546 = vpack.c.b16 %v2444, %v2442
  %v2547 = vpack.c.b16 %v2447, %v2445
  %v2548 = vpack.c.b16 %v2448, %v2446
  %v2549 = vpack.c.b16 %v2451, %v2449
  %v2550 = vpack.c.b16 %v2452, %v2450
  %v2551 = vpack.c.b16 %v2455, %v2453
  %v2552 = vpack.c.b16 %v2456, %v2454
  %v2553 = vpack.c.b16 %v2459, %v2457
  %v2554 = vpack.c.b16 %v2460, %v2458
  %v2555 = vpack.c.b16 %v2463, %v2461
  %v2556 = vpack.c.b16 %v2464, %v2462
  %v2557 = vpack.c.b16 %v2467, %v2465
  %v2558 = vpack.c.b16 %v2468, %v2466
  %v2559 = vpack.c.b16 %v2471, %v2469
  %v2560 = vpack.c.b16 %v2472, %v2470
  %v2561 = vpack.c.b16 %v2475, %v2473
  %v2562 = vpack.c.b16 %v2476, %v2474
  %v2563 = vpack.c.b16 %v2479, %v2477
  %v2564 = vpack.c.b16 %v2480, %v2478
  %v2565 = vpack.c.b16 %v2483, %v2481
  %v2566 = vpack.c.b16 %v2484, %v2482
  %v2567 = vpack.c.b16 %v2487, %v2485
  %v2568 = vpack.c.b16 %v2488, %v2486
  %v2569 = vpack.c.b16 %v2491, %v2489
  %v2570 = vpack.c.b16 %v2492, %v2490
  %v2571 = vpack.c.b16 %v2495, %v2493
  %v2572 = vpack.c.b16 %v2496, %v2494
  %v2573 = vpack.c.b16 %v2499, %v2497
  %v2574 = vpack.c.b16 %v2500, %v2498
  %v2575 = vpack.c.b16 %v2503, %v2501
  %v2576 = vpack.c.b16 %v2504, %v2502
  %v2577 = vpack.c.b16 %v2507, %v2505
  %v2578 = vpack.c.b16 %v2508, %v2506
  %v2579 = vpack.c.b16 %v2511, %v2509
  %v2580 = vpack.c.b16 %v2512, %v2510
  %v2581 = vpack.c.b16 %v2515, %v2513
  %v2582 = vpack.c.b16 %v2516, %v2514
  %v2583 = vpack.c.b16 %v2519, %v2517
  %v2584 = vpack.c.b16 %v2520, %v2518
  %v2713 = vunpack.c.l.b16 %v1049
  %v2714 = vunpack.c.h.b16 %v1049
  %v2715 = vunpack.c.l.b16 %v1050
  %v2716 = vunpack.c.h.b16 %v1050
  %v2717 = vunpack.c.l.b16 %v1051
  %v2718 = vunpack.c.h.b16 %v1051
  %v2719 = vunpack.c.l.b16 %v1052
  %v2720 = vunpack.c.h.b16 %v1052
  %v2721 = vunpack.c.l.b16 %v1053
  %v2722 = vunpack.c.h.b16 %v1053
  %v2723 = vunpack.c.l.b16 %v1054
  %v2724 = vunpack.c.h.b16 %v1054
  %v2725 = vunpack.c.l.b16 %v1055
  %v2726 = vunpack.c.h.b16 %v1055
  %v2727 = vunpack.c.l.b16 %v1056
  %v2728 = vunpack.c.h.b16 %v1056
  %v2729 = vunpack.c.l.b16 %v1057
  %v2730 = vunpack.c.h.b16 %v1057
  %v2731 = vunpack.c.l.b16 %v1058
  %v2732 = vunpack.c.h.b16 %v1058
  %v2733 = vunpack.c.l.b16 %v1059
  %v2734 = vunpack.c.h.b16 %v1059
  %v2735 = vunpack.c.l.b16 %v1060
  %v2736 = vunpack.c.h.b16 %v1060
  %v2737 = vunpack.c.l.b16 %v1061
  %v2738 = vunpack.c.h.b16 %v1061
  %v2739 = vunpack.c.l.b16 %v1062
  %v2740 = vunpack.c.h.b16 %v1062
  %v2741 = vunpack.c.l.b16 %v1063
  %v2742 = vunpack.c.h.b16 %v1063
  %v2743 = vunpack.c.l.b16 %v1064
  %v2744 = vunpack.c.h.b16 %v1064
  %v2745 = vunpack.c.l.b16 %v1065
  %v2746 = vunpack.c.h.b16 %v1065
  %v2747 = vunpack.c.l.b16 %v1066
  %v2748 = vunpack.c.h.b16 %v1066
  %v2749 = vunpack.c.l.b16 %v1067
  %v2750 = vunpack.c.h.b16 %v1067
  %v2751 = vunpack.c.l.b16 %v1068
  %v2752 = vunpack.c.h.b16 %v1068
  %v2753 = vunpack.c.l.b16 %v1069
  %v2754 = vunpack.c.h.b16 %v1069
  %v2755 = vunpack.c.l.b16 %v1070
  %v2756 = vunpack.c.h.b16 %v1070
  %v2757 = vunpack.c.l.b16 %v1071
  %v2758 = vunpack.c.h.b16 %v1071
  %v2759 = vunpack.c.l.b16 %v1072
  %v2760 = vunpack.c.h.b16 %v1072
  %v2761 = vunpack.c.l.b16 %v1073
  %v2762 = vunpack.c.h.b16 %v1073
  %v2763 = vunpack.c.l.b16 %v1074
  %v2764 = vunpack.c.h.b16 %v1074
  %v2765 = vunpack.c.l.b16 %v1075
  %v2766 = vunpack.c.h.b16 %v1075
  %v2767 = vunpack.c.l.b16 %v1076
  %v2768 = vunpack.c.h.b16 %v1076
  %v2769 = vunpack.c.l.b16 %v1077
  %v2770 = vunpack.c.h.b16 %v1077
  %v2771 = vunpack.c.l.b16 %v1078
  %v2772 = vunpack.c.h.b16 %v1078
  %v2773 = vunpack.c.l.b16 %v1079
  %v2774 = vunpack.c.h.b16 %v1079
  %v2775 = vunpack.c.l.b16 %v1080
  %v2776 = vunpack.c.h.b16 %v1080
  %v2777 = vunpack.c.l.b16 %v1081
  %v2778 = vunpack.c.h.b16 %v1081
  %v2779 = vunpack.c.l.b16 %v1082
  %v2780 = vunpack.c.h.b16 %v1082
  %v2781 = vunpack.c.l.b16 %v1083
  %v2782 = vunpack.c.h.b16 %v1083
  %v2783 = vunpack.c.l.b16 %v1084
  %v2784 = vunpack.c.h.b16 %v1084
  %v2785 = vunpack.c.l.b16 %v1085
  %v2786 = vunpack.c.h.b16 %v1085
  %v2787 = vunpack.c.l.b16 %v1086
  %v2788 = vunpack.c.h.b16 %v1086
  %v2789 = vunpack.c.l.b16 %v1087
  %v2790 = vunpack.c.h.b16 %v1087
  %v2791 = vunpack.c.l.b16 %v1088
  %v2792 = vunpack.c.h.b16 %v1088
  %v2793 = vunpack.c.l.b16 %v1089
  %v2794 = vunpack.c.h.b16 %v1089
  %v2795 = vunpack.c.l.b16 %v1090
  %v2796 = vunpack.c.h.b16 %v1090
  %v2797 = vunpack.c.l.b16 %v1091
  %v2798 = vunpack.c.h.b16 %v1091
  %v2799 = vunpack.c.l.b16 %v1092
  %v2800 = vunpack.c.h.b16 %v1092
  %v2801 = vunpack.c.l.b16 %v1093
  %v2802 = vunpack.c.h.b16 %v1093
  %v2803 = vunpack.c.l.b16 %v1094
  %v2804 = vunpack.c.h.b16 %v1094
  %v2805 = vunpack.c.l.b16 %v1095
  %v2806 = vunpack.c.h.b16 %v1095
  %v2807 = vunpack.c.l.b16 %v1096
  %v2808 = vunpack.c.h.b16 %v1096
  %v2809 = vunpack.c.l.b16 %v1097
  %v2810 = vunpack.c.h.b16 %v1097
  %v2811 = vunpack.c.l.b16 %v1098
  %v2812 = vunpack.c.h.b16 %v1098
  %v2813 = vunpack.c.l.b16 %v1099
  %v2814 = vunpack.c.h.b16 %v1099
  %v2815 = vunpack.c.l.b16 %v1100
  %v2816 = vunpack.c.h.b16 %v1100
  %v2817 = vunpack.c.l.b16 %v1101
  %v2818 = vunpack.c.h.b16 %v1101
  %v2819 = vunpack.c.l.b16 %v1102
  %v2820 = vunpack.c.h.b16 %v1102
  %v2821 = vunpack.c.l.b16 %v1103
  %v2822 = vunpack.c.h.b16 %v1103
  %v2823 = vunpack.c.l.b16 %v1104
  %v2824 = vunpack.c.h.b16 %v1104
  %v2825 = vunpack.c.l.b16 %v1105
  %v2826 = vunpack.c.h.b16 %v1105
  %v2827 = vunpack.c.l.b16 %v1106
  %v2828 = vunpack.c.h.b16 %v1106
  %v2829 = vunpack.c.l.b16 %v1107
  %v2830 = vunpack.c.h.b16 %v1107
  %v2831 = vunpack.c.l.b16 %v1108
  %v2832 = vunpack.c.h.b16 %v1108
  %v2833 = vunpack.c.l.b16 %v1109
  %v2834 = vunpack.c.h.b16 %v1109
  %v2835 = vunpack.c.l.b16 %v1110
  %v2836 = vunpack.c.h.b16 %v1110
  %v2837 = vunpack.c.l.b16 %v1111
  %v2838 = vunpack.c.h.b16 %v1111
  %v2839 = vunpack.c.l.b16 %v1112
  %v2840 = vunpack.c.h.b16 %v1112
  %v2841 = vpack.c.b16 %v2715, %v2713
  %v2842 = vpack.c.b16 %v2716, %v2714
  %v2843 = vpack.c.b16 %v2719, %v2717
  %v2844 = vpack.c.b16 %v2720, %v2718
  %v2845 = vpack.c.b16 %v2723, %v2721
  %v2846 = vpack.c.b16 %v2724, %v2722
  %v2847 = vpack.c.b16 %v2727, %v2725
  %v2848 = vpack.c.b16 %v2728, %v2726
  %v2849 = vpack.c.b16 %v2731, %v2729
  %v2850 = vpack.c.b16 %v2732, %v2730
  %v2851 = vpack.c.b16 %v2735, %v2733
  %v2852 = vpack.c.b16 %v2736, %v2734
  %v2853 = vpack.c.b16 %v2739, %v2737
  %v2854 = vpack.c.b16 %v2740, %v2738
  %v2855 = vpack.c.b16 %v2743, %v2741
  %v2856 = vpack.c.b16 %v2744, %v2742
  %v2857 = vpack.c.b16 %v2747, %v2745
  %v2858 = vpack.c.b16 %v2748, %v2746
  %v2859 = vpack.c.b16 %v2751, %v2749
  %v2860 = vpack.c.b16 %v2752, %v2750
  %v2861 = vpack.c.b16 %v2755, %v2753
  %v2862 = vpack.c.b16 %v2756, %v2754
  %v2863 = vpack.c.b16 %v2759, %v2757
  %v2864 = vpack.c.b16 %v2760, %v2758
  %v2865 = vpack.c.b16 %v2763, %v2761
  %v2866 = vpack.c.b16 %v2764, %v2762
  %v2867 = vpack.c.b16 %v2767, %v2765
  %v2868 = vpack.c.b16 %v2768, %v2766
  %v2869 = vpack.c.b16 %v2771, %v2769
  %v2870 = vpack.c.b16 %v2772, %v2770
  %v2871 = vpack.c.b16 %v2775, %v2773
  %v2872 = vpack.c.b16 %v2776, %v2774
  %v2873 = vpack.c.b16 %v2779, %v2777
  %v2874 = vpack.c.b16 %v2780, %v2778
  %v2875 = vpack.c.b16 %v2783, %v2781
  %v2876 = vpack.c.b16 %v2784, %v2782
  %v2877 = vpack.c.b16 %v2787, %v2785
  %v2878 = vpack.c.b16 %v2788, %v2786
  %v2879 = vpack.c.b16 %v2791, %v2789
  %v2880 = vpack.c.b16 %v2792, %v2790
  %v2881 = vpack.c.b16 %v2795, %v2793
  %v2882 = vpack.c.b16 %v2796, %v2794
  %v2883 = vpack.c.b16 %v2799, %v2797
  %v2884 = vpack.c.b16 %v2800, %v2798
  %v2885 = vpack.c.b16 %v2803, %v2801
  %v2886 = vpack.c.b16 %v2804, %v2802
  %v2887 = vpack.c.b16 %v2807, %v2805
  %v2888 = vpack.c.b16 %v2808, %v2806
  %v2889 = vpack.c.b16 %v2811, %v2809
  %v2890 = vpack.c.b16 %v2812, %v2810
  %v2891 = vpack.c.b16 %v2815, %v2813
  %v2892 = vpack.c.b16 %v2816, %v2814
  %v2893 = vpack.c.b16 %v2819, %v2817
  %v2894 = vpack.c.b16 %v2820, %v2818
  %v2895 = vpack.c.b16 %v2823, %v2821
  %v2896 = vpack.c.b16 %v2824, %v2822
  %v2897 = vpack.c.b16 %v2827, %v2825
  %v2898 = vpack.c.b16 %v2828, %v2826
  %v2899 = vpack.c.b16 %v2831, %v2829
  %v2900 = vpack.c.b16 %v2832, %v2830
  %v2901 = vpack.c.b16 %v2835, %v2833
  %v2902 = vpack.c.b16 %v2836, %v2834
  %v2903 = vpack.c.b16 %v2839, %v2837
  %v2904 = vpack.c.b16 %v2840, %v2838
  %v2969 = vunpack.c.l.b16 %v1190
  %v2970 = vunpack.c.h.b16 %v1190
  %v2971 = vunpack.c.l.b16 %v1204
  %v2972 = vunpack.c.h.b16 %v1204
  %v2973 = vunpack.c.l.b16 %v1218
  %v2974 = vunpack.c.h.b16 %v1218
  %v2975 = vunpack.c.l.b16 %v1232
  %v2976 = vunpack.c.h.b16 %v1232
  %v2977 = vunpack.c.l.b16 %v1246
  %v2978 = vunpack.c.h.b16 %v1246
  %v2979 = vunpack.c.l.b16 %v1260
  %v2980 = vunpack.c.h.b16 %v1260
  %v2981 = vunpack.c.l.b16 %v1274
  %v2982 = vunpack.c.h.b16 %v1274
  %v2983 = vunpack.c.l.b16 %v1288
  %v2984 = vunpack.c.h.b16 %v1288
  %v2985 = vunpack.c.l.b16 %v1302
  %v2986 = vunpack.c.h.b16 %v1302
  %v2987 = vunpack.c.l.b16 %v1316
  %v2988 = vunpack.c.h.b16 %v1316
  %v2989 = vunpack.c.l.b16 %v1330
  %v2990 = vunpack.c.h.b16 %v1330
  %v2991 = vunpack.c.l.b16 %v1344
  %v2992 = vunpack.c.h.b16 %v1344
  %v2993 = vunpack.c.l.b16 %v1358
  %v2994 = vunpack.c.h.b16 %v1358
  %v2995 = vunpack.c.l.b16 %v1372
  %v2996 = vunpack.c.h.b16 %v1372
  %v2997 = vunpack.c.l.b16 %v1386
  %v2998 = vunpack.c.h.b16 %v1386
  %v2999 = vunpack.c.l.b16 %v1400
  %v3000 = vunpack.c.h.b16 %v1400
  %v3001 = vunpack.c.l.b16 %v1414
  %v3002 = vunpack.c.h.b16 %v1414
  %v3003 = vunpack.c.l.b16 %v1428
  %v3004 = vunpack.c.h.b16 %v1428
  %v3005 = vunpack.c.l.b16 %v1442
  %v3006 = vunpack.c.h.b16 %v1442
  %v3007 = vunpack.c.l.b16 %v1456
  %v3008 = vunpack.c.h.b16 %v1456
  %v3009 = vunpack.c.l.b16 %v1470
  %v3010 = vunpack.c.h.b16 %v1470
  %v3011 = vunpack.c.l.b16 %v1484
  %v3012 = vunpack.c.h.b16 %v1484
  %v3013 = vunpack.c.l.b16 %v1498
  %v3014 = vunpack.c.h.b16 %v1498
  %v3015 = vunpack.c.l.b16 %v1512
  %v3016 = vunpack.c.h.b16 %v1512
  %v3017 = vunpack.c.l.b16 %v1526
  %v3018 = vunpack.c.h.b16 %v1526
  %v3019 = vunpack.c.l.b16 %v1540
  %v3020 = vunpack.c.h.b16 %v1540
  %v3021 = vunpack.c.l.b16 %v1554
  %v3022 = vunpack.c.h.b16 %v1554
  %v3023 = vunpack.c.l.b16 %v1568
  %v3024 = vunpack.c.h.b16 %v1568
  %v3025 = vunpack.c.l.b16 %v1582
  %v3026 = vunpack.c.h.b16 %v1582
  %v3027 = vunpack.c.l.b16 %v1596
  %v3028 = vunpack.c.h.b16 %v1596
  %v3029 = vunpack.c.l.b16 %v1610
  %v3030 = vunpack.c.h.b16 %v1610
  %v3031 = vunpack.c.l.b16 %v1624
  %v3032 = vunpack.c.h.b16 %v1624
  %v3033 = vunpack.c.l.b16 %v1638
  %v3034 = vunpack.c.h.b16 %v1638
  %v3035 = vunpack.c.l.b16 %v1652
  %v3036 = vunpack.c.h.b16 %v1652
  %v3037 = vunpack.c.l.b16 %v1666
  %v3038 = vunpack.c.h.b16 %v1666
  %v3039 = vunpack.c.l.b16 %v1680
  %v3040 = vunpack.c.h.b16 %v1680
  %v3041 = vunpack.c.l.b16 %v1694
  %v3042 = vunpack.c.h.b16 %v1694
  %v3043 = vunpack.c.l.b16 %v1708
  %v3044 = vunpack.c.h.b16 %v1708
  %v3045 = vunpack.c.l.b16 %v1722
  %v3046 = vunpack.c.h.b16 %v1722
  %v3047 = vunpack.c.l.b16 %v1736
  %v3048 = vunpack.c.h.b16 %v1736
  %v3049 = vunpack.c.l.b16 %v1750
  %v3050 = vunpack.c.h.b16 %v1750
  %v3051 = vunpack.c.l.b16 %v1764
  %v3052 = vunpack.c.h.b16 %v1764
  %v3053 = vunpack.c.l.b16 %v1778
  %v3054 = vunpack.c.h.b16 %v1778
  %v3055 = vunpack.c.l.b16 %v1792
  %v3056 = vunpack.c.h.b16 %v1792
  %v3057 = vunpack.c.l.b16 %v1806
  %v3058 = vunpack.c.h.b16 %v1806
  %v3059 = vunpack.c.l.b16 %v1820
  %v3060 = vunpack.c.h.b16 %v1820
  %v3061 = vunpack.c.l.b16 %v1834
  %v3062 = vunpack.c.h.b16 %v1834
  %v3063 = vunpack.c.l.b16 %v1848
  %v3064 = vunpack.c.h.b16 %v1848
  %v3065 = vunpack.c.l.b16 %v1862
  %v3066 = vunpack.c.h.b16 %v1862
  %v3067 = vunpack.c.l.b16 %v1876
  %v3068 = vunpack.c.h.b16 %v1876
  %v3069 = vunpack.c.l.b16 %v1890
  %v3070 = vunpack.c.h.b16 %v1890
  %v3071 = vunpack.c.l.b16 %v1904
  %v3072 = vunpack.c.h.b16 %v1904
  %v3073 = vunpack.c.l.b16 %v1918
  %v3074 = vunpack.c.h.b16 %v1918
  %v3075 = vunpack.c.l.b16 %v1932
  %v3076 = vunpack.c.h.b16 %v1932
  %v3077 = vunpack.c.l.b16 %v1946
  %v3078 = vunpack.c.h.b16 %v1946
  %v3079 = vunpack.c.l.b16 %v1960
  %v3080 = vunpack.c.h.b16 %v1960
  %v3081 = vunpack.c.l.b16 %v1974
  %v3082 = vunpack.c.h.b16 %v1974
  %v3083 = vunpack.c.l.b16 %v1988
  %v3084 = vunpack.c.h.b16 %v1988
  %v3085 = vunpack.c.l.b16 %v2002
  %v3086 = vunpack.c.h.b16 %v2002
  %v3087 = vunpack.c.l.b16 %v2016
  %v3088 = vunpack.c.h.b16 %v2016
  %v3089 = vunpack.c.l.b16 %v2030
  %v3090 = vunpack.c.h.b16 %v2030
  %v3091 = vunpack.c.l.b16 %v2044
  %v3092 = vunpack.c.h.b16 %v2044
  %v3093 = vunpack.c.l.b16 %v2058
  %v3094 = vunpack.c.h.b16 %v2058
  %v3095 = vunpack.c.l.b16 %v2072
  %v3096 = vunpack.c.h.b16 %v2072
  %v3097 = vpack.c.b16 %v2971, %v2969
  %v3098 = vpack.c.b16 %v2972, %v2970
  %v3099 = vpack.c.b16 %v2975, %v2973
  %v3100 = vpack.c.b16 %v2976, %v2974
  %v3101 = vpack.c.b16 %v2979, %v2977
  %v3102 = vpack.c.b16 %v2980, %v2978
  %v3103 = vpack.c.b16 %v2983, %v2981
  %v3104 = vpack.c.b16 %v2984, %v2982
  %v3105 = vpack.c.b16 %v2987, %v2985
  %v3106 = vpack.c.b16 %v2988, %v2986
  %v3107 = vpack.c.b16 %v2991, %v2989
  %v3108 = vpack.c.b16 %v2992, %v2990
  %v3109 = vpack.c.b16 %v2995, %v2993
  %v3110 = vpack.c.b16 %v2996, %v2994
  %v3111 = vpack.c.b16 %v2999, %v2997
  %v3112 = vpack.c.b16 %v3000, %v2998
  %v3113 = vpack.c.b16 %v3003, %v3001
  %v3114 = vpack.c.b16 %v3004, %v3002
  %v3115 = vpack.c.b16 %v3007, %v3005
  %v3116 = vpack.c.b16 %v3008, %v3006
  %v3117 = vpack.c.b16 %v3011, %v3009
  %v3118 = vpack.c.b16 %v3012, %v3010
  %v3119 = vpack.c.b16 %v3015, %v3013
  %v3120 = vpack.c.b16 %v3016, %v3014
  %v3121 = vpack.c.b16 %v3019, %v3017
  %v3122 = vpack.c.b16 %v3020, %v3018
  %v3123 = vpack.c.b16 %v3023, %v3021
  %v3124 = vpack.c.b16 %v3024, %v3022
  %v3125 = vpack.c.b16 %v3027, %v3025
  %v3126 = vpack.c.b16 %v3028, %v3026
  %v3127 = vpack.c.b16 %v3031, %v3029
  %v3128 = vpack.c.b16 %v3032, %v3030
  %v3129 = vpack.c.b16 %v3035, %v3033
  %v3130 = vpack.c.b16 %v3036, %v3034
  %v3131 = vpack.c.b16 %v3039, %v3037
  %v3132 = vpack.c.b16 %v3040, %v3038
  %v3133 = vpack.c.b16 %v3043, %v3041
  %v3134 = vpack.c.b16 %v3044, %v3042
  %v3135 = vpack.c.b16 %v3047, %v3045
  %v3136 = vpack.c.b16 %v3048, %v3046
  %v3137 = vpack.c.b16 %v3051, %v3049
  %v3138 = vpack.c.b16 %v3052, %v3050
  %v3139 = vpack.c.b16 %v3055, %v3053
  %v3140 = vpack.c.b16 %v3056, %v3054
  %v3141 = vpack.c.b16 %v3059, %v3057
  %v3142 = vpack.c.b16 %v3060, %v3058
  %v3143 = vpack.c.b16 %v3063, %v3061
  %v3144 = vpack.c.b16 %v3064, %v3062
  %v3145 = vpack.c.b16 %v3067, %v3065
  %v3146 = vpack.c.b16 %v3068, %v3066
  %v3147 = vpack.c.b16 %v3071, %v3069
  %v3148 = vpack.c.b16 %v3072, %v3070
  %v3149 = vpack.c.b16 %v3075, %v3073
  %v3150 = vpack.c.b16 %v3076, %v3074
  %v3151 = vpack.c.b16 %v3079, %v3077
  %v3152 = vpack.c.b16 %v3080, %v3078
  %v3153 = vpack.c.b16 %v3083, %v3081
  %v3154 = vpack.c.b16 %v3084, %v3082
  %v3155 = vpack.c.b16 %v3087, %v3085
  %v3156 = vpack.c.b16 %v3088, %v3086
  %v3157 = vpack.c.b16 %v3091, %v3089
  %v3158 = vpack.c.b16 %v3092, %v3090
  %v3159 = vpack.c.b16 %v3095, %v3093
  %v3160 = vpack.c.b16 %v3096, %v3094
  %v3225 = vld [vmem:[%s1] sm:$0xf]
  %v3226 = vld [vmem:[%s1 + $0x4] sm:$0xf]
  %v3227 = vld [vmem:[%s1 + $0x8] sm:$0xf]
  %v3228 = vld [vmem:[%s1 + $0xc] sm:$0xf]
  %v3229 = vld [vmem:[%s1 + $0x10] sm:$0xf]
  %v3230 = vld [vmem:[%s1 + $0x14] sm:$0xf]
  %v3231 = vld [vmem:[%s1 + $0x18] sm:$0xf]
  %v3232 = vld [vmem:[%s1 + $0x1c] sm:$0xf]
  %v3233 = vld [vmem:[%s1 + $0x20] sm:$0xf]
  %v3234 = vld [vmem:[%s1 + $0x24] sm:$0xf]
  %v3235 = vld [vmem:[%s1 + $0x28] sm:$0xf]
  %v3236 = vld [vmem:[%s1 + $0x2c] sm:$0xf]
  %v3237 = vld [vmem:[%s1 + $0x30] sm:$0xf]
  %v3238 = vld [vmem:[%s1 + $0x34] sm:$0xf]
  %v3239 = vld [vmem:[%s1 + $0x38] sm:$0xf]
  %v3240 = vld [vmem:[%s1 + $0x3c] sm:$0xf]
  %v3241 = vld [vmem:[%s1 + $0x40] sm:$0xf]
  %v3242 = vld [vmem:[%s1 + $0x44] sm:$0xf]
  %v3243 = vld [vmem:[%s1 + $0x48] sm:$0xf]
  %v3244 = vld [vmem:[%s1 + $0x4c] sm:$0xf]
  %v3245 = vld [vmem:[%s1 + $0x50] sm:$0xf]
  %v3246 = vld [vmem:[%s1 + $0x54] sm:$0xf]
  %v3247 = vld [vmem:[%s1 + $0x58] sm:$0xf]
  %v3248 = vld [vmem:[%s1 + $0x5c] sm:$0xf]
  %v3249 = vld [vmem:[%s1 + $0x60] sm:$0xf]
  %v3250 = vld [vmem:[%s1 + $0x64] sm:$0xf]
  %v3251 = vld [vmem:[%s1 + $0x68] sm:$0xf]
  %v3252 = vld [vmem:[%s1 + $0x6c] sm:$0xf]
  %v3253 = vld [vmem:[%s1 + $0x70] sm:$0xf]
  %v3254 = vld [vmem:[%s1 + $0x74] sm:$0xf]
  %v3255 = vld [vmem:[%s1 + $0x78] sm:$0xf]
  %v3256 = vld [vmem:[%s1 + $0x7c] sm:$0xf]
  %v3257 = vld [vmem:[%s1 + $0x80] sm:$0xf]
  %v3258 = vld [vmem:[%s1 + $0x84] sm:$0xf]
  %v3259 = vld [vmem:[%s1 + $0x88] sm:$0xf]
  %v3260 = vld [vmem:[%s1 + $0x8c] sm:$0xf]
  %v3261 = vld [vmem:[%s1 + $0x90] sm:$0xf]
  %v3262 = vld [vmem:[%s1 + $0x94] sm:$0xf]
  %v3263 = vld [vmem:[%s1 + $0x98] sm:$0xf]
  %v3264 = vld [vmem:[%s1 + $0x9c] sm:$0xf]
  %v3265 = vld [vmem:[%s1 + $0xa0] sm:$0xf]
  %v3266 = vld [vmem:[%s1 + $0xa4] sm:$0xf]
  %v3267 = vld [vmem:[%s1 + $0xa8] sm:$0xf]
  %v3268 = vld [vmem:[%s1 + $0xac] sm:$0xf]
  %v3269 = vld [vmem:[%s1 + $0xb0] sm:$0xf]
  %v3270 = vld [vmem:[%s1 + $0xb4] sm:$0xf]
  %v3271 = vld [vmem:[%s1 + $0xb8] sm:$0xf]
  %v3272 = vld [vmem:[%s1 + $0xbc] sm:$0xf]
  %v3273 = vld [vmem:[%s1 + $0xc0] sm:$0xf]
  %v3274 = vld [vmem:[%s1 + $0xc4] sm:$0xf]
  %v3275 = vld [vmem:[%s1 + $0xc8] sm:$0xf]
  %v3276 = vld [vmem:[%s1 + $0xcc] sm:$0xf]
  %v3277 = vld [vmem:[%s1 + $0xd0] sm:$0xf]
  %v3278 = vld [vmem:[%s1 + $0xd4] sm:$0xf]
  %v3279 = vld [vmem:[%s1 + $0xd8] sm:$0xf]
  %v3280 = vld [vmem:[%s1 + $0xdc] sm:$0xf]
  %v3281 = vld [vmem:[%s1 + $0xe0] sm:$0xf]
  %v3282 = vld [vmem:[%s1 + $0xe4] sm:$0xf]
  %v3283 = vld [vmem:[%s1 + $0xe8] sm:$0xf]
  %v3284 = vld [vmem:[%s1 + $0xec] sm:$0xf]
  %v3285 = vld [vmem:[%s1 + $0xf0] sm:$0xf]
  %v3286 = vld [vmem:[%s1 + $0xf4] sm:$0xf]
  %v3287 = vld [vmem:[%s1 + $0xf8] sm:$0xf]
  %v3288 = vld [vmem:[%s1 + $0xfc] sm:$0xf]
  %v3289 = vld [vmem:[%s1 + $0x100] sm:$0xf]
  %v3290 = vld [vmem:[%s1 + $0x104] sm:$0xf]
  %v3291 = vld [vmem:[%s1 + $0x108] sm:$0xf]
  %v3292 = vld [vmem:[%s1 + $0x10c] sm:$0xf]
  %v3293 = vld [vmem:[%s1 + $0x110] sm:$0xf]
  %v3294 = vld [vmem:[%s1 + $0x114] sm:$0xf]
  %v3295 = vld [vmem:[%s1 + $0x118] sm:$0xf]
  %v3296 = vld [vmem:[%s1 + $0x11c] sm:$0xf]
  %v3297 = vld [vmem:[%s1 + $0x120] sm:$0xf]
  %v3298 = vld [vmem:[%s1 + $0x124] sm:$0xf]
  %v3299 = vld [vmem:[%s1 + $0x128] sm:$0xf]
  %v3300 = vld [vmem:[%s1 + $0x12c] sm:$0xf]
  %v3301 = vld [vmem:[%s1 + $0x130] sm:$0xf]
  %v3302 = vld [vmem:[%s1 + $0x134] sm:$0xf]
  %v3303 = vld [vmem:[%s1 + $0x138] sm:$0xf]
  %v3304 = vld [vmem:[%s1 + $0x13c] sm:$0xf]
  %v3305 = vld [vmem:[%s1 + $0x140] sm:$0xf]
  %v3306 = vld [vmem:[%s1 + $0x144] sm:$0xf]
  %v3307 = vld [vmem:[%s1 + $0x148] sm:$0xf]
  %v3308 = vld [vmem:[%s1 + $0x14c] sm:$0xf]
  %v3309 = vld [vmem:[%s1 + $0x150] sm:$0xf]
  %v3310 = vld [vmem:[%s1 + $0x154] sm:$0xf]
  %v3311 = vld [vmem:[%s1 + $0x158] sm:$0xf]
  %v3312 = vld [vmem:[%s1 + $0x15c] sm:$0xf]
  %v3313 = vld [vmem:[%s1 + $0x160] sm:$0xf]
  %v3314 = vld [vmem:[%s1 + $0x164] sm:$0xf]
  %v3315 = vld [vmem:[%s1 + $0x168] sm:$0xf]
  %v3316 = vld [vmem:[%s1 + $0x16c] sm:$0xf]
  %v3317 = vld [vmem:[%s1 + $0x170] sm:$0xf]
  %v3318 = vld [vmem:[%s1 + $0x174] sm:$0xf]
  %v3319 = vld [vmem:[%s1 + $0x178] sm:$0xf]
  %v3320 = vld [vmem:[%s1 + $0x17c] sm:$0xf]
  %v3321 = vld [vmem:[%s1 + $0x180] sm:$0xf]
  %v3322 = vld [vmem:[%s1 + $0x184] sm:$0xf]
  %v3323 = vld [vmem:[%s1 + $0x188] sm:$0xf]
  %v3324 = vld [vmem:[%s1 + $0x18c] sm:$0xf]
  %v3325 = vld [vmem:[%s1 + $0x190] sm:$0xf]
  %v3326 = vld [vmem:[%s1 + $0x194] sm:$0xf]
  %v3327 = vld [vmem:[%s1 + $0x198] sm:$0xf]
  %v3328 = vld [vmem:[%s1 + $0x19c] sm:$0xf]
  %v3329 = vld [vmem:[%s1 + $0x1a0] sm:$0xf]
  %v3330 = vld [vmem:[%s1 + $0x1a4] sm:$0xf]
  %v3331 = vld [vmem:[%s1 + $0x1a8] sm:$0xf]
  %v3332 = vld [vmem:[%s1 + $0x1ac] sm:$0xf]
  %v3333 = vld [vmem:[%s1 + $0x1b0] sm:$0xf]
  %v3334 = vld [vmem:[%s1 + $0x1b4] sm:$0xf]
  %v3335 = vld [vmem:[%s1 + $0x1b8] sm:$0xf]
  %v3336 = vld [vmem:[%s1 + $0x1bc] sm:$0xf]
  %v3337 = vld [vmem:[%s1 + $0x1c0] sm:$0xf]
  %v3338 = vld [vmem:[%s1 + $0x1c4] sm:$0xf]
  %v3339 = vld [vmem:[%s1 + $0x1c8] sm:$0xf]
  %v3340 = vld [vmem:[%s1 + $0x1cc] sm:$0xf]
  %v3341 = vld [vmem:[%s1 + $0x1d0] sm:$0xf]
  %v3342 = vld [vmem:[%s1 + $0x1d4] sm:$0xf]
  %v3343 = vld [vmem:[%s1 + $0x1d8] sm:$0xf]
  %v3344 = vld [vmem:[%s1 + $0x1dc] sm:$0xf]
  %v3345 = vld [vmem:[%s1 + $0x1e0] sm:$0xf]
  %v3346 = vld [vmem:[%s1 + $0x1e4] sm:$0xf]
  %v3347 = vld [vmem:[%s1 + $0x1e8] sm:$0xf]
  %v3348 = vld [vmem:[%s1 + $0x1ec] sm:$0xf]
  %v3349 = vld [vmem:[%s1 + $0x1f0] sm:$0xf]
  %v3350 = vld [vmem:[%s1 + $0x1f4] sm:$0xf]
  %v3351 = vld [vmem:[%s1 + $0x1f8] sm:$0xf]
  %v3352 = vld [vmem:[%s1 + $0x1fc] sm:$0xf]
  %v3353 = vld [vmem:[%s2] sm:$0x1]
  %v3355 = vlaneseq
  %v3356 = vshrl.u32 %v3355, 7
  %v3357 = vsub.s32 0, %v3356
  %v3358 = vrot.slane %v3353, %v3357
  %v3488 = vunpack.c.l.b16 %v3225
  %v3489 = vunpack.c.l.b16 %v3226
  %v3490 = vunpack.c.l.b16 %v3227
  %v3491 = vunpack.c.l.b16 %v3228
  %v3492 = vunpack.c.l.b16 %v3229
  %v3493 = vunpack.c.l.b16 %v3230
  %v3494 = vunpack.c.l.b16 %v3231
  %v3495 = vunpack.c.l.b16 %v3232
  %v3496 = vunpack.c.l.b16 %v3233
  %v3497 = vunpack.c.l.b16 %v3234
  %v3498 = vunpack.c.l.b16 %v3235
  %v3499 = vunpack.c.l.b16 %v3236
  %v3500 = vunpack.c.l.b16 %v3237
  %v3501 = vunpack.c.l.b16 %v3238
  %v3502 = vunpack.c.l.b16 %v3239
  %v3503 = vunpack.c.l.b16 %v3240
  %v3504 = vunpack.c.l.b16 %v3241
  %v3505 = vunpack.c.l.b16 %v3242
  %v3506 = vunpack.c.l.b16 %v3243
  %v3507 = vunpack.c.l.b16 %v3244
  %v3508 = vunpack.c.l.b16 %v3245
  %v3509 = vunpack.c.l.b16 %v3246
  %v3510 = vunpack.c.l.b16 %v3247
  %v3511 = vunpack.c.l.b16 %v3248
  %v3512 = vunpack.c.l.b16 %v3249
  %v3513 = vunpack.c.l.b16 %v3250
  %v3514 = vunpack.c.l.b16 %v3251
  %v3515 = vunpack.c.l.b16 %v3252
  %v3516 = vunpack.c.l.b16 %v3253
  %v3517 = vunpack.c.l.b16 %v3254
  %v3518 = vunpack.c.l.b16 %v3255
  %v3519 = vunpack.c.l.b16 %v3256
  %v3520 = vunpack.c.l.b16 %v3257
  %v3521 = vunpack.c.l.b16 %v3258
  %v3522 = vunpack.c.l.b16 %v3259
  %v3523 = vunpack.c.l.b16 %v3260
  %v3524 = vunpack.c.l.b16 %v3261
  %v3525 = vunpack.c.l.b16 %v3262
  %v3526 = vunpack.c.l.b16 %v3263
  %v3527 = vunpack.c.l.b16 %v3264
  %v3528 = vunpack.c.l.b16 %v3265
  %v3529 = vunpack.c.l.b16 %v3266
  %v3530 = vunpack.c.l.b16 %v3267
  %v3531 = vunpack.c.l.b16 %v3268
  %v3532 = vunpack.c.l.b16 %v3269
  %v3533 = vunpack.c.l.b16 %v3270
  %v3534 = vunpack.c.l.b16 %v3271
  %v3535 = vunpack.c.l.b16 %v3272
  %v3536 = vunpack.c.l.b16 %v3273
  %v3537 = vunpack.c.l.b16 %v3274
  %v3538 = vunpack.c.l.b16 %v3275
  %v3539 = vunpack.c.l.b16 %v3276
  %v3540 = vunpack.c.l.b16 %v3277
  %v3541 = vunpack.c.l.b16 %v3278
  %v3542 = vunpack.c.l.b16 %v3279
  %v3543 = vunpack.c.l.b16 %v3280
  %v3544 = vunpack.c.l.b16 %v3281
  %v3545 = vunpack.c.l.b16 %v3282
  %v3546 = vunpack.c.l.b16 %v3283
  %v3547 = vunpack.c.l.b16 %v3284
  %v3548 = vunpack.c.l.b16 %v3285
  %v3549 = vunpack.c.l.b16 %v3286
  %v3550 = vunpack.c.l.b16 %v3287
  %v3551 = vunpack.c.l.b16 %v3288
  %v3552 = vunpack.c.l.b16 %v3289
  %v3553 = vunpack.c.l.b16 %v3290
  %v3554 = vunpack.c.l.b16 %v3291
  %v3555 = vunpack.c.l.b16 %v3292
  %v3556 = vunpack.c.l.b16 %v3293
  %v3557 = vunpack.c.l.b16 %v3294
  %v3558 = vunpack.c.l.b16 %v3295
  %v3559 = vunpack.c.l.b16 %v3296
  %v3560 = vunpack.c.l.b16 %v3297
  %v3561 = vunpack.c.l.b16 %v3298
  %v3562 = vunpack.c.l.b16 %v3299
  %v3563 = vunpack.c.l.b16 %v3300
  %v3564 = vunpack.c.l.b16 %v3301
  %v3565 = vunpack.c.l.b16 %v3302
  %v3566 = vunpack.c.l.b16 %v3303
  %v3567 = vunpack.c.l.b16 %v3304
  %v3568 = vunpack.c.l.b16 %v3305
  %v3569 = vunpack.c.l.b16 %v3306
  %v3570 = vunpack.c.l.b16 %v3307
  %v3571 = vunpack.c.l.b16 %v3308
  %v3572 = vunpack.c.l.b16 %v3309
  %v3573 = vunpack.c.l.b16 %v3310
  %v3574 = vunpack.c.l.b16 %v3311
  %v3575 = vunpack.c.l.b16 %v3312
  %v3576 = vunpack.c.l.b16 %v3313
  %v3577 = vunpack.c.l.b16 %v3314
  %v3578 = vunpack.c.l.b16 %v3315
  %v3579 = vunpack.c.l.b16 %v3316
  %v3580 = vunpack.c.l.b16 %v3317
  %v3581 = vunpack.c.l.b16 %v3318
  %v3582 = vunpack.c.l.b16 %v3319
  %v3583 = vunpack.c.l.b16 %v3320
  %v3584 = vunpack.c.l.b16 %v3321
  %v3585 = vunpack.c.l.b16 %v3322
  %v3586 = vunpack.c.l.b16 %v3323
  %v3587 = vunpack.c.l.b16 %v3324
  %v3588 = vunpack.c.l.b16 %v3325
  %v3589 = vunpack.c.l.b16 %v3326
  %v3590 = vunpack.c.l.b16 %v3327
  %v3591 = vunpack.c.l.b16 %v3328
  %v3592 = vunpack.c.l.b16 %v3329
  %v3593 = vunpack.c.l.b16 %v3330
  %v3594 = vunpack.c.l.b16 %v3331
  %v3595 = vunpack.c.l.b16 %v3332
  %v3596 = vunpack.c.l.b16 %v3333
  %v3597 = vunpack.c.l.b16 %v3334
  %v3598 = vunpack.c.l.b16 %v3335
  %v3599 = vunpack.c.l.b16 %v3336
  %v3600 = vunpack.c.l.b16 %v3337
  %v3601 = vunpack.c.l.b16 %v3338
  %v3602 = vunpack.c.l.b16 %v3339
  %v3603 = vunpack.c.l.b16 %v3340
  %v3604 = vunpack.c.l.b16 %v3341
  %v3605 = vunpack.c.l.b16 %v3342
  %v3606 = vunpack.c.l.b16 %v3343
  %v3607 = vunpack.c.l.b16 %v3344
  %v3608 = vunpack.c.l.b16 %v3345
  %v3609 = vunpack.c.l.b16 %v3346
  %v3610 = vunpack.c.l.b16 %v3347
  %v3611 = vunpack.c.l.b16 %v3348
  %v3612 = vunpack.c.l.b16 %v3349
  %v3613 = vunpack.c.l.b16 %v3350
  %v3614 = vunpack.c.l.b16 %v3351
  %v3615 = vunpack.c.l.b16 %v3352
  %v3616 = vpack.c.b16 %v3489, %v3488
  %v3617 = vpack.c.b16 %v3491, %v3490
  %v3618 = vpack.c.b16 %v3493, %v3492
  %v3619 = vpack.c.b16 %v3495, %v3494
  %v3620 = vpack.c.b16 %v3497, %v3496
  %v3621 = vpack.c.b16 %v3499, %v3498
  %v3622 = vpack.c.b16 %v3501, %v3500
  %v3623 = vpack.c.b16 %v3503, %v3502
  %v3624 = vpack.c.b16 %v3505, %v3504
  %v3625 = vpack.c.b16 %v3507, %v3506
  %v3626 = vpack.c.b16 %v3509, %v3508
  %v3627 = vpack.c.b16 %v3511, %v3510
  %v3628 = vpack.c.b16 %v3513, %v3512
  %v3629 = vpack.c.b16 %v3515, %v3514
  %v3630 = vpack.c.b16 %v3517, %v3516
  %v3631 = vpack.c.b16 %v3519, %v3518
  %v3632 = vpack.c.b16 %v3521, %v3520
  %v3633 = vpack.c.b16 %v3523, %v3522
  %v3634 = vpack.c.b16 %v3525, %v3524
  %v3635 = vpack.c.b16 %v3527, %v3526
  %v3636 = vpack.c.b16 %v3529, %v3528
  %v3637 = vpack.c.b16 %v3531, %v3530
  %v3638 = vpack.c.b16 %v3533, %v3532
  %v3639 = vpack.c.b16 %v3535, %v3534
  %v3640 = vpack.c.b16 %v3537, %v3536
  %v3641 = vpack.c.b16 %v3539, %v3538
  %v3642 = vpack.c.b16 %v3541, %v3540
  %v3643 = vpack.c.b16 %v3543, %v3542
  %v3644 = vpack.c.b16 %v3545, %v3544
  %v3645 = vpack.c.b16 %v3547, %v3546
  %v3646 = vpack.c.b16 %v3549, %v3548
  %v3647 = vpack.c.b16 %v3551, %v3550
  %v3648 = vpack.c.b16 %v3553, %v3552
  %v3649 = vpack.c.b16 %v3555, %v3554
  %v3650 = vpack.c.b16 %v3557, %v3556
  %v3651 = vpack.c.b16 %v3559, %v3558
  %v3652 = vpack.c.b16 %v3561, %v3560
  %v3653 = vpack.c.b16 %v3563, %v3562
  %v3654 = vpack.c.b16 %v3565, %v3564
  %v3655 = vpack.c.b16 %v3567, %v3566
  %v3656 = vpack.c.b16 %v3569, %v3568
  %v3657 = vpack.c.b16 %v3571, %v3570
  %v3658 = vpack.c.b16 %v3573, %v3572
  %v3659 = vpack.c.b16 %v3575, %v3574
  %v3660 = vpack.c.b16 %v3577, %v3576
  %v3661 = vpack.c.b16 %v3579, %v3578
  %v3662 = vpack.c.b16 %v3581, %v3580
  %v3663 = vpack.c.b16 %v3583, %v3582
  %v3664 = vpack.c.b16 %v3585, %v3584
  %v3665 = vpack.c.b16 %v3587, %v3586
  %v3666 = vpack.c.b16 %v3589, %v3588
  %v3667 = vpack.c.b16 %v3591, %v3590
  %v3668 = vpack.c.b16 %v3593, %v3592
  %v3669 = vpack.c.b16 %v3595, %v3594
  %v3670 = vpack.c.b16 %v3597, %v3596
  %v3671 = vpack.c.b16 %v3599, %v3598
  %v3672 = vpack.c.b16 %v3601, %v3600
  %v3673 = vpack.c.b16 %v3603, %v3602
  %v3674 = vpack.c.b16 %v3605, %v3604
  %v3675 = vpack.c.b16 %v3607, %v3606
  %v3676 = vpack.c.b16 %v3609, %v3608
  %v3677 = vpack.c.b16 %v3611, %v3610
  %v3678 = vpack.c.b16 %v3613, %v3612
  %v3679 = vpack.c.b16 %v3615, %v3614
  %3744 = vmatprep.subr.bf16.mxu0 0
  %3745 = vmatpush1.bf16.msra.mxu0 %v3616
  %3746 = vmatprep.subr.bf16.mxu0 0
  %3747 = vmatpush1.bf16.msra.mxu0 %v3617
  %3748 = vmatprep.subr.bf16.mxu0 0
  %3749 = vmatpush1.bf16.msra.mxu0 %v3618
  %3750 = vmatprep.subr.bf16.mxu0 0
  %3751 = vmatpush1.bf16.msra.mxu0 %v3619
  %3752 = vmatprep.subr.bf16.mxu0 0
  %3753 = vmatpush1.bf16.msra.mxu0 %v3620
  %3754 = vmatprep.subr.bf16.mxu0 0
  %3755 = vmatpush1.bf16.msra.mxu0 %v3621
  %3756 = vmatprep.subr.bf16.mxu0 0
  %3757 = vmatpush1.bf16.msra.mxu0 %v3622
  %3758 = vmatprep.subr.bf16.mxu0 0
  %3759 = vmatpush1.bf16.msra.mxu0 %v3623
  %3760 = vmatprep.subr.bf16.mxu0 0
  %3761 = vmatpush1.bf16.msra.mxu0 %v3624
  %3762 = vmatprep.subr.bf16.mxu0 0
  %3763 = vmatpush1.bf16.msra.mxu0 %v3625
  %3764 = vmatprep.subr.bf16.mxu0 0
  %3765 = vmatpush1.bf16.msra.mxu0 %v3626
  %3766 = vmatprep.subr.bf16.mxu0 0
  %3767 = vmatpush1.bf16.msra.mxu0 %v3627
  %3768 = vmatprep.subr.bf16.mxu0 0
  %3769 = vmatpush1.bf16.msra.mxu0 %v3628
  %3770 = vmatprep.subr.bf16.mxu0 0
  %3771 = vmatpush1.bf16.msra.mxu0 %v3629
  %3772 = vmatprep.subr.bf16.mxu0 0
  %3773 = vmatpush1.bf16.msra.mxu0 %v3630
  %3774 = vmatprep.subr.bf16.mxu0 0
  %3775 = vmatpush1.bf16.msra.mxu0 %v3631
  %3776 = vmatprep.mubr.bf16.mxu0 %v2266
  %3777 = vmatmul.mubr.bf16.gmra.mrb[0].mxu0 %v2265
  %v3778 = vpop.f32.mrb[0].mxu0
  %v3779 = vadd.f32 %v3358, %v3778
  %v3780 = vpop.f32.mrb[0].mxu0
  %v3781 = vpop.f32.mrb[0].mxu0
  %v3782 = vadd.f32 %v3358, %v3781
  %v3783 = vpop.f32.mrb[0].mxu0
  %3784 = vmatprep.mubr.bf16.mxu0 %v2268
  %3785 = vmatmul.mubr.bf16.gmra.mrb[0].mxu0 %v2267
  %v3786 = vpop.f32.mrb[0].mxu0
  %v3787 = vadd.f32 %v3358, %v3786
  %v3788 = vpop.f32.mrb[0].mxu0
  %v3789 = vpop.f32.mrb[0].mxu0
  %v3790 = vadd.f32 %v3358, %v3789
  %v3791 = vpop.f32.mrb[0].mxu0
  %3792 = vmatprep.mubr.bf16.mxu0 %v2270
  %3793 = vmatmul.mubr.bf16.gmra.mrb[0].mxu0 %v2269
  %v3794 = vpop.f32.mrb[0].mxu0
  %v3795 = vadd.f32 %v3358, %v3794
  %v3796 = vpop.f32.mrb[0].mxu0
  %v3797 = vpop.f32.mrb[0].mxu0
  %v3798 = vadd.f32 %v3358, %v3797
  %v3799 = vpop.f32.mrb[0].mxu0
  %3800 = vmatprep.mubr.bf16.mxu0 %v2272
  %3801 = vmatmul.mubr.bf16.gmra.mrb[0].mxu0 %v2271
  %v3802 = vpop.f32.mrb[0].mxu0
  %v3803 = vadd.f32 %v3358, %v3802
  %v3804 = vpop.f32.mrb[0].mxu0
  %v3805 = vpop.f32.mrb[0].mxu0
  %v3806 = vadd.f32 %v3358, %v3805
  %v3807 = vpop.f32.mrb[0].mxu0
  %3808 = vmatprep.mubr.bf16.mxu0 %v2274
  %3809 = vmatmul.mubr.bf16.gmra.mrb[0].mxu0 %v2273
  %v3810 = vpop.f32.mrb[0].mxu0
  %v3811 = vadd.f32 %v3358, %v3810
  %v3812 = vpop.f32.mrb[0].mxu0
  %v3813 = vpop.f32.mrb[0].mxu0
  %v3814 = vadd.f32 %v3358, %v3813
  %v3815 = vpop.f32.mrb[0].mxu0
  %3816 = vmatprep.mubr.bf16.mxu0 %v2276
  %3817 = vmatmul.mubr.bf16.gmra.mrb[0].mxu0 %v2275
  %v3818 = vpop.f32.mrb[0].mxu0
  %v3819 = vadd.f32 %v3358, %v3818
  %v3820 = vpop.f32.mrb[0].mxu0
  %v3821 = vpop.f32.mrb[0].mxu0
  %v3822 = vadd.f32 %v3358, %v3821
  %v3823 = vpop.f32.mrb[0].mxu0
  %3824 = vmatprep.mubr.bf16.mxu0 %v2278
  %3825 = vmatmul.mubr.bf16.gmra.mrb[0].mxu0 %v2277
  %v3826 = vpop.f32.mrb[0].mxu0
  %v3827 = vadd.f32 %v3358, %v3826
  %v3828 = vpop.f32.mrb[0].mxu0
  %v3829 = vpop.f32.mrb[0].mxu0
  %v3830 = vadd.f32 %v3358, %v3829
  %v3831 = vpop.f32.mrb[0].mxu0
  %3832 = vmatprep.mubr.bf16.mxu0 %v2280
  %3833 = vmatmul.mubr.bf16.gmra.mrb[0].mxu0 %v2279
  %v3834 = vpop.f32.mrb[0].mxu0
  %v3835 = vadd.f32 %v3358, %v3834
  %v3836 = vpop.f32.mrb[0].mxu0
  %v3837 = vpop.f32.mrb[0].mxu0
  %v3838 = vadd.f32 %v3358, %v3837
  %v3839 = vpop.f32.mrb[0].mxu0
  %3840 = vmatprep.mubr.bf16.mxu0 %v2282
  %3841 = vmatmul.mubr.bf16.gmra.mrb[0].mxu0 %v2281
  %v3842 = vpop.f32.mrb[0].mxu0
  %v3843 = vadd.f32 %v3358, %v3842
  %v3844 = vpop.f32.mrb[0].mxu0
  %v3845 = vpop.f32.mrb[0].mxu0
  %v3846 = vadd.f32 %v3358, %v3845
  %v3847 = vpop.f32.mrb[0].mxu0
  %3848 = vmatprep.mubr.bf16.mxu0 %v2284
  %3849 = vmatmul.mubr.bf16.gmra.mrb[0].mxu0 %v2283
  %v3850 = vpop.f32.mrb[0].mxu0
  %v3851 = vadd.f32 %v3358, %v3850
  %v3852 = vpop.f32.mrb[0].mxu0
  %v3853 = vpop.f32.mrb[0].mxu0
  %v3854 = vadd.f32 %v3358, %v3853
  %v3855 = vpop.f32.mrb[0].mxu0
  %3856 = vmatprep.mubr.bf16.mxu0 %v2286
  %3857 = vmatmul.mubr.bf16.gmra.mrb[0].mxu0 %v2285
  %v3858 = vpop.f32.mrb[0].mxu0
  %v3859 = vadd.f32 %v3358, %v3858
  %v3860 = vpop.f32.mrb[0].mxu0
  %v3861 = vpop.f32.mrb[0].mxu0
  %v3862 = vadd.f32 %v3358, %v3861
  %v3863 = vpop.f32.mrb[0].mxu0
  %3864 = vmatprep.mubr.bf16.mxu0 %v2288
  %3865 = vmatmul.mubr.bf16.gmra.mrb[0].mxu0 %v2287
  %v3866 = vpop.f32.mrb[0].mxu0
  %v3867 = vadd.f32 %v3358, %v3866
  %v3868 = vpop.f32.mrb[0].mxu0
  %v3869 = vpop.f32.mrb[0].mxu0
  %v3870 = vadd.f32 %v3358, %v3869
  %v3871 = vpop.f32.mrb[0].mxu0
  %3872 = vmatprep.mubr.bf16.mxu0 %v2290
  %3873 = vmatmul.mubr.bf16.gmra.mrb[0].mxu0 %v2289
  %v3874 = vpop.f32.mrb[0].mxu0
  %v3875 = vadd.f32 %v3358, %v3874
  %v3876 = vpop.f32.mrb[0].mxu0
  %v3877 = vpop.f32.mrb[0].mxu0
  %v3878 = vadd.f32 %v3358, %v3877
  %v3879 = vpop.f32.mrb[0].mxu0
  %3880 = vmatprep.mubr.bf16.mxu0 %v2292
  %3881 = vmatmul.mubr.bf16.gmra.mrb[0].mxu0 %v2291
  %v3882 = vpop.f32.mrb[0].mxu0
  %v3883 = vadd.f32 %v3358, %v3882
  %v3884 = vpop.f32.mrb[0].mxu0
  %v3885 = vpop.f32.mrb[0].mxu0
  %v3886 = vadd.f32 %v3358, %v3885
  %v3887 = vpop.f32.mrb[0].mxu0
  %3888 = vmatprep.mubr.bf16.mxu0 %v2294
  %3889 = vmatmul.mubr.bf16.gmra.mrb[0].mxu0 %v2293
  %v3890 = vpop.f32.mrb[0].mxu0
  %v3891 = vadd.f32 %v3358, %v3890
  %v3892 = vpop.f32.mrb[0].mxu0
  %v3893 = vpop.f32.mrb[0].mxu0
  %v3894 = vadd.f32 %v3358, %v3893
  %v3895 = vpop.f32.mrb[0].mxu0
  %3896 = vmatprep.mubr.bf16.mxu0 %v2296
  %3897 = vmatmul.mubr.bf16.gmra.mrb[0].mxu0 %v2295
  %v3898 = vpop.f32.mrb[0].mxu0
  %v3899 = vadd.f32 %v3358, %v3898
  %v3900 = vpop.f32.mrb[0].mxu0
  %v3901 = vpop.f32.mrb[0].mxu0
  %v3902 = vadd.f32 %v3358, %v3901
  %v3903 = vpop.f32.mrb[0].mxu0
  %3904 = vmatprep.mubr.bf16.mxu0 %v2298
  %3905 = vmatmul.mubr.bf16.gmra.mrb[0].mxu0 %v2297
  %v3906 = vpop.f32.mrb[0].mxu0
  %v3907 = vadd.f32 %v3358, %v3906
  %v3908 = vpop.f32.mrb[0].mxu0
  %v3909 = vpop.f32.mrb[0].mxu0
  %v3910 = vadd.f32 %v3358, %v3909
  %v3911 = vpop.f32.mrb[0].mxu0
  %3912 = vmatprep.mubr.bf16.mxu0 %v2300
  %3913 = vmatmul.mubr.bf16.gmra.mrb[0].mxu0 %v2299
  %v3914 = vpop.f32.mrb[0].mxu0
  %v3915 = vadd.f32 %v3358, %v3914
  %v3916 = vpop.f32.mrb[0].mxu0
  %v3917 = vpop.f32.mrb[0].mxu0
  %v3918 = vadd.f32 %v3358, %v3917
  %v3919 = vpop.f32.mrb[0].mxu0
  %3920 = vmatprep.mubr.bf16.mxu0 %v2302
  %3921 = vmatmul.mubr.bf16.gmra.mrb[0].mxu0 %v2301
  %v3922 = vpop.f32.mrb[0].mxu0
  %v3923 = vadd.f32 %v3358, %v3922
  %v3924 = vpop.f32.mrb[0].mxu0
  %v3925 = vpop.f32.mrb[0].mxu0
  %v3926 = vadd.f32 %v3358, %v3925
  %v3927 = vpop.f32.mrb[0].mxu0
  %3928 = vmatprep.mubr.bf16.mxu0 %v2304
  %3929 = vmatmul.mubr.bf16.gmra.mrb[0].mxu0 %v2303
  %v3930 = vpop.f32.mrb[0].mxu0
  %v3931 = vadd.f32 %v3358, %v3930
  %v3932 = vpop.f32.mrb[0].mxu0
  %v3933 = vpop.f32.mrb[0].mxu0
  %v3934 = vadd.f32 %v3358, %v3933
  %v3935 = vpop.f32.mrb[0].mxu0
  %3936 = vmatprep.mubr.bf16.mxu0 %v2306
  %3937 = vmatmul.mubr.bf16.gmra.mrb[0].mxu0 %v2305
  %v3938 = vpop.f32.mrb[0].mxu0
  %v3939 = vadd.f32 %v3358, %v3938
  %v3940 = vpop.f32.mrb[0].mxu0
  %v3941 = vpop.f32.mrb[0].mxu0
  %v3942 = vadd.f32 %v3358, %v3941
  %v3943 = vpop.f32.mrb[0].mxu0
  %3944 = vmatprep.mubr.bf16.mxu0 %v2308
  %3945 = vmatmul.mubr.bf16.gmra.mrb[0].mxu0 %v2307
  %v3946 = vpop.f32.mrb[0].mxu0
  %v3947 = vadd.f32 %v3358, %v3946
  %v3948 = vpop.f32.mrb[0].mxu0
  %v3949 = vpop.f32.mrb[0].mxu0
  %v3950 = vadd.f32 %v3358, %v3949
  %v3951 = vpop.f32.mrb[0].mxu0
  %3952 = vmatprep.mubr.bf16.mxu0 %v2310
  %3953 = vmatmul.mubr.bf16.gmra.mrb[0].mxu0 %v2309
  %v3954 = vpop.f32.mrb[0].mxu0
  %v3955 = vadd.f32 %v3358, %v3954
  %v3956 = vpop.f32.mrb[0].mxu0
  %v3957 = vpop.f32.mrb[0].mxu0
  %v3958 = vadd.f32 %v3358, %v3957
  %v3959 = vpop.f32.mrb[0].mxu0
  %3960 = vmatprep.mubr.bf16.mxu0 %v2312
  %3961 = vmatmul.mubr.bf16.gmra.mrb[0].mxu0 %v2311
  %v3962 = vpop.f32.mrb[0].mxu0
  %v3963 = vadd.f32 %v3358, %v3962
  %v3964 = vpop.f32.mrb[0].mxu0
  %v3965 = vpop.f32.mrb[0].mxu0
  %v3966 = vadd.f32 %v3358, %v3965
  %v3967 = vpop.f32.mrb[0].mxu0
  %3968 = vmatprep.mubr.bf16.mxu0 %v2314
  %3969 = vmatmul.mubr.bf16.gmra.mrb[0].mxu0 %v2313
  %v3970 = vpop.f32.mrb[0].mxu0
  %v3971 = vadd.f32 %v3358, %v3970
  %v3972 = vpop.f32.mrb[0].mxu0
  %v3973 = vpop.f32.mrb[0].mxu0
  %v3974 = vadd.f32 %v3358, %v3973
  %v3975 = vpop.f32.mrb[0].mxu0
  %3976 = vmatprep.mubr.bf16.mxu0 %v2316
  %3977 = vmatmul.mubr.bf16.gmra.mrb[0].mxu0 %v2315
  %v3978 = vpop.f32.mrb[0].mxu0
  %v3979 = vadd.f32 %v3358, %v3978
  %v3980 = vpop.f32.mrb[0].mxu0
  %v3981 = vpop.f32.mrb[0].mxu0
  %v3982 = vadd.f32 %v3358, %v3981
  %v3983 = vpop.f32.mrb[0].mxu0
  %3984 = vmatprep.mubr.bf16.mxu0 %v2318
  %3985 = vmatmul.mubr.bf16.gmra.mrb[0].mxu0 %v2317
  %v3986 = vpop.f32.mrb[0].mxu0
  %v3987 = vadd.f32 %v3358, %v3986
  %v3988 = vpop.f32.mrb[0].mxu0
  %v3989 = vpop.f32.mrb[0].mxu0
  %v3990 = vadd.f32 %v3358, %v3989
  %v3991 = vpop.f32.mrb[0].mxu0
  %3992 = vmatprep.mubr.bf16.mxu0 %v2320
  %3993 = vmatmul.mubr.bf16.gmra.mrb[0].mxu0 %v2319
  %v3994 = vpop.f32.mrb[0].mxu0
  %v3995 = vadd.f32 %v3358, %v3994
  %v3996 = vpop.f32.mrb[0].mxu0
  %v3997 = vpop.f32.mrb[0].mxu0
  %v3998 = vadd.f32 %v3358, %v3997
  %v3999 = vpop.f32.mrb[0].mxu0
  %4000 = vmatprep.mubr.bf16.mxu0 %v2322
  %4001 = vmatmul.mubr.bf16.gmra.mrb[0].mxu0 %v2321
  %v4002 = vpop.f32.mrb[0].mxu0
  %v4003 = vadd.f32 %v3358, %v4002
  %v4004 = vpop.f32.mrb[0].mxu0
  %v4005 = vpop.f32.mrb[0].mxu0
  %v4006 = vadd.f32 %v3358, %v4005
  %v4007 = vpop.f32.mrb[0].mxu0
  %4008 = vmatprep.mubr.bf16.mxu0 %v2324
  %4009 = vmatmul.mubr.bf16.gmra.mrb[0].mxu0 %v2323
  %v4010 = vpop.f32.mrb[0].mxu0
  %v4011 = vadd.f32 %v3358, %v4010
  %v4012 = vpop.f32.mrb[0].mxu0
  %v4013 = vpop.f32.mrb[0].mxu0
  %v4014 = vadd.f32 %v3358, %v4013
  %v4015 = vpop.f32.mrb[0].mxu0
  %4016 = vmatprep.mubr.bf16.mxu0 %v2326
  %4017 = vmatmul.mubr.bf16.gmra.mrb[0].mxu0 %v2325
  %v4018 = vpop.f32.mrb[0].mxu0
  %v4019 = vadd.f32 %v3358, %v4018
  %v4020 = vpop.f32.mrb[0].mxu0
  %v4021 = vpop.f32.mrb[0].mxu0
  %v4022 = vadd.f32 %v3358, %v4021
  %v4023 = vpop.f32.mrb[0].mxu0
  %4024 = vmatprep.mubr.bf16.mxu0 %v2328
  %4025 = vmatmul.mubr.bf16.gmra.mrb[0].mxu0 %v2327
  %v4026 = vpop.f32.mrb[0].mxu0
  %v4027 = vadd.f32 %v3358, %v4026
  %v4028 = vpop.f32.mrb[0].mxu0
  %v4029 = vpop.f32.mrb[0].mxu0
  %v4030 = vadd.f32 %v3358, %v4029
  %v4031 = vpop.f32.mrb[0].mxu0
  %4032 = vdwg.mxu0
  %4033 = vmatprep.subr.bf16.mxu0 0
  %4034 = vmatpush1.bf16.msra.mxu0 %v3632
  %4035 = vmatprep.subr.bf16.mxu0 0
  %4036 = vmatpush1.bf16.msra.mxu0 %v3633
  %4037 = vmatprep.subr.bf16.mxu0 0
  %4038 = vmatpush1.bf16.msra.mxu0 %v3634
  %4039 = vmatprep.subr.bf16.mxu0 0
  %4040 = vmatpush1.bf16.msra.mxu0 %v3635
  %4041 = vmatprep.subr.bf16.mxu0 0
  %4042 = vmatpush1.bf16.msra.mxu0 %v3636
  %4043 = vmatprep.subr.bf16.mxu0 0
  %4044 = vmatpush1.bf16.msra.mxu0 %v3637
  %4045 = vmatprep.subr.bf16.mxu0 0
  %4046 = vmatpush1.bf16.msra.mxu0 %v3638
  %4047 = vmatprep.subr.bf16.mxu0 0
  %4048 = vmatpush1.bf16.msra.mxu0 %v3639
  %4049 = vmatprep.subr.bf16.mxu0 0
  %4050 = vmatpush1.bf16.msra.mxu0 %v3640
  %4051 = vmatprep.subr.bf16.mxu0 0
  %4052 = vmatpush1.bf16.msra.mxu0 %v3641
  %4053 = vmatprep.subr.bf16.mxu0 0
  %4054 = vmatpush1.bf16.msra.mxu0 %v3642
  %4055 = vmatprep.subr.bf16.mxu0 0
  %4056 = vmatpush1.bf16.msra.mxu0 %v3643
  %4057 = vmatprep.subr.bf16.mxu0 0
  %4058 = vmatpush1.bf16.msra.mxu0 %v3644
  %4059 = vmatprep.subr.bf16.mxu0 0
  %4060 = vmatpush1.bf16.msra.mxu0 %v3645
  %4061 = vmatprep.subr.bf16.mxu0 0
  %4062 = vmatpush1.bf16.msra.mxu0 %v3646
  %4063 = vmatprep.subr.bf16.mxu0 0
  %4064 = vmatpush1.bf16.msra.mxu0 %v3647
  %4065 = vmatprep.mubr.bf16.mxu0 %v2522
  %4066 = vmatmul.mubr.bf16.gmra.mrb[0].mxu0 %v2521
  %v4067 = vpop.f32.mrb[0].mxu0
  %v4068 = vadd.f32 %v3779, %v4067
  %v4069 = vpop.f32.mrb[0].mxu0
  %v4070 = vpop.f32.mrb[0].mxu0
  %v4071 = vadd.f32 %v3782, %v4070
  %v4072 = vpop.f32.mrb[0].mxu0
  %4073 = vmatprep.mubr.bf16.mxu0 %v2524
  %4074 = vmatmul.mubr.bf16.gmra.mrb[0].mxu0 %v2523
  %v4075 = vpop.f32.mrb[0].mxu0
  %v4076 = vadd.f32 %v3787, %v4075
  %v4077 = vpop.f32.mrb[0].mxu0
  %v4078 = vpop.f32.mrb[0].mxu0
  %v4079 = vadd.f32 %v3790, %v4078
  %v4080 = vpop.f32.mrb[0].mxu0
  %4081 = vmatprep.mubr.bf16.mxu0 %v2526
  %4082 = vmatmul.mubr.bf16.gmra.mrb[0].mxu0 %v2525
  %v4083 = vpop.f32.mrb[0].mxu0
  %v4084 = vadd.f32 %v3795, %v4083
  %v4085 = vpop.f32.mrb[0].mxu0
  %v4086 = vpop.f32.mrb[0].mxu0
  %v4087 = vadd.f32 %v3798, %v4086
  %v4088 = vpop.f32.mrb[0].mxu0
  %4089 = vmatprep.mubr.bf16.mxu0 %v2528
  %4090 = vmatmul.mubr.bf16.gmra.mrb[0].mxu0 %v2527
  %v4091 = vpop.f32.mrb[0].mxu0
  %v4092 = vadd.f32 %v3803, %v4091
  %v4093 = vpop.f32.mrb[0].mxu0
  %v4094 = vpop.f32.mrb[0].mxu0
  %v4095 = vadd.f32 %v3806, %v4094
  %v4096 = vpop.f32.mrb[0].mxu0
  %4097 = vmatprep.mubr.bf16.mxu0 %v2530
  %4098 = vmatmul.mubr.bf16.gmra.mrb[0].mxu0 %v2529
  %v4099 = vpop.f32.mrb[0].mxu0
  %v4100 = vadd.f32 %v3811, %v4099
  %v4101 = vpop.f32.mrb[0].mxu0
  %v4102 = vpop.f32.mrb[0].mxu0
  %v4103 = vadd.f32 %v3814, %v4102
  %v4104 = vpop.f32.mrb[0].mxu0
  %4105 = vmatprep.mubr.bf16.mxu0 %v2532
  %4106 = vmatmul.mubr.bf16.gmra.mrb[0].mxu0 %v2531
  %v4107 = vpop.f32.mrb[0].mxu0
  %v4108 = vadd.f32 %v3819, %v4107
  %v4109 = vpop.f32.mrb[0].mxu0
  %v4110 = vpop.f32.mrb[0].mxu0
  %v4111 = vadd.f32 %v3822, %v4110
  %v4112 = vpop.f32.mrb[0].mxu0
  %4113 = vmatprep.mubr.bf16.mxu0 %v2534
  %4114 = vmatmul.mubr.bf16.gmra.mrb[0].mxu0 %v2533
  %v4115 = vpop.f32.mrb[0].mxu0
  %v4116 = vadd.f32 %v3827, %v4115
  %v4117 = vpop.f32.mrb[0].mxu0
  %v4118 = vpop.f32.mrb[0].mxu0
  %v4119 = vadd.f32 %v3830, %v4118
  %v4120 = vpop.f32.mrb[0].mxu0
  %4121 = vmatprep.mubr.bf16.mxu0 %v2536
  %4122 = vmatmul.mubr.bf16.gmra.mrb[0].mxu0 %v2535
  %v4123 = vpop.f32.mrb[0].mxu0
  %v4124 = vadd.f32 %v3835, %v4123
  %v4125 = vpop.f32.mrb[0].mxu0
  %v4126 = vpop.f32.mrb[0].mxu0
  %v4127 = vadd.f32 %v3838, %v4126
  %v4128 = vpop.f32.mrb[0].mxu0
  %4129 = vmatprep.mubr.bf16.mxu0 %v2538
  %4130 = vmatmul.mubr.bf16.gmra.mrb[0].mxu0 %v2537
  %v4131 = vpop.f32.mrb[0].mxu0
  %v4132 = vadd.f32 %v3843, %v4131
  %v4133 = vpop.f32.mrb[0].mxu0
  %v4134 = vpop.f32.mrb[0].mxu0
  %v4135 = vadd.f32 %v3846, %v4134
  %v4136 = vpop.f32.mrb[0].mxu0
  %4137 = vmatprep.mubr.bf16.mxu0 %v2540
  %4138 = vmatmul.mubr.bf16.gmra.mrb[0].mxu0 %v2539
  %v4139 = vpop.f32.mrb[0].mxu0
  %v4140 = vadd.f32 %v3851, %v4139
  %v4141 = vpop.f32.mrb[0].mxu0
  %v4142 = vpop.f32.mrb[0].mxu0
  %v4143 = vadd.f32 %v3854, %v4142
  %v4144 = vpop.f32.mrb[0].mxu0
  %4145 = vmatprep.mubr.bf16.mxu0 %v2542
  %4146 = vmatmul.mubr.bf16.gmra.mrb[0].mxu0 %v2541
  %v4147 = vpop.f32.mrb[0].mxu0
  %v4148 = vadd.f32 %v3859, %v4147
  %v4149 = vpop.f32.mrb[0].mxu0
  %v4150 = vpop.f32.mrb[0].mxu0
  %v4151 = vadd.f32 %v3862, %v4150
  %v4152 = vpop.f32.mrb[0].mxu0
  %4153 = vmatprep.mubr.bf16.mxu0 %v2544
  %4154 = vmatmul.mubr.bf16.gmra.mrb[0].mxu0 %v2543
  %v4155 = vpop.f32.mrb[0].mxu0
  %v4156 = vadd.f32 %v3867, %v4155
  %v4157 = vpop.f32.mrb[0].mxu0
  %v4158 = vpop.f32.mrb[0].mxu0
  %v4159 = vadd.f32 %v3870, %v4158
  %v4160 = vpop.f32.mrb[0].mxu0
  %4161 = vmatprep.mubr.bf16.mxu0 %v2546
  %4162 = vmatmul.mubr.bf16.gmra.mrb[0].mxu0 %v2545
  %v4163 = vpop.f32.mrb[0].mxu0
  %v4164 = vadd.f32 %v3875, %v4163
  %v4165 = vpop.f32.mrb[0].mxu0
  %v4166 = vpop.f32.mrb[0].mxu0
  %v4167 = vadd.f32 %v3878, %v4166
  %v4168 = vpop.f32.mrb[0].mxu0
  %4169 = vmatprep.mubr.bf16.mxu0 %v2548
  %4170 = vmatmul.mubr.bf16.gmra.mrb[0].mxu0 %v2547
  %v4171 = vpop.f32.mrb[0].mxu0
  %v4172 = vadd.f32 %v3883, %v4171
  %v4173 = vpop.f32.mrb[0].mxu0
  %v4174 = vpop.f32.mrb[0].mxu0
  %v4175 = vadd.f32 %v3886, %v4174
  %v4176 = vpop.f32.mrb[0].mxu0
  %4177 = vmatprep.mubr.bf16.mxu0 %v2550
  %4178 = vmatmul.mubr.bf16.gmra.mrb[0].mxu0 %v2549
  %v4179 = vpop.f32.mrb[0].mxu0
  %v4180 = vadd.f32 %v3891, %v4179
  %v4181 = vpop.f32.mrb[0].mxu0
  %v4182 = vpop.f32.mrb[0].mxu0
  %v4183 = vadd.f32 %v3894, %v4182
  %v4184 = vpop.f32.mrb[0].mxu0
  %4185 = vmatprep.mubr.bf16.mxu0 %v2552
  %4186 = vmatmul.mubr.bf16.gmra.mrb[0].mxu0 %v2551
  %v4187 = vpop.f32.mrb[0].mxu0
  %v4188 = vadd.f32 %v3899, %v4187
  %v4189 = vpop.f32.mrb[0].mxu0
  %v4190 = vpop.f32.mrb[0].mxu0
  %v4191 = vadd.f32 %v3902, %v4190
  %v4192 = vpop.f32.mrb[0].mxu0
  %4193 = vmatprep.mubr.bf16.mxu0 %v2554
  %4194 = vmatmul.mubr.bf16.gmra.mrb[0].mxu0 %v2553
  %v4195 = vpop.f32.mrb[0].mxu0
  %v4196 = vadd.f32 %v3907, %v4195
  %v4197 = vpop.f32.mrb[0].mxu0
  %v4198 = vpop.f32.mrb[0].mxu0
  %v4199 = vadd.f32 %v3910, %v4198
  %v4200 = vpop.f32.mrb[0].mxu0
  %4201 = vmatprep.mubr.bf16.mxu0 %v2556
  %4202 = vmatmul.mubr.bf16.gmra.mrb[0].mxu0 %v2555
  %v4203 = vpop.f32.mrb[0].mxu0
  %v4204 = vadd.f32 %v3915, %v4203
  %v4205 = vpop.f32.mrb[0].mxu0
  %v4206 = vpop.f32.mrb[0].mxu0
  %v4207 = vadd.f32 %v3918, %v4206
  %v4208 = vpop.f32.mrb[0].mxu0
  %4209 = vmatprep.mubr.bf16.mxu0 %v2558
  %4210 = vmatmul.mubr.bf16.gmra.mrb[0].mxu0 %v2557
  %v4211 = vpop.f32.mrb[0].mxu0
  %v4212 = vadd.f32 %v3923, %v4211
  %v4213 = vpop.f32.mrb[0].mxu0
  %v4214 = vpop.f32.mrb[0].mxu0
  %v4215 = vadd.f32 %v3926, %v4214
  %v4216 = vpop.f32.mrb[0].mxu0
  %4217 = vmatprep.mubr.bf16.mxu0 %v2560
  %4218 = vmatmul.mubr.bf16.gmra.mrb[0].mxu0 %v2559
  %v4219 = vpop.f32.mrb[0].mxu0
  %v4220 = vadd.f32 %v3931, %v4219
  %v4221 = vpop.f32.mrb[0].mxu0
  %v4222 = vpop.f32.mrb[0].mxu0
  %v4223 = vadd.f32 %v3934, %v4222
  %v4224 = vpop.f32.mrb[0].mxu0
  %4225 = vmatprep.mubr.bf16.mxu0 %v2562
  %4226 = vmatmul.mubr.bf16.gmra.mrb[0].mxu0 %v2561
  %v4227 = vpop.f32.mrb[0].mxu0
  %v4228 = vadd.f32 %v3939, %v4227
  %v4229 = vpop.f32.mrb[0].mxu0
  %v4230 = vpop.f32.mrb[0].mxu0
  %v4231 = vadd.f32 %v3942, %v4230
  %v4232 = vpop.f32.mrb[0].mxu0
  %4233 = vmatprep.mubr.bf16.mxu0 %v2564
  %4234 = vmatmul.mubr.bf16.gmra.mrb[0].mxu0 %v2563
  %v4235 = vpop.f32.mrb[0].mxu0
  %v4236 = vadd.f32 %v3947, %v4235
  %v4237 = vpop.f32.mrb[0].mxu0
  %v4238 = vpop.f32.mrb[0].mxu0
  %v4239 = vadd.f32 %v3950, %v4238
  %v4240 = vpop.f32.mrb[0].mxu0
  %4241 = vmatprep.mubr.bf16.mxu0 %v2566
  %4242 = vmatmul.mubr.bf16.gmra.mrb[0].mxu0 %v2565
  %v4243 = vpop.f32.mrb[0].mxu0
  %v4244 = vadd.f32 %v3955, %v4243
  %v4245 = vpop.f32.mrb[0].mxu0
  %v4246 = vpop.f32.mrb[0].mxu0
  %v4247 = vadd.f32 %v3958, %v4246
  %v4248 = vpop.f32.mrb[0].mxu0
  %4249 = vmatprep.mubr.bf16.mxu0 %v2568
  %4250 = vmatmul.mubr.bf16.gmra.mrb[0].mxu0 %v2567
  %v4251 = vpop.f32.mrb[0].mxu0
  %v4252 = vadd.f32 %v3963, %v4251
  %v4253 = vpop.f32.mrb[0].mxu0
  %v4254 = vpop.f32.mrb[0].mxu0
  %v4255 = vadd.f32 %v3966, %v4254
  %v4256 = vpop.f32.mrb[0].mxu0
  %4257 = vmatprep.mubr.bf16.mxu0 %v2570
  %4258 = vmatmul.mubr.bf16.gmra.mrb[0].mxu0 %v2569
  %v4259 = vpop.f32.mrb[0].mxu0
  %v4260 = vadd.f32 %v3971, %v4259
  %v4261 = vpop.f32.mrb[0].mxu0
  %v4262 = vpop.f32.mrb[0].mxu0
  %v4263 = vadd.f32 %v3974, %v4262
  %v4264 = vpop.f32.mrb[0].mxu0
  %4265 = vmatprep.mubr.bf16.mxu0 %v2572
  %4266 = vmatmul.mubr.bf16.gmra.mrb[0].mxu0 %v2571
  %v4267 = vpop.f32.mrb[0].mxu0
  %v4268 = vadd.f32 %v3979, %v4267
  %v4269 = vpop.f32.mrb[0].mxu0
  %v4270 = vpop.f32.mrb[0].mxu0
  %v4271 = vadd.f32 %v3982, %v4270
  %v4272 = vpop.f32.mrb[0].mxu0
  %4273 = vmatprep.mubr.bf16.mxu0 %v2574
  %4274 = vmatmul.mubr.bf16.gmra.mrb[0].mxu0 %v2573
  %v4275 = vpop.f32.mrb[0].mxu0
  %v4276 = vadd.f32 %v3987, %v4275
  %v4277 = vpop.f32.mrb[0].mxu0
  %v4278 = vpop.f32.mrb[0].mxu0
  %v4279 = vadd.f32 %v3990, %v4278
  %v4280 = vpop.f32.mrb[0].mxu0
  %4281 = vmatprep.mubr.bf16.mxu0 %v2576
  %4282 = vmatmul.mubr.bf16.gmra.mrb[0].mxu0 %v2575
  %v4283 = vpop.f32.mrb[0].mxu0
  %v4284 = vadd.f32 %v3995, %v4283
  %v4285 = vpop.f32.mrb[0].mxu0
  %v4286 = vpop.f32.mrb[0].mxu0
  %v4287 = vadd.f32 %v3998, %v4286
  %v4288 = vpop.f32.mrb[0].mxu0
  %4289 = vmatprep.mubr.bf16.mxu0 %v2578
  %4290 = vmatmul.mubr.bf16.gmra.mrb[0].mxu0 %v2577
  %v4291 = vpop.f32.mrb[0].mxu0
  %v4292 = vadd.f32 %v4003, %v4291
  %v4293 = vpop.f32.mrb[0].mxu0
  %v4294 = vpop.f32.mrb[0].mxu0
  %v4295 = vadd.f32 %v4006, %v4294
  %v4296 = vpop.f32.mrb[0].mxu0
  %4297 = vmatprep.mubr.bf16.mxu0 %v2580
  %4298 = vmatmul.mubr.bf16.gmra.mrb[0].mxu0 %v2579
  %v4299 = vpop.f32.mrb[0].mxu0
  %v4300 = vadd.f32 %v4011, %v4299
  %v4301 = vpop.f32.mrb[0].mxu0
  %v4302 = vpop.f32.mrb[0].mxu0
  %v4303 = vadd.f32 %v4014, %v4302
  %v4304 = vpop.f32.mrb[0].mxu0
  %4305 = vmatprep.mubr.bf16.mxu0 %v2582
  %4306 = vmatmul.mubr.bf16.gmra.mrb[0].mxu0 %v2581
  %v4307 = vpop.f32.mrb[0].mxu0
  %v4308 = vadd.f32 %v4019, %v4307
  %v4309 = vpop.f32.mrb[0].mxu0
  %v4310 = vpop.f32.mrb[0].mxu0
  %v4311 = vadd.f32 %v4022, %v4310
  %v4312 = vpop.f32.mrb[0].mxu0
  %4313 = vmatprep.mubr.bf16.mxu0 %v2584
  %4314 = vmatmul.mubr.bf16.gmra.mrb[0].mxu0 %v2583
  %v4315 = vpop.f32.mrb[0].mxu0
  %v4316 = vadd.f32 %v4027, %v4315
  %v4317 = vpop.f32.mrb[0].mxu0
  %v4318 = vpop.f32.mrb[0].mxu0
  %v4319 = vadd.f32 %v4030, %v4318
  %v4320 = vpop.f32.mrb[0].mxu0
  %4321 = vdwg.mxu0
  %4322 = vmatprep.subr.bf16.mxu0 0
  %4323 = vmatpush1.bf16.msra.mxu0 %v3648
  %4324 = vmatprep.subr.bf16.mxu0 0
  %4325 = vmatpush1.bf16.msra.mxu0 %v3649
  %4326 = vmatprep.subr.bf16.mxu0 0
  %4327 = vmatpush1.bf16.msra.mxu0 %v3650
  %4328 = vmatprep.subr.bf16.mxu0 0
  %4329 = vmatpush1.bf16.msra.mxu0 %v3651
  %4330 = vmatprep.subr.bf16.mxu0 0
  %4331 = vmatpush1.bf16.msra.mxu0 %v3652
  %4332 = vmatprep.subr.bf16.mxu0 0
  %4333 = vmatpush1.bf16.msra.mxu0 %v3653
  %4334 = vmatprep.subr.bf16.mxu0 0
  %4335 = vmatpush1.bf16.msra.mxu0 %v3654
  %4336 = vmatprep.subr.bf16.mxu0 0
  %4337 = vmatpush1.bf16.msra.mxu0 %v3655
  %4338 = vmatprep.subr.bf16.mxu0 0
  %4339 = vmatpush1.bf16.msra.mxu0 %v3656
  %4340 = vmatprep.subr.bf16.mxu0 0
  %4341 = vmatpush1.bf16.msra.mxu0 %v3657
  %4342 = vmatprep.subr.bf16.mxu0 0
  %4343 = vmatpush1.bf16.msra.mxu0 %v3658
  %4344 = vmatprep.subr.bf16.mxu0 0
  %4345 = vmatpush1.bf16.msra.mxu0 %v3659
  %4346 = vmatprep.subr.bf16.mxu0 0
  %4347 = vmatpush1.bf16.msra.mxu0 %v3660
  %4348 = vmatprep.subr.bf16.mxu0 0
  %4349 = vmatpush1.bf16.msra.mxu0 %v3661
  %4350 = vmatprep.subr.bf16.mxu0 0
  %4351 = vmatpush1.bf16.msra.mxu0 %v3662
  %4352 = vmatprep.subr.bf16.mxu0 0
  %4353 = vmatpush1.bf16.msra.mxu0 %v3663
  %4354 = vmatprep.mubr.bf16.mxu0 %v2842
  %4355 = vmatmul.mubr.bf16.gmra.mrb[0].mxu0 %v2841
  %v4356 = vpop.f32.mrb[0].mxu0
  %v4357 = vadd.f32 %v4068, %v4356
  %v4358 = vpop.f32.mrb[0].mxu0
  %v4359 = vpop.f32.mrb[0].mxu0
  %v4360 = vadd.f32 %v4071, %v4359
  %v4361 = vpop.f32.mrb[0].mxu0
  %4362 = vmatprep.mubr.bf16.mxu0 %v2844
  %4363 = vmatmul.mubr.bf16.gmra.mrb[0].mxu0 %v2843
  %v4364 = vpop.f32.mrb[0].mxu0
  %v4365 = vadd.f32 %v4076, %v4364
  %v4366 = vpop.f32.mrb[0].mxu0
  %v4367 = vpop.f32.mrb[0].mxu0
  %v4368 = vadd.f32 %v4079, %v4367
  %v4369 = vpop.f32.mrb[0].mxu0
  %4370 = vmatprep.mubr.bf16.mxu0 %v2846
  %4371 = vmatmul.mubr.bf16.gmra.mrb[0].mxu0 %v2845
  %v4372 = vpop.f32.mrb[0].mxu0
  %v4373 = vadd.f32 %v4084, %v4372
  %v4374 = vpop.f32.mrb[0].mxu0
  %v4375 = vpop.f32.mrb[0].mxu0
  %v4376 = vadd.f32 %v4087, %v4375
  %v4377 = vpop.f32.mrb[0].mxu0
  %4378 = vmatprep.mubr.bf16.mxu0 %v2848
  %4379 = vmatmul.mubr.bf16.gmra.mrb[0].mxu0 %v2847
  %v4380 = vpop.f32.mrb[0].mxu0
  %v4381 = vadd.f32 %v4092, %v4380
  %v4382 = vpop.f32.mrb[0].mxu0
  %v4383 = vpop.f32.mrb[0].mxu0
  %v4384 = vadd.f32 %v4095, %v4383
  %v4385 = vpop.f32.mrb[0].mxu0
  %4386 = vmatprep.mubr.bf16.mxu0 %v2850
  %4387 = vmatmul.mubr.bf16.gmra.mrb[0].mxu0 %v2849
  %v4388 = vpop.f32.mrb[0].mxu0
  %v4389 = vadd.f32 %v4100, %v4388
  %v4390 = vpop.f32.mrb[0].mxu0
  %v4391 = vpop.f32.mrb[0].mxu0
  %v4392 = vadd.f32 %v4103, %v4391
  %v4393 = vpop.f32.mrb[0].mxu0
  %4394 = vmatprep.mubr.bf16.mxu0 %v2852
  %4395 = vmatmul.mubr.bf16.gmra.mrb[0].mxu0 %v2851
  %v4396 = vpop.f32.mrb[0].mxu0
  %v4397 = vadd.f32 %v4108, %v4396
  %v4398 = vpop.f32.mrb[0].mxu0
  %v4399 = vpop.f32.mrb[0].mxu0
  %v4400 = vadd.f32 %v4111, %v4399
  %v4401 = vpop.f32.mrb[0].mxu0
  %4402 = vmatprep.mubr.bf16.mxu0 %v2854
  %4403 = vmatmul.mubr.bf16.gmra.mrb[0].mxu0 %v2853
  %v4404 = vpop.f32.mrb[0].mxu0
  %v4405 = vadd.f32 %v4116, %v4404
  %v4406 = vpop.f32.mrb[0].mxu0
  %v4407 = vpop.f32.mrb[0].mxu0
  %v4408 = vadd.f32 %v4119, %v4407
  %v4409 = vpop.f32.mrb[0].mxu0
  %4410 = vmatprep.mubr.bf16.mxu0 %v2856
  %4411 = vmatmul.mubr.bf16.gmra.mrb[0].mxu0 %v2855
  %v4412 = vpop.f32.mrb[0].mxu0
  %v4413 = vadd.f32 %v4124, %v4412
  %v4414 = vpop.f32.mrb[0].mxu0
  %v4415 = vpop.f32.mrb[0].mxu0
  %v4416 = vadd.f32 %v4127, %v4415
  %v4417 = vpop.f32.mrb[0].mxu0
  %4418 = vmatprep.mubr.bf16.mxu0 %v2858
  %4419 = vmatmul.mubr.bf16.gmra.mrb[0].mxu0 %v2857
  %v4420 = vpop.f32.mrb[0].mxu0
  %v4421 = vadd.f32 %v4132, %v4420
  %v4422 = vpop.f32.mrb[0].mxu0
  %v4423 = vpop.f32.mrb[0].mxu0
  %v4424 = vadd.f32 %v4135, %v4423
  %v4425 = vpop.f32.mrb[0].mxu0
  %4426 = vmatprep.mubr.bf16.mxu0 %v2860
  %4427 = vmatmul.mubr.bf16.gmra.mrb[0].mxu0 %v2859
  %v4428 = vpop.f32.mrb[0].mxu0
  %v4429 = vadd.f32 %v4140, %v4428
  %v4430 = vpop.f32.mrb[0].mxu0
  %v4431 = vpop.f32.mrb[0].mxu0
  %v4432 = vadd.f32 %v4143, %v4431
  %v4433 = vpop.f32.mrb[0].mxu0
  %4434 = vmatprep.mubr.bf16.mxu0 %v2862
  %4435 = vmatmul.mubr.bf16.gmra.mrb[0].mxu0 %v2861
  %v4436 = vpop.f32.mrb[0].mxu0
  %v4437 = vadd.f32 %v4148, %v4436
  %v4438 = vpop.f32.mrb[0].mxu0
  %v4439 = vpop.f32.mrb[0].mxu0
  %v4440 = vadd.f32 %v4151, %v4439
  %v4441 = vpop.f32.mrb[0].mxu0
  %4442 = vmatprep.mubr.bf16.mxu0 %v2864
  %4443 = vmatmul.mubr.bf16.gmra.mrb[0].mxu0 %v2863
  %v4444 = vpop.f32.mrb[0].mxu0
  %v4445 = vadd.f32 %v4156, %v4444
  %v4446 = vpop.f32.mrb[0].mxu0
  %v4447 = vpop.f32.mrb[0].mxu0
  %v4448 = vadd.f32 %v4159, %v4447
  %v4449 = vpop.f32.mrb[0].mxu0
  %4450 = vmatprep.mubr.bf16.mxu0 %v2866
  %4451 = vmatmul.mubr.bf16.gmra.mrb[0].mxu0 %v2865
  %v4452 = vpop.f32.mrb[0].mxu0
  %v4453 = vadd.f32 %v4164, %v4452
  %v4454 = vpop.f32.mrb[0].mxu0
  %v4455 = vpop.f32.mrb[0].mxu0
  %v4456 = vadd.f32 %v4167, %v4455
  %v4457 = vpop.f32.mrb[0].mxu0
  %4458 = vmatprep.mubr.bf16.mxu0 %v2868
  %4459 = vmatmul.mubr.bf16.gmra.mrb[0].mxu0 %v2867
  %v4460 = vpop.f32.mrb[0].mxu0
  %v4461 = vadd.f32 %v4172, %v4460
  %v4462 = vpop.f32.mrb[0].mxu0
  %v4463 = vpop.f32.mrb[0].mxu0
  %v4464 = vadd.f32 %v4175, %v4463
  %v4465 = vpop.f32.mrb[0].mxu0
  %4466 = vmatprep.mubr.bf16.mxu0 %v2870
  %4467 = vmatmul.mubr.bf16.gmra.mrb[0].mxu0 %v2869
  %v4468 = vpop.f32.mrb[0].mxu0
  %v4469 = vadd.f32 %v4180, %v4468
  %v4470 = vpop.f32.mrb[0].mxu0
  %v4471 = vpop.f32.mrb[0].mxu0
  %v4472 = vadd.f32 %v4183, %v4471
  %v4473 = vpop.f32.mrb[0].mxu0
  %4474 = vmatprep.mubr.bf16.mxu0 %v2872
  %4475 = vmatmul.mubr.bf16.gmra.mrb[0].mxu0 %v2871
  %v4476 = vpop.f32.mrb[0].mxu0
  %v4477 = vadd.f32 %v4188, %v4476
  %v4478 = vpop.f32.mrb[0].mxu0
  %v4479 = vpop.f32.mrb[0].mxu0
  %v4480 = vadd.f32 %v4191, %v4479
  %v4481 = vpop.f32.mrb[0].mxu0
  %4482 = vmatprep.mubr.bf16.mxu0 %v2874
  %4483 = vmatmul.mubr.bf16.gmra.mrb[0].mxu0 %v2873
  %v4484 = vpop.f32.mrb[0].mxu0
  %v4485 = vadd.f32 %v4196, %v4484
  %v4486 = vpop.f32.mrb[0].mxu0
  %v4487 = vpop.f32.mrb[0].mxu0
  %v4488 = vadd.f32 %v4199, %v4487
  %v4489 = vpop.f32.mrb[0].mxu0
  %4490 = vmatprep.mubr.bf16.mxu0 %v2876
  %4491 = vmatmul.mubr.bf16.gmra.mrb[0].mxu0 %v2875
  %v4492 = vpop.f32.mrb[0].mxu0
  %v4493 = vadd.f32 %v4204, %v4492
  %v4494 = vpop.f32.mrb[0].mxu0
  %v4495 = vpop.f32.mrb[0].mxu0
  %v4496 = vadd.f32 %v4207, %v4495
  %v4497 = vpop.f32.mrb[0].mxu0
  %4498 = vmatprep.mubr.bf16.mxu0 %v2878
  %4499 = vmatmul.mubr.bf16.gmra.mrb[0].mxu0 %v2877
  %v4500 = vpop.f32.mrb[0].mxu0
  %v4501 = vadd.f32 %v4212, %v4500
  %v4502 = vpop.f32.mrb[0].mxu0
  %v4503 = vpop.f32.mrb[0].mxu0
  %v4504 = vadd.f32 %v4215, %v4503
  %v4505 = vpop.f32.mrb[0].mxu0
  %4506 = vmatprep.mubr.bf16.mxu0 %v2880
  %4507 = vmatmul.mubr.bf16.gmra.mrb[0].mxu0 %v2879
  %v4508 = vpop.f32.mrb[0].mxu0
  %v4509 = vadd.f32 %v4220, %v4508
  %v4510 = vpop.f32.mrb[0].mxu0
  %v4511 = vpop.f32.mrb[0].mxu0
  %v4512 = vadd.f32 %v4223, %v4511
  %v4513 = vpop.f32.mrb[0].mxu0
  %4514 = vmatprep.mubr.bf16.mxu0 %v2882
  %4515 = vmatmul.mubr.bf16.gmra.mrb[0].mxu0 %v2881
  %v4516 = vpop.f32.mrb[0].mxu0
  %v4517 = vadd.f32 %v4228, %v4516
  %v4518 = vpop.f32.mrb[0].mxu0
  %v4519 = vpop.f32.mrb[0].mxu0
  %v4520 = vadd.f32 %v4231, %v4519
  %v4521 = vpop.f32.mrb[0].mxu0
  %4522 = vmatprep.mubr.bf16.mxu0 %v2884
  %4523 = vmatmul.mubr.bf16.gmra.mrb[0].mxu0 %v2883
  %v4524 = vpop.f32.mrb[0].mxu0
  %v4525 = vadd.f32 %v4236, %v4524
  %v4526 = vpop.f32.mrb[0].mxu0
  %v4527 = vpop.f32.mrb[0].mxu0
  %v4528 = vadd.f32 %v4239, %v4527
  %v4529 = vpop.f32.mrb[0].mxu0
  %4530 = vmatprep.mubr.bf16.mxu0 %v2886
  %4531 = vmatmul.mubr.bf16.gmra.mrb[0].mxu0 %v2885
  %v4532 = vpop.f32.mrb[0].mxu0
  %v4533 = vadd.f32 %v4244, %v4532
  %v4534 = vpop.f32.mrb[0].mxu0
  %v4535 = vpop.f32.mrb[0].mxu0
  %v4536 = vadd.f32 %v4247, %v4535
  %v4537 = vpop.f32.mrb[0].mxu0
  %4538 = vmatprep.mubr.bf16.mxu0 %v2888
  %4539 = vmatmul.mubr.bf16.gmra.mrb[0].mxu0 %v2887
  %v4540 = vpop.f32.mrb[0].mxu0
  %v4541 = vadd.f32 %v4252, %v4540
  %v4542 = vpop.f32.mrb[0].mxu0
  %v4543 = vpop.f32.mrb[0].mxu0
  %v4544 = vadd.f32 %v4255, %v4543
  %v4545 = vpop.f32.mrb[0].mxu0
  %4546 = vmatprep.mubr.bf16.mxu0 %v2890
  %4547 = vmatmul.mubr.bf16.gmra.mrb[0].mxu0 %v2889
  %v4548 = vpop.f32.mrb[0].mxu0
  %v4549 = vadd.f32 %v4260, %v4548
  %v4550 = vpop.f32.mrb[0].mxu0
  %v4551 = vpop.f32.mrb[0].mxu0
  %v4552 = vadd.f32 %v4263, %v4551
  %v4553 = vpop.f32.mrb[0].mxu0
  %4554 = vmatprep.mubr.bf16.mxu0 %v2892
  %4555 = vmatmul.mubr.bf16.gmra.mrb[0].mxu0 %v2891
  %v4556 = vpop.f32.mrb[0].mxu0
  %v4557 = vadd.f32 %v4268, %v4556
  %v4558 = vpop.f32.mrb[0].mxu0
  %v4559 = vpop.f32.mrb[0].mxu0
  %v4560 = vadd.f32 %v4271, %v4559
  %v4561 = vpop.f32.mrb[0].mxu0
  %4562 = vmatprep.mubr.bf16.mxu0 %v2894
  %4563 = vmatmul.mubr.bf16.gmra.mrb[0].mxu0 %v2893
  %v4564 = vpop.f32.mrb[0].mxu0
  %v4565 = vadd.f32 %v4276, %v4564
  %v4566 = vpop.f32.mrb[0].mxu0
  %v4567 = vpop.f32.mrb[0].mxu0
  %v4568 = vadd.f32 %v4279, %v4567
  %v4569 = vpop.f32.mrb[0].mxu0
  %4570 = vmatprep.mubr.bf16.mxu0 %v2896
  %4571 = vmatmul.mubr.bf16.gmra.mrb[0].mxu0 %v2895
  %v4572 = vpop.f32.mrb[0].mxu0
  %v4573 = vadd.f32 %v4284, %v4572
  %v4574 = vpop.f32.mrb[0].mxu0
  %v4575 = vpop.f32.mrb[0].mxu0
  %v4576 = vadd.f32 %v4287, %v4575
  %v4577 = vpop.f32.mrb[0].mxu0
  %4578 = vmatprep.mubr.bf16.mxu0 %v2898
  %4579 = vmatmul.mubr.bf16.gmra.mrb[0].mxu0 %v2897
  %v4580 = vpop.f32.mrb[0].mxu0
  %v4581 = vadd.f32 %v4292, %v4580
  %v4582 = vpop.f32.mrb[0].mxu0
  %v4583 = vpop.f32.mrb[0].mxu0
  %v4584 = vadd.f32 %v4295, %v4583
  %v4585 = vpop.f32.mrb[0].mxu0
  %4586 = vmatprep.mubr.bf16.mxu0 %v2900
  %4587 = vmatmul.mubr.bf16.gmra.mrb[0].mxu0 %v2899
  %v4588 = vpop.f32.mrb[0].mxu0
  %v4589 = vadd.f32 %v4300, %v4588
  %v4590 = vpop.f32.mrb[0].mxu0
  %v4591 = vpop.f32.mrb[0].mxu0
  %v4592 = vadd.f32 %v4303, %v4591
  %v4593 = vpop.f32.mrb[0].mxu0
  %4594 = vmatprep.mubr.bf16.mxu0 %v2902
  %4595 = vmatmul.mubr.bf16.gmra.mrb[0].mxu0 %v2901
  %v4596 = vpop.f32.mrb[0].mxu0
  %v4597 = vadd.f32 %v4308, %v4596
  %v4598 = vpop.f32.mrb[0].mxu0
  %v4599 = vpop.f32.mrb[0].mxu0
  %v4600 = vadd.f32 %v4311, %v4599
  %v4601 = vpop.f32.mrb[0].mxu0
  %4602 = vmatprep.mubr.bf16.mxu0 %v2904
  %4603 = vmatmul.mubr.bf16.gmra.mrb[0].mxu0 %v2903
  %v4604 = vpop.f32.mrb[0].mxu0
  %v4605 = vadd.f32 %v4316, %v4604
  %v4606 = vpop.f32.mrb[0].mxu0
  %v4607 = vpop.f32.mrb[0].mxu0
  %v4608 = vadd.f32 %v4319, %v4607
  %v4609 = vpop.f32.mrb[0].mxu0
  %4610 = vdwg.mxu0
  %4611 = vmatprep.subr.bf16.mxu0 0
  %4612 = vmatpush1.bf16.msra.mxu0 %v3664
  %4613 = vmatprep.subr.bf16.mxu0 0
  %4614 = vmatpush1.bf16.msra.mxu0 %v3665
  %4615 = vmatprep.subr.bf16.mxu0 0
  %4616 = vmatpush1.bf16.msra.mxu0 %v3666
  %4617 = vmatprep.subr.bf16.mxu0 0
  %4618 = vmatpush1.bf16.msra.mxu0 %v3667
  %4619 = vmatprep.subr.bf16.mxu0 0
  %4620 = vmatpush1.bf16.msra.mxu0 %v3668
  %4621 = vmatprep.subr.bf16.mxu0 0
  %4622 = vmatpush1.bf16.msra.mxu0 %v3669
  %4623 = vmatprep.subr.bf16.mxu0 0
  %4624 = vmatpush1.bf16.msra.mxu0 %v3670
  %4625 = vmatprep.subr.bf16.mxu0 0
  %4626 = vmatpush1.bf16.msra.mxu0 %v3671
  %4627 = vmatprep.subr.bf16.mxu0 0
  %4628 = vmatpush1.bf16.msra.mxu0 %v3672
  %4629 = vmatprep.subr.bf16.mxu0 0
  %4630 = vmatpush1.bf16.msra.mxu0 %v3673
  %4631 = vmatprep.subr.bf16.mxu0 0
  %4632 = vmatpush1.bf16.msra.mxu0 %v3674
  %4633 = vmatprep.subr.bf16.mxu0 0
  %4634 = vmatpush1.bf16.msra.mxu0 %v3675
  %4635 = vmatprep.subr.bf16.mxu0 0
  %4636 = vmatpush1.bf16.msra.mxu0 %v3676
  %4637 = vmatprep.subr.bf16.mxu0 0
  %4638 = vmatpush1.bf16.msra.mxu0 %v3677
  %4639 = vmatprep.subr.bf16.mxu0 0
  %4640 = vmatpush1.bf16.msra.mxu0 %v3678
  %4641 = vmatprep.subr.bf16.mxu0 0
  %4642 = vmatpush1.bf16.msra.mxu0 %v3679
  %4643 = vmatprep.mubr.bf16.mxu0 %v3098
  %4644 = vmatmul.mubr.bf16.gmra.mrb[0].mxu0 %v3097
  %v4645 = vpop.f32.mrb[0].mxu0
  %v4646 = vadd.f32 %v4357, %v4645
  %v4647 = vpop.f32.mrb[0].mxu0
  %v4648 = vpop.f32.mrb[0].mxu0
  %v4649 = vadd.f32 %v4360, %v4648
  %v4650 = vpop.f32.mrb[0].mxu0
  %4651 = vmatprep.mubr.bf16.mxu0 %v3100
  %4652 = vmatmul.mubr.bf16.gmra.mrb[0].mxu0 %v3099
  %v4653 = vpop.f32.mrb[0].mxu0
  %v4654 = vadd.f32 %v4365, %v4653
  %v4655 = vpop.f32.mrb[0].mxu0
  %v4656 = vpop.f32.mrb[0].mxu0
  %v4657 = vadd.f32 %v4368, %v4656
  %v4658 = vpop.f32.mrb[0].mxu0
  %4659 = vmatprep.mubr.bf16.mxu0 %v3102
  %4660 = vmatmul.mubr.bf16.gmra.mrb[0].mxu0 %v3101
  %v4661 = vpop.f32.mrb[0].mxu0
  %v4662 = vadd.f32 %v4373, %v4661
  %v4663 = vpop.f32.mrb[0].mxu0
  %v4664 = vpop.f32.mrb[0].mxu0
  %v4665 = vadd.f32 %v4376, %v4664
  %v4666 = vpop.f32.mrb[0].mxu0
  %4667 = vmatprep.mubr.bf16.mxu0 %v3104
  %4668 = vmatmul.mubr.bf16.gmra.mrb[0].mxu0 %v3103
  %v4669 = vpop.f32.mrb[0].mxu0
  %v4670 = vadd.f32 %v4381, %v4669
  %v4671 = vpop.f32.mrb[0].mxu0
  %v4672 = vpop.f32.mrb[0].mxu0
  %v4673 = vadd.f32 %v4384, %v4672
  %v4674 = vpop.f32.mrb[0].mxu0
  %4675 = vmatprep.mubr.bf16.mxu0 %v3106
  %4676 = vmatmul.mubr.bf16.gmra.mrb[0].mxu0 %v3105
  %v4677 = vpop.f32.mrb[0].mxu0
  %v4678 = vadd.f32 %v4389, %v4677
  %v4679 = vpop.f32.mrb[0].mxu0
  %v4680 = vpop.f32.mrb[0].mxu0
  %v4681 = vadd.f32 %v4392, %v4680
  %v4682 = vpop.f32.mrb[0].mxu0
  %4683 = vmatprep.mubr.bf16.mxu0 %v3108
  %4684 = vmatmul.mubr.bf16.gmra.mrb[0].mxu0 %v3107
  %v4685 = vpop.f32.mrb[0].mxu0
  %v4686 = vadd.f32 %v4397, %v4685
  %v4687 = vpop.f32.mrb[0].mxu0
  %v4688 = vpop.f32.mrb[0].mxu0
  %v4689 = vadd.f32 %v4400, %v4688
  %v4690 = vpop.f32.mrb[0].mxu0
  %4691 = vmatprep.mubr.bf16.mxu0 %v3110
  %4692 = vmatmul.mubr.bf16.gmra.mrb[0].mxu0 %v3109
  %v4693 = vpop.f32.mrb[0].mxu0
  %v4694 = vadd.f32 %v4405, %v4693
  %v4695 = vpop.f32.mrb[0].mxu0
  %v4696 = vpop.f32.mrb[0].mxu0
  %v4697 = vadd.f32 %v4408, %v4696
  %v4698 = vpop.f32.mrb[0].mxu0
  %4699 = vmatprep.mubr.bf16.mxu0 %v3112
  %4700 = vmatmul.mubr.bf16.gmra.mrb[0].mxu0 %v3111
  %v4701 = vpop.f32.mrb[0].mxu0
  %v4702 = vadd.f32 %v4413, %v4701
  %v4703 = vpop.f32.mrb[0].mxu0
  %v4704 = vpop.f32.mrb[0].mxu0
  %v4705 = vadd.f32 %v4416, %v4704
  %v4706 = vpop.f32.mrb[0].mxu0
  %4707 = vmatprep.mubr.bf16.mxu0 %v3114
  %4708 = vmatmul.mubr.bf16.gmra.mrb[0].mxu0 %v3113
  %v4709 = vpop.f32.mrb[0].mxu0
  %v4710 = vadd.f32 %v4421, %v4709
  %v4711 = vpop.f32.mrb[0].mxu0
  %v4712 = vpop.f32.mrb[0].mxu0
  %v4713 = vadd.f32 %v4424, %v4712
  %v4714 = vpop.f32.mrb[0].mxu0
  %4715 = vmatprep.mubr.bf16.mxu0 %v3116
  %4716 = vmatmul.mubr.bf16.gmra.mrb[0].mxu0 %v3115
  %v4717 = vpop.f32.mrb[0].mxu0
  %v4718 = vadd.f32 %v4429, %v4717
  %v4719 = vpop.f32.mrb[0].mxu0
  %v4720 = vpop.f32.mrb[0].mxu0
  %v4721 = vadd.f32 %v4432, %v4720
  %v4722 = vpop.f32.mrb[0].mxu0
  %4723 = vmatprep.mubr.bf16.mxu0 %v3118
  %4724 = vmatmul.mubr.bf16.gmra.mrb[0].mxu0 %v3117
  %v4725 = vpop.f32.mrb[0].mxu0
  %v4726 = vadd.f32 %v4437, %v4725
  %v4727 = vpop.f32.mrb[0].mxu0
  %v4728 = vpop.f32.mrb[0].mxu0
  %v4729 = vadd.f32 %v4440, %v4728
  %v4730 = vpop.f32.mrb[0].mxu0
  %4731 = vmatprep.mubr.bf16.mxu0 %v3120
  %4732 = vmatmul.mubr.bf16.gmra.mrb[0].mxu0 %v3119
  %v4733 = vpop.f32.mrb[0].mxu0
  %v4734 = vadd.f32 %v4445, %v4733
  %v4735 = vpop.f32.mrb[0].mxu0
  %v4736 = vpop.f32.mrb[0].mxu0
  %v4737 = vadd.f32 %v4448, %v4736
  %v4738 = vpop.f32.mrb[0].mxu0
  %4739 = vmatprep.mubr.bf16.mxu0 %v3122
  %4740 = vmatmul.mubr.bf16.gmra.mrb[0].mxu0 %v3121
  %v4741 = vpop.f32.mrb[0].mxu0
  %v4742 = vadd.f32 %v4453, %v4741
  %v4743 = vpop.f32.mrb[0].mxu0
  %v4744 = vpop.f32.mrb[0].mxu0
  %v4745 = vadd.f32 %v4456, %v4744
  %v4746 = vpop.f32.mrb[0].mxu0
  %4747 = vmatprep.mubr.bf16.mxu0 %v3124
  %4748 = vmatmul.mubr.bf16.gmra.mrb[0].mxu0 %v3123
  %v4749 = vpop.f32.mrb[0].mxu0
  %v4750 = vadd.f32 %v4461, %v4749
  %v4751 = vpop.f32.mrb[0].mxu0
  %v4752 = vpop.f32.mrb[0].mxu0
  %v4753 = vadd.f32 %v4464, %v4752
  %v4754 = vpop.f32.mrb[0].mxu0
  %4755 = vmatprep.mubr.bf16.mxu0 %v3126
  %4756 = vmatmul.mubr.bf16.gmra.mrb[0].mxu0 %v3125
  %v4757 = vpop.f32.mrb[0].mxu0
  %v4758 = vadd.f32 %v4469, %v4757
  %v4759 = vpop.f32.mrb[0].mxu0
  %v4760 = vpop.f32.mrb[0].mxu0
  %v4761 = vadd.f32 %v4472, %v4760
  %v4762 = vpop.f32.mrb[0].mxu0
  %4763 = vmatprep.mubr.bf16.mxu0 %v3128
  %4764 = vmatmul.mubr.bf16.gmra.mrb[0].mxu0 %v3127
  %v4765 = vpop.f32.mrb[0].mxu0
  %v4766 = vadd.f32 %v4477, %v4765
  %v4767 = vpop.f32.mrb[0].mxu0
  %v4768 = vpop.f32.mrb[0].mxu0
  %v4769 = vadd.f32 %v4480, %v4768
  %v4770 = vpop.f32.mrb[0].mxu0
  %4771 = vmatprep.mubr.bf16.mxu0 %v3130
  %4772 = vmatmul.mubr.bf16.gmra.mrb[0].mxu0 %v3129
  %v4773 = vpop.f32.mrb[0].mxu0
  %v4774 = vadd.f32 %v4485, %v4773
  %v4775 = vpop.f32.mrb[0].mxu0
  %v4776 = vpop.f32.mrb[0].mxu0
  %v4777 = vadd.f32 %v4488, %v4776
  %v4778 = vpop.f32.mrb[0].mxu0
  %4779 = vmatprep.mubr.bf16.mxu0 %v3132
  %4780 = vmatmul.mubr.bf16.gmra.mrb[0].mxu0 %v3131
  %v4781 = vpop.f32.mrb[0].mxu0
  %v4782 = vadd.f32 %v4493, %v4781
  %v4783 = vpop.f32.mrb[0].mxu0
  %v4784 = vpop.f32.mrb[0].mxu0
  %v4785 = vadd.f32 %v4496, %v4784
  %v4786 = vpop.f32.mrb[0].mxu0
  %4787 = vmatprep.mubr.bf16.mxu0 %v3134
  %4788 = vmatmul.mubr.bf16.gmra.mrb[0].mxu0 %v3133
  %v4789 = vpop.f32.mrb[0].mxu0
  %v4790 = vadd.f32 %v4501, %v4789
  %v4791 = vpop.f32.mrb[0].mxu0
  %v4792 = vpop.f32.mrb[0].mxu0
  %v4793 = vadd.f32 %v4504, %v4792
  %v4794 = vpop.f32.mrb[0].mxu0
  %4795 = vmatprep.mubr.bf16.mxu0 %v3136
  %4796 = vmatmul.mubr.bf16.gmra.mrb[0].mxu0 %v3135
  %v4797 = vpop.f32.mrb[0].mxu0
  %v4798 = vadd.f32 %v4509, %v4797
  %v4799 = vpop.f32.mrb[0].mxu0
  %v4800 = vpop.f32.mrb[0].mxu0
  %v4801 = vadd.f32 %v4512, %v4800
  %v4802 = vpop.f32.mrb[0].mxu0
  %4803 = vmatprep.mubr.bf16.mxu0 %v3138
  %4804 = vmatmul.mubr.bf16.gmra.mrb[0].mxu0 %v3137
  %v4805 = vpop.f32.mrb[0].mxu0
  %v4806 = vadd.f32 %v4517, %v4805
  %v4807 = vpop.f32.mrb[0].mxu0
  %v4808 = vpop.f32.mrb[0].mxu0
  %v4809 = vadd.f32 %v4520, %v4808
  %v4810 = vpop.f32.mrb[0].mxu0
  %4811 = vmatprep.mubr.bf16.mxu0 %v3140
  %4812 = vmatmul.mubr.bf16.gmra.mrb[0].mxu0 %v3139
  %v4813 = vpop.f32.mrb[0].mxu0
  %v4814 = vadd.f32 %v4525, %v4813
  %v4815 = vpop.f32.mrb[0].mxu0
  %v4816 = vpop.f32.mrb[0].mxu0
  %v4817 = vadd.f32 %v4528, %v4816
  %v4818 = vpop.f32.mrb[0].mxu0
  %4819 = vmatprep.mubr.bf16.mxu0 %v3142
  %4820 = vmatmul.mubr.bf16.gmra.mrb[0].mxu0 %v3141
  %v4821 = vpop.f32.mrb[0].mxu0
  %v4822 = vadd.f32 %v4533, %v4821
  %v4823 = vpop.f32.mrb[0].mxu0
  %v4824 = vpop.f32.mrb[0].mxu0
  %v4825 = vadd.f32 %v4536, %v4824
  %v4826 = vpop.f32.mrb[0].mxu0
  %4827 = vmatprep.mubr.bf16.mxu0 %v3144
  %4828 = vmatmul.mubr.bf16.gmra.mrb[0].mxu0 %v3143
  %v4829 = vpop.f32.mrb[0].mxu0
  %v4830 = vadd.f32 %v4541, %v4829
  %v4831 = vpop.f32.mrb[0].mxu0
  %v4832 = vpop.f32.mrb[0].mxu0
  %v4833 = vadd.f32 %v4544, %v4832
  %v4834 = vpop.f32.mrb[0].mxu0
  %4835 = vmatprep.mubr.bf16.mxu0 %v3146
  %4836 = vmatmul.mubr.bf16.gmra.mrb[0].mxu0 %v3145
  %v4837 = vpop.f32.mrb[0].mxu0
  %v4838 = vadd.f32 %v4549, %v4837
  %v4839 = vpop.f32.mrb[0].mxu0
  %v4840 = vpop.f32.mrb[0].mxu0
  %v4841 = vadd.f32 %v4552, %v4840
  %v4842 = vpop.f32.mrb[0].mxu0
  %4843 = vmatprep.mubr.bf16.mxu0 %v3148
  %4844 = vmatmul.mubr.bf16.gmra.mrb[0].mxu0 %v3147
  %v4845 = vpop.f32.mrb[0].mxu0
  %v4846 = vadd.f32 %v4557, %v4845
  %v4847 = vpop.f32.mrb[0].mxu0
  %v4848 = vpop.f32.mrb[0].mxu0
  %v4849 = vadd.f32 %v4560, %v4848
  %v4850 = vpop.f32.mrb[0].mxu0
  %4851 = vmatprep.mubr.bf16.mxu0 %v3150
  %4852 = vmatmul.mubr.bf16.gmra.mrb[0].mxu0 %v3149
  %v4853 = vpop.f32.mrb[0].mxu0
  %v4854 = vadd.f32 %v4565, %v4853
  %v4855 = vpop.f32.mrb[0].mxu0
  %v4856 = vpop.f32.mrb[0].mxu0
  %v4857 = vadd.f32 %v4568, %v4856
  %v4858 = vpop.f32.mrb[0].mxu0
  %4859 = vmatprep.mubr.bf16.mxu0 %v3152
  %4860 = vmatmul.mubr.bf16.gmra.mrb[0].mxu0 %v3151
  %v4861 = vpop.f32.mrb[0].mxu0
  %v4862 = vadd.f32 %v4573, %v4861
  %v4863 = vpop.f32.mrb[0].mxu0
  %v4864 = vpop.f32.mrb[0].mxu0
  %v4865 = vadd.f32 %v4576, %v4864
  %v4866 = vpop.f32.mrb[0].mxu0
  %4867 = vmatprep.mubr.bf16.mxu0 %v3154
  %4868 = vmatmul.mubr.bf16.gmra.mrb[0].mxu0 %v3153
  %v4869 = vpop.f32.mrb[0].mxu0
  %v4870 = vadd.f32 %v4581, %v4869
  %v4871 = vpop.f32.mrb[0].mxu0
  %v4872 = vpop.f32.mrb[0].mxu0
  %v4873 = vadd.f32 %v4584, %v4872
  %v4874 = vpop.f32.mrb[0].mxu0
  %4875 = vmatprep.mubr.bf16.mxu0 %v3156
  %4876 = vmatmul.mubr.bf16.gmra.mrb[0].mxu0 %v3155
  %v4877 = vpop.f32.mrb[0].mxu0
  %v4878 = vadd.f32 %v4589, %v4877
  %v4879 = vpop.f32.mrb[0].mxu0
  %v4880 = vpop.f32.mrb[0].mxu0
  %v4881 = vadd.f32 %v4592, %v4880
  %v4882 = vpop.f32.mrb[0].mxu0
  %4883 = vmatprep.mubr.bf16.mxu0 %v3158
  %4884 = vmatmul.mubr.bf16.gmra.mrb[0].mxu0 %v3157
  %v4885 = vpop.f32.mrb[0].mxu0
  %v4886 = vadd.f32 %v4597, %v4885
  %v4887 = vpop.f32.mrb[0].mxu0
  %v4888 = vpop.f32.mrb[0].mxu0
  %v4889 = vadd.f32 %v4600, %v4888
  %v4890 = vpop.f32.mrb[0].mxu0
  %4891 = vmatprep.mubr.bf16.mxu0 %v3160
  %4892 = vmatmul.mubr.bf16.gmra.mrb[0].mxu0 %v3159
  %v4893 = vpop.f32.mrb[0].mxu0
  %v4894 = vadd.f32 %v4605, %v4893
  %v4895 = vpop.f32.mrb[0].mxu0
  %v4896 = vpop.f32.mrb[0].mxu0
  %v4897 = vadd.f32 %v4608, %v4896
  %v4898 = vpop.f32.mrb[0].mxu0
  %4899 = vdwg.mxu0
  %v4900 = vmax.f32 %v4646, 0.0
  %v4901 = vmax.f32 %v4649, 0.0
  %v4902 = vmax.f32 %v4654, 0.0
  %v4903 = vmax.f32 %v4657, 0.0
  %v4904 = vmax.f32 %v4662, 0.0
  %v4905 = vmax.f32 %v4665, 0.0
  %v4906 = vmax.f32 %v4670, 0.0
  %v4907 = vmax.f32 %v4673, 0.0
  %v4908 = vmax.f32 %v4678, 0.0
  %v4909 = vmax.f32 %v4681, 0.0
  %v4910 = vmax.f32 %v4686, 0.0
  %v4911 = vmax.f32 %v4689, 0.0
  %v4912 = vmax.f32 %v4694, 0.0
  %v4913 = vmax.f32 %v4697, 0.0
  %v4914 = vmax.f32 %v4702, 0.0
  %v4915 = vmax.f32 %v4705, 0.0
  %v4916 = vmax.f32 %v4710, 0.0
  %v4917 = vmax.f32 %v4713, 0.0
  %v4918 = vmax.f32 %v4718, 0.0
  %v4919 = vmax.f32 %v4721, 0.0
  %v4920 = vmax.f32 %v4726, 0.0
  %v4921 = vmax.f32 %v4729, 0.0
  %v4922 = vmax.f32 %v4734, 0.0
  %v4923 = vmax.f32 %v4737, 0.0
  %v4924 = vmax.f32 %v4742, 0.0
  %v4925 = vmax.f32 %v4745, 0.0
  %v4926 = vmax.f32 %v4750, 0.0
  %v4927 = vmax.f32 %v4753, 0.0
  %v4928 = vmax.f32 %v4758, 0.0
  %v4929 = vmax.f32 %v4761, 0.0
  %v4930 = vmax.f32 %v4766, 0.0
  %v4931 = vmax.f32 %v4769, 0.0
  %v4932 = vmax.f32 %v4774, 0.0
  %v4933 = vmax.f32 %v4777, 0.0
  %v4934 = vmax.f32 %v4782, 0.0
  %v4935 = vmax.f32 %v4785, 0.0
  %v4936 = vmax.f32 %v4790, 0.0
  %v4937 = vmax.f32 %v4793, 0.0
  %v4938 = vmax.f32 %v4798, 0.0
  %v4939 = vmax.f32 %v4801, 0.0
  %v4940 = vmax.f32 %v4806, 0.0
  %v4941 = vmax.f32 %v4809, 0.0
  %v4942 = vmax.f32 %v4814, 0.0
  %v4943 = vmax.f32 %v4817, 0.0
  %v4944 = vmax.f32 %v4822, 0.0
  %v4945 = vmax.f32 %v4825, 0.0
  %v4946 = vmax.f32 %v4830, 0.0
  %v4947 = vmax.f32 %v4833, 0.0
  %v4948 = vmax.f32 %v4838, 0.0
  %v4949 = vmax.f32 %v4841, 0.0
  %v4950 = vmax.f32 %v4846, 0.0
  %v4951 = vmax.f32 %v4849, 0.0
  %v4952 = vmax.f32 %v4854, 0.0
  %v4953 = vmax.f32 %v4857, 0.0
  %v4954 = vmax.f32 %v4862, 0.0
  %v4955 = vmax.f32 %v4865, 0.0
  %v4956 = vmax.f32 %v4870, 0.0
  %v4957 = vmax.f32 %v4873, 0.0
  %v4958 = vmax.f32 %v4878, 0.0
  %v4959 = vmax.f32 %v4881, 0.0
  %v4960 = vmax.f32 %v4886, 0.0
  %v4961 = vmax.f32 %v4889, 0.0
  %v4962 = vmax.f32 %v4894, 0.0
  %v4963 = vmax.f32 %v4897, 0.0
  %v4964 = vpack.c.bf16 %v4901, %v4900
  %v4965 = vpack.c.bf16 %v4903, %v4902
  %v4966 = vpack.c.bf16 %v4905, %v4904
  %v4967 = vpack.c.bf16 %v4907, %v4906
  %v4968 = vpack.c.bf16 %v4909, %v4908
  %v4969 = vpack.c.bf16 %v4911, %v4910
  %v4970 = vpack.c.bf16 %v4913, %v4912
  %v4971 = vpack.c.bf16 %v4915, %v4914
  %v4972 = vpack.c.bf16 %v4917, %v4916
  %v4973 = vpack.c.bf16 %v4919, %v4918
  %v4974 = vpack.c.bf16 %v4921, %v4920
  %v4975 = vpack.c.bf16 %v4923, %v4922
  %v4976 = vpack.c.bf16 %v4925, %v4924
  %v4977 = vpack.c.bf16 %v4927, %v4926
  %v4978 = vpack.c.bf16 %v4929, %v4928
  %v4979 = vpack.c.bf16 %v4931, %v4930
  %v4980 = vpack.c.bf16 %v4933, %v4932
  %v4981 = vpack.c.bf16 %v4935, %v4934
  %v4982 = vpack.c.bf16 %v4937, %v4936
  %v4983 = vpack.c.bf16 %v4939, %v4938
  %v4984 = vpack.c.bf16 %v4941, %v4940
  %v4985 = vpack.c.bf16 %v4943, %v4942
  %v4986 = vpack.c.bf16 %v4945, %v4944
  %v4987 = vpack.c.bf16 %v4947, %v4946
  %v4988 = vpack.c.bf16 %v4949, %v4948
  %v4989 = vpack.c.bf16 %v4951, %v4950
  %v4990 = vpack.c.bf16 %v4953, %v4952
  %v4991 = vpack.c.bf16 %v4955, %v4954
  %v4992 = vpack.c.bf16 %v4957, %v4956
  %v4993 = vpack.c.bf16 %v4959, %v4958
  %v4994 = vpack.c.bf16 %v4961, %v4960
  %v4995 = vpack.c.bf16 %v4963, %v4962
  %vm4996 = vcmask 519168
  %4997 = vst.msk [vmem:[#allocation2] sm:$0xf] %vm4996, 0
  %vm4998 = vcmask 516096
  %vm4999 = vsmask.f32 256
  %vm5000 = vmand %vm4998, %vm4999
  %v5001 = vld [vmem:[#allocation2 + $0x4] sm:$0x1]
  %v5002 = vsel %vm5000, 0, %v5001
  %5003 = vst [vmem:[#allocation2 + $0x4] sm:$0x1] %v5002
  %5004 = vst.msk [vmem:[#allocation2 + $0x8] sm:$0xf] %vm4996, 0
  %v5005 = vld [vmem:[#allocation2 + $0xc] sm:$0x1]
  %v5006 = vsel %vm5000, 0, %v5005
  %5007 = vst [vmem:[#allocation2 + $0xc] sm:$0x1] %v5006
  %5008 = vst.msk [vmem:[#allocation2 + $0x10] sm:$0xf] %vm4996, 0
  %v5009 = vld [vmem:[#allocation2 + $0x14] sm:$0x1]
  %v5010 = vsel %vm5000, 0, %v5009
  %5011 = vst [vmem:[#allocation2 + $0x14] sm:$0x1] %v5010
  %5012 = vst.msk [vmem:[#allocation2 + $0x18] sm:$0xf] %vm4996, 0
  %v5013 = vld [vmem:[#allocation2 + $0x1c] sm:$0x1]
  %v5014 = vsel %vm5000, 0, %v5013
  %5015 = vst [vmem:[#allocation2 + $0x1c] sm:$0x1] %v5014
  %5016 = vst.msk [vmem:[#allocation2 + $0x20] sm:$0xf] %vm4996, 0
  %v5017 = vld [vmem:[#allocation2 + $0x24] sm:$0x1]
  %v5018 = vsel %vm5000, 0, %v5017
  %5019 = vst [vmem:[#allocation2 + $0x24] sm:$0x1] %v5018
  %5020 = vst.msk [vmem:[#allocation2 + $0x28] sm:$0xf] %vm4996, 0
  %v5021 = vld [vmem:[#allocation2 + $0x2c] sm:$0x1]
  %v5022 = vsel %vm5000, 0, %v5021
  %5023 = vst [vmem:[#allocation2 + $0x2c] sm:$0x1] %v5022
  %5024 = vst.msk [vmem:[#allocation2 + $0x30] sm:$0xf] %vm4996, 0
  %v5025 = vld [vmem:[#allocation2 + $0x34] sm:$0x1]
  %v5026 = vsel %vm5000, 0, %v5025
  %5027 = vst [vmem:[#allocation2 + $0x34] sm:$0x1] %v5026
  %5028 = vst.msk [vmem:[#allocation2 + $0x38] sm:$0xf] %vm4996, 0
  %v5029 = vld [vmem:[#allocation2 + $0x3c] sm:$0x1]
  %v5030 = vsel %vm5000, 0, %v5029
  %5031 = vst [vmem:[#allocation2 + $0x3c] sm:$0x1] %v5030
  %5032 = vst.msk [vmem:[#allocation2 + $0x40] sm:$0xf] %vm4996, 0
  %v5033 = vld [vmem:[#allocation2 + $0x44] sm:$0x1]
  %v5034 = vsel %vm5000, 0, %v5033
  %5035 = vst [vmem:[#allocation2 + $0x44] sm:$0x1] %v5034
  %5036 = vst.msk [vmem:[#allocation2 + $0x48] sm:$0xf] %vm4996, 0
  %v5037 = vld [vmem:[#allocation2 + $0x4c] sm:$0x1]
  %v5038 = vsel %vm5000, 0, %v5037
  %5039 = vst [vmem:[#allocation2 + $0x4c] sm:$0x1] %v5038
  %5040 = vst.msk [vmem:[#allocation2 + $0x50] sm:$0xf] %vm4996, 0
  %v5041 = vld [vmem:[#allocation2 + $0x54] sm:$0x1]
  %v5042 = vsel %vm5000, 0, %v5041
  %5043 = vst [vmem:[#allocation2 + $0x54] sm:$0x1] %v5042
  %5044 = vst.msk [vmem:[#allocation2 + $0x58] sm:$0xf] %vm4996, 0
  %v5045 = vld [vmem:[#allocation2 + $0x5c] sm:$0x1]
  %v5046 = vsel %vm5000, 0, %v5045
  %5047 = vst [vmem:[#allocation2 + $0x5c] sm:$0x1] %v5046
  %5048 = vst.msk [vmem:[#allocation2 + $0x60] sm:$0xf] %vm4996, 0
  %v5049 = vld [vmem:[#allocation2 + $0x64] sm:$0x1]
  %v5050 = vsel %vm5000, 0, %v5049
  %5051 = vst [vmem:[#allocation2 + $0x64] sm:$0x1] %v5050
  %5052 = vst.msk [vmem:[#allocation2 + $0x68] sm:$0xf] %vm4996, 0
  %v5053 = vld [vmem:[#allocation2 + $0x6c] sm:$0x1]
  %v5054 = vsel %vm5000, 0, %v5053
  %5055 = vst [vmem:[#allocation2 + $0x6c] sm:$0x1] %v5054
  %5056 = vst.msk [vmem:[#allocation2 + $0x70] sm:$0xf] %vm4996, 0
  %v5057 = vld [vmem:[#allocation2 + $0x74] sm:$0x1]
  %v5058 = vsel %vm5000, 0, %v5057
  %5059 = vst [vmem:[#allocation2 + $0x74] sm:$0x1] %v5058
  %5060 = vst.msk [vmem:[#allocation2 + $0x78] sm:$0xf] %vm4996, 0
  %v5061 = vld [vmem:[#allocation2 + $0x7c] sm:$0x1]
  %v5062 = vsel %vm5000, 0, %v5061
  %5063 = vst [vmem:[#allocation2 + $0x7c] sm:$0x1] %v5062
  %5064 = vst.msk [vmem:[#allocation2 + $0x80] sm:$0xf] %vm4996, 0
  %v5065 = vld [vmem:[#allocation2 + $0x84] sm:$0x1]
  %v5066 = vsel %vm5000, 0, %v5065
  %5067 = vst [vmem:[#allocation2 + $0x84] sm:$0x1] %v5066
  %5068 = vst.msk [vmem:[#allocation2 + $0x88] sm:$0xf] %vm4996, 0
  %v5069 = vld [vmem:[#allocation2 + $0x8c] sm:$0x1]
  %v5070 = vsel %vm5000, 0, %v5069
  %5071 = vst [vmem:[#allocation2 + $0x8c] sm:$0x1] %v5070
  %5072 = vst.msk [vmem:[#allocation2 + $0x90] sm:$0xf] %vm4996, 0
  %v5073 = vld [vmem:[#allocation2 + $0x94] sm:$0x1]
  %v5074 = vsel %vm5000, 0, %v5073
  %5075 = vst [vmem:[#allocation2 + $0x94] sm:$0x1] %v5074
  %5076 = vst.msk [vmem:[#allocation2 + $0x98] sm:$0xf] %vm4996, 0
  %v5077 = vld [vmem:[#allocation2 + $0x9c] sm:$0x1]
  %v5078 = vsel %vm5000, 0, %v5077
  %5079 = vst [vmem:[#allocation2 + $0x9c] sm:$0x1] %v5078
  %5080 = vst.msk [vmem:[#allocation2 + $0xa0] sm:$0xf] %vm4996, 0
  %v5081 = vld [vmem:[#allocation2 + $0xa4] sm:$0x1]
  %v5082 = vsel %vm5000, 0, %v5081
  %5083 = vst [vmem:[#allocation2 + $0xa4] sm:$0x1] %v5082
  %5084 = vst.msk [vmem:[#allocation2 + $0xa8] sm:$0xf] %vm4996, 0
  %v5085 = vld [vmem:[#allocation2 + $0xac] sm:$0x1]
  %v5086 = vsel %vm5000, 0, %v5085
  %5087 = vst [vmem:[#allocation2 + $0xac] sm:$0x1] %v5086
  %5088 = vst.msk [vmem:[#allocation2 + $0xb0] sm:$0xf] %vm4996, 0
  %v5089 = vld [vmem:[#allocation2 + $0xb4] sm:$0x1]
  %v5090 = vsel %vm5000, 0, %v5089
  %5091 = vst [vmem:[#allocation2 + $0xb4] sm:$0x1] %v5090
  %5092 = vst.msk [vmem:[#allocation2 + $0xb8] sm:$0xf] %vm4996, 0
  %v5093 = vld [vmem:[#allocation2 + $0xbc] sm:$0x1]
  %v5094 = vsel %vm5000, 0, %v5093
  %5095 = vst [vmem:[#allocation2 + $0xbc] sm:$0x1] %v5094
  %5096 = vst.msk [vmem:[#allocation2 + $0xc0] sm:$0xf] %vm4996, 0
  %v5097 = vld [vmem:[#allocation2 + $0xc4] sm:$0x1]
  %v5098 = vsel %vm5000, 0, %v5097
  %5099 = vst [vmem:[#allocation2 + $0xc4] sm:$0x1] %v5098
  %5100 = vst.msk [vmem:[#allocation2 + $0xc8] sm:$0xf] %vm4996, 0
  %v5101 = vld [vmem:[#allocation2 + $0xcc] sm:$0x1]
  %v5102 = vsel %vm5000, 0, %v5101
  %5103 = vst [vmem:[#allocation2 + $0xcc] sm:$0x1] %v5102
  %5104 = vst.msk [vmem:[#allocation2 + $0xd0] sm:$0xf] %vm4996, 0
  %v5105 = vld [vmem:[#allocation2 + $0xd4] sm:$0x1]
  %v5106 = vsel %vm5000, 0, %v5105
  %5107 = vst [vmem:[#allocation2 + $0xd4] sm:$0x1] %v5106
  %5108 = vst.msk [vmem:[#allocation2 + $0xd8] sm:$0xf] %vm4996, 0
  %v5109 = vld [vmem:[#allocation2 + $0xdc] sm:$0x1]
  %v5110 = vsel %vm5000, 0, %v5109
  %5111 = vst [vmem:[#allocation2 + $0xdc] sm:$0x1] %v5110
  %5112 = vst.msk [vmem:[#allocation2 + $0xe0] sm:$0xf] %vm4996, 0
  %v5113 = vld [vmem:[#allocation2 + $0xe4] sm:$0x1]
  %v5114 = vsel %vm5000, 0, %v5113
  %5115 = vst [vmem:[#allocation2 + $0xe4] sm:$0x1] %v5114
  %5116 = vst.msk [vmem:[#allocation2 + $0xe8] sm:$0xf] %vm4996, 0
  %v5117 = vld [vmem:[#allocation2 + $0xec] sm:$0x1]
  %v5118 = vsel %vm5000, 0, %v5117
  %5119 = vst [vmem:[#allocation2 + $0xec] sm:$0x1] %v5118
  %5120 = vst.msk [vmem:[#allocation2 + $0xf0] sm:$0xf] %vm4996, 0
  %v5121 = vld [vmem:[#allocation2 + $0xf4] sm:$0x1]
  %v5122 = vsel %vm5000, 0, %v5121
  %5123 = vst [vmem:[#allocation2 + $0xf4] sm:$0x1] %v5122
  %5124 = vst.msk [vmem:[#allocation2 + $0xf8] sm:$0xf] %vm4996, 0
  %v5125 = vld [vmem:[#allocation2 + $0xfc] sm:$0x1]
  %v5126 = vsel %vm5000, 0, %v5125
  %5127 = vst [vmem:[#allocation2 + $0xfc] sm:$0x1] %v5126
  %5128 = vst.msk [vmem:[#allocation2 + $0x100] sm:$0xf] %vm4996, 0
  %v5129 = vld [vmem:[#allocation2 + $0x104] sm:$0x1]
  %v5130 = vsel %vm5000, 0, %v5129
  %5131 = vst [vmem:[#allocation2 + $0x104] sm:$0x1] %v5130
  %5132 = vst.msk [vmem:[#allocation2 + $0x108] sm:$0xf] %vm4996, 0
  %v5133 = vld [vmem:[#allocation2 + $0x10c] sm:$0x1]
  %v5134 = vsel %vm5000, 0, %v5133
  %5135 = vst [vmem:[#allocation2 + $0x10c] sm:$0x1] %v5134
  %5136 = vst.msk [vmem:[#allocation2 + $0x110] sm:$0xf] %vm4996, 0
  %v5137 = vld [vmem:[#allocation2 + $0x114] sm:$0x1]
  %v5138 = vsel %vm5000, 0, %v5137
  %5139 = vst [vmem:[#allocation2 + $0x114] sm:$0x1] %v5138
  %5140 = vst.msk [vmem:[#allocation2 + $0x118] sm:$0xf] %vm4996, 0
  %v5141 = vld [vmem:[#allocation2 + $0x11c] sm:$0x1]
  %v5142 = vsel %vm5000, 0, %v5141
  %5143 = vst [vmem:[#allocation2 + $0x11c] sm:$0x1] %v5142
  %5144 = vst.msk [vmem:[#allocation2 + $0x120] sm:$0xf] %vm4996, 0
  %v5145 = vld [vmem:[#allocation2 + $0x124] sm:$0x1]
  %v5146 = vsel %vm5000, 0, %v5145
  %5147 = vst [vmem:[#allocation2 + $0x124] sm:$0x1] %v5146
  %5148 = vst.msk [vmem:[#allocation2 + $0x128] sm:$0xf] %vm4996, 0
  %v5149 = vld [vmem:[#allocation2 + $0x12c] sm:$0x1]
  %v5150 = vsel %vm5000, 0, %v5149
  %5151 = vst [vmem:[#allocation2 + $0x12c] sm:$0x1] %v5150
  %5152 = vst.msk [vmem:[#allocation2 + $0x130] sm:$0xf] %vm4996, 0
  %v5153 = vld [vmem:[#allocation2 + $0x134] sm:$0x1]
  %v5154 = vsel %vm5000, 0, %v5153
  %5155 = vst [vmem:[#allocation2 + $0x134] sm:$0x1] %v5154
  %5156 = vst.msk [vmem:[#allocation2 + $0x138] sm:$0xf] %vm4996, 0
  %v5157 = vld [vmem:[#allocation2 + $0x13c] sm:$0x1]
  %v5158 = vsel %vm5000, 0, %v5157
  %5159 = vst [vmem:[#allocation2 + $0x13c] sm:$0x1] %v5158
  %5160 = vst.msk [vmem:[#allocation2 + $0x140] sm:$0xf] %vm4996, 0
  %v5161 = vld [vmem:[#allocation2 + $0x144] sm:$0x1]
  %v5162 = vsel %vm5000, 0, %v5161
  %5163 = vst [vmem:[#allocation2 + $0x144] sm:$0x1] %v5162
  %5164 = vst.msk [vmem:[#allocation2 + $0x148] sm:$0xf] %vm4996, 0
  %v5165 = vld [vmem:[#allocation2 + $0x14c] sm:$0x1]
  %v5166 = vsel %vm5000, 0, %v5165
  %5167 = vst [vmem:[#allocation2 + $0x14c] sm:$0x1] %v5166
  %5168 = vst.msk [vmem:[#allocation2 + $0x150] sm:$0xf] %vm4996, 0
  %v5169 = vld [vmem:[#allocation2 + $0x154] sm:$0x1]
  %v5170 = vsel %vm5000, 0, %v5169
  %5171 = vst [vmem:[#allocation2 + $0x154] sm:$0x1] %v5170
  %5172 = vst.msk [vmem:[#allocation2 + $0x158] sm:$0xf] %vm4996, 0
  %v5173 = vld [vmem:[#allocation2 + $0x15c] sm:$0x1]
  %v5174 = vsel %vm5000, 0, %v5173
  %5175 = vst [vmem:[#allocation2 + $0x15c] sm:$0x1] %v5174
  %5176 = vst.msk [vmem:[#allocation2 + $0x160] sm:$0xf] %vm4996, 0
  %v5177 = vld [vmem:[#allocation2 + $0x164] sm:$0x1]
  %v5178 = vsel %vm5000, 0, %v5177
  %5179 = vst [vmem:[#allocation2 + $0x164] sm:$0x1] %v5178
  %5180 = vst.msk [vmem:[#allocation2 + $0x168] sm:$0xf] %vm4996, 0
  %v5181 = vld [vmem:[#allocation2 + $0x16c] sm:$0x1]
  %v5182 = vsel %vm5000, 0, %v5181
  %5183 = vst [vmem:[#allocation2 + $0x16c] sm:$0x1] %v5182
  %5184 = vst.msk [vmem:[#allocation2 + $0x170] sm:$0xf] %vm4996, 0
  %v5185 = vld [vmem:[#allocation2 + $0x174] sm:$0x1]
  %v5186 = vsel %vm5000, 0, %v5185
  %5187 = vst [vmem:[#allocation2 + $0x174] sm:$0x1] %v5186
  %5188 = vst.msk [vmem:[#allocation2 + $0x178] sm:$0xf] %vm4996, 0
  %v5189 = vld [vmem:[#allocation2 + $0x17c] sm:$0x1]
  %v5190 = vsel %vm5000, 0, %v5189
  %5191 = vst [vmem:[#allocation2 + $0x17c] sm:$0x1] %v5190
  %5192 = vst.msk [vmem:[#allocation2 + $0x180] sm:$0xf] %vm4996, 0
  %v5193 = vld [vmem:[#allocation2 + $0x184] sm:$0x1]
  %v5194 = vsel %vm5000, 0, %v5193
  %5195 = vst [vmem:[#allocation2 + $0x184] sm:$0x1] %v5194
  %5196 = vst.msk [vmem:[#allocation2 + $0x188] sm:$0xf] %vm4996, 0
  %v5197 = vld [vmem:[#allocation2 + $0x18c] sm:$0x1]
  %v5198 = vsel %vm5000, 0, %v5197
  %5199 = vst [vmem:[#allocation2 + $0x18c] sm:$0x1] %v5198
  %5200 = vst.msk [vmem:[#allocation2 + $0x190] sm:$0xf] %vm4996, 0
  %v5201 = vld [vmem:[#allocation2 + $0x194] sm:$0x1]
  %v5202 = vsel %vm5000, 0, %v5201
  %5203 = vst [vmem:[#allocation2 + $0x194] sm:$0x1] %v5202
  %5204 = vst.msk [vmem:[#allocation2 + $0x198] sm:$0xf] %vm4996, 0
  %v5205 = vld [vmem:[#allocation2 + $0x19c] sm:$0x1]
  %v5206 = vsel %vm5000, 0, %v5205
  %5207 = vst [vmem:[#allocation2 + $0x19c] sm:$0x1] %v5206
  %5208 = vst.msk [vmem:[#allocation2 + $0x1a0] sm:$0xf] %vm4996, 0
  %v5209 = vld [vmem:[#allocation2 + $0x1a4] sm:$0x1]
  %v5210 = vsel %vm5000, 0, %v5209
  %5211 = vst [vmem:[#allocation2 + $0x1a4] sm:$0x1] %v5210
  %5212 = vst.msk [vmem:[#allocation2 + $0x1a8] sm:$0xf] %vm4996, 0
  %v5213 = vld [vmem:[#allocation2 + $0x1ac] sm:$0x1]
  %v5214 = vsel %vm5000, 0, %v5213
  %5215 = vst [vmem:[#allocation2 + $0x1ac] sm:$0x1] %v5214
  %5216 = vst.msk [vmem:[#allocation2 + $0x1b0] sm:$0xf] %vm4996, 0
  %v5217 = vld [vmem:[#allocation2 + $0x1b4] sm:$0x1]
  %v5218 = vsel %vm5000, 0, %v5217
  %5219 = vst [vmem:[#allocation2 + $0x1b4] sm:$0x1] %v5218
  %5220 = vst.msk [vmem:[#allocation2 + $0x1b8] sm:$0xf] %vm4996, 0
  %v5221 = vld [vmem:[#allocation2 + $0x1bc] sm:$0x1]
  %v5222 = vsel %vm5000, 0, %v5221
  %5223 = vst [vmem:[#allocation2 + $0x1bc] sm:$0x1] %v5222
  %5224 = vst.msk [vmem:[#allocation2 + $0x1c0] sm:$0xf] %vm4996, 0
  %v5225 = vld [vmem:[#allocation2 + $0x1c4] sm:$0x1]
  %v5226 = vsel %vm5000, 0, %v5225
  %5227 = vst [vmem:[#allocation2 + $0x1c4] sm:$0x1] %v5226
  %5228 = vst.msk [vmem:[#allocation2 + $0x1c8] sm:$0xf] %vm4996, 0
  %v5229 = vld [vmem:[#allocation2 + $0x1cc] sm:$0x1]
  %v5230 = vsel %vm5000, 0, %v5229
  %5231 = vst [vmem:[#allocation2 + $0x1cc] sm:$0x1] %v5230
  %5232 = vst.msk [vmem:[#allocation2 + $0x1d0] sm:$0xf] %vm4996, 0
  %v5233 = vld [vmem:[#allocation2 + $0x1d4] sm:$0x1]
  %v5234 = vsel %vm5000, 0, %v5233
  %5235 = vst [vmem:[#allocation2 + $0x1d4] sm:$0x1] %v5234
  %5236 = vst.msk [vmem:[#allocation2 + $0x1d8] sm:$0xf] %vm4996, 0
  %v5237 = vld [vmem:[#allocation2 + $0x1dc] sm:$0x1]
  %v5238 = vsel %vm5000, 0, %v5237
  %5239 = vst [vmem:[#allocation2 + $0x1dc] sm:$0x1] %v5238
  %5240 = vst.msk [vmem:[#allocation2 + $0x1e0] sm:$0xf] %vm4996, 0
  %v5241 = vld [vmem:[#allocation2 + $0x1e4] sm:$0x1]
  %v5242 = vsel %vm5000, 0, %v5241
  %5243 = vst [vmem:[#allocation2 + $0x1e4] sm:$0x1] %v5242
  %5244 = vst.msk [vmem:[#allocation2 + $0x1e8] sm:$0xf] %vm4996, 0
  %v5245 = vld [vmem:[#allocation2 + $0x1ec] sm:$0x1]
  %v5246 = vsel %vm5000, 0, %v5245
  %5247 = vst [vmem:[#allocation2 + $0x1ec] sm:$0x1] %v5246
  %5248 = vst.msk [vmem:[#allocation2 + $0x1f0] sm:$0xf] %vm4996, 0
  %v5249 = vld [vmem:[#allocation2 + $0x1f4] sm:$0x1]
  %v5250 = vsel %vm5000, 0, %v5249
  %5251 = vst [vmem:[#allocation2 + $0x1f4] sm:$0x1] %v5250
  %5252 = vst.msk [vmem:[#allocation2 + $0x1f8] sm:$0xf] %vm4996, 0
  %v5253 = vld [vmem:[#allocation2 + $0x1fc] sm:$0x1]
  %v5254 = vsel %vm5000, 0, %v5253
  %5255 = vst [vmem:[#allocation2 + $0x1fc] sm:$0x1] %v5254
  %5256 = vst.msk [vmem:[#allocation2 + $0x200] sm:$0xf] %vm4996, 0
  %v5257 = vld [vmem:[#allocation2 + $0x204] sm:$0x1]
  %v5258 = vsel %vm5000, 0, %v5257
  %5259 = vst [vmem:[#allocation2 + $0x204] sm:$0x1] %v5258
  %5260 = vst.msk [vmem:[#allocation2 + $0x208] sm:$0xf] %vm4996, 0
  %v5261 = vld [vmem:[#allocation2 + $0x20c] sm:$0x1]
  %v5262 = vsel %vm5000, 0, %v5261
  %5263 = vst [vmem:[#allocation2 + $0x20c] sm:$0x1] %v5262
  %5264 = vst.msk [vmem:[#allocation2 + $0x210] sm:$0xf] %vm4996, 0
  %v5265 = vld [vmem:[#allocation2 + $0x214] sm:$0x1]
  %v5266 = vsel %vm5000, 0, %v5265
  %5267 = vst [vmem:[#allocation2 + $0x214] sm:$0x1] %v5266
  %5268 = vst.msk [vmem:[#allocation2 + $0x218] sm:$0xf] %vm4996, 0
  %v5269 = vld [vmem:[#allocation2 + $0x21c] sm:$0x1]
  %v5270 = vsel %vm5000, 0, %v5269
  %5271 = vst [vmem:[#allocation2 + $0x21c] sm:$0x1] %v5270
  %5272 = vst.msk [vmem:[#allocation2 + $0x220] sm:$0xf] %vm4996, 0
  %v5273 = vld [vmem:[#allocation2 + $0x224] sm:$0x1]
  %v5274 = vsel %vm5000, 0, %v5273
  %5275 = vst [vmem:[#allocation2 + $0x224] sm:$0x1] %v5274
  %5276 = vst.msk [vmem:[#allocation2 + $0x228] sm:$0xf] %vm4996, 0
  %v5277 = vld [vmem:[#allocation2 + $0x22c] sm:$0x1]
  %v5278 = vsel %vm5000, 0, %v5277
  %5279 = vst [vmem:[#allocation2 + $0x22c] sm:$0x1] %v5278
  %5280 = vst.msk [vmem:[#allocation2 + $0x230] sm:$0xf] %vm4996, 0
  %v5281 = vld [vmem:[#allocation2 + $0x234] sm:$0x1]
  %v5282 = vsel %vm5000, 0, %v5281
  %5283 = vst [vmem:[#allocation2 + $0x234] sm:$0x1] %v5282
  %5284 = vst.msk [vmem:[#allocation2 + $0x238] sm:$0xf] %vm4996, 0
  %v5285 = vld [vmem:[#allocation2 + $0x23c] sm:$0x1]
  %v5286 = vsel %vm5000, 0, %v5285
  %5287 = vst [vmem:[#allocation2 + $0x23c] sm:$0x1] %v5286
  %v5320 = vunpack.c.l.b16 %v4964
  %v5321 = vunpack.c.h.b16 %v4964
  %v5322 = vunpack.c.l.b16 %v4965
  %v5323 = vunpack.c.h.b16 %v4965
  %v5324 = vunpack.c.l.b16 %v4966
  %v5325 = vunpack.c.h.b16 %v4966
  %v5326 = vunpack.c.l.b16 %v4967
  %v5327 = vunpack.c.h.b16 %v4967
  %v5328 = vunpack.c.l.b16 %v4968
  %v5329 = vunpack.c.h.b16 %v4968
  %v5330 = vunpack.c.l.b16 %v4969
  %v5331 = vunpack.c.h.b16 %v4969
  %v5332 = vunpack.c.l.b16 %v4970
  %v5333 = vunpack.c.h.b16 %v4970
  %v5334 = vunpack.c.l.b16 %v4971
  %v5335 = vunpack.c.h.b16 %v4971
  %v5336 = vunpack.c.l.b16 %v4972
  %v5337 = vunpack.c.h.b16 %v4972
  %v5338 = vunpack.c.l.b16 %v4973
  %v5339 = vunpack.c.h.b16 %v4973
  %v5340 = vunpack.c.l.b16 %v4974
  %v5341 = vunpack.c.h.b16 %v4974
  %v5342 = vunpack.c.l.b16 %v4975
  %v5343 = vunpack.c.h.b16 %v4975
  %v5344 = vunpack.c.l.b16 %v4976
  %v5345 = vunpack.c.h.b16 %v4976
  %v5346 = vunpack.c.l.b16 %v4977
  %v5347 = vunpack.c.h.b16 %v4977
  %v5348 = vunpack.c.l.b16 %v4978
  %v5349 = vunpack.c.h.b16 %v4978
  %v5350 = vunpack.c.l.b16 %v4979
  %v5351 = vunpack.c.h.b16 %v4979
  %v5352 = vunpack.c.l.b16 %v4980
  %v5353 = vunpack.c.h.b16 %v4980
  %v5354 = vunpack.c.l.b16 %v4981
  %v5355 = vunpack.c.h.b16 %v4981
  %v5356 = vunpack.c.l.b16 %v4982
  %v5357 = vunpack.c.h.b16 %v4982
  %v5358 = vunpack.c.l.b16 %v4983
  %v5359 = vunpack.c.h.b16 %v4983
  %v5360 = vunpack.c.l.b16 %v4984
  %v5361 = vunpack.c.h.b16 %v4984
  %v5362 = vunpack.c.l.b16 %v4985
  %v5363 = vunpack.c.h.b16 %v4985
  %v5364 = vunpack.c.l.b16 %v4986
  %v5365 = vunpack.c.h.b16 %v4986
  %v5366 = vunpack.c.l.b16 %v4987
  %v5367 = vunpack.c.h.b16 %v4987
  %v5368 = vunpack.c.l.b16 %v4988
  %v5369 = vunpack.c.h.b16 %v4988
  %v5370 = vunpack.c.l.b16 %v4989
  %v5371 = vunpack.c.h.b16 %v4989
  %v5372 = vunpack.c.l.b16 %v4990
  %v5373 = vunpack.c.h.b16 %v4990
  %v5374 = vunpack.c.l.b16 %v4991
  %v5375 = vunpack.c.h.b16 %v4991
  %v5376 = vunpack.c.l.b16 %v4992
  %v5377 = vunpack.c.h.b16 %v4992
  %v5378 = vunpack.c.l.b16 %v4993
  %v5379 = vunpack.c.h.b16 %v4993
  %v5380 = vunpack.c.l.b16 %v4994
  %v5381 = vunpack.c.h.b16 %v4994
  %v5382 = vunpack.c.l.b16 %v4995
  %v5383 = vunpack.c.h.b16 %v4995
  %v5384 = vpack.c.b16 %v5320, %v5320
  %v5385 = vpack.c.b16 %v5321, %v5321
  %v5386 = vpack.c.b16 %v5322, %v5322
  %v5387 = vpack.c.b16 %v5323, %v5323
  %v5388 = vpack.c.b16 %v5324, %v5324
  %v5389 = vpack.c.b16 %v5325, %v5325
  %v5390 = vpack.c.b16 %v5326, %v5326
  %v5391 = vpack.c.b16 %v5327, %v5327
  %v5392 = vpack.c.b16 %v5328, %v5328
  %v5393 = vpack.c.b16 %v5329, %v5329
  %v5394 = vpack.c.b16 %v5330, %v5330
  %v5395 = vpack.c.b16 %v5331, %v5331
  %v5396 = vpack.c.b16 %v5332, %v5332
  %v5397 = vpack.c.b16 %v5333, %v5333
  %v5398 = vpack.c.b16 %v5334, %v5334
  %v5399 = vpack.c.b16 %v5335, %v5335
  %v5400 = vpack.c.b16 %v5336, %v5336
  %v5401 = vpack.c.b16 %v5337, %v5337
  %v5402 = vpack.c.b16 %v5338, %v5338
  %v5403 = vpack.c.b16 %v5339, %v5339
  %v5404 = vpack.c.b16 %v5340, %v5340
  %v5405 = vpack.c.b16 %v5341, %v5341
  %v5406 = vpack.c.b16 %v5342, %v5342
  %v5407 = vpack.c.b16 %v5343, %v5343
  %v5408 = vpack.c.b16 %v5344, %v5344
  %v5409 = vpack.c.b16 %v5345, %v5345
  %v5410 = vpack.c.b16 %v5346, %v5346
  %v5411 = vpack.c.b16 %v5347, %v5347
  %v5412 = vpack.c.b16 %v5348, %v5348
  %v5413 = vpack.c.b16 %v5349, %v5349
  %v5414 = vpack.c.b16 %v5350, %v5350
  %v5415 = vpack.c.b16 %v5351, %v5351
  %v5416 = vpack.c.b16 %v5352, %v5352
  %v5417 = vpack.c.b16 %v5353, %v5353
  %v5418 = vpack.c.b16 %v5354, %v5354
  %v5419 = vpack.c.b16 %v5355, %v5355
  %v5420 = vpack.c.b16 %v5356, %v5356
  %v5421 = vpack.c.b16 %v5357, %v5357
  %v5422 = vpack.c.b16 %v5358, %v5358
  %v5423 = vpack.c.b16 %v5359, %v5359
  %v5424 = vpack.c.b16 %v5360, %v5360
  %v5425 = vpack.c.b16 %v5361, %v5361
  %v5426 = vpack.c.b16 %v5362, %v5362
  %v5427 = vpack.c.b16 %v5363, %v5363
  %v5428 = vpack.c.b16 %v5364, %v5364
  %v5429 = vpack.c.b16 %v5365, %v5365
  %v5430 = vpack.c.b16 %v5366, %v5366
  %v5431 = vpack.c.b16 %v5367, %v5367
  %v5432 = vpack.c.b16 %v5368, %v5368
  %v5433 = vpack.c.b16 %v5369, %v5369
  %v5434 = vpack.c.b16 %v5370, %v5370
  %v5435 = vpack.c.b16 %v5371, %v5371
  %v5436 = vpack.c.b16 %v5372, %v5372
  %v5437 = vpack.c.b16 %v5373, %v5373
  %v5438 = vpack.c.b16 %v5374, %v5374
  %v5439 = vpack.c.b16 %v5375, %v5375
  %v5440 = vpack.c.b16 %v5376, %v5376
  %v5441 = vpack.c.b16 %v5377, %v5377
  %v5442 = vpack.c.b16 %v5378, %v5378
  %v5443 = vpack.c.b16 %v5379, %v5379
  %v5444 = vpack.c.b16 %v5380, %v5380
  %v5445 = vpack.c.b16 %v5381, %v5381
  %v5446 = vpack.c.b16 %v5382, %v5382
  %v5447 = vpack.c.b16 %v5383, %v5383
  %vm5512 = vcmask 125952
  %5513 = vst.msk [vmem:[#allocation2] sm:$0xf] %vm5512, %v5384
  %5514 = vst.msk [vmem:[#allocation2 + $0x8] sm:$0xf] %vm5512, %v5385
  %5515 = vst.msk [vmem:[#allocation2 + $0x10] sm:$0xf] %vm5512, %v5386
  %5516 = vst.msk [vmem:[#allocation2 + $0x18] sm:$0xf] %vm5512, %v5387
  %5517 = vst.msk [vmem:[#allocation2 + $0x20] sm:$0xf] %vm5512, %v5388
  %5518 = vst.msk [vmem:[#allocation2 + $0x28] sm:$0xf] %vm5512, %v5389
  %5519 = vst.msk [vmem:[#allocation2 + $0x30] sm:$0xf] %vm5512, %v5390
  %5520 = vst.msk [vmem:[#allocation2 + $0x38] sm:$0xf] %vm5512, %v5391
  %5521 = vst.msk [vmem:[#allocation2 + $0x48] sm:$0xf] %vm5512, %v5392
  %5522 = vst.msk [vmem:[#allocation2 + $0x50] sm:$0xf] %vm5512, %v5393
  %5523 = vst.msk [vmem:[#allocation2 + $0x58] sm:$0xf] %vm5512, %v5394
  %5524 = vst.msk [vmem:[#allocation2 + $0x60] sm:$0xf] %vm5512, %v5395
  %5525 = vst.msk [vmem:[#allocation2 + $0x68] sm:$0xf] %vm5512, %v5396
  %5526 = vst.msk [vmem:[#allocation2 + $0x70] sm:$0xf] %vm5512, %v5397
  %5527 = vst.msk [vmem:[#allocation2 + $0x78] sm:$0xf] %vm5512, %v5398
  %5528 = vst.msk [vmem:[#allocation2 + $0x80] sm:$0xf] %vm5512, %v5399
  %5529 = vst.msk [vmem:[#allocation2 + $0x90] sm:$0xf] %vm5512, %v5400
  %5530 = vst.msk [vmem:[#allocation2 + $0x98] sm:$0xf] %vm5512, %v5401
  %5531 = vst.msk [vmem:[#allocation2 + $0xa0] sm:$0xf] %vm5512, %v5402
  %5532 = vst.msk [vmem:[#allocation2 + $0xa8] sm:$0xf] %vm5512, %v5403
  %5533 = vst.msk [vmem:[#allocation2 + $0xb0] sm:$0xf] %vm5512, %v5404
  %5534 = vst.msk [vmem:[#allocation2 + $0xb8] sm:$0xf] %vm5512, %v5405
  %5535 = vst.msk [vmem:[#allocation2 + $0xc0] sm:$0xf] %vm5512, %v5406
  %5536 = vst.msk [vmem:[#allocation2 + $0xc8] sm:$0xf] %vm5512, %v5407
  %5537 = vst.msk [vmem:[#allocation2 + $0xd8] sm:$0xf] %vm5512, %v5408
  %5538 = vst.msk [vmem:[#allocation2 + $0xe0] sm:$0xf] %vm5512, %v5409
  %5539 = vst.msk [vmem:[#allocation2 + $0xe8] sm:$0xf] %vm5512, %v5410
  %5540 = vst.msk [vmem:[#allocation2 + $0xf0] sm:$0xf] %vm5512, %v5411
  %5541 = vst.msk [vmem:[#allocation2 + $0xf8] sm:$0xf] %vm5512, %v5412
  %5542 = vst.msk [vmem:[#allocation2 + $0x100] sm:$0xf] %vm5512, %v5413
  %5543 = vst.msk [vmem:[#allocation2 + $0x108] sm:$0xf] %vm5512, %v5414
  %5544 = vst.msk [vmem:[#allocation2 + $0x110] sm:$0xf] %vm5512, %v5415
  %5545 = vst.msk [vmem:[#allocation2 + $0x120] sm:$0xf] %vm5512, %v5416
  %5546 = vst.msk [vmem:[#allocation2 + $0x128] sm:$0xf] %vm5512, %v5417
  %5547 = vst.msk [vmem:[#allocation2 + $0x130] sm:$0xf] %vm5512, %v5418
  %5548 = vst.msk [vmem:[#allocation2 + $0x138] sm:$0xf] %vm5512, %v5419
  %5549 = vst.msk [vmem:[#allocation2 + $0x140] sm:$0xf] %vm5512, %v5420
  %5550 = vst.msk [vmem:[#allocation2 + $0x148] sm:$0xf] %vm5512, %v5421
  %5551 = vst.msk [vmem:[#allocation2 + $0x150] sm:$0xf] %vm5512, %v5422
  %5552 = vst.msk [vmem:[#allocation2 + $0x158] sm:$0xf] %vm5512, %v5423
  %5553 = vst.msk [vmem:[#allocation2 + $0x168] sm:$0xf] %vm5512, %v5424
  %5554 = vst.msk [vmem:[#allocation2 + $0x170] sm:$0xf] %vm5512, %v5425
  %5555 = vst.msk [vmem:[#allocation2 + $0x178] sm:$0xf] %vm5512, %v5426
  %5556 = vst.msk [vmem:[#allocation2 + $0x180] sm:$0xf] %vm5512, %v5427
  %5557 = vst.msk [vmem:[#allocation2 + $0x188] sm:$0xf] %vm5512, %v5428
  %5558 = vst.msk [vmem:[#allocation2 + $0x190] sm:$0xf] %vm5512, %v5429
  %5559 = vst.msk [vmem:[#allocation2 + $0x198] sm:$0xf] %vm5512, %v5430
  %5560 = vst.msk [vmem:[#allocation2 + $0x1a0] sm:$0xf] %vm5512, %v5431
  %5561 = vst.msk [vmem:[#allocation2 + $0x1b0] sm:$0xf] %vm5512, %v5432
  %5562 = vst.msk [vmem:[#allocation2 + $0x1b8] sm:$0xf] %vm5512, %v5433
  %5563 = vst.msk [vmem:[#allocation2 + $0x1c0] sm:$0xf] %vm5512, %v5434
  %5564 = vst.msk [vmem:[#allocation2 + $0x1c8] sm:$0xf] %vm5512, %v5435
  %5565 = vst.msk [vmem:[#allocation2 + $0x1d0] sm:$0xf] %vm5512, %v5436
  %5566 = vst.msk [vmem:[#allocation2 + $0x1d8] sm:$0xf] %vm5512, %v5437
  %5567 = vst.msk [vmem:[#allocation2 + $0x1e0] sm:$0xf] %vm5512, %v5438
  %5568 = vst.msk [vmem:[#allocation2 + $0x1e8] sm:$0xf] %vm5512, %v5439
  %5569 = vst.msk [vmem:[#allocation2 + $0x1f8] sm:$0xf] %vm5512, %v5440
  %5570 = vst.msk [vmem:[#allocation2 + $0x200] sm:$0xf] %vm5512, %v5441
  %5571 = vst.msk [vmem:[#allocation2 + $0x208] sm:$0xf] %vm5512, %v5442
  %5572 = vst.msk [vmem:[#allocation2 + $0x210] sm:$0xf] %vm5512, %v5443
  %5573 = vst.msk [vmem:[#allocation2 + $0x218] sm:$0xf] %vm5512, %v5444
  %5574 = vst.msk [vmem:[#allocation2 + $0x220] sm:$0xf] %vm5512, %v5445
  %5575 = vst.msk [vmem:[#allocation2 + $0x228] sm:$0xf] %vm5512, %v5446
  %5576 = vst.msk [vmem:[#allocation2 + $0x230] sm:$0xf] %vm5512, %v5447
  %v5578 = vshrl.u32 %v5384, 16
  %v5580 = vrot.slane %v5578, 7
  %v5581 = vshll.u32 %v5384, 16
  %v5583 = vor.u32 %v5580, %v5581
  %v5584 = vrot.slane %v5580, 4
  %v5586 = vshrl.u32 %v5385, 16
  %v5588 = vrot.slane %v5586, 7
  %v5589 = vshll.u32 %v5385, 16
  %v5591 = vor.u32 %v5588, %v5589
  %v5592 = vrot.slane %v5588, 4
  %v5594 = vshrl.u32 %v5386, 16
  %v5596 = vrot.slane %v5594, 7
  %v5597 = vshll.u32 %v5386, 16
  %v5599 = vor.u32 %v5596, %v5597
  %v5600 = vrot.slane %v5596, 4
  %v5602 = vshrl.u32 %v5387, 16
  %v5604 = vrot.slane %v5602, 7
  %v5605 = vshll.u32 %v5387, 16
  %v5607 = vor.u32 %v5604, %v5605
  %v5608 = vrot.slane %v5604, 4
  %v5610 = vshrl.u32 %v5388, 16
  %v5612 = vrot.slane %v5610, 7
  %v5613 = vshll.u32 %v5388, 16
  %v5615 = vor.u32 %v5612, %v5613
  %v5616 = vrot.slane %v5612, 4
  %v5618 = vshrl.u32 %v5389, 16
  %v5620 = vrot.slane %v5618, 7
  %v5621 = vshll.u32 %v5389, 16
  %v5623 = vor.u32 %v5620, %v5621
  %v5624 = vrot.slane %v5620, 4
  %v5626 = vshrl.u32 %v5390, 16
  %v5628 = vrot.slane %v5626, 7
  %v5629 = vshll.u32 %v5390, 16
  %v5631 = vor.u32 %v5628, %v5629
  %v5632 = vrot.slane %v5628, 4
  %v5634 = vshrl.u32 %v5391, 16
  %v5636 = vrot.slane %v5634, 7
  %v5637 = vshll.u32 %v5391, 16
  %v5639 = vor.u32 %v5636, %v5637
  %v5640 = vrot.slane %v5636, 4
  %v5642 = vshrl.u32 %v5392, 16
  %v5644 = vrot.slane %v5642, 7
  %v5645 = vshll.u32 %v5392, 16
  %v5647 = vor.u32 %v5644, %v5645
  %v5648 = vrot.slane %v5644, 4
  %v5650 = vshrl.u32 %v5393, 16
  %v5652 = vrot.slane %v5650, 7
  %v5653 = vshll.u32 %v5393, 16
  %v5655 = vor.u32 %v5652, %v5653
  %v5656 = vrot.slane %v5652, 4
  %v5658 = vshrl.u32 %v5394, 16
  %v5660 = vrot.slane %v5658, 7
  %v5661 = vshll.u32 %v5394, 16
  %v5663 = vor.u32 %v5660, %v5661
  %v5664 = vrot.slane %v5660, 4
  %v5666 = vshrl.u32 %v5395, 16
  %v5668 = vrot.slane %v5666, 7
  %v5669 = vshll.u32 %v5395, 16
  %v5671 = vor.u32 %v5668, %v5669
  %v5672 = vrot.slane %v5668, 4
  %v5674 = vshrl.u32 %v5396, 16
  %v5676 = vrot.slane %v5674, 7
  %v5677 = vshll.u32 %v5396, 16
  %v5679 = vor.u32 %v5676, %v5677
  %v5680 = vrot.slane %v5676, 4
  %v5682 = vshrl.u32 %v5397, 16
  %v5684 = vrot.slane %v5682, 7
  %v5685 = vshll.u32 %v5397, 16
  %v5687 = vor.u32 %v5684, %v5685
  %v5688 = vrot.slane %v5684, 4
  %v5690 = vshrl.u32 %v5398, 16
  %v5692 = vrot.slane %v5690, 7
  %v5693 = vshll.u32 %v5398, 16
  %v5695 = vor.u32 %v5692, %v5693
  %v5696 = vrot.slane %v5692, 4
  %v5698 = vshrl.u32 %v5399, 16
  %v5700 = vrot.slane %v5698, 7
  %v5701 = vshll.u32 %v5399, 16
  %v5703 = vor.u32 %v5700, %v5701
  %v5704 = vrot.slane %v5700, 4
  %v5706 = vshrl.u32 %v5400, 16
  %v5708 = vrot.slane %v5706, 7
  %v5709 = vshll.u32 %v5400, 16
  %v5711 = vor.u32 %v5708, %v5709
  %v5712 = vrot.slane %v5708, 4
  %v5714 = vshrl.u32 %v5401, 16
  %v5716 = vrot.slane %v5714, 7
  %v5717 = vshll.u32 %v5401, 16
  %v5719 = vor.u32 %v5716, %v5717
  %v5720 = vrot.slane %v5716, 4
  %v5722 = vshrl.u32 %v5402, 16
  %v5724 = vrot.slane %v5722, 7
  %v5725 = vshll.u32 %v5402, 16
  %v5727 = vor.u32 %v5724, %v5725
  %v5728 = vrot.slane %v5724, 4
  %v5730 = vshrl.u32 %v5403, 16
  %v5732 = vrot.slane %v5730, 7
  %v5733 = vshll.u32 %v5403, 16
  %v5735 = vor.u32 %v5732, %v5733
  %v5736 = vrot.slane %v5732, 4
  %v5738 = vshrl.u32 %v5404, 16
  %v5740 = vrot.slane %v5738, 7
  %v5741 = vshll.u32 %v5404, 16
  %v5743 = vor.u32 %v5740, %v5741
  %v5744 = vrot.slane %v5740, 4
  %v5746 = vshrl.u32 %v5405, 16
  %v5748 = vrot.slane %v5746, 7
  %v5749 = vshll.u32 %v5405, 16
  %v5751 = vor.u32 %v5748, %v5749
  %v5752 = vrot.slane %v5748, 4
  %v5754 = vshrl.u32 %v5406, 16
  %v5756 = vrot.slane %v5754, 7
  %v5757 = vshll.u32 %v5406, 16
  %v5759 = vor.u32 %v5756, %v5757
  %v5760 = vrot.slane %v5756, 4
  %v5762 = vshrl.u32 %v5407, 16
  %v5764 = vrot.slane %v5762, 7
  %v5765 = vshll.u32 %v5407, 16
  %v5767 = vor.u32 %v5764, %v5765
  %v5768 = vrot.slane %v5764, 4
  %v5770 = vshrl.u32 %v5408, 16
  %v5772 = vrot.slane %v5770, 7
  %v5773 = vshll.u32 %v5408, 16
  %v5775 = vor.u32 %v5772, %v5773
  %v5776 = vrot.slane %v5772, 4
  %v5778 = vshrl.u32 %v5409, 16
  %v5780 = vrot.slane %v5778, 7
  %v5781 = vshll.u32 %v5409, 16
  %v5783 = vor.u32 %v5780, %v5781
  %v5784 = vrot.slane %v5780, 4
  %v5786 = vshrl.u32 %v5410, 16
  %v5788 = vrot.slane %v5786, 7
  %v5789 = vshll.u32 %v5410, 16
  %v5791 = vor.u32 %v5788, %v5789
  %v5792 = vrot.slane %v5788, 4
  %v5794 = vshrl.u32 %v5411, 16
  %v5796 = vrot.slane %v5794, 7
  %v5797 = vshll.u32 %v5411, 16
  %v5799 = vor.u32 %v5796, %v5797
  %v5800 = vrot.slane %v5796, 4
  %v5802 = vshrl.u32 %v5412, 16
  %v5804 = vrot.slane %v5802, 7
  %v5805 = vshll.u32 %v5412, 16
  %v5807 = vor.u32 %v5804, %v5805
  %v5808 = vrot.slane %v5804, 4
  %v5810 = vshrl.u32 %v5413, 16
  %v5812 = vrot.slane %v5810, 7
  %v5813 = vshll.u32 %v5413, 16
  %v5815 = vor.u32 %v5812, %v5813
  %v5816 = vrot.slane %v5812, 4
  %v5818 = vshrl.u32 %v5414, 16
  %v5820 = vrot.slane %v5818, 7
  %v5821 = vshll.u32 %v5414, 16
  %v5823 = vor.u32 %v5820, %v5821
  %v5824 = vrot.slane %v5820, 4
  %v5826 = vshrl.u32 %v5415, 16
  %v5828 = vrot.slane %v5826, 7
  %v5829 = vshll.u32 %v5415, 16
  %v5831 = vor.u32 %v5828, %v5829
  %v5832 = vrot.slane %v5828, 4
  %v5834 = vshrl.u32 %v5416, 16
  %v5836 = vrot.slane %v5834, 7
  %v5837 = vshll.u32 %v5416, 16
  %v5839 = vor.u32 %v5836, %v5837
  %v5840 = vrot.slane %v5836, 4
  %v5842 = vshrl.u32 %v5417, 16
  %v5844 = vrot.slane %v5842, 7
  %v5845 = vshll.u32 %v5417, 16
  %v5847 = vor.u32 %v5844, %v5845
  %v5848 = vrot.slane %v5844, 4
  %v5850 = vshrl.u32 %v5418, 16
  %v5852 = vrot.slane %v5850, 7
  %v5853 = vshll.u32 %v5418, 16
  %v5855 = vor.u32 %v5852, %v5853
  %v5856 = vrot.slane %v5852, 4
  %v5858 = vshrl.u32 %v5419, 16
  %v5860 = vrot.slane %v5858, 7
  %v5861 = vshll.u32 %v5419, 16
  %v5863 = vor.u32 %v5860, %v5861
  %v5864 = vrot.slane %v5860, 4
  %v5866 = vshrl.u32 %v5420, 16
  %v5868 = vrot.slane %v5866, 7
  %v5869 = vshll.u32 %v5420, 16
  %v5871 = vor.u32 %v5868, %v5869
  %v5872 = vrot.slane %v5868, 4
  %v5874 = vshrl.u32 %v5421, 16
  %v5876 = vrot.slane %v5874, 7
  %v5877 = vshll.u32 %v5421, 16
  %v5879 = vor.u32 %v5876, %v5877
  %v5880 = vrot.slane %v5876, 4
  %v5882 = vshrl.u32 %v5422, 16
  %v5884 = vrot.slane %v5882, 7
  %v5885 = vshll.u32 %v5422, 16
  %v5887 = vor.u32 %v5884, %v5885
  %v5888 = vrot.slane %v5884, 4
  %v5890 = vshrl.u32 %v5423, 16
  %v5892 = vrot.slane %v5890, 7
  %v5893 = vshll.u32 %v5423, 16
  %v5895 = vor.u32 %v5892, %v5893
  %v5896 = vrot.slane %v5892, 4
  %v5898 = vshrl.u32 %v5424, 16
  %v5900 = vrot.slane %v5898, 7
  %v5901 = vshll.u32 %v5424, 16
  %v5903 = vor.u32 %v5900, %v5901
  %v5904 = vrot.slane %v5900, 4
  %v5906 = vshrl.u32 %v5425, 16
  %v5908 = vrot.slane %v5906, 7
  %v5909 = vshll.u32 %v5425, 16
  %v5911 = vor.u32 %v5908, %v5909
  %v5912 = vrot.slane %v5908, 4
  %v5914 = vshrl.u32 %v5426, 16
  %v5916 = vrot.slane %v5914, 7
  %v5917 = vshll.u32 %v5426, 16
  %v5919 = vor.u32 %v5916, %v5917
  %v5920 = vrot.slane %v5916, 4
  %v5922 = vshrl.u32 %v5427, 16
  %v5924 = vrot.slane %v5922, 7
  %v5925 = vshll.u32 %v5427, 16
  %v5927 = vor.u32 %v5924, %v5925
  %v5928 = vrot.slane %v5924, 4
  %v5930 = vshrl.u32 %v5428, 16
  %v5932 = vrot.slane %v5930, 7
  %v5933 = vshll.u32 %v5428, 16
  %v5935 = vor.u32 %v5932, %v5933
  %v5936 = vrot.slane %v5932, 4
  %v5938 = vshrl.u32 %v5429, 16
  %v5940 = vrot.slane %v5938, 7
  %v5941 = vshll.u32 %v5429, 16
  %v5943 = vor.u32 %v5940, %v5941
  %v5944 = vrot.slane %v5940, 4
  %v5946 = vshrl.u32 %v5430, 16
  %v5948 = vrot.slane %v5946, 7
  %v5949 = vshll.u32 %v5430, 16
  %v5951 = vor.u32 %v5948, %v5949
  %v5952 = vrot.slane %v5948, 4
  %v5954 = vshrl.u32 %v5431, 16
  %v5956 = vrot.slane %v5954, 7
  %v5957 = vshll.u32 %v5431, 16
  %v5959 = vor.u32 %v5956, %v5957
  %v5960 = vrot.slane %v5956, 4
  %v5962 = vshrl.u32 %v5432, 16
  %v5964 = vrot.slane %v5962, 7
  %v5965 = vshll.u32 %v5432, 16
  %v5967 = vor.u32 %v5964, %v5965
  %v5968 = vrot.slane %v5964, 4
  %v5970 = vshrl.u32 %v5433, 16
  %v5972 = vrot.slane %v5970, 7
  %v5973 = vshll.u32 %v5433, 16
  %v5975 = vor.u32 %v5972, %v5973
  %v5976 = vrot.slane %v5972, 4
  %v5978 = vshrl.u32 %v5434, 16
  %v5980 = vrot.slane %v5978, 7
  %v5981 = vshll.u32 %v5434, 16
  %v5983 = vor.u32 %v5980, %v5981
  %v5984 = vrot.slane %v5980, 4
  %v5986 = vshrl.u32 %v5435, 16
  %v5988 = vrot.slane %v5986, 7
  %v5989 = vshll.u32 %v5435, 16
  %v5991 = vor.u32 %v5988, %v5989
  %v5992 = vrot.slane %v5988, 4
  %v5994 = vshrl.u32 %v5436, 16
  %v5996 = vrot.slane %v5994, 7
  %v5997 = vshll.u32 %v5436, 16
  %v5999 = vor.u32 %v5996, %v5997
  %v6000 = vrot.slane %v5996, 4
  %v6002 = vshrl.u32 %v5437, 16
  %v6004 = vrot.slane %v6002, 7
  %v6005 = vshll.u32 %v5437, 16
  %v6007 = vor.u32 %v6004, %v6005
  %v6008 = vrot.slane %v6004, 4
  %v6010 = vshrl.u32 %v5438, 16
  %v6012 = vrot.slane %v6010, 7
  %v6013 = vshll.u32 %v5438, 16
  %v6015 = vor.u32 %v6012, %v6013
  %v6016 = vrot.slane %v6012, 4
  %v6018 = vshrl.u32 %v5439, 16
  %v6020 = vrot.slane %v6018, 7
  %v6021 = vshll.u32 %v5439, 16
  %v6023 = vor.u32 %v6020, %v6021
  %v6024 = vrot.slane %v6020, 4
  %v6026 = vshrl.u32 %v5440, 16
  %v6028 = vrot.slane %v6026, 7
  %v6029 = vshll.u32 %v5440, 16
  %v6031 = vor.u32 %v6028, %v6029
  %v6032 = vrot.slane %v6028, 4
  %v6034 = vshrl.u32 %v5441, 16
  %v6036 = vrot.slane %v6034, 7
  %v6037 = vshll.u32 %v5441, 16
  %v6039 = vor.u32 %v6036, %v6037
  %v6040 = vrot.slane %v6036, 4
  %v6042 = vshrl.u32 %v5442, 16
  %v6044 = vrot.slane %v6042, 7
  %v6045 = vshll.u32 %v5442, 16
  %v6047 = vor.u32 %v6044, %v6045
  %v6048 = vrot.slane %v6044, 4
  %v6050 = vshrl.u32 %v5443, 16
  %v6052 = vrot.slane %v6050, 7
  %v6053 = vshll.u32 %v5443, 16
  %v6055 = vor.u32 %v6052, %v6053
  %v6056 = vrot.slane %v6052, 4
  %v6058 = vshrl.u32 %v5444, 16
  %v6060 = vrot.slane %v6058, 7
  %v6061 = vshll.u32 %v5444, 16
  %v6063 = vor.u32 %v6060, %v6061
  %v6064 = vrot.slane %v6060, 4
  %v6066 = vshrl.u32 %v5445, 16
  %v6068 = vrot.slane %v6066, 7
  %v6069 = vshll.u32 %v5445, 16
  %v6071 = vor.u32 %v6068, %v6069
  %v6072 = vrot.slane %v6068, 4
  %v6074 = vshrl.u32 %v5446, 16
  %v6076 = vrot.slane %v6074, 7
  %v6077 = vshll.u32 %v5446, 16
  %v6079 = vor.u32 %v6076, %v6077
  %v6080 = vrot.slane %v6076, 4
  %v6082 = vshrl.u32 %v5447, 16
  %v6084 = vrot.slane %v6082, 7
  %v6085 = vshll.u32 %v5447, 16
  %v6087 = vor.u32 %v6084, %v6085
  %v6088 = vrot.slane %v6084, 4
  %vm6217 = vcmask 257152
  %vm6218 = vsmask.f32 7938
  %vm6219 = vmand %vm6217, %vm6218
  %v6220 = vld [vmem:[#allocation2] sm:$0xf]
  %v6221 = vsel %vm6219, %v5583, %v6220
  %6222 = vst [vmem:[#allocation2] sm:$0xf] %v6221
  %vm6223 = vcmask 254080
  %vm6224 = vmand %vm6223, %vm4999
  %v6225 = vld [vmem:[#allocation2 + $0x4] sm:$0x1]
  %v6226 = vsel %vm6224, %v5584, %v6225
  %6227 = vst [vmem:[#allocation2 + $0x4] sm:$0x1] %v6226
  %v6228 = vld [vmem:[#allocation2 + $0x8] sm:$0xf]
  %v6229 = vsel %vm6219, %v5591, %v6228
  %6230 = vst [vmem:[#allocation2 + $0x8] sm:$0xf] %v6229
  %v6231 = vld [vmem:[#allocation2 + $0xc] sm:$0x1]
  %v6232 = vsel %vm6224, %v5592, %v6231
  %6233 = vst [vmem:[#allocation2 + $0xc] sm:$0x1] %v6232
  %v6234 = vld [vmem:[#allocation2 + $0x10] sm:$0xf]
  %v6235 = vsel %vm6219, %v5599, %v6234
  %6236 = vst [vmem:[#allocation2 + $0x10] sm:$0xf] %v6235
  %v6237 = vld [vmem:[#allocation2 + $0x14] sm:$0x1]
  %v6238 = vsel %vm6224, %v5600, %v6237
  %6239 = vst [vmem:[#allocation2 + $0x14] sm:$0x1] %v6238
  %v6240 = vld [vmem:[#allocation2 + $0x18] sm:$0xf]
  %v6241 = vsel %vm6219, %v5607, %v6240
  %6242 = vst [vmem:[#allocation2 + $0x18] sm:$0xf] %v6241
  %v6243 = vld [vmem:[#allocation2 + $0x1c] sm:$0x1]
  %v6244 = vsel %vm6224, %v5608, %v6243
  %6245 = vst [vmem:[#allocation2 + $0x1c] sm:$0x1] %v6244
  %v6246 = vld [vmem:[#allocation2 + $0x20] sm:$0xf]
  %v6247 = vsel %vm6219, %v5615, %v6246
  %6248 = vst [vmem:[#allocation2 + $0x20] sm:$0xf] %v6247
  %v6249 = vld [vmem:[#allocation2 + $0x24] sm:$0x1]
  %v6250 = vsel %vm6224, %v5616, %v6249
  %6251 = vst [vmem:[#allocation2 + $0x24] sm:$0x1] %v6250
  %v6252 = vld [vmem:[#allocation2 + $0x28] sm:$0xf]
  %v6253 = vsel %vm6219, %v5623, %v6252
  %6254 = vst [vmem:[#allocation2 + $0x28] sm:$0xf] %v6253
  %v6255 = vld [vmem:[#allocation2 + $0x2c] sm:$0x1]
  %v6256 = vsel %vm6224, %v5624, %v6255
  %6257 = vst [vmem:[#allocation2 + $0x2c] sm:$0x1] %v6256
  %v6258 = vld [vmem:[#allocation2 + $0x30] sm:$0xf]
  %v6259 = vsel %vm6219, %v5631, %v6258
  %6260 = vst [vmem:[#allocation2 + $0x30] sm:$0xf] %v6259
  %v6261 = vld [vmem:[#allocation2 + $0x34] sm:$0x1]
  %v6262 = vsel %vm6224, %v5632, %v6261
  %6263 = vst [vmem:[#allocation2 + $0x34] sm:$0x1] %v6262
  %v6264 = vld [vmem:[#allocation2 + $0x38] sm:$0xf]
  %v6265 = vsel %vm6219, %v5639, %v6264
  %6266 = vst [vmem:[#allocation2 + $0x38] sm:$0xf] %v6265
  %v6267 = vld [vmem:[#allocation2 + $0x3c] sm:$0x1]
  %v6268 = vsel %vm6224, %v5640, %v6267
  %6269 = vst [vmem:[#allocation2 + $0x3c] sm:$0x1] %v6268
  %v6270 = vld [vmem:[#allocation2 + $0x48] sm:$0xf]
  %v6271 = vsel %vm6219, %v5647, %v6270
  %6272 = vst [vmem:[#allocation2 + $0x48] sm:$0xf] %v6271
  %v6273 = vld [vmem:[#allocation2 + $0x4c] sm:$0x1]
  %v6274 = vsel %vm6224, %v5648, %v6273
  %6275 = vst [vmem:[#allocation2 + $0x4c] sm:$0x1] %v6274
  %v6276 = vld [vmem:[#allocation2 + $0x50] sm:$0xf]
  %v6277 = vsel %vm6219, %v5655, %v6276
  %6278 = vst [vmem:[#allocation2 + $0x50] sm:$0xf] %v6277
  %v6279 = vld [vmem:[#allocation2 + $0x54] sm:$0x1]
  %v6280 = vsel %vm6224, %v5656, %v6279
  %6281 = vst [vmem:[#allocation2 + $0x54] sm:$0x1] %v6280
  %v6282 = vld [vmem:[#allocation2 + $0x58] sm:$0xf]
  %v6283 = vsel %vm6219, %v5663, %v6282
  %6284 = vst [vmem:[#allocation2 + $0x58] sm:$0xf] %v6283
  %v6285 = vld [vmem:[#allocation2 + $0x5c] sm:$0x1]
  %v6286 = vsel %vm6224, %v5664, %v6285
  %6287 = vst [vmem:[#allocation2 + $0x5c] sm:$0x1] %v6286
  %v6288 = vld [vmem:[#allocation2 + $0x60] sm:$0xf]
  %v6289 = vsel %vm6219, %v5671, %v6288
  %6290 = vst [vmem:[#allocation2 + $0x60] sm:$0xf] %v6289
  %v6291 = vld [vmem:[#allocation2 + $0x64] sm:$0x1]
  %v6292 = vsel %vm6224, %v5672, %v6291
  %6293 = vst [vmem:[#allocation2 + $0x64] sm:$0x1] %v6292
  %v6294 = vld [vmem:[#allocation2 + $0x68] sm:$0xf]
  %v6295 = vsel %vm6219, %v5679, %v6294
  %6296 = vst [vmem:[#allocation2 + $0x68] sm:$0xf] %v6295
  %v6297 = vld [vmem:[#allocation2 + $0x6c] sm:$0x1]
  %v6298 = vsel %vm6224, %v5680, %v6297
  %6299 = vst [vmem:[#allocation2 + $0x6c] sm:$0x1] %v6298
  %v6300 = vld [vmem:[#allocation2 + $0x70] sm:$0xf]
  %v6301 = vsel %vm6219, %v5687, %v6300
  %6302 = vst [vmem:[#allocation2 + $0x70] sm:$0xf] %v6301
  %v6303 = vld [vmem:[#allocation2 + $0x74] sm:$0x1]
  %v6304 = vsel %vm6224, %v5688, %v6303
  %6305 = vst [vmem:[#allocation2 + $0x74] sm:$0x1] %v6304
  %v6306 = vld [vmem:[#allocation2 + $0x78] sm:$0xf]
  %v6307 = vsel %vm6219, %v5695, %v6306
  %6308 = vst [vmem:[#allocation2 + $0x78] sm:$0xf] %v6307
  %v6309 = vld [vmem:[#allocation2 + $0x7c] sm:$0x1]
  %v6310 = vsel %vm6224, %v5696, %v6309
  %6311 = vst [vmem:[#allocation2 + $0x7c] sm:$0x1] %v6310
  %v6312 = vld [vmem:[#allocation2 + $0x80] sm:$0xf]
  %v6313 = vsel %vm6219, %v5703, %v6312
  %6314 = vst [vmem:[#allocation2 + $0x80] sm:$0xf] %v6313
  %v6315 = vld [vmem:[#allocation2 + $0x84] sm:$0x1]
  %v6316 = vsel %vm6224, %v5704, %v6315
  %6317 = vst [vmem:[#allocation2 + $0x84] sm:$0x1] %v6316
  %v6318 = vld [vmem:[#allocation2 + $0x90] sm:$0xf]
  %v6319 = vsel %vm6219, %v5711, %v6318
  %6320 = vst [vmem:[#allocation2 + $0x90] sm:$0xf] %v6319
  %v6321 = vld [vmem:[#allocation2 + $0x94] sm:$0x1]
  %v6322 = vsel %vm6224, %v5712, %v6321
  %6323 = vst [vmem:[#allocation2 + $0x94] sm:$0x1] %v6322
  %v6324 = vld [vmem:[#allocation2 + $0x98] sm:$0xf]
  %v6325 = vsel %vm6219, %v5719, %v6324
  %6326 = vst [vmem:[#allocation2 + $0x98] sm:$0xf] %v6325
  %v6327 = vld [vmem:[#allocation2 + $0x9c] sm:$0x1]
  %v6328 = vsel %vm6224, %v5720, %v6327
  %6329 = vst [vmem:[#allocation2 + $0x9c] sm:$0x1] %v6328
  %v6330 = vld [vmem:[#allocation2 + $0xa0] sm:$0xf]
  %v6331 = vsel %vm6219, %v5727, %v6330
  %6332 = vst [vmem:[#allocation2 + $0xa0] sm:$0xf] %v6331
  %v6333 = vld [vmem:[#allocation2 + $0xa4] sm:$0x1]
  %v6334 = vsel %vm6224, %v5728, %v6333
  %6335 = vst [vmem:[#allocation2 + $0xa4] sm:$0x1] %v6334
  %v6336 = vld [vmem:[#allocation2 + $0xa8] sm:$0xf]
  %v6337 = vsel %vm6219, %v5735, %v6336
  %6338 = vst [vmem:[#allocation2 + $0xa8] sm:$0xf] %v6337
  %v6339 = vld [vmem:[#allocation2 + $0xac] sm:$0x1]
  %v6340 = vsel %vm6224, %v5736, %v6339
  %6341 = vst [vmem:[#allocation2 + $0xac] sm:$0x1] %v6340
  %v6342 = vld [vmem:[#allocation2 + $0xb0] sm:$0xf]
  %v6343 = vsel %vm6219, %v5743, %v6342
  %6344 = vst [vmem:[#allocation2 + $0xb0] sm:$0xf] %v6343
  %v6345 = vld [vmem:[#allocation2 + $0xb4] sm:$0x1]
  %v6346 = vsel %vm6224, %v5744, %v6345
  %6347 = vst [vmem:[#allocation2 + $0xb4] sm:$0x1] %v6346
  %v6348 = vld [vmem:[#allocation2 + $0xb8] sm:$0xf]
  %v6349 = vsel %vm6219, %v5751, %v6348
  %6350 = vst [vmem:[#allocation2 + $0xb8] sm:$0xf] %v6349
  %v6351 = vld [vmem:[#allocation2 + $0xbc] sm:$0x1]
  %v6352 = vsel %vm6224, %v5752, %v6351
  %6353 = vst [vmem:[#allocation2 + $0xbc] sm:$0x1] %v6352
  %v6354 = vld [vmem:[#allocation2 + $0xc0] sm:$0xf]
  %v6355 = vsel %vm6219, %v5759, %v6354
  %6356 = vst [vmem:[#allocation2 + $0xc0] sm:$0xf] %v6355
  %v6357 = vld [vmem:[#allocation2 + $0xc4] sm:$0x1]
  %v6358 = vsel %vm6224, %v5760, %v6357
  %6359 = vst [vmem:[#allocation2 + $0xc4] sm:$0x1] %v6358
  %v6360 = vld [vmem:[#allocation2 + $0xc8] sm:$0xf]
  %v6361 = vsel %vm6219, %v5767, %v6360
  %6362 = vst [vmem:[#allocation2 + $0xc8] sm:$0xf] %v6361
  %v6363 = vld [vmem:[#allocation2 + $0xcc] sm:$0x1]
  %v6364 = vsel %vm6224, %v5768, %v6363
  %6365 = vst [vmem:[#allocation2 + $0xcc] sm:$0x1] %v6364
  %v6366 = vld [vmem:[#allocation2 + $0xd8] sm:$0xf]
  %v6367 = vsel %vm6219, %v5775, %v6366
  %6368 = vst [vmem:[#allocation2 + $0xd8] sm:$0xf] %v6367
  %v6369 = vld [vmem:[#allocation2 + $0xdc] sm:$0x1]
  %v6370 = vsel %vm6224, %v5776, %v6369
  %6371 = vst [vmem:[#allocation2 + $0xdc] sm:$0x1] %v6370
  %v6372 = vld [vmem:[#allocation2 + $0xe0] sm:$0xf]
  %v6373 = vsel %vm6219, %v5783, %v6372
  %6374 = vst [vmem:[#allocation2 + $0xe0] sm:$0xf] %v6373
  %v6375 = vld [vmem:[#allocation2 + $0xe4] sm:$0x1]
  %v6376 = vsel %vm6224, %v5784, %v6375
  %6377 = vst [vmem:[#allocation2 + $0xe4] sm:$0x1] %v6376
  %v6378 = vld [vmem:[#allocation2 + $0xe8] sm:$0xf]
  %v6379 = vsel %vm6219, %v5791, %v6378
  %6380 = vst [vmem:[#allocation2 + $0xe8] sm:$0xf] %v6379
  %v6381 = vld [vmem:[#allocation2 + $0xec] sm:$0x1]
  %v6382 = vsel %vm6224, %v5792, %v6381
  %6383 = vst [vmem:[#allocation2 + $0xec] sm:$0x1] %v6382
  %v6384 = vld [vmem:[#allocation2 + $0xf0] sm:$0xf]
  %v6385 = vsel %vm6219, %v5799, %v6384
  %6386 = vst [vmem:[#allocation2 + $0xf0] sm:$0xf] %v6385
  %v6387 = vld [vmem:[#allocation2 + $0xf4] sm:$0x1]
  %v6388 = vsel %vm6224, %v5800, %v6387
  %6389 = vst [vmem:[#allocation2 + $0xf4] sm:$0x1] %v6388
  %v6390 = vld [vmem:[#allocation2 + $0xf8] sm:$0xf]
  %v6391 = vsel %vm6219, %v5807, %v6390
  %6392 = vst [vmem:[#allocation2 + $0xf8] sm:$0xf] %v6391
  %v6393 = vld [vmem:[#allocation2 + $0xfc] sm:$0x1]
  %v6394 = vsel %vm6224, %v5808, %v6393
  %6395 = vst [vmem:[#allocation2 + $0xfc] sm:$0x1] %v6394
  %v6396 = vld [vmem:[#allocation2 + $0x100] sm:$0xf]
  %v6397 = vsel %vm6219, %v5815, %v6396
  %6398 = vst [vmem:[#allocation2 + $0x100] sm:$0xf] %v6397
  %v6399 = vld [vmem:[#allocation2 + $0x104] sm:$0x1]
  %v6400 = vsel %vm6224, %v5816, %v6399
  %6401 = vst [vmem:[#allocation2 + $0x104] sm:$0x1] %v6400
  %v6402 = vld [vmem:[#allocation2 + $0x108] sm:$0xf]
  %v6403 = vsel %vm6219, %v5823, %v6402
  %6404 = vst [vmem:[#allocation2 + $0x108] sm:$0xf] %v6403
  %v6405 = vld [vmem:[#allocation2 + $0x10c] sm:$0x1]
  %v6406 = vsel %vm6224, %v5824, %v6405
  %6407 = vst [vmem:[#allocation2 + $0x10c] sm:$0x1] %v6406
  %v6408 = vld [vmem:[#allocation2 + $0x110] sm:$0xf]
  %v6409 = vsel %vm6219, %v5831, %v6408
  %6410 = vst [vmem:[#allocation2 + $0x110] sm:$0xf] %v6409
  %v6411 = vld [vmem:[#allocation2 + $0x114] sm:$0x1]
  %v6412 = vsel %vm6224, %v5832, %v6411
  %6413 = vst [vmem:[#allocation2 + $0x114] sm:$0x1] %v6412
  %v6414 = vld [vmem:[#allocation2 + $0x120] sm:$0xf]
  %v6415 = vsel %vm6219, %v5839, %v6414
  %6416 = vst [vmem:[#allocation2 + $0x120] sm:$0xf] %v6415
  %v6417 = vld [vmem:[#allocation2 + $0x124] sm:$0x1]
  %v6418 = vsel %vm6224, %v5840, %v6417
  %6419 = vst [vmem:[#allocation2 + $0x124] sm:$0x1] %v6418
  %v6420 = vld [vmem:[#allocation2 + $0x128] sm:$0xf]
  %v6421 = vsel %vm6219, %v5847, %v6420
  %6422 = vst [vmem:[#allocation2 + $0x128] sm:$0xf] %v6421
  %v6423 = vld [vmem:[#allocation2 + $0x12c] sm:$0x1]
  %v6424 = vsel %vm6224, %v5848, %v6423
  %6425 = vst [vmem:[#allocation2 + $0x12c] sm:$0x1] %v6424
  %v6426 = vld [vmem:[#allocation2 + $0x130] sm:$0xf]
  %v6427 = vsel %vm6219, %v5855, %v6426
  %6428 = vst [vmem:[#allocation2 + $0x130] sm:$0xf] %v6427
  %v6429 = vld [vmem:[#allocation2 + $0x134] sm:$0x1]
  %v6430 = vsel %vm6224, %v5856, %v6429
  %6431 = vst [vmem:[#allocation2 + $0x134] sm:$0x1] %v6430
  %v6432 = vld [vmem:[#allocation2 + $0x138] sm:$0xf]
  %v6433 = vsel %vm6219, %v5863, %v6432
  %6434 = vst [vmem:[#allocation2 + $0x138] sm:$0xf] %v6433
  %v6435 = vld [vmem:[#allocation2 + $0x13c] sm:$0x1]
  %v6436 = vsel %vm6224, %v5864, %v6435
  %6437 = vst [vmem:[#allocation2 + $0x13c] sm:$0x1] %v6436
  %v6438 = vld [vmem:[#allocation2 + $0x140] sm:$0xf]
  %v6439 = vsel %vm6219, %v5871, %v6438
  %6440 = vst [vmem:[#allocation2 + $0x140] sm:$0xf] %v6439
  %v6441 = vld [vmem:[#allocation2 + $0x144] sm:$0x1]
  %v6442 = vsel %vm6224, %v5872, %v6441
  %6443 = vst [vmem:[#allocation2 + $0x144] sm:$0x1] %v6442
  %v6444 = vld [vmem:[#allocation2 + $0x148] sm:$0xf]
  %v6445 = vsel %vm6219, %v5879, %v6444
  %6446 = vst [vmem:[#allocation2 + $0x148] sm:$0xf] %v6445
  %v6447 = vld [vmem:[#allocation2 + $0x14c] sm:$0x1]
  %v6448 = vsel %vm6224, %v5880, %v6447
  %6449 = vst [vmem:[#allocation2 + $0x14c] sm:$0x1] %v6448
  %v6450 = vld [vmem:[#allocation2 + $0x150] sm:$0xf]
  %v6451 = vsel %vm6219, %v5887, %v6450
  %6452 = vst [vmem:[#allocation2 + $0x150] sm:$0xf] %v6451
  %v6453 = vld [vmem:[#allocation2 + $0x154] sm:$0x1]
  %v6454 = vsel %vm6224, %v5888, %v6453
  %6455 = vst [vmem:[#allocation2 + $0x154] sm:$0x1] %v6454
  %v6456 = vld [vmem:[#allocation2 + $0x158] sm:$0xf]
  %v6457 = vsel %vm6219, %v5895, %v6456
  %6458 = vst [vmem:[#allocation2 + $0x158] sm:$0xf] %v6457
  %v6459 = vld [vmem:[#allocation2 + $0x15c] sm:$0x1]
  %v6460 = vsel %vm6224, %v5896, %v6459
  %6461 = vst [vmem:[#allocation2 + $0x15c] sm:$0x1] %v6460
  %v6462 = vld [vmem:[#allocation2 + $0x168] sm:$0xf]
  %v6463 = vsel %vm6219, %v5903, %v6462
  %6464 = vst [vmem:[#allocation2 + $0x168] sm:$0xf] %v6463
  %v6465 = vld [vmem:[#allocation2 + $0x16c] sm:$0x1]
  %v6466 = vsel %vm6224, %v5904, %v6465
  %6467 = vst [vmem:[#allocation2 + $0x16c] sm:$0x1] %v6466
  %v6468 = vld [vmem:[#allocation2 + $0x170] sm:$0xf]
  %v6469 = vsel %vm6219, %v5911, %v6468
  %6470 = vst [vmem:[#allocation2 + $0x170] sm:$0xf] %v6469
  %v6471 = vld [vmem:[#allocation2 + $0x174] sm:$0x1]
  %v6472 = vsel %vm6224, %v5912, %v6471
  %6473 = vst [vmem:[#allocation2 + $0x174] sm:$0x1] %v6472
  %v6474 = vld [vmem:[#allocation2 + $0x178] sm:$0xf]
  %v6475 = vsel %vm6219, %v5919, %v6474
  %6476 = vst [vmem:[#allocation2 + $0x178] sm:$0xf] %v6475
  %v6477 = vld [vmem:[#allocation2 + $0x17c] sm:$0x1]
  %v6478 = vsel %vm6224, %v5920, %v6477
  %6479 = vst [vmem:[#allocation2 + $0x17c] sm:$0x1] %v6478
  %v6480 = vld [vmem:[#allocation2 + $0x180] sm:$0xf]
  %v6481 = vsel %vm6219, %v5927, %v6480
  %6482 = vst [vmem:[#allocation2 + $0x180] sm:$0xf] %v6481
  %v6483 = vld [vmem:[#allocation2 + $0x184] sm:$0x1]
  %v6484 = vsel %vm6224, %v5928, %v6483
  %6485 = vst [vmem:[#allocation2 + $0x184] sm:$0x1] %v6484
  %v6486 = vld [vmem:[#allocation2 + $0x188] sm:$0xf]
  %v6487 = vsel %vm6219, %v5935, %v6486
  %6488 = vst [vmem:[#allocation2 + $0x188] sm:$0xf] %v6487
  %v6489 = vld [vmem:[#allocation2 + $0x18c] sm:$0x1]
  %v6490 = vsel %vm6224, %v5936, %v6489
  %6491 = vst [vmem:[#allocation2 + $0x18c] sm:$0x1] %v6490
  %v6492 = vld [vmem:[#allocation2 + $0x190] sm:$0xf]
  %v6493 = vsel %vm6219, %v5943, %v6492
  %6494 = vst [vmem:[#allocation2 + $0x190] sm:$0xf] %v6493
  %v6495 = vld [vmem:[#allocation2 + $0x194] sm:$0x1]
  %v6496 = vsel %vm6224, %v5944, %v6495
  %6497 = vst [vmem:[#allocation2 + $0x194] sm:$0x1] %v6496
  %v6498 = vld [vmem:[#allocation2 + $0x198] sm:$0xf]
  %v6499 = vsel %vm6219, %v5951, %v6498
  %6500 = vst [vmem:[#allocation2 + $0x198] sm:$0xf] %v6499
  %v6501 = vld [vmem:[#allocation2 + $0x19c] sm:$0x1]
  %v6502 = vsel %vm6224, %v5952, %v6501
  %6503 = vst [vmem:[#allocation2 + $0x19c] sm:$0x1] %v6502
  %v6504 = vld [vmem:[#allocation2 + $0x1a0] sm:$0xf]
  %v6505 = vsel %vm6219, %v5959, %v6504
  %6506 = vst [vmem:[#allocation2 + $0x1a0] sm:$0xf] %v6505
  %v6507 = vld [vmem:[#allocation2 + $0x1a4] sm:$0x1]
  %v6508 = vsel %vm6224, %v5960, %v6507
  %6509 = vst [vmem:[#allocation2 + $0x1a4] sm:$0x1] %v6508
  %v6510 = vld [vmem:[#allocation2 + $0x1b0] sm:$0xf]
  %v6511 = vsel %vm6219, %v5967, %v6510
  %6512 = vst [vmem:[#allocation2 + $0x1b0] sm:$0xf] %v6511
  %v6513 = vld [vmem:[#allocation2 + $0x1b4] sm:$0x1]
  %v6514 = vsel %vm6224, %v5968, %v6513
  %6515 = vst [vmem:[#allocation2 + $0x1b4] sm:$0x1] %v6514
  %v6516 = vld [vmem:[#allocation2 + $0x1b8] sm:$0xf]
  %v6517 = vsel %vm6219, %v5975, %v6516
  %6518 = vst [vmem:[#allocation2 + $0x1b8] sm:$0xf] %v6517
  %v6519 = vld [vmem:[#allocation2 + $0x1bc] sm:$0x1]
  %v6520 = vsel %vm6224, %v5976, %v6519
  %6521 = vst [vmem:[#allocation2 + $0x1bc] sm:$0x1] %v6520
  %v6522 = vld [vmem:[#allocation2 + $0x1c0] sm:$0xf]
  %v6523 = vsel %vm6219, %v5983, %v6522
  %6524 = vst [vmem:[#allocation2 + $0x1c0] sm:$0xf] %v6523
  %v6525 = vld [vmem:[#allocation2 + $0x1c4] sm:$0x1]
  %v6526 = vsel %vm6224, %v5984, %v6525
  %6527 = vst [vmem:[#allocation2 + $0x1c4] sm:$0x1] %v6526
  %v6528 = vld [vmem:[#allocation2 + $0x1c8] sm:$0xf]
  %v6529 = vsel %vm6219, %v5991, %v6528
  %6530 = vst [vmem:[#allocation2 + $0x1c8] sm:$0xf] %v6529
  %v6531 = vld [vmem:[#allocation2 + $0x1cc] sm:$0x1]
  %v6532 = vsel %vm6224, %v5992, %v6531
  %6533 = vst [vmem:[#allocation2 + $0x1cc] sm:$0x1] %v6532
  %v6534 = vld [vmem:[#allocation2 + $0x1d0] sm:$0xf]
  %v6535 = vsel %vm6219, %v5999, %v6534
  %6536 = vst [vmem:[#allocation2 + $0x1d0] sm:$0xf] %v6535
  %v6537 = vld [vmem:[#allocation2 + $0x1d4] sm:$0x1]
  %v6538 = vsel %vm6224, %v6000, %v6537
  %6539 = vst [vmem:[#allocation2 + $0x1d4] sm:$0x1] %v6538
  %v6540 = vld [vmem:[#allocation2 + $0x1d8] sm:$0xf]
  %v6541 = vsel %vm6219, %v6007, %v6540
  %6542 = vst [vmem:[#allocation2 + $0x1d8] sm:$0xf] %v6541
  %v6543 = vld [vmem:[#allocation2 + $0x1dc] sm:$0x1]
  %v6544 = vsel %vm6224, %v6008, %v6543
  %6545 = vst [vmem:[#allocation2 + $0x1dc] sm:$0x1] %v6544
  %v6546 = vld [vmem:[#allocation2 + $0x1e0] sm:$0xf]
  %v6547 = vsel %vm6219, %v6015, %v6546
  %6548 = vst [vmem:[#allocation2 + $0x1e0] sm:$0xf] %v6547
  %v6549 = vld [vmem:[#allocation2 + $0x1e4] sm:$0x1]
  %v6550 = vsel %vm6224, %v6016, %v6549
  %6551 = vst [vmem:[#allocation2 + $0x1e4] sm:$0x1] %v6550
  %v6552 = vld [vmem:[#allocation2 + $0x1e8] sm:$0xf]
  %v6553 = vsel %vm6219, %v6023, %v6552
  %6554 = vst [vmem:[#allocation2 + $0x1e8] sm:$0xf] %v6553
  %v6555 = vld [vmem:[#allocation2 + $0x1ec] sm:$0x1]
  %v6556 = vsel %vm6224, %v6024, %v6555
  %6557 = vst [vmem:[#allocation2 + $0x1ec] sm:$0x1] %v6556
  %v6558 = vld [vmem:[#allocation2 + $0x1f8] sm:$0xf]
  %v6559 = vsel %vm6219, %v6031, %v6558
  %6560 = vst [vmem:[#allocation2 + $0x1f8] sm:$0xf] %v6559
  %v6561 = vld [vmem:[#allocation2 + $0x1fc] sm:$0x1]
  %v6562 = vsel %vm6224, %v6032, %v6561
  %6563 = vst [vmem:[#allocation2 + $0x1fc] sm:$0x1] %v6562
  %v6564 = vld [vmem:[#allocation2 + $0x200] sm:$0xf]
  %v6565 = vsel %vm6219, %v6039, %v6564
  %6566 = vst [vmem:[#allocation2 + $0x200] sm:$0xf] %v6565
  %v6567 = vld [vmem:[#allocation2 + $0x204] sm:$0x1]
  %v6568 = vsel %vm6224, %v6040, %v6567
  %6569 = vst [vmem:[#allocation2 + $0x204] sm:$0x1] %v6568
  %v6570 = vld [vmem:[#allocation2 + $0x208] sm:$0xf]
  %v6571 = vsel %vm6219, %v6047, %v6570
  %6572 = vst [vmem:[#allocation2 + $0x208] sm:$0xf] %v6571
  %v6573 = vld [vmem:[#allocation2 + $0x20c] sm:$0x1]
  %v6574 = vsel %vm6224, %v6048, %v6573
  %6575 = vst [vmem:[#allocation2 + $0x20c] sm:$0x1] %v6574
  %v6576 = vld [vmem:[#allocation2 + $0x210] sm:$0xf]
  %v6577 = vsel %vm6219, %v6055, %v6576
  %6578 = vst [vmem:[#allocation2 + $0x210] sm:$0xf] %v6577
  %v6579 = vld [vmem:[#allocation2 + $0x214] sm:$0x1]
  %v6580 = vsel %vm6224, %v6056, %v6579
  %6581 = vst [vmem:[#allocation2 + $0x214] sm:$0x1] %v6580
  %v6582 = vld [vmem:[#allocation2 + $0x218] sm:$0xf]
  %v6583 = vsel %vm6219, %v6063, %v6582
  %6584 = vst [vmem:[#allocation2 + $0x218] sm:$0xf] %v6583
  %v6585 = vld [vmem:[#allocation2 + $0x21c] sm:$0x1]
  %v6586 = vsel %vm6224, %v6064, %v6585
  %6587 = vst [vmem:[#allocation2 + $0x21c] sm:$0x1] %v6586
  %v6588 = vld [vmem:[#allocation2 + $0x220] sm:$0xf]
  %v6589 = vsel %vm6219, %v6071, %v6588
  %6590 = vst [vmem:[#allocation2 + $0x220] sm:$0xf] %v6589
  %v6591 = vld [vmem:[#allocation2 + $0x224] sm:$0x1]
  %v6592 = vsel %vm6224, %v6072, %v6591
  %6593 = vst [vmem:[#allocation2 + $0x224] sm:$0x1] %v6592
  %v6594 = vld [vmem:[#allocation2 + $0x228] sm:$0xf]
  %v6595 = vsel %vm6219, %v6079, %v6594
  %6596 = vst [vmem:[#allocation2 + $0x228] sm:$0xf] %v6595
  %v6597 = vld [vmem:[#allocation2 + $0x22c] sm:$0x1]
  %v6598 = vsel %vm6224, %v6080, %v6597
  %6599 = vst [vmem:[#allocation2 + $0x22c] sm:$0x1] %v6598
  %v6600 = vld [vmem:[#allocation2 + $0x230] sm:$0xf]
  %v6601 = vsel %vm6219, %v6087, %v6600
  %6602 = vst [vmem:[#allocation2 + $0x230] sm:$0xf] %v6601
  %v6603 = vld [vmem:[#allocation2 + $0x234] sm:$0x1]
  %v6604 = vsel %vm6224, %v6088, %v6603
  %6605 = vst [vmem:[#allocation2 + $0x234] sm:$0x1] %v6604
  %s6606 = scalar_lea.vmem [#allocation2], 8
  %vm6607 = vcmask 388352
  %6608 = vst.msk [vmem:[%s6606] sm:$0xf] %vm6607, %v5384
  %6609 = vst.msk [vmem:[%s6606 + $0x8] sm:$0xf] %vm6607, %v5385
  %6610 = vst.msk [vmem:[%s6606 + $0x10] sm:$0xf] %vm6607, %v5386
  %6611 = vst.msk [vmem:[%s6606 + $0x18] sm:$0xf] %vm6607, %v5387
  %6612 = vst.msk [vmem:[%s6606 + $0x20] sm:$0xf] %vm6607, %v5388
  %6613 = vst.msk [vmem:[%s6606 + $0x28] sm:$0xf] %vm6607, %v5389
  %6614 = vst.msk [vmem:[%s6606 + $0x30] sm:$0xf] %vm6607, %v5390
  %6615 = vst.msk [vmem:[%s6606 + $0x38] sm:$0xf] %vm6607, %v5391
  %6616 = vst.msk [vmem:[%s6606 + $0x48] sm:$0xf] %vm6607, %v5392
  %6617 = vst.msk [vmem:[%s6606 + $0x50] sm:$0xf] %vm6607, %v5393
  %6618 = vst.msk [vmem:[%s6606 + $0x58] sm:$0xf] %vm6607, %v5394
  %6619 = vst.msk [vmem:[%s6606 + $0x60] sm:$0xf] %vm6607, %v5395
  %6620 = vst.msk [vmem:[%s6606 + $0x68] sm:$0xf] %vm6607, %v5396
  %6621 = vst.msk [vmem:[%s6606 + $0x70] sm:$0xf] %vm6607, %v5397
  %6622 = vst.msk [vmem:[%s6606 + $0x78] sm:$0xf] %vm6607, %v5398
  %6623 = vst.msk [vmem:[%s6606 + $0x80] sm:$0xf] %vm6607, %v5399
  %6624 = vst.msk [vmem:[%s6606 + $0x90] sm:$0xf] %vm6607, %v5400
  %6625 = vst.msk [vmem:[%s6606 + $0x98] sm:$0xf] %vm6607, %v5401
  %6626 = vst.msk [vmem:[%s6606 + $0xa0] sm:$0xf] %vm6607, %v5402
  %6627 = vst.msk [vmem:[%s6606 + $0xa8] sm:$0xf] %vm6607, %v5403
  %6628 = vst.msk [vmem:[%s6606 + $0xb0] sm:$0xf] %vm6607, %v5404
  %6629 = vst.msk [vmem:[%s6606 + $0xb8] sm:$0xf] %vm6607, %v5405
  %6630 = vst.msk [vmem:[%s6606 + $0xc0] sm:$0xf] %vm6607, %v5406
  %6631 = vst.msk [vmem:[%s6606 + $0xc8] sm:$0xf] %vm6607, %v5407
  %6632 = vst.msk [vmem:[%s6606 + $0xd8] sm:$0xf] %vm6607, %v5408
  %6633 = vst.msk [vmem:[%s6606 + $0xe0] sm:$0xf] %vm6607, %v5409
  %6634 = vst.msk [vmem:[%s6606 + $0xe8] sm:$0xf] %vm6607, %v5410
  %6635 = vst.msk [vmem:[%s6606 + $0xf0] sm:$0xf] %vm6607, %v5411
  %6636 = vst.msk [vmem:[%s6606 + $0xf8] sm:$0xf] %vm6607, %v5412
  %6637 = vst.msk [vmem:[%s6606 + $0x100] sm:$0xf] %vm6607, %v5413
  %6638 = vst.msk [vmem:[%s6606 + $0x108] sm:$0xf] %vm6607, %v5414
  %6639 = vst.msk [vmem:[%s6606 + $0x110] sm:$0xf] %vm6607, %v5415
  %6640 = vst.msk [vmem:[%s6606 + $0x120] sm:$0xf] %vm6607, %v5416
  %6641 = vst.msk [vmem:[%s6606 + $0x128] sm:$0xf] %vm6607, %v5417
  %6642 = vst.msk [vmem:[%s6606 + $0x130] sm:$0xf] %vm6607, %v5418
  %6643 = vst.msk [vmem:[%s6606 + $0x138] sm:$0xf] %vm6607, %v5419
  %6644 = vst.msk [vmem:[%s6606 + $0x140] sm:$0xf] %vm6607, %v5420
  %6645 = vst.msk [vmem:[%s6606 + $0x148] sm:$0xf] %vm6607, %v5421
  %6646 = vst.msk [vmem:[%s6606 + $0x150] sm:$0xf] %vm6607, %v5422
  %6647 = vst.msk [vmem:[%s6606 + $0x158] sm:$0xf] %vm6607, %v5423
  %6648 = vst.msk [vmem:[%s6606 + $0x168] sm:$0xf] %vm6607, %v5424
  %6649 = vst.msk [vmem:[%s6606 + $0x170] sm:$0xf] %vm6607, %v5425
  %6650 = vst.msk [vmem:[%s6606 + $0x178] sm:$0xf] %vm6607, %v5426
  %6651 = vst.msk [vmem:[%s6606 + $0x180] sm:$0xf] %vm6607, %v5427
  %6652 = vst.msk [vmem:[%s6606 + $0x188] sm:$0xf] %vm6607, %v5428
  %6653 = vst.msk [vmem:[%s6606 + $0x190] sm:$0xf] %vm6607, %v5429
  %6654 = vst.msk [vmem:[%s6606 + $0x198] sm:$0xf] %vm6607, %v5430
  %6655 = vst.msk [vmem:[%s6606 + $0x1a0] sm:$0xf] %vm6607, %v5431
  %6656 = vst.msk [vmem:[%s6606 + $0x1b0] sm:$0xf] %vm6607, %v5432
  %6657 = vst.msk [vmem:[%s6606 + $0x1b8] sm:$0xf] %vm6607, %v5433
  %6658 = vst.msk [vmem:[%s6606 + $0x1c0] sm:$0xf] %vm6607, %v5434
  %6659 = vst.msk [vmem:[%s6606 + $0x1c8] sm:$0xf] %vm6607, %v5435
  %6660 = vst.msk [vmem:[%s6606 + $0x1d0] sm:$0xf] %vm6607, %v5436
  %6661 = vst.msk [vmem:[%s6606 + $0x1d8] sm:$0xf] %vm6607, %v5437
  %6662 = vst.msk [vmem:[%s6606 + $0x1e0] sm:$0xf] %vm6607, %v5438
  %6663 = vst.msk [vmem:[%s6606 + $0x1e8] sm:$0xf] %vm6607, %v5439
  %6664 = vst.msk [vmem:[%s6606 + $0x1f8] sm:$0xf] %vm6607, %v5440
  %6665 = vst.msk [vmem:[%s6606 + $0x200] sm:$0xf] %vm6607, %v5441
  %6666 = vst.msk [vmem:[%s6606 + $0x208] sm:$0xf] %vm6607, %v5442
  %6667 = vst.msk [vmem:[%s6606 + $0x210] sm:$0xf] %vm6607, %v5443
  %6668 = vst.msk [vmem:[%s6606 + $0x218] sm:$0xf] %vm6607, %v5444
  %6669 = vst.msk [vmem:[%s6606 + $0x220] sm:$0xf] %vm6607, %v5445
  %6670 = vst.msk [vmem:[%s6606 + $0x228] sm:$0xf] %vm6607, %v5446
  %6671 = vst.msk [vmem:[%s6606 + $0x230] sm:$0xf] %vm6607, %v5447
  %vm6672 = vcmask 519552
  %vm6673 = vmand %vm6672, %vm6218
  %v6674 = vld [vmem:[%s6606] sm:$0xf]
  %v6675 = vsel %vm6673, %v5583, %v6674
  %6676 = vst [vmem:[%s6606] sm:$0xf] %v6675
  %vm6677 = vcmask 516480
  %vm6678 = vmand %vm6677, %vm4999
  %v6679 = vld [vmem:[%s6606 + $0x4] sm:$0x1]
  %v6680 = vsel %vm6678, %v5584, %v6679
  %6681 = vst [vmem:[%s6606 + $0x4] sm:$0x1] %v6680
  %v6682 = vld [vmem:[%s6606 + $0x8] sm:$0xf]
  %v6683 = vsel %vm6673, %v5591, %v6682
  %6684 = vst [vmem:[%s6606 + $0x8] sm:$0xf] %v6683
  %v6685 = vld [vmem:[%s6606 + $0xc] sm:$0x1]
  %v6686 = vsel %vm6678, %v5592, %v6685
  %6687 = vst [vmem:[%s6606 + $0xc] sm:$0x1] %v6686
  %v6688 = vld [vmem:[%s6606 + $0x10] sm:$0xf]
  %v6689 = vsel %vm6673, %v5599, %v6688
  %6690 = vst [vmem:[%s6606 + $0x10] sm:$0xf] %v6689
  %v6691 = vld [vmem:[%s6606 + $0x14] sm:$0x1]
  %v6692 = vsel %vm6678, %v5600, %v6691
  %6693 = vst [vmem:[%s6606 + $0x14] sm:$0x1] %v6692
  %v6694 = vld [vmem:[%s6606 + $0x18] sm:$0xf]
  %v6695 = vsel %vm6673, %v5607, %v6694
  %6696 = vst [vmem:[%s6606 + $0x18] sm:$0xf] %v6695
  %v6697 = vld [vmem:[%s6606 + $0x1c] sm:$0x1]
  %v6698 = vsel %vm6678, %v5608, %v6697
  %6699 = vst [vmem:[%s6606 + $0x1c] sm:$0x1] %v6698
  %v6700 = vld [vmem:[%s6606 + $0x20] sm:$0xf]
  %v6701 = vsel %vm6673, %v5615, %v6700
  %6702 = vst [vmem:[%s6606 + $0x20] sm:$0xf] %v6701
  %v6703 = vld [vmem:[%s6606 + $0x24] sm:$0x1]
  %v6704 = vsel %vm6678, %v5616, %v6703
  %6705 = vst [vmem:[%s6606 + $0x24] sm:$0x1] %v6704
  %v6706 = vld [vmem:[%s6606 + $0x28] sm:$0xf]
  %v6707 = vsel %vm6673, %v5623, %v6706
  %6708 = vst [vmem:[%s6606 + $0x28] sm:$0xf] %v6707
  %v6709 = vld [vmem:[%s6606 + $0x2c] sm:$0x1]
  %v6710 = vsel %vm6678, %v5624, %v6709
  %6711 = vst [vmem:[%s6606 + $0x2c] sm:$0x1] %v6710
  %v6712 = vld [vmem:[%s6606 + $0x30] sm:$0xf]
  %v6713 = vsel %vm6673, %v5631, %v6712
  %6714 = vst [vmem:[%s6606 + $0x30] sm:$0xf] %v6713
  %v6715 = vld [vmem:[%s6606 + $0x34] sm:$0x1]
  %v6716 = vsel %vm6678, %v5632, %v6715
  %6717 = vst [vmem:[%s6606 + $0x34] sm:$0x1] %v6716
  %v6718 = vld [vmem:[%s6606 + $0x38] sm:$0xf]
  %v6719 = vsel %vm6673, %v5639, %v6718
  %6720 = vst [vmem:[%s6606 + $0x38] sm:$0xf] %v6719
  %v6721 = vld [vmem:[%s6606 + $0x3c] sm:$0x1]
  %v6722 = vsel %vm6678, %v5640, %v6721
  %6723 = vst [vmem:[%s6606 + $0x3c] sm:$0x1] %v6722
  %v6724 = vld [vmem:[%s6606 + $0x48] sm:$0xf]
  %v6725 = vsel %vm6673, %v5647, %v6724
  %6726 = vst [vmem:[%s6606 + $0x48] sm:$0xf] %v6725
  %v6727 = vld [vmem:[%s6606 + $0x4c] sm:$0x1]
  %v6728 = vsel %vm6678, %v5648, %v6727
  %6729 = vst [vmem:[%s6606 + $0x4c] sm:$0x1] %v6728
  %v6730 = vld [vmem:[%s6606 + $0x50] sm:$0xf]
  %v6731 = vsel %vm6673, %v5655, %v6730
  %6732 = vst [vmem:[%s6606 + $0x50] sm:$0xf] %v6731
  %v6733 = vld [vmem:[%s6606 + $0x54] sm:$0x1]
  %v6734 = vsel %vm6678, %v5656, %v6733
  %6735 = vst [vmem:[%s6606 + $0x54] sm:$0x1] %v6734
  %v6736 = vld [vmem:[%s6606 + $0x58] sm:$0xf]
  %v6737 = vsel %vm6673, %v5663, %v6736
  %6738 = vst [vmem:[%s6606 + $0x58] sm:$0xf] %v6737
  %v6739 = vld [vmem:[%s6606 + $0x5c] sm:$0x1]
  %v6740 = vsel %vm6678, %v5664, %v6739
  %6741 = vst [vmem:[%s6606 + $0x5c] sm:$0x1] %v6740
  %v6742 = vld [vmem:[%s6606 + $0x60] sm:$0xf]
  %v6743 = vsel %vm6673, %v5671, %v6742
  %6744 = vst [vmem:[%s6606 + $0x60] sm:$0xf] %v6743
  %v6745 = vld [vmem:[%s6606 + $0x64] sm:$0x1]
  %v6746 = vsel %vm6678, %v5672, %v6745
  %6747 = vst [vmem:[%s6606 + $0x64] sm:$0x1] %v6746
  %v6748 = vld [vmem:[%s6606 + $0x68] sm:$0xf]
  %v6749 = vsel %vm6673, %v5679, %v6748
  %6750 = vst [vmem:[%s6606 + $0x68] sm:$0xf] %v6749
  %v6751 = vld [vmem:[%s6606 + $0x6c] sm:$0x1]
  %v6752 = vsel %vm6678, %v5680, %v6751
  %6753 = vst [vmem:[%s6606 + $0x6c] sm:$0x1] %v6752
  %v6754 = vld [vmem:[%s6606 + $0x70] sm:$0xf]
  %v6755 = vsel %vm6673, %v5687, %v6754
  %6756 = vst [vmem:[%s6606 + $0x70] sm:$0xf] %v6755
  %v6757 = vld [vmem:[%s6606 + $0x74] sm:$0x1]
  %v6758 = vsel %vm6678, %v5688, %v6757
  %6759 = vst [vmem:[%s6606 + $0x74] sm:$0x1] %v6758
  %v6760 = vld [vmem:[%s6606 + $0x78] sm:$0xf]
  %v6761 = vsel %vm6673, %v5695, %v6760
  %6762 = vst [vmem:[%s6606 + $0x78] sm:$0xf] %v6761
  %v6763 = vld [vmem:[%s6606 + $0x7c] sm:$0x1]
  %v6764 = vsel %vm6678, %v5696, %v6763
  %6765 = vst [vmem:[%s6606 + $0x7c] sm:$0x1] %v6764
  %v6766 = vld [vmem:[%s6606 + $0x80] sm:$0xf]
  %v6767 = vsel %vm6673, %v5703, %v6766
  %6768 = vst [vmem:[%s6606 + $0x80] sm:$0xf] %v6767
  %v6769 = vld [vmem:[%s6606 + $0x84] sm:$0x1]
  %v6770 = vsel %vm6678, %v5704, %v6769
  %6771 = vst [vmem:[%s6606 + $0x84] sm:$0x1] %v6770
  %v6772 = vld [vmem:[%s6606 + $0x90] sm:$0xf]
  %v6773 = vsel %vm6673, %v5711, %v6772
  %6774 = vst [vmem:[%s6606 + $0x90] sm:$0xf] %v6773
  %v6775 = vld [vmem:[%s6606 + $0x94] sm:$0x1]
  %v6776 = vsel %vm6678, %v5712, %v6775
  %6777 = vst [vmem:[%s6606 + $0x94] sm:$0x1] %v6776
  %v6778 = vld [vmem:[%s6606 + $0x98] sm:$0xf]
  %v6779 = vsel %vm6673, %v5719, %v6778
  %6780 = vst [vmem:[%s6606 + $0x98] sm:$0xf] %v6779
  %v6781 = vld [vmem:[%s6606 + $0x9c] sm:$0x1]
  %v6782 = vsel %vm6678, %v5720, %v6781
  %6783 = vst [vmem:[%s6606 + $0x9c] sm:$0x1] %v6782
  %v6784 = vld [vmem:[%s6606 + $0xa0] sm:$0xf]
  %v6785 = vsel %vm6673, %v5727, %v6784
  %6786 = vst [vmem:[%s6606 + $0xa0] sm:$0xf] %v6785
  %v6787 = vld [vmem:[%s6606 + $0xa4] sm:$0x1]
  %v6788 = vsel %vm6678, %v5728, %v6787
  %6789 = vst [vmem:[%s6606 + $0xa4] sm:$0x1] %v6788
  %v6790 = vld [vmem:[%s6606 + $0xa8] sm:$0xf]
  %v6791 = vsel %vm6673, %v5735, %v6790
  %6792 = vst [vmem:[%s6606 + $0xa8] sm:$0xf] %v6791
  %v6793 = vld [vmem:[%s6606 + $0xac] sm:$0x1]
  %v6794 = vsel %vm6678, %v5736, %v6793
  %6795 = vst [vmem:[%s6606 + $0xac] sm:$0x1] %v6794
  %v6796 = vld [vmem:[%s6606 + $0xb0] sm:$0xf]
  %v6797 = vsel %vm6673, %v5743, %v6796
  %6798 = vst [vmem:[%s6606 + $0xb0] sm:$0xf] %v6797
  %v6799 = vld [vmem:[%s6606 + $0xb4] sm:$0x1]
  %v6800 = vsel %vm6678, %v5744, %v6799
  %6801 = vst [vmem:[%s6606 + $0xb4] sm:$0x1] %v6800
  %v6802 = vld [vmem:[%s6606 + $0xb8] sm:$0xf]
  %v6803 = vsel %vm6673, %v5751, %v6802
  %6804 = vst [vmem:[%s6606 + $0xb8] sm:$0xf] %v6803
  %v6805 = vld [vmem:[%s6606 + $0xbc] sm:$0x1]
  %v6806 = vsel %vm6678, %v5752, %v6805
  %6807 = vst [vmem:[%s6606 + $0xbc] sm:$0x1] %v6806
  %v6808 = vld [vmem:[%s6606 + $0xc0] sm:$0xf]
  %v6809 = vsel %vm6673, %v5759, %v6808
  %6810 = vst [vmem:[%s6606 + $0xc0] sm:$0xf] %v6809
  %v6811 = vld [vmem:[%s6606 + $0xc4] sm:$0x1]
  %v6812 = vsel %vm6678, %v5760, %v6811
  %6813 = vst [vmem:[%s6606 + $0xc4] sm:$0x1] %v6812
  %v6814 = vld [vmem:[%s6606 + $0xc8] sm:$0xf]
  %v6815 = vsel %vm6673, %v5767, %v6814
  %6816 = vst [vmem:[%s6606 + $0xc8] sm:$0xf] %v6815
  %v6817 = vld [vmem:[%s6606 + $0xcc] sm:$0x1]
  %v6818 = vsel %vm6678, %v5768, %v6817
  %6819 = vst [vmem:[%s6606 + $0xcc] sm:$0x1] %v6818
  %v6820 = vld [vmem:[%s6606 + $0xd8] sm:$0xf]
  %v6821 = vsel %vm6673, %v5775, %v6820
  %6822 = vst [vmem:[%s6606 + $0xd8] sm:$0xf] %v6821
  %v6823 = vld [vmem:[%s6606 + $0xdc] sm:$0x1]
  %v6824 = vsel %vm6678, %v5776, %v6823
  %6825 = vst [vmem:[%s6606 + $0xdc] sm:$0x1] %v6824
  %v6826 = vld [vmem:[%s6606 + $0xe0] sm:$0xf]
  %v6827 = vsel %vm6673, %v5783, %v6826
  %6828 = vst [vmem:[%s6606 + $0xe0] sm:$0xf] %v6827
  %v6829 = vld [vmem:[%s6606 + $0xe4] sm:$0x1]
  %v6830 = vsel %vm6678, %v5784, %v6829
  %6831 = vst [vmem:[%s6606 + $0xe4] sm:$0x1] %v6830
  %v6832 = vld [vmem:[%s6606 + $0xe8] sm:$0xf]
  %v6833 = vsel %vm6673, %v5791, %v6832
  %6834 = vst [vmem:[%s6606 + $0xe8] sm:$0xf] %v6833
  %v6835 = vld [vmem:[%s6606 + $0xec] sm:$0x1]
  %v6836 = vsel %vm6678, %v5792, %v6835
  %6837 = vst [vmem:[%s6606 + $0xec] sm:$0x1] %v6836
  %v6838 = vld [vmem:[%s6606 + $0xf0] sm:$0xf]
  %v6839 = vsel %vm6673, %v5799, %v6838
  %6840 = vst [vmem:[%s6606 + $0xf0] sm:$0xf] %v6839
  %v6841 = vld [vmem:[%s6606 + $0xf4] sm:$0x1]
  %v6842 = vsel %vm6678, %v5800, %v6841
  %6843 = vst [vmem:[%s6606 + $0xf4] sm:$0x1] %v6842
  %v6844 = vld [vmem:[%s6606 + $0xf8] sm:$0xf]
  %v6845 = vsel %vm6673, %v5807, %v6844
  %6846 = vst [vmem:[%s6606 + $0xf8] sm:$0xf] %v6845
  %v6847 = vld [vmem:[%s6606 + $0xfc] sm:$0x1]
  %v6848 = vsel %vm6678, %v5808, %v6847
  %6849 = vst [vmem:[%s6606 + $0xfc] sm:$0x1] %v6848
  %v6850 = vld [vmem:[%s6606 + $0x100] sm:$0xf]
  %v6851 = vsel %vm6673, %v5815, %v6850
  %6852 = vst [vmem:[%s6606 + $0x100] sm:$0xf] %v6851
  %v6853 = vld [vmem:[%s6606 + $0x104] sm:$0x1]
  %v6854 = vsel %vm6678, %v5816, %v6853
  %6855 = vst [vmem:[%s6606 + $0x104] sm:$0x1] %v6854
  %v6856 = vld [vmem:[%s6606 + $0x108] sm:$0xf]
  %v6857 = vsel %vm6673, %v5823, %v6856
  %6858 = vst [vmem:[%s6606 + $0x108] sm:$0xf] %v6857
  %v6859 = vld [vmem:[%s6606 + $0x10c] sm:$0x1]
  %v6860 = vsel %vm6678, %v5824, %v6859
  %6861 = vst [vmem:[%s6606 + $0x10c] sm:$0x1] %v6860
  %v6862 = vld [vmem:[%s6606 + $0x110] sm:$0xf]
  %v6863 = vsel %vm6673, %v5831, %v6862
  %6864 = vst [vmem:[%s6606 + $0x110] sm:$0xf] %v6863
  %v6865 = vld [vmem:[%s6606 + $0x114] sm:$0x1]
  %v6866 = vsel %vm6678, %v5832, %v6865
  %6867 = vst [vmem:[%s6606 + $0x114] sm:$0x1] %v6866
  %v6868 = vld [vmem:[%s6606 + $0x120] sm:$0xf]
  %v6869 = vsel %vm6673, %v5839, %v6868
  %6870 = vst [vmem:[%s6606 + $0x120] sm:$0xf] %v6869
  %v6871 = vld [vmem:[%s6606 + $0x124] sm:$0x1]
  %v6872 = vsel %vm6678, %v5840, %v6871
  %6873 = vst [vmem:[%s6606 + $0x124] sm:$0x1] %v6872
  %v6874 = vld [vmem:[%s6606 + $0x128] sm:$0xf]
  %v6875 = vsel %vm6673, %v5847, %v6874
  %6876 = vst [vmem:[%s6606 + $0x128] sm:$0xf] %v6875
  %v6877 = vld [vmem:[%s6606 + $0x12c] sm:$0x1]
  %v6878 = vsel %vm6678, %v5848, %v6877
  %6879 = vst [vmem:[%s6606 + $0x12c] sm:$0x1] %v6878
  %v6880 = vld [vmem:[%s6606 + $0x130] sm:$0xf]
  %v6881 = vsel %vm6673, %v5855, %v6880
  %6882 = vst [vmem:[%s6606 + $0x130] sm:$0xf] %v6881
  %v6883 = vld [vmem:[%s6606 + $0x134] sm:$0x1]
  %v6884 = vsel %vm6678, %v5856, %v6883
  %6885 = vst [vmem:[%s6606 + $0x134] sm:$0x1] %v6884
  %v6886 = vld [vmem:[%s6606 + $0x138] sm:$0xf]
  %v6887 = vsel %vm6673, %v5863, %v6886
  %6888 = vst [vmem:[%s6606 + $0x138] sm:$0xf] %v6887
  %v6889 = vld [vmem:[%s6606 + $0x13c] sm:$0x1]
  %v6890 = vsel %vm6678, %v5864, %v6889
  %6891 = vst [vmem:[%s6606 + $0x13c] sm:$0x1] %v6890
  %v6892 = vld [vmem:[%s6606 + $0x140] sm:$0xf]
  %v6893 = vsel %vm6673, %v5871, %v6892
  %6894 = vst [vmem:[%s6606 + $0x140] sm:$0xf] %v6893
  %v6895 = vld [vmem:[%s6606 + $0x144] sm:$0x1]
  %v6896 = vsel %vm6678, %v5872, %v6895
  %6897 = vst [vmem:[%s6606 + $0x144] sm:$0x1] %v6896
  %v6898 = vld [vmem:[%s6606 + $0x148] sm:$0xf]
  %v6899 = vsel %vm6673, %v5879, %v6898
  %6900 = vst [vmem:[%s6606 + $0x148] sm:$0xf] %v6899
  %v6901 = vld [vmem:[%s6606 + $0x14c] sm:$0x1]
  %v6902 = vsel %vm6678, %v5880, %v6901
  %6903 = vst [vmem:[%s6606 + $0x14c] sm:$0x1] %v6902
  %v6904 = vld [vmem:[%s6606 + $0x150] sm:$0xf]
  %v6905 = vsel %vm6673, %v5887, %v6904
  %6906 = vst [vmem:[%s6606 + $0x150] sm:$0xf] %v6905
  %v6907 = vld [vmem:[%s6606 + $0x154] sm:$0x1]
  %v6908 = vsel %vm6678, %v5888, %v6907
  %6909 = vst [vmem:[%s6606 + $0x154] sm:$0x1] %v6908
  %v6910 = vld [vmem:[%s6606 + $0x158] sm:$0xf]
  %v6911 = vsel %vm6673, %v5895, %v6910
  %6912 = vst [vmem:[%s6606 + $0x158] sm:$0xf] %v6911
  %v6913 = vld [vmem:[%s6606 + $0x15c] sm:$0x1]
  %v6914 = vsel %vm6678, %v5896, %v6913
  %6915 = vst [vmem:[%s6606 + $0x15c] sm:$0x1] %v6914
  %v6916 = vld [vmem:[%s6606 + $0x168] sm:$0xf]
  %v6917 = vsel %vm6673, %v5903, %v6916
  %6918 = vst [vmem:[%s6606 + $0x168] sm:$0xf] %v6917
  %v6919 = vld [vmem:[%s6606 + $0x16c] sm:$0x1]
  %v6920 = vsel %vm6678, %v5904, %v6919
  %6921 = vst [vmem:[%s6606 + $0x16c] sm:$0x1] %v6920
  %v6922 = vld [vmem:[%s6606 + $0x170] sm:$0xf]
  %v6923 = vsel %vm6673, %v5911, %v6922
  %6924 = vst [vmem:[%s6606 + $0x170] sm:$0xf] %v6923
  %v6925 = vld [vmem:[%s6606 + $0x174] sm:$0x1]
  %v6926 = vsel %vm6678, %v5912, %v6925
  %6927 = vst [vmem:[%s6606 + $0x174] sm:$0x1] %v6926
  %v6928 = vld [vmem:[%s6606 + $0x178] sm:$0xf]
  %v6929 = vsel %vm6673, %v5919, %v6928
  %6930 = vst [vmem:[%s6606 + $0x178] sm:$0xf] %v6929
  %v6931 = vld [vmem:[%s6606 + $0x17c] sm:$0x1]
  %v6932 = vsel %vm6678, %v5920, %v6931
  %6933 = vst [vmem:[%s6606 + $0x17c] sm:$0x1] %v6932
  %v6934 = vld [vmem:[%s6606 + $0x180] sm:$0xf]
  %v6935 = vsel %vm6673, %v5927, %v6934
  %6936 = vst [vmem:[%s6606 + $0x180] sm:$0xf] %v6935
  %v6937 = vld [vmem:[%s6606 + $0x184] sm:$0x1]
  %v6938 = vsel %vm6678, %v5928, %v6937
  %6939 = vst [vmem:[%s6606 + $0x184] sm:$0x1] %v6938
  %v6940 = vld [vmem:[%s6606 + $0x188] sm:$0xf]
  %v6941 = vsel %vm6673, %v5935, %v6940
  %6942 = vst [vmem:[%s6606 + $0x188] sm:$0xf] %v6941
  %v6943 = vld [vmem:[%s6606 + $0x18c] sm:$0x1]
  %v6944 = vsel %vm6678, %v5936, %v6943
  %6945 = vst [vmem:[%s6606 + $0x18c] sm:$0x1] %v6944
  %v6946 = vld [vmem:[%s6606 + $0x190] sm:$0xf]
  %v6947 = vsel %vm6673, %v5943, %v6946
  %6948 = vst [vmem:[%s6606 + $0x190] sm:$0xf] %v6947
  %v6949 = vld [vmem:[%s6606 + $0x194] sm:$0x1]
  %v6950 = vsel %vm6678, %v5944, %v6949
  %6951 = vst [vmem:[%s6606 + $0x194] sm:$0x1] %v6950
  %v6952 = vld [vmem:[%s6606 + $0x198] sm:$0xf]
  %v6953 = vsel %vm6673, %v5951, %v6952
  %6954 = vst [vmem:[%s6606 + $0x198] sm:$0xf] %v6953
  %v6955 = vld [vmem:[%s6606 + $0x19c] sm:$0x1]
  %v6956 = vsel %vm6678, %v5952, %v6955
  %6957 = vst [vmem:[%s6606 + $0x19c] sm:$0x1] %v6956
  %v6958 = vld [vmem:[%s6606 + $0x1a0] sm:$0xf]
  %v6959 = vsel %vm6673, %v5959, %v6958
  %6960 = vst [vmem:[%s6606 + $0x1a0] sm:$0xf] %v6959
  %v6961 = vld [vmem:[%s6606 + $0x1a4] sm:$0x1]
  %v6962 = vsel %vm6678, %v5960, %v6961
  %6963 = vst [vmem:[%s6606 + $0x1a4] sm:$0x1] %v6962
  %v6964 = vld [vmem:[%s6606 + $0x1b0] sm:$0xf]
  %v6965 = vsel %vm6673, %v5967, %v6964
  %6966 = vst [vmem:[%s6606 + $0x1b0] sm:$0xf] %v6965
  %v6967 = vld [vmem:[%s6606 + $0x1b4] sm:$0x1]
  %v6968 = vsel %vm6678, %v5968, %v6967
  %6969 = vst [vmem:[%s6606 + $0x1b4] sm:$0x1] %v6968
  %v6970 = vld [vmem:[%s6606 + $0x1b8] sm:$0xf]
  %v6971 = vsel %vm6673, %v5975, %v6970
  %6972 = vst [vmem:[%s6606 + $0x1b8] sm:$0xf] %v6971
  %v6973 = vld [vmem:[%s6606 + $0x1bc] sm:$0x1]
  %v6974 = vsel %vm6678, %v5976, %v6973
  %6975 = vst [vmem:[%s6606 + $0x1bc] sm:$0x1] %v6974
  %v6976 = vld [vmem:[%s6606 + $0x1c0] sm:$0xf]
  %v6977 = vsel %vm6673, %v5983, %v6976
  %6978 = vst [vmem:[%s6606 + $0x1c0] sm:$0xf] %v6977
  %v6979 = vld [vmem:[%s6606 + $0x1c4] sm:$0x1]
  %v6980 = vsel %vm6678, %v5984, %v6979
  %6981 = vst [vmem:[%s6606 + $0x1c4] sm:$0x1] %v6980
  %v6982 = vld [vmem:[%s6606 + $0x1c8] sm:$0xf]
  %v6983 = vsel %vm6673, %v5991, %v6982
  %6984 = vst [vmem:[%s6606 + $0x1c8] sm:$0xf] %v6983
  %v6985 = vld [vmem:[%s6606 + $0x1cc] sm:$0x1]
  %v6986 = vsel %vm6678, %v5992, %v6985
  %6987 = vst [vmem:[%s6606 + $0x1cc] sm:$0x1] %v6986
  %v6988 = vld [vmem:[%s6606 + $0x1d0] sm:$0xf]
  %v6989 = vsel %vm6673, %v5999, %v6988
  %6990 = vst [vmem:[%s6606 + $0x1d0] sm:$0xf] %v6989
  %v6991 = vld [vmem:[%s6606 + $0x1d4] sm:$0x1]
  %v6992 = vsel %vm6678, %v6000, %v6991
  %6993 = vst [vmem:[%s6606 + $0x1d4] sm:$0x1] %v6992
  %v6994 = vld [vmem:[%s6606 + $0x1d8] sm:$0xf]
  %v6995 = vsel %vm6673, %v6007, %v6994
  %6996 = vst [vmem:[%s6606 + $0x1d8] sm:$0xf] %v6995
  %v6997 = vld [vmem:[%s6606 + $0x1dc] sm:$0x1]
  %v6998 = vsel %vm6678, %v6008, %v6997
  %6999 = vst [vmem:[%s6606 + $0x1dc] sm:$0x1] %v6998
  %v7000 = vld [vmem:[%s6606 + $0x1e0] sm:$0xf]
  %v7001 = vsel %vm6673, %v6015, %v7000
  %7002 = vst [vmem:[%s6606 + $0x1e0] sm:$0xf] %v7001
  %v7003 = vld [vmem:[%s6606 + $0x1e4] sm:$0x1]
  %v7004 = vsel %vm6678, %v6016, %v7003
  %7005 = vst [vmem:[%s6606 + $0x1e4] sm:$0x1] %v7004
  %v7006 = vld [vmem:[%s6606 + $0x1e8] sm:$0xf]
  %v7007 = vsel %vm6673, %v6023, %v7006
  %7008 = vst [vmem:[%s6606 + $0x1e8] sm:$0xf] %v7007
  %v7009 = vld [vmem:[%s6606 + $0x1ec] sm:$0x1]
  %v7010 = vsel %vm6678, %v6024, %v7009
  %7011 = vst [vmem:[%s6606 + $0x1ec] sm:$0x1] %v7010
  %v7012 = vld [vmem:[%s6606 + $0x1f8] sm:$0xf]
  %v7013 = vsel %vm6673, %v6031, %v7012
  %7014 = vst [vmem:[%s6606 + $0x1f8] sm:$0xf] %v7013
  %v7015 = vld [vmem:[%s6606 + $0x1fc] sm:$0x1]
  %v7016 = vsel %vm6678, %v6032, %v7015
  %7017 = vst [vmem:[%s6606 + $0x1fc] sm:$0x1] %v7016
  %v7018 = vld [vmem:[%s6606 + $0x200] sm:$0xf]
  %v7019 = vsel %vm6673, %v6039, %v7018
  %7020 = vst [vmem:[%s6606 + $0x200] sm:$0xf] %v7019
  %v7021 = vld [vmem:[%s6606 + $0x204] sm:$0x1]
  %v7022 = vsel %vm6678, %v6040, %v7021
  %7023 = vst [vmem:[%s6606 + $0x204] sm:$0x1] %v7022
  %v7024 = vld [vmem:[%s6606 + $0x208] sm:$0xf]
  %v7025 = vsel %vm6673, %v6047, %v7024
  %7026 = vst [vmem:[%s6606 + $0x208] sm:$0xf] %v7025
  %v7027 = vld [vmem:[%s6606 + $0x20c] sm:$0x1]
  %v7028 = vsel %vm6678, %v6048, %v7027
  %7029 = vst [vmem:[%s6606 + $0x20c] sm:$0x1] %v7028
  %v7030 = vld [vmem:[%s6606 + $0x210] sm:$0xf]
  %v7031 = vsel %vm6673, %v6055, %v7030
  %7032 = vst [vmem:[%s6606 + $0x210] sm:$0xf] %v7031
  %v7033 = vld [vmem:[%s6606 + $0x214] sm:$0x1]
  %v7034 = vsel %vm6678, %v6056, %v7033
  %7035 = vst [vmem:[%s6606 + $0x214] sm:$0x1] %v7034
  %v7036 = vld [vmem:[%s6606 + $0x218] sm:$0xf]
  %v7037 = vsel %vm6673, %v6063, %v7036
  %7038 = vst [vmem:[%s6606 + $0x218] sm:$0xf] %v7037
  %v7039 = vld [vmem:[%s6606 + $0x21c] sm:$0x1]
  %v7040 = vsel %vm6678, %v6064, %v7039
  %7041 = vst [vmem:[%s6606 + $0x21c] sm:$0x1] %v7040
  %v7042 = vld [vmem:[%s6606 + $0x220] sm:$0xf]
  %v7043 = vsel %vm6673, %v6071, %v7042
  %7044 = vst [vmem:[%s6606 + $0x220] sm:$0xf] %v7043
  %v7045 = vld [vmem:[%s6606 + $0x224] sm:$0x1]
  %v7046 = vsel %vm6678, %v6072, %v7045
  %7047 = vst [vmem:[%s6606 + $0x224] sm:$0x1] %v7046
  %v7048 = vld [vmem:[%s6606 + $0x228] sm:$0xf]
  %v7049 = vsel %vm6673, %v6079, %v7048
  %7050 = vst [vmem:[%s6606 + $0x228] sm:$0xf] %v7049
  %v7051 = vld [vmem:[%s6606 + $0x22c] sm:$0x1]
  %v7052 = vsel %vm6678, %v6080, %v7051
  %7053 = vst [vmem:[%s6606 + $0x22c] sm:$0x1] %v7052
  %v7054 = vld [vmem:[%s6606 + $0x230] sm:$0xf]
  %v7055 = vsel %vm6673, %v6087, %v7054
  %7056 = vst [vmem:[%s6606 + $0x230] sm:$0xf] %v7055
  %v7057 = vld [vmem:[%s6606 + $0x234] sm:$0x1]
  %v7058 = vsel %vm6678, %v6088, %v7057
  %7059 = vst [vmem:[%s6606 + $0x234] sm:$0x1] %v7058
  %v7060 = vld [vmem:[#allocation2] sm:$0xf]
  %v7061 = vld [vmem:[#allocation2 + $0x8] sm:$0xf]
  %v7062 = vld [vmem:[#allocation2 + $0x10] sm:$0xf]
  %v7063 = vld [vmem:[#allocation2 + $0x18] sm:$0xf]
  %v7064 = vld [vmem:[#allocation2 + $0x20] sm:$0xf]
  %v7065 = vld [vmem:[#allocation2 + $0x28] sm:$0xf]
  %v7066 = vld [vmem:[#allocation2 + $0x30] sm:$0xf]
  %v7067 = vld [vmem:[#allocation2 + $0x38] sm:$0xf]
  %v7068 = vld [vmem:[#allocation2 + $0x48] sm:$0xf]
  %v7069 = vld [vmem:[#allocation2 + $0x50] sm:$0xf]
  %v7070 = vld [vmem:[#allocation2 + $0x58] sm:$0xf]
  %v7071 = vld [vmem:[#allocation2 + $0x60] sm:$0xf]
  %v7072 = vld [vmem:[#allocation2 + $0x68] sm:$0xf]
  %v7073 = vld [vmem:[#allocation2 + $0x70] sm:$0xf]
  %v7074 = vld [vmem:[#allocation2 + $0x78] sm:$0xf]
  %v7075 = vld [vmem:[#allocation2 + $0x80] sm:$0xf]
  %v7076 = vld [vmem:[#allocation2 + $0x90] sm:$0xf]
  %v7077 = vld [vmem:[#allocation2 + $0x98] sm:$0xf]
  %v7078 = vld [vmem:[#allocation2 + $0xa0] sm:$0xf]
  %v7079 = vld [vmem:[#allocation2 + $0xa8] sm:$0xf]
  %v7080 = vld [vmem:[#allocation2 + $0xb0] sm:$0xf]
  %v7081 = vld [vmem:[#allocation2 + $0xb8] sm:$0xf]
  %v7082 = vld [vmem:[#allocation2 + $0xc0] sm:$0xf]
  %v7083 = vld [vmem:[#allocation2 + $0xc8] sm:$0xf]
  %v7084 = vld [vmem:[#allocation2 + $0xd8] sm:$0xf]
  %v7085 = vld [vmem:[#allocation2 + $0xe0] sm:$0xf]
  %v7086 = vld [vmem:[#allocation2 + $0xe8] sm:$0xf]
  %v7087 = vld [vmem:[#allocation2 + $0xf0] sm:$0xf]
  %v7088 = vld [vmem:[#allocation2 + $0xf8] sm:$0xf]
  %v7089 = vld [vmem:[#allocation2 + $0x100] sm:$0xf]
  %v7090 = vld [vmem:[#allocation2 + $0x108] sm:$0xf]
  %v7091 = vld [vmem:[#allocation2 + $0x110] sm:$0xf]
  %v7092 = vld [vmem:[#allocation2 + $0x120] sm:$0xf]
  %v7093 = vld [vmem:[#allocation2 + $0x128] sm:$0xf]
  %v7094 = vld [vmem:[#allocation2 + $0x130] sm:$0xf]
  %v7095 = vld [vmem:[#allocation2 + $0x138] sm:$0xf]
  %v7096 = vld [vmem:[#allocation2 + $0x140] sm:$0xf]
  %v7097 = vld [vmem:[#allocation2 + $0x148] sm:$0xf]
  %v7098 = vld [vmem:[#allocation2 + $0x150] sm:$0xf]
  %v7099 = vld [vmem:[#allocation2 + $0x158] sm:$0xf]
  %v7100 = vld [vmem:[#allocation2 + $0x168] sm:$0xf]
  %v7101 = vld [vmem:[#allocation2 + $0x170] sm:$0xf]
  %v7102 = vld [vmem:[#allocation2 + $0x178] sm:$0xf]
  %v7103 = vld [vmem:[#allocation2 + $0x180] sm:$0xf]
  %v7104 = vld [vmem:[#allocation2 + $0x188] sm:$0xf]
  %v7105 = vld [vmem:[#allocation2 + $0x190] sm:$0xf]
  %v7106 = vld [vmem:[#allocation2 + $0x198] sm:$0xf]
  %v7107 = vld [vmem:[#allocation2 + $0x1a0] sm:$0xf]
  %v7108 = vld [vmem:[#allocation2 + $0x1b0] sm:$0xf]
  %v7109 = vld [vmem:[#allocation2 + $0x1b8] sm:$0xf]
  %v7110 = vld [vmem:[#allocation2 + $0x1c0] sm:$0xf]
  %v7111 = vld [vmem:[#allocation2 + $0x1c8] sm:$0xf]
  %v7112 = vld [vmem:[#allocation2 + $0x1d0] sm:$0xf]
  %v7113 = vld [vmem:[#allocation2 + $0x1d8] sm:$0xf]
  %v7114 = vld [vmem:[#allocation2 + $0x1e0] sm:$0xf]
  %v7115 = vld [vmem:[#allocation2 + $0x1e8] sm:$0xf]
  %v7116 = vld [vmem:[#allocation2 + $0x1f8] sm:$0xf]
  %v7117 = vld [vmem:[#allocation2 + $0x200] sm:$0xf]
  %v7118 = vld [vmem:[#allocation2 + $0x208] sm:$0xf]
  %v7119 = vld [vmem:[#allocation2 + $0x210] sm:$0xf]
  %v7120 = vld [vmem:[#allocation2 + $0x218] sm:$0xf]
  %v7121 = vld [vmem:[#allocation2 + $0x220] sm:$0xf]
  %v7122 = vld [vmem:[#allocation2 + $0x228] sm:$0xf]
  %v7123 = vld [vmem:[#allocation2 + $0x230] sm:$0xf]
  %v7124 = vld [vmem:[%s3] sm:$0xf]
  %v7125 = vld [vmem:[%s3 + $0x4] sm:$0xf]
  %v7126 = vld [vmem:[%s3 + $0x8] sm:$0xf]
  %v7127 = vld [vmem:[%s3 + $0xc] sm:$0xf]
  %v7128 = vld [vmem:[%s3 + $0x10] sm:$0xf]
  %v7129 = vld [vmem:[%s3 + $0x14] sm:$0xf]
  %v7130 = vld [vmem:[%s3 + $0x18] sm:$0xf]
  %v7131 = vld [vmem:[%s3 + $0x1c] sm:$0xf]
  %v7132 = vld [vmem:[#allocation2 + $0x4] sm:$0x1]
  %v7133 = vld [vmem:[#allocation2 + $0xc] sm:$0x1]
  %v7134 = vld [vmem:[#allocation2 + $0x14] sm:$0x1]
  %v7135 = vld [vmem:[#allocation2 + $0x1c] sm:$0x1]
  %v7136 = vld [vmem:[#allocation2 + $0x24] sm:$0x1]
  %v7137 = vld [vmem:[#allocation2 + $0x2c] sm:$0x1]
  %v7138 = vld [vmem:[#allocation2 + $0x34] sm:$0x1]
  %v7139 = vld [vmem:[#allocation2 + $0x3c] sm:$0x1]
  %v7140 = vld [vmem:[#allocation2 + $0x4c] sm:$0x1]
  %v7141 = vld [vmem:[#allocation2 + $0x54] sm:$0x1]
  %v7142 = vld [vmem:[#allocation2 + $0x5c] sm:$0x1]
  %v7143 = vld [vmem:[#allocation2 + $0x64] sm:$0x1]
  %v7144 = vld [vmem:[#allocation2 + $0x6c] sm:$0x1]
  %v7145 = vld [vmem:[#allocation2 + $0x74] sm:$0x1]
  %v7146 = vld [vmem:[#allocation2 + $0x7c] sm:$0x1]
  %v7147 = vld [vmem:[#allocation2 + $0x84] sm:$0x1]
  %v7148 = vld [vmem:[#allocation2 + $0x94] sm:$0x1]
  %v7149 = vld [vmem:[#allocation2 + $0x9c] sm:$0x1]
  %v7150 = vld [vmem:[#allocation2 + $0xa4] sm:$0x1]
  %v7151 = vld [vmem:[#allocation2 + $0xac] sm:$0x1]
  %v7152 = vld [vmem:[#allocation2 + $0xb4] sm:$0x1]
  %v7153 = vld [vmem:[#allocation2 + $0xbc] sm:$0x1]
  %v7154 = vld [vmem:[#allocation2 + $0xc4] sm:$0x1]
  %v7155 = vld [vmem:[#allocation2 + $0xcc] sm:$0x1]
  %v7156 = vld [vmem:[#allocation2 + $0xdc] sm:$0x1]
  %v7157 = vld [vmem:[#allocation2 + $0xe4] sm:$0x1]
  %v7158 = vld [vmem:[#allocation2 + $0xec] sm:$0x1]
  %v7159 = vld [vmem:[#allocation2 + $0xf4] sm:$0x1]
  %v7160 = vld [vmem:[#allocation2 + $0xfc] sm:$0x1]
  %v7161 = vld [vmem:[#allocation2 + $0x104] sm:$0x1]
  %v7162 = vld [vmem:[#allocation2 + $0x10c] sm:$0x1]
  %v7163 = vld [vmem:[#allocation2 + $0x114] sm:$0x1]
  %v7164 = vld [vmem:[#allocation2 + $0x124] sm:$0x1]
  %v7165 = vld [vmem:[#allocation2 + $0x12c] sm:$0x1]
  %v7166 = vld [vmem:[#allocation2 + $0x134] sm:$0x1]
  %v7167 = vld [vmem:[#allocation2 + $0x13c] sm:$0x1]
  %v7168 = vld [vmem:[#allocation2 + $0x144] sm:$0x1]
  %v7169 = vld [vmem:[#allocation2 + $0x14c] sm:$0x1]
  %v7170 = vld [vmem:[#allocation2 + $0x154] sm:$0x1]
  %v7171 = vld [vmem:[#allocation2 + $0x15c] sm:$0x1]
  %v7172 = vld [vmem:[#allocation2 + $0x16c] sm:$0x1]
  %v7173 = vld [vmem:[#allocation2 + $0x174] sm:$0x1]
  %v7174 = vld [vmem:[#allocation2 + $0x17c] sm:$0x1]
  %v7175 = vld [vmem:[#allocation2 + $0x184] sm:$0x1]
  %v7176 = vld [vmem:[#allocation2 + $0x18c] sm:$0x1]
  %v7177 = vld [vmem:[#allocation2 + $0x194] sm:$0x1]
  %v7178 = vld [vmem:[#allocation2 + $0x19c] sm:$0x1]
  %v7179 = vld [vmem:[#allocation2 + $0x1a4] sm:$0x1]
  %v7180 = vld [vmem:[#allocation2 + $0x1b4] sm:$0x1]
  %v7181 = vld [vmem:[#allocation2 + $0x1bc] sm:$0x1]
  %v7182 = vld [vmem:[#allocation2 + $0x1c4] sm:$0x1]
  %v7183 = vld [vmem:[#allocation2 + $0x1cc] sm:$0x1]
  %v7184 = vld [vmem:[#allocation2 + $0x1d4] sm:$0x1]
  %v7185 = vld [vmem:[#allocation2 + $0x1dc] sm:$0x1]
  %v7186 = vld [vmem:[#allocation2 + $0x1e4] sm:$0x1]
  %v7187 = vld [vmem:[#allocation2 + $0x1ec] sm:$0x1]
  %v7188 = vld [vmem:[#allocation2 + $0x1fc] sm:$0x1]
  %v7189 = vld [vmem:[#allocation2 + $0x204] sm:$0x1]
  %v7190 = vld [vmem:[#allocation2 + $0x20c] sm:$0x1]
  %v7191 = vld [vmem:[#allocation2 + $0x214] sm:$0x1]
  %v7192 = vld [vmem:[#allocation2 + $0x21c] sm:$0x1]
  %v7193 = vld [vmem:[#allocation2 + $0x224] sm:$0x1]
  %v7194 = vld [vmem:[#allocation2 + $0x22c] sm:$0x1]
  %v7195 = vld [vmem:[#allocation2 + $0x234] sm:$0x1]
  %v7197 = vshrl.u32 %v7060, 16
  %v7199 = vrot.slane %v7197, 4
  %v7200 = vshll.u32 %v7060, 16
  %v7202 = vrot.slane %v7200, 5
  %v7203 = vor.u32 %v7199, %v7202
  %v7204 = vrot.slane %v7203, 4
  %v7206 = vshll.u32 %v7132, 16
  %v7208 = vrot.slane %v7206, 5
  %v7209 = vsel %vm151, %v7204, %v7208
  %v7211 = vshrl.u32 %v7061, 16
  %v7213 = vrot.slane %v7211, 4
  %v7214 = vshll.u32 %v7061, 16
  %v7216 = vrot.slane %v7214, 5
  %v7217 = vor.u32 %v7213, %v7216
  %v7218 = vrot.slane %v7217, 4
  %v7220 = vshll.u32 %v7133, 16
  %v7222 = vrot.slane %v7220, 5
  %v7223 = vsel %vm151, %v7218, %v7222
  %v7225 = vshrl.u32 %v7062, 16
  %v7227 = vrot.slane %v7225, 4
  %v7228 = vshll.u32 %v7062, 16
  %v7230 = vrot.slane %v7228, 5
  %v7231 = vor.u32 %v7227, %v7230
  %v7232 = vrot.slane %v7231, 4
  %v7234 = vshll.u32 %v7134, 16
  %v7236 = vrot.slane %v7234, 5
  %v7237 = vsel %vm151, %v7232, %v7236
  %v7239 = vshrl.u32 %v7063, 16
  %v7241 = vrot.slane %v7239, 4
  %v7242 = vshll.u32 %v7063, 16
  %v7244 = vrot.slane %v7242, 5
  %v7245 = vor.u32 %v7241, %v7244
  %v7246 = vrot.slane %v7245, 4
  %v7248 = vshll.u32 %v7135, 16
  %v7250 = vrot.slane %v7248, 5
  %v7251 = vsel %vm151, %v7246, %v7250
  %v7253 = vshrl.u32 %v7064, 16
  %v7255 = vrot.slane %v7253, 4
  %v7256 = vshll.u32 %v7064, 16
  %v7258 = vrot.slane %v7256, 5
  %v7259 = vor.u32 %v7255, %v7258
  %v7260 = vrot.slane %v7259, 4
  %v7262 = vshll.u32 %v7136, 16
  %v7264 = vrot.slane %v7262, 5
  %v7265 = vsel %vm151, %v7260, %v7264
  %v7267 = vshrl.u32 %v7065, 16
  %v7269 = vrot.slane %v7267, 4
  %v7270 = vshll.u32 %v7065, 16
  %v7272 = vrot.slane %v7270, 5
  %v7273 = vor.u32 %v7269, %v7272
  %v7274 = vrot.slane %v7273, 4
  %v7276 = vshll.u32 %v7137, 16
  %v7278 = vrot.slane %v7276, 5
  %v7279 = vsel %vm151, %v7274, %v7278
  %v7281 = vshrl.u32 %v7066, 16
  %v7283 = vrot.slane %v7281, 4
  %v7284 = vshll.u32 %v7066, 16
  %v7286 = vrot.slane %v7284, 5
  %v7287 = vor.u32 %v7283, %v7286
  %v7288 = vrot.slane %v7287, 4
  %v7290 = vshll.u32 %v7138, 16
  %v7292 = vrot.slane %v7290, 5
  %v7293 = vsel %vm151, %v7288, %v7292
  %v7295 = vshrl.u32 %v7067, 16
  %v7297 = vrot.slane %v7295, 4
  %v7298 = vshll.u32 %v7067, 16
  %v7300 = vrot.slane %v7298, 5
  %v7301 = vor.u32 %v7297, %v7300
  %v7302 = vrot.slane %v7301, 4
  %v7304 = vshll.u32 %v7139, 16
  %v7306 = vrot.slane %v7304, 5
  %v7307 = vsel %vm151, %v7302, %v7306
  %v7309 = vshrl.u32 %v7068, 16
  %v7311 = vrot.slane %v7309, 4
  %v7312 = vshll.u32 %v7068, 16
  %v7314 = vrot.slane %v7312, 5
  %v7315 = vor.u32 %v7311, %v7314
  %v7316 = vrot.slane %v7315, 4
  %v7318 = vshll.u32 %v7140, 16
  %v7320 = vrot.slane %v7318, 5
  %v7321 = vsel %vm151, %v7316, %v7320
  %v7323 = vshrl.u32 %v7069, 16
  %v7325 = vrot.slane %v7323, 4
  %v7326 = vshll.u32 %v7069, 16
  %v7328 = vrot.slane %v7326, 5
  %v7329 = vor.u32 %v7325, %v7328
  %v7330 = vrot.slane %v7329, 4
  %v7332 = vshll.u32 %v7141, 16
  %v7334 = vrot.slane %v7332, 5
  %v7335 = vsel %vm151, %v7330, %v7334
  %v7337 = vshrl.u32 %v7070, 16
  %v7339 = vrot.slane %v7337, 4
  %v7340 = vshll.u32 %v7070, 16
  %v7342 = vrot.slane %v7340, 5
  %v7343 = vor.u32 %v7339, %v7342
  %v7344 = vrot.slane %v7343, 4
  %v7346 = vshll.u32 %v7142, 16
  %v7348 = vrot.slane %v7346, 5
  %v7349 = vsel %vm151, %v7344, %v7348
  %v7351 = vshrl.u32 %v7071, 16
  %v7353 = vrot.slane %v7351, 4
  %v7354 = vshll.u32 %v7071, 16
  %v7356 = vrot.slane %v7354, 5
  %v7357 = vor.u32 %v7353, %v7356
  %v7358 = vrot.slane %v7357, 4
  %v7360 = vshll.u32 %v7143, 16
  %v7362 = vrot.slane %v7360, 5
  %v7363 = vsel %vm151, %v7358, %v7362
  %v7365 = vshrl.u32 %v7072, 16
  %v7367 = vrot.slane %v7365, 4
  %v7368 = vshll.u32 %v7072, 16
  %v7370 = vrot.slane %v7368, 5
  %v7371 = vor.u32 %v7367, %v7370
  %v7372 = vrot.slane %v7371, 4
  %v7374 = vshll.u32 %v7144, 16
  %v7376 = vrot.slane %v7374, 5
  %v7377 = vsel %vm151, %v7372, %v7376
  %v7379 = vshrl.u32 %v7073, 16
  %v7381 = vrot.slane %v7379, 4
  %v7382 = vshll.u32 %v7073, 16
  %v7384 = vrot.slane %v7382, 5
  %v7385 = vor.u32 %v7381, %v7384
  %v7386 = vrot.slane %v7385, 4
  %v7388 = vshll.u32 %v7145, 16
  %v7390 = vrot.slane %v7388, 5
  %v7391 = vsel %vm151, %v7386, %v7390
  %v7393 = vshrl.u32 %v7074, 16
  %v7395 = vrot.slane %v7393, 4
  %v7396 = vshll.u32 %v7074, 16
  %v7398 = vrot.slane %v7396, 5
  %v7399 = vor.u32 %v7395, %v7398
  %v7400 = vrot.slane %v7399, 4
  %v7402 = vshll.u32 %v7146, 16
  %v7404 = vrot.slane %v7402, 5
  %v7405 = vsel %vm151, %v7400, %v7404
  %v7407 = vshrl.u32 %v7075, 16
  %v7409 = vrot.slane %v7407, 4
  %v7410 = vshll.u32 %v7075, 16
  %v7412 = vrot.slane %v7410, 5
  %v7413 = vor.u32 %v7409, %v7412
  %v7414 = vrot.slane %v7413, 4
  %v7416 = vshll.u32 %v7147, 16
  %v7418 = vrot.slane %v7416, 5
  %v7419 = vsel %vm151, %v7414, %v7418
  %v7421 = vshrl.u32 %v7076, 16
  %v7423 = vrot.slane %v7421, 4
  %v7424 = vshll.u32 %v7076, 16
  %v7426 = vrot.slane %v7424, 5
  %v7427 = vor.u32 %v7423, %v7426
  %v7428 = vrot.slane %v7427, 4
  %v7430 = vshll.u32 %v7148, 16
  %v7432 = vrot.slane %v7430, 5
  %v7433 = vsel %vm151, %v7428, %v7432
  %v7435 = vshrl.u32 %v7077, 16
  %v7437 = vrot.slane %v7435, 4
  %v7438 = vshll.u32 %v7077, 16
  %v7440 = vrot.slane %v7438, 5
  %v7441 = vor.u32 %v7437, %v7440
  %v7442 = vrot.slane %v7441, 4
  %v7444 = vshll.u32 %v7149, 16
  %v7446 = vrot.slane %v7444, 5
  %v7447 = vsel %vm151, %v7442, %v7446
  %v7449 = vshrl.u32 %v7078, 16
  %v7451 = vrot.slane %v7449, 4
  %v7452 = vshll.u32 %v7078, 16
  %v7454 = vrot.slane %v7452, 5
  %v7455 = vor.u32 %v7451, %v7454
  %v7456 = vrot.slane %v7455, 4
  %v7458 = vshll.u32 %v7150, 16
  %v7460 = vrot.slane %v7458, 5
  %v7461 = vsel %vm151, %v7456, %v7460
  %v7463 = vshrl.u32 %v7079, 16
  %v7465 = vrot.slane %v7463, 4
  %v7466 = vshll.u32 %v7079, 16
  %v7468 = vrot.slane %v7466, 5
  %v7469 = vor.u32 %v7465, %v7468
  %v7470 = vrot.slane %v7469, 4
  %v7472 = vshll.u32 %v7151, 16
  %v7474 = vrot.slane %v7472, 5
  %v7475 = vsel %vm151, %v7470, %v7474
  %v7477 = vshrl.u32 %v7080, 16
  %v7479 = vrot.slane %v7477, 4
  %v7480 = vshll.u32 %v7080, 16
  %v7482 = vrot.slane %v7480, 5
  %v7483 = vor.u32 %v7479, %v7482
  %v7484 = vrot.slane %v7483, 4
  %v7486 = vshll.u32 %v7152, 16
  %v7488 = vrot.slane %v7486, 5
  %v7489 = vsel %vm151, %v7484, %v7488
  %v7491 = vshrl.u32 %v7081, 16
  %v7493 = vrot.slane %v7491, 4
  %v7494 = vshll.u32 %v7081, 16
  %v7496 = vrot.slane %v7494, 5
  %v7497 = vor.u32 %v7493, %v7496
  %v7498 = vrot.slane %v7497, 4
  %v7500 = vshll.u32 %v7153, 16
  %v7502 = vrot.slane %v7500, 5
  %v7503 = vsel %vm151, %v7498, %v7502
  %v7505 = vshrl.u32 %v7082, 16
  %v7507 = vrot.slane %v7505, 4
  %v7508 = vshll.u32 %v7082, 16
  %v7510 = vrot.slane %v7508, 5
  %v7511 = vor.u32 %v7507, %v7510
  %v7512 = vrot.slane %v7511, 4
  %v7514 = vshll.u32 %v7154, 16
  %v7516 = vrot.slane %v7514, 5
  %v7517 = vsel %vm151, %v7512, %v7516
  %v7519 = vshrl.u32 %v7083, 16
  %v7521 = vrot.slane %v7519, 4
  %v7522 = vshll.u32 %v7083, 16
  %v7524 = vrot.slane %v7522, 5
  %v7525 = vor.u32 %v7521, %v7524
  %v7526 = vrot.slane %v7525, 4
  %v7528 = vshll.u32 %v7155, 16
  %v7530 = vrot.slane %v7528, 5
  %v7531 = vsel %vm151, %v7526, %v7530
  %v7533 = vshrl.u32 %v7084, 16
  %v7535 = vrot.slane %v7533, 4
  %v7536 = vshll.u32 %v7084, 16
  %v7538 = vrot.slane %v7536, 5
  %v7539 = vor.u32 %v7535, %v7538
  %v7540 = vrot.slane %v7539, 4
  %v7542 = vshll.u32 %v7156, 16
  %v7544 = vrot.slane %v7542, 5
  %v7545 = vsel %vm151, %v7540, %v7544
  %v7547 = vshrl.u32 %v7085, 16
  %v7549 = vrot.slane %v7547, 4
  %v7550 = vshll.u32 %v7085, 16
  %v7552 = vrot.slane %v7550, 5
  %v7553 = vor.u32 %v7549, %v7552
  %v7554 = vrot.slane %v7553, 4
  %v7556 = vshll.u32 %v7157, 16
  %v7558 = vrot.slane %v7556, 5
  %v7559 = vsel %vm151, %v7554, %v7558
  %v7561 = vshrl.u32 %v7086, 16
  %v7563 = vrot.slane %v7561, 4
  %v7564 = vshll.u32 %v7086, 16
  %v7566 = vrot.slane %v7564, 5
  %v7567 = vor.u32 %v7563, %v7566
  %v7568 = vrot.slane %v7567, 4
  %v7570 = vshll.u32 %v7158, 16
  %v7572 = vrot.slane %v7570, 5
  %v7573 = vsel %vm151, %v7568, %v7572
  %v7575 = vshrl.u32 %v7087, 16
  %v7577 = vrot.slane %v7575, 4
  %v7578 = vshll.u32 %v7087, 16
  %v7580 = vrot.slane %v7578, 5
  %v7581 = vor.u32 %v7577, %v7580
  %v7582 = vrot.slane %v7581, 4
  %v7584 = vshll.u32 %v7159, 16
  %v7586 = vrot.slane %v7584, 5
  %v7587 = vsel %vm151, %v7582, %v7586
  %v7589 = vshrl.u32 %v7088, 16
  %v7591 = vrot.slane %v7589, 4
  %v7592 = vshll.u32 %v7088, 16
  %v7594 = vrot.slane %v7592, 5
  %v7595 = vor.u32 %v7591, %v7594
  %v7596 = vrot.slane %v7595, 4
  %v7598 = vshll.u32 %v7160, 16
  %v7600 = vrot.slane %v7598, 5
  %v7601 = vsel %vm151, %v7596, %v7600
  %v7603 = vshrl.u32 %v7089, 16
  %v7605 = vrot.slane %v7603, 4
  %v7606 = vshll.u32 %v7089, 16
  %v7608 = vrot.slane %v7606, 5
  %v7609 = vor.u32 %v7605, %v7608
  %v7610 = vrot.slane %v7609, 4
  %v7612 = vshll.u32 %v7161, 16
  %v7614 = vrot.slane %v7612, 5
  %v7615 = vsel %vm151, %v7610, %v7614
  %v7617 = vshrl.u32 %v7090, 16
  %v7619 = vrot.slane %v7617, 4
  %v7620 = vshll.u32 %v7090, 16
  %v7622 = vrot.slane %v7620, 5
  %v7623 = vor.u32 %v7619, %v7622
  %v7624 = vrot.slane %v7623, 4
  %v7626 = vshll.u32 %v7162, 16
  %v7628 = vrot.slane %v7626, 5
  %v7629 = vsel %vm151, %v7624, %v7628
  %v7631 = vshrl.u32 %v7091, 16
  %v7633 = vrot.slane %v7631, 4
  %v7634 = vshll.u32 %v7091, 16
  %v7636 = vrot.slane %v7634, 5
  %v7637 = vor.u32 %v7633, %v7636
  %v7638 = vrot.slane %v7637, 4
  %v7640 = vshll.u32 %v7163, 16
  %v7642 = vrot.slane %v7640, 5
  %v7643 = vsel %vm151, %v7638, %v7642
  %v7645 = vshrl.u32 %v7092, 16
  %v7647 = vrot.slane %v7645, 4
  %v7648 = vshll.u32 %v7092, 16
  %v7650 = vrot.slane %v7648, 5
  %v7651 = vor.u32 %v7647, %v7650
  %v7652 = vrot.slane %v7651, 4
  %v7654 = vshll.u32 %v7164, 16
  %v7656 = vrot.slane %v7654, 5
  %v7657 = vsel %vm151, %v7652, %v7656
  %v7659 = vshrl.u32 %v7093, 16
  %v7661 = vrot.slane %v7659, 4
  %v7662 = vshll.u32 %v7093, 16
  %v7664 = vrot.slane %v7662, 5
  %v7665 = vor.u32 %v7661, %v7664
  %v7666 = vrot.slane %v7665, 4
  %v7668 = vshll.u32 %v7165, 16
  %v7670 = vrot.slane %v7668, 5
  %v7671 = vsel %vm151, %v7666, %v7670
  %v7673 = vshrl.u32 %v7094, 16
  %v7675 = vrot.slane %v7673, 4
  %v7676 = vshll.u32 %v7094, 16
  %v7678 = vrot.slane %v7676, 5
  %v7679 = vor.u32 %v7675, %v7678
  %v7680 = vrot.slane %v7679, 4
  %v7682 = vshll.u32 %v7166, 16
  %v7684 = vrot.slane %v7682, 5
  %v7685 = vsel %vm151, %v7680, %v7684
  %v7687 = vshrl.u32 %v7095, 16
  %v7689 = vrot.slane %v7687, 4
  %v7690 = vshll.u32 %v7095, 16
  %v7692 = vrot.slane %v7690, 5
  %v7693 = vor.u32 %v7689, %v7692
  %v7694 = vrot.slane %v7693, 4
  %v7696 = vshll.u32 %v7167, 16
  %v7698 = vrot.slane %v7696, 5
  %v7699 = vsel %vm151, %v7694, %v7698
  %v7701 = vshrl.u32 %v7096, 16
  %v7703 = vrot.slane %v7701, 4
  %v7704 = vshll.u32 %v7096, 16
  %v7706 = vrot.slane %v7704, 5
  %v7707 = vor.u32 %v7703, %v7706
  %v7708 = vrot.slane %v7707, 4
  %v7710 = vshll.u32 %v7168, 16
  %v7712 = vrot.slane %v7710, 5
  %v7713 = vsel %vm151, %v7708, %v7712
  %v7715 = vshrl.u32 %v7097, 16
  %v7717 = vrot.slane %v7715, 4
  %v7718 = vshll.u32 %v7097, 16
  %v7720 = vrot.slane %v7718, 5
  %v7721 = vor.u32 %v7717, %v7720
  %v7722 = vrot.slane %v7721, 4
  %v7724 = vshll.u32 %v7169, 16
  %v7726 = vrot.slane %v7724, 5
  %v7727 = vsel %vm151, %v7722, %v7726
  %v7729 = vshrl.u32 %v7098, 16
  %v7731 = vrot.slane %v7729, 4
  %v7732 = vshll.u32 %v7098, 16
  %v7734 = vrot.slane %v7732, 5
  %v7735 = vor.u32 %v7731, %v7734
  %v7736 = vrot.slane %v7735, 4
  %v7738 = vshll.u32 %v7170, 16
  %v7740 = vrot.slane %v7738, 5
  %v7741 = vsel %vm151, %v7736, %v7740
  %v7743 = vshrl.u32 %v7099, 16
  %v7745 = vrot.slane %v7743, 4
  %v7746 = vshll.u32 %v7099, 16
  %v7748 = vrot.slane %v7746, 5
  %v7749 = vor.u32 %v7745, %v7748
  %v7750 = vrot.slane %v7749, 4
  %v7752 = vshll.u32 %v7171, 16
  %v7754 = vrot.slane %v7752, 5
  %v7755 = vsel %vm151, %v7750, %v7754
  %v7757 = vshrl.u32 %v7100, 16
  %v7759 = vrot.slane %v7757, 4
  %v7760 = vshll.u32 %v7100, 16
  %v7762 = vrot.slane %v7760, 5
  %v7763 = vor.u32 %v7759, %v7762
  %v7764 = vrot.slane %v7763, 4
  %v7766 = vshll.u32 %v7172, 16
  %v7768 = vrot.slane %v7766, 5
  %v7769 = vsel %vm151, %v7764, %v7768
  %v7771 = vshrl.u32 %v7101, 16
  %v7773 = vrot.slane %v7771, 4
  %v7774 = vshll.u32 %v7101, 16
  %v7776 = vrot.slane %v7774, 5
  %v7777 = vor.u32 %v7773, %v7776
  %v7778 = vrot.slane %v7777, 4
  %v7780 = vshll.u32 %v7173, 16
  %v7782 = vrot.slane %v7780, 5
  %v7783 = vsel %vm151, %v7778, %v7782
  %v7785 = vshrl.u32 %v7102, 16
  %v7787 = vrot.slane %v7785, 4
  %v7788 = vshll.u32 %v7102, 16
  %v7790 = vrot.slane %v7788, 5
  %v7791 = vor.u32 %v7787, %v7790
  %v7792 = vrot.slane %v7791, 4
  %v7794 = vshll.u32 %v7174, 16
  %v7796 = vrot.slane %v7794, 5
  %v7797 = vsel %vm151, %v7792, %v7796
  %v7799 = vshrl.u32 %v7103, 16
  %v7801 = vrot.slane %v7799, 4
  %v7802 = vshll.u32 %v7103, 16
  %v7804 = vrot.slane %v7802, 5
  %v7805 = vor.u32 %v7801, %v7804
  %v7806 = vrot.slane %v7805, 4
  %v7808 = vshll.u32 %v7175, 16
  %v7810 = vrot.slane %v7808, 5
  %v7811 = vsel %vm151, %v7806, %v7810
  %v7813 = vshrl.u32 %v7104, 16
  %v7815 = vrot.slane %v7813, 4
  %v7816 = vshll.u32 %v7104, 16
  %v7818 = vrot.slane %v7816, 5
  %v7819 = vor.u32 %v7815, %v7818
  %v7820 = vrot.slane %v7819, 4
  %v7822 = vshll.u32 %v7176, 16
  %v7824 = vrot.slane %v7822, 5
  %v7825 = vsel %vm151, %v7820, %v7824
  %v7827 = vshrl.u32 %v7105, 16
  %v7829 = vrot.slane %v7827, 4
  %v7830 = vshll.u32 %v7105, 16
  %v7832 = vrot.slane %v7830, 5
  %v7833 = vor.u32 %v7829, %v7832
  %v7834 = vrot.slane %v7833, 4
  %v7836 = vshll.u32 %v7177, 16
  %v7838 = vrot.slane %v7836, 5
  %v7839 = vsel %vm151, %v7834, %v7838
  %v7841 = vshrl.u32 %v7106, 16
  %v7843 = vrot.slane %v7841, 4
  %v7844 = vshll.u32 %v7106, 16
  %v7846 = vrot.slane %v7844, 5
  %v7847 = vor.u32 %v7843, %v7846
  %v7848 = vrot.slane %v7847, 4
  %v7850 = vshll.u32 %v7178, 16
  %v7852 = vrot.slane %v7850, 5
  %v7853 = vsel %vm151, %v7848, %v7852
  %v7855 = vshrl.u32 %v7107, 16
  %v7857 = vrot.slane %v7855, 4
  %v7858 = vshll.u32 %v7107, 16
  %v7860 = vrot.slane %v7858, 5
  %v7861 = vor.u32 %v7857, %v7860
  %v7862 = vrot.slane %v7861, 4
  %v7864 = vshll.u32 %v7179, 16
  %v7866 = vrot.slane %v7864, 5
  %v7867 = vsel %vm151, %v7862, %v7866
  %v7869 = vshrl.u32 %v7108, 16
  %v7871 = vrot.slane %v7869, 4
  %v7872 = vshll.u32 %v7108, 16
  %v7874 = vrot.slane %v7872, 5
  %v7875 = vor.u32 %v7871, %v7874
  %v7876 = vrot.slane %v7875, 4
  %v7878 = vshll.u32 %v7180, 16
  %v7880 = vrot.slane %v7878, 5
  %v7881 = vsel %vm151, %v7876, %v7880
  %v7883 = vshrl.u32 %v7109, 16
  %v7885 = vrot.slane %v7883, 4
  %v7886 = vshll.u32 %v7109, 16
  %v7888 = vrot.slane %v7886, 5
  %v7889 = vor.u32 %v7885, %v7888
  %v7890 = vrot.slane %v7889, 4
  %v7892 = vshll.u32 %v7181, 16
  %v7894 = vrot.slane %v7892, 5
  %v7895 = vsel %vm151, %v7890, %v7894
  %v7897 = vshrl.u32 %v7110, 16
  %v7899 = vrot.slane %v7897, 4
  %v7900 = vshll.u32 %v7110, 16
  %v7902 = vrot.slane %v7900, 5
  %v7903 = vor.u32 %v7899, %v7902
  %v7904 = vrot.slane %v7903, 4
  %v7906 = vshll.u32 %v7182, 16
  %v7908 = vrot.slane %v7906, 5
  %v7909 = vsel %vm151, %v7904, %v7908
  %v7911 = vshrl.u32 %v7111, 16
  %v7913 = vrot.slane %v7911, 4
  %v7914 = vshll.u32 %v7111, 16
  %v7916 = vrot.slane %v7914, 5
  %v7917 = vor.u32 %v7913, %v7916
  %v7918 = vrot.slane %v7917, 4
  %v7920 = vshll.u32 %v7183, 16
  %v7922 = vrot.slane %v7920, 5
  %v7923 = vsel %vm151, %v7918, %v7922
  %v7925 = vshrl.u32 %v7112, 16
  %v7927 = vrot.slane %v7925, 4
  %v7928 = vshll.u32 %v7112, 16
  %v7930 = vrot.slane %v7928, 5
  %v7931 = vor.u32 %v7927, %v7930
  %v7932 = vrot.slane %v7931, 4
  %v7934 = vshll.u32 %v7184, 16
  %v7936 = vrot.slane %v7934, 5
  %v7937 = vsel %vm151, %v7932, %v7936
  %v7939 = vshrl.u32 %v7113, 16
  %v7941 = vrot.slane %v7939, 4
  %v7942 = vshll.u32 %v7113, 16
  %v7944 = vrot.slane %v7942, 5
  %v7945 = vor.u32 %v7941, %v7944
  %v7946 = vrot.slane %v7945, 4
  %v7948 = vshll.u32 %v7185, 16
  %v7950 = vrot.slane %v7948, 5
  %v7951 = vsel %vm151, %v7946, %v7950
  %v7953 = vshrl.u32 %v7114, 16
  %v7955 = vrot.slane %v7953, 4
  %v7956 = vshll.u32 %v7114, 16
  %v7958 = vrot.slane %v7956, 5
  %v7959 = vor.u32 %v7955, %v7958
  %v7960 = vrot.slane %v7959, 4
  %v7962 = vshll.u32 %v7186, 16
  %v7964 = vrot.slane %v7962, 5
  %v7965 = vsel %vm151, %v7960, %v7964
  %v7967 = vshrl.u32 %v7115, 16
  %v7969 = vrot.slane %v7967, 4
  %v7970 = vshll.u32 %v7115, 16
  %v7972 = vrot.slane %v7970, 5
  %v7973 = vor.u32 %v7969, %v7972
  %v7974 = vrot.slane %v7973, 4
  %v7976 = vshll.u32 %v7187, 16
  %v7978 = vrot.slane %v7976, 5
  %v7979 = vsel %vm151, %v7974, %v7978
  %v7981 = vshrl.u32 %v7116, 16
  %v7983 = vrot.slane %v7981, 4
  %v7984 = vshll.u32 %v7116, 16
  %v7986 = vrot.slane %v7984, 5
  %v7987 = vor.u32 %v7983, %v7986
  %v7988 = vrot.slane %v7987, 4
  %v7990 = vshll.u32 %v7188, 16
  %v7992 = vrot.slane %v7990, 5
  %v7993 = vsel %vm151, %v7988, %v7992
  %v7995 = vshrl.u32 %v7117, 16
  %v7997 = vrot.slane %v7995, 4
  %v7998 = vshll.u32 %v7117, 16
  %v8000 = vrot.slane %v7998, 5
  %v8001 = vor.u32 %v7997, %v8000
  %v8002 = vrot.slane %v8001, 4
  %v8004 = vshll.u32 %v7189, 16
  %v8006 = vrot.slane %v8004, 5
  %v8007 = vsel %vm151, %v8002, %v8006
  %v8009 = vshrl.u32 %v7118, 16
  %v8011 = vrot.slane %v8009, 4
  %v8012 = vshll.u32 %v7118, 16
  %v8014 = vrot.slane %v8012, 5
  %v8015 = vor.u32 %v8011, %v8014
  %v8016 = vrot.slane %v8015, 4
  %v8018 = vshll.u32 %v7190, 16
  %v8020 = vrot.slane %v8018, 5
  %v8021 = vsel %vm151, %v8016, %v8020
  %v8023 = vshrl.u32 %v7119, 16
  %v8025 = vrot.slane %v8023, 4
  %v8026 = vshll.u32 %v7119, 16
  %v8028 = vrot.slane %v8026, 5
  %v8029 = vor.u32 %v8025, %v8028
  %v8030 = vrot.slane %v8029, 4
  %v8032 = vshll.u32 %v7191, 16
  %v8034 = vrot.slane %v8032, 5
  %v8035 = vsel %vm151, %v8030, %v8034
  %v8037 = vshrl.u32 %v7120, 16
  %v8039 = vrot.slane %v8037, 4
  %v8040 = vshll.u32 %v7120, 16
  %v8042 = vrot.slane %v8040, 5
  %v8043 = vor.u32 %v8039, %v8042
  %v8044 = vrot.slane %v8043, 4
  %v8046 = vshll.u32 %v7192, 16
  %v8048 = vrot.slane %v8046, 5
  %v8049 = vsel %vm151, %v8044, %v8048
  %v8051 = vshrl.u32 %v7121, 16
  %v8053 = vrot.slane %v8051, 4
  %v8054 = vshll.u32 %v7121, 16
  %v8056 = vrot.slane %v8054, 5
  %v8057 = vor.u32 %v8053, %v8056
  %v8058 = vrot.slane %v8057, 4
  %v8060 = vshll.u32 %v7193, 16
  %v8062 = vrot.slane %v8060, 5
  %v8063 = vsel %vm151, %v8058, %v8062
  %v8065 = vshrl.u32 %v7122, 16
  %v8067 = vrot.slane %v8065, 4
  %v8068 = vshll.u32 %v7122, 16
  %v8070 = vrot.slane %v8068, 5
  %v8071 = vor.u32 %v8067, %v8070
  %v8072 = vrot.slane %v8071, 4
  %v8074 = vshll.u32 %v7194, 16
  %v8076 = vrot.slane %v8074, 5
  %v8077 = vsel %vm151, %v8072, %v8076
  %v8079 = vshrl.u32 %v7123, 16
  %v8081 = vrot.slane %v8079, 4
  %v8082 = vshll.u32 %v7123, 16
  %v8084 = vrot.slane %v8082, 5
  %v8085 = vor.u32 %v8081, %v8084
  %v8086 = vrot.slane %v8085, 4
  %v8088 = vshll.u32 %v7195, 16
  %v8090 = vrot.slane %v8088, 5
  %v8091 = vsel %vm151, %v8086, %v8090
  %s8092 = scalar_lea.vmem %s3, 32
  %v8093 = vld [vmem:[%s8092] sm:$0xf]
  %v8094 = vld [vmem:[%s8092 + $0x4] sm:$0xf]
  %v8095 = vld [vmem:[%s8092 + $0x8] sm:$0xf]
  %v8096 = vld [vmem:[%s8092 + $0xc] sm:$0xf]
  %v8097 = vld [vmem:[%s8092 + $0x10] sm:$0xf]
  %v8098 = vld [vmem:[%s8092 + $0x14] sm:$0xf]
  %v8099 = vld [vmem:[%s8092 + $0x18] sm:$0xf]
  %v8100 = vld [vmem:[%s8092 + $0x1c] sm:$0xf]
  %v8101 = vunpack.c.l.b16 %v7209
  %v8102 = vunpack.c.l.b16 %v7223
  %v8103 = vunpack.c.l.b16 %v7237
  %v8104 = vunpack.c.l.b16 %v7251
  %v8105 = vunpack.c.l.b16 %v7265
  %v8106 = vunpack.c.l.b16 %v7279
  %v8107 = vunpack.c.l.b16 %v7293
  %v8108 = vunpack.c.l.b16 %v7307
  %v8109 = vunpack.c.l.b16 %v7321
  %v8110 = vunpack.c.l.b16 %v7335
  %v8111 = vunpack.c.l.b16 %v7349
  %v8112 = vunpack.c.l.b16 %v7363
  %v8113 = vunpack.c.l.b16 %v7377
  %v8114 = vunpack.c.l.b16 %v7391
  %v8115 = vunpack.c.l.b16 %v7405
  %v8116 = vunpack.c.l.b16 %v7419
  %v8117 = vunpack.c.l.b16 %v7433
  %v8118 = vunpack.c.l.b16 %v7447
  %v8119 = vunpack.c.l.b16 %v7461
  %v8120 = vunpack.c.l.b16 %v7475
  %v8121 = vunpack.c.l.b16 %v7489
  %v8122 = vunpack.c.l.b16 %v7503
  %v8123 = vunpack.c.l.b16 %v7517
  %v8124 = vunpack.c.l.b16 %v7531
  %v8125 = vunpack.c.l.b16 %v7545
  %v8126 = vunpack.c.l.b16 %v7559
  %v8127 = vunpack.c.l.b16 %v7573
  %v8128 = vunpack.c.l.b16 %v7587
  %v8129 = vunpack.c.l.b16 %v7601
  %v8130 = vunpack.c.l.b16 %v7615
  %v8131 = vunpack.c.l.b16 %v7629
  %v8132 = vunpack.c.l.b16 %v7643
  %v8133 = vunpack.c.l.b16 %v7657
  %v8134 = vunpack.c.l.b16 %v7671
  %v8135 = vunpack.c.l.b16 %v7685
  %v8136 = vunpack.c.l.b16 %v7699
  %v8137 = vunpack.c.l.b16 %v7713
  %v8138 = vunpack.c.l.b16 %v7727
  %v8139 = vunpack.c.l.b16 %v7741
  %v8140 = vunpack.c.l.b16 %v7755
  %v8141 = vunpack.c.l.b16 %v7769
  %v8142 = vunpack.c.l.b16 %v7783
  %v8143 = vunpack.c.l.b16 %v7797
  %v8144 = vunpack.c.l.b16 %v7811
  %v8145 = vunpack.c.l.b16 %v7825
  %v8146 = vunpack.c.l.b16 %v7839
  %v8147 = vunpack.c.l.b16 %v7853
  %v8148 = vunpack.c.l.b16 %v7867
  %v8149 = vunpack.c.l.b16 %v7881
  %v8150 = vunpack.c.l.b16 %v7895
  %v8151 = vunpack.c.l.b16 %v7909
  %v8152 = vunpack.c.l.b16 %v7923
  %v8153 = vunpack.c.l.b16 %v7937
  %v8154 = vunpack.c.l.b16 %v7951
  %v8155 = vunpack.c.l.b16 %v7965
  %v8156 = vunpack.c.l.b16 %v7979
  %v8157 = vunpack.c.l.b16 %v7993
  %v8158 = vunpack.c.l.b16 %v8007
  %v8159 = vunpack.c.l.b16 %v8021
  %v8160 = vunpack.c.l.b16 %v8035
  %v8161 = vunpack.c.l.b16 %v8049
  %v8162 = vunpack.c.l.b16 %v8063
  %v8163 = vunpack.c.l.b16 %v8077
  %v8164 = vunpack.c.l.b16 %v8091
  %v8165 = vpack.c.b16 %v8102, %v8101
  %v8166 = vpack.c.b16 %v8104, %v8103
  %v8167 = vpack.c.b16 %v8106, %v8105
  %v8168 = vpack.c.b16 %v8108, %v8107
  %v8169 = vpack.c.b16 %v8110, %v8109
  %v8170 = vpack.c.b16 %v8112, %v8111
  %v8171 = vpack.c.b16 %v8114, %v8113
  %v8172 = vpack.c.b16 %v8116, %v8115
  %v8173 = vpack.c.b16 %v8118, %v8117
  %v8174 = vpack.c.b16 %v8120, %v8119
  %v8175 = vpack.c.b16 %v8122, %v8121
  %v8176 = vpack.c.b16 %v8124, %v8123
  %v8177 = vpack.c.b16 %v8126, %v8125
  %v8178 = vpack.c.b16 %v8128, %v8127
  %v8179 = vpack.c.b16 %v8130, %v8129
  %v8180 = vpack.c.b16 %v8132, %v8131
  %v8181 = vpack.c.b16 %v8134, %v8133
  %v8182 = vpack.c.b16 %v8136, %v8135
  %v8183 = vpack.c.b16 %v8138, %v8137
  %v8184 = vpack.c.b16 %v8140, %v8139
  %v8185 = vpack.c.b16 %v8142, %v8141
  %v8186 = vpack.c.b16 %v8144, %v8143
  %v8187 = vpack.c.b16 %v8146, %v8145
  %v8188 = vpack.c.b16 %v8148, %v8147
  %v8189 = vpack.c.b16 %v8150, %v8149
  %v8190 = vpack.c.b16 %v8152, %v8151
  %v8191 = vpack.c.b16 %v8154, %v8153
  %v8192 = vpack.c.b16 %v8156, %v8155
  %v8193 = vpack.c.b16 %v8158, %v8157
  %v8194 = vpack.c.b16 %v8160, %v8159
  %v8195 = vpack.c.b16 %v8162, %v8161
  %v8196 = vpack.c.b16 %v8164, %v8163
  %v8205 = vunpack.c.l.b16 %v8093
  %v8206 = vunpack.c.l.b16 %v8094
  %v8207 = vunpack.c.l.b16 %v8095
  %v8208 = vunpack.c.l.b16 %v8096
  %v8209 = vunpack.c.l.b16 %v8097
  %v8210 = vunpack.c.l.b16 %v8098
  %v8211 = vunpack.c.l.b16 %v8099
  %v8212 = vunpack.c.l.b16 %v8100
  %v8213 = vpack.c.b16 %v8206, %v8205
  %v8214 = vpack.c.b16 %v8208, %v8207
  %v8215 = vpack.c.b16 %v8210, %v8209
  %v8216 = vpack.c.b16 %v8212, %v8211
  %vm8221 = vcmask 523264
  %v8223 = vsel %vm8221, %v8165, 0
  %v8226 = vsel %vm8221, %v8166, 0
  %v8229 = vsel %vm8221, %v8167, 0
  %v8232 = vsel %vm8221, %v8168, 0
  %v8235 = vsel %vm8221, %v8169, 0
  %v8238 = vsel %vm8221, %v8170, 0
  %v8241 = vsel %vm8221, %v8171, 0
  %v8244 = vsel %vm8221, %v8172, 0
  %v8247 = vsel %vm8221, %v8173, 0
  %v8250 = vsel %vm8221, %v8174, 0
  %v8253 = vsel %vm8221, %v8175, 0
  %v8256 = vsel %vm8221, %v8176, 0
  %v8259 = vsel %vm8221, %v8177, 0
  %v8262 = vsel %vm8221, %v8178, 0
  %v8265 = vsel %vm8221, %v8179, 0
  %v8268 = vsel %vm8221, %v8180, 0
  %v8271 = vsel %vm8221, %v8181, 0
  %v8274 = vsel %vm8221, %v8182, 0
  %v8277 = vsel %vm8221, %v8183, 0
  %v8280 = vsel %vm8221, %v8184, 0
  %v8283 = vsel %vm8221, %v8185, 0
  %v8286 = vsel %vm8221, %v8186, 0
  %v8289 = vsel %vm8221, %v8187, 0
  %v8292 = vsel %vm8221, %v8188, 0
  %v8295 = vsel %vm8221, %v8189, 0
  %v8298 = vsel %vm8221, %v8190, 0
  %v8301 = vsel %vm8221, %v8191, 0
  %v8304 = vsel %vm8221, %v8192, 0
  %v8307 = vsel %vm8221, %v8193, 0
  %v8310 = vsel %vm8221, %v8194, 0
  %v8313 = vsel %vm8221, %v8195, 0
  %v8316 = vsel %vm8221, %v8196, 0
  %8318 = vmatprep.subr.bf16.mxu0 0
  %8319 = vmatpush1.bf16.msra.mxu0 %v8213
  %8320 = vmatprep.subr.bf16.mxu0 0
  %8321 = vmatpush1.bf16.msra.mxu0 %v8214
  %8322 = vmatprep.subr.bf16.mxu0 0
  %8323 = vmatpush1.bf16.msra.mxu0 %v8215
  %8324 = vmatprep.subr.bf16.mxu0 0
  %8325 = vmatpush1.bf16.msra.mxu0 %v8216
  %8326 = vmatprep.subr.bf16.mxu0 0
  %8327 = vmatpush1.bf16.msra.mxu0 0
  %8328 = vmatprep.subr.bf16.mxu0 0
  %8329 = vmatpush1.bf16.msra.mxu0 0
  %8330 = vmatprep.subr.bf16.mxu0 0
  %8331 = vmatpush1.bf16.msra.mxu0 0
  %8332 = vmatprep.subr.bf16.mxu0 0
  %8333 = vmatpush1.bf16.msra.mxu0 0
  %8334 = vmatprep.subr.bf16.mxu0 0
  %8335 = vmatpush1.bf16.msra.mxu0 0
  %8336 = vmatprep.subr.bf16.mxu0 0
  %8337 = vmatpush1.bf16.msra.mxu0 0
  %8338 = vmatprep.subr.bf16.mxu0 0
  %8339 = vmatpush1.bf16.msra.mxu0 0
  %8340 = vmatprep.subr.bf16.mxu0 0
  %8341 = vmatpush1.bf16.msra.mxu0 0
  %8342 = vmatprep.subr.bf16.mxu0 0
  %8343 = vmatpush1.bf16.msra.mxu0 0
  %8344 = vmatprep.subr.bf16.mxu0 0
  %8345 = vmatpush1.bf16.msra.mxu0 0
  %8346 = vmatprep.subr.bf16.mxu0 0
  %8347 = vmatpush1.bf16.msra.mxu0 0
  %8348 = vmatprep.subr.bf16.mxu0 0
  %8349 = vmatpush1.bf16.msra.mxu0 0
  %8350 = vmatprep.mubr.bf16.mxu0 0
  %8351 = vmatmul.mubr.bf16.gmra.mrb[0].mxu0 %v8223
  %v8352 = vpop.f32.mrb[0].mxu0
  %v8353 = vadd.f32 0.0, %v8352
  %v8354 = vpop.f32.mrb[0].mxu0
  %v8355 = vpop.f32.mrb[0].mxu0
  %v8356 = vadd.f32 0.0, %v8355
  %v8357 = vpop.f32.mrb[0].mxu0
  %8358 = vmatprep.mubr.bf16.mxu0 0
  %8359 = vmatmul.mubr.bf16.gmra.mrb[0].mxu0 %v8226
  %v8360 = vpop.f32.mrb[0].mxu0
  %v8361 = vadd.f32 0.0, %v8360
  %v8362 = vpop.f32.mrb[0].mxu0
  %v8363 = vpop.f32.mrb[0].mxu0
  %v8364 = vadd.f32 0.0, %v8363
  %v8365 = vpop.f32.mrb[0].mxu0
  %8366 = vmatprep.mubr.bf16.mxu0 0
  %8367 = vmatmul.mubr.bf16.gmra.mrb[0].mxu0 %v8229
  %v8368 = vpop.f32.mrb[0].mxu0
  %v8369 = vadd.f32 0.0, %v8368
  %v8370 = vpop.f32.mrb[0].mxu0
  %v8371 = vpop.f32.mrb[0].mxu0
  %v8372 = vadd.f32 0.0, %v8371
  %v8373 = vpop.f32.mrb[0].mxu0
  %8374 = vmatprep.mubr.bf16.mxu0 0
  %8375 = vmatmul.mubr.bf16.gmra.mrb[0].mxu0 %v8232
  %v8376 = vpop.f32.mrb[0].mxu0
  %v8377 = vadd.f32 0.0, %v8376
  %v8378 = vpop.f32.mrb[0].mxu0
  %v8379 = vpop.f32.mrb[0].mxu0
  %v8380 = vadd.f32 0.0, %v8379
  %v8381 = vpop.f32.mrb[0].mxu0
  %8382 = vmatprep.mubr.bf16.mxu0 0
  %8383 = vmatmul.mubr.bf16.gmra.mrb[0].mxu0 %v8235
  %v8384 = vpop.f32.mrb[0].mxu0
  %v8385 = vadd.f32 0.0, %v8384
  %v8386 = vpop.f32.mrb[0].mxu0
  %v8387 = vpop.f32.mrb[0].mxu0
  %v8388 = vadd.f32 0.0, %v8387
  %v8389 = vpop.f32.mrb[0].mxu0
  %8390 = vmatprep.mubr.bf16.mxu0 0
  %8391 = vmatmul.mubr.bf16.gmra.mrb[0].mxu0 %v8238
  %v8392 = vpop.f32.mrb[0].mxu0
  %v8393 = vadd.f32 0.0, %v8392
  %v8394 = vpop.f32.mrb[0].mxu0
  %v8395 = vpop.f32.mrb[0].mxu0
  %v8396 = vadd.f32 0.0, %v8395
  %v8397 = vpop.f32.mrb[0].mxu0
  %8398 = vmatprep.mubr.bf16.mxu0 0
  %8399 = vmatmul.mubr.bf16.gmra.mrb[0].mxu0 %v8241
  %v8400 = vpop.f32.mrb[0].mxu0
  %v8401 = vadd.f32 0.0, %v8400
  %v8402 = vpop.f32.mrb[0].mxu0
  %v8403 = vpop.f32.mrb[0].mxu0
  %v8404 = vadd.f32 0.0, %v8403
  %v8405 = vpop.f32.mrb[0].mxu0
  %8406 = vmatprep.mubr.bf16.mxu0 0
  %8407 = vmatmul.mubr.bf16.gmra.mrb[0].mxu0 %v8244
  %v8408 = vpop.f32.mrb[0].mxu0
  %v8409 = vadd.f32 0.0, %v8408
  %v8410 = vpop.f32.mrb[0].mxu0
  %v8411 = vpop.f32.mrb[0].mxu0
  %v8412 = vadd.f32 0.0, %v8411
  %v8413 = vpop.f32.mrb[0].mxu0
  %8414 = vmatprep.mubr.bf16.mxu0 0
  %8415 = vmatmul.mubr.bf16.gmra.mrb[0].mxu0 %v8247
  %v8416 = vpop.f32.mrb[0].mxu0
  %v8417 = vadd.f32 0.0, %v8416
  %v8418 = vpop.f32.mrb[0].mxu0
  %v8419 = vpop.f32.mrb[0].mxu0
  %v8420 = vadd.f32 0.0, %v8419
  %v8421 = vpop.f32.mrb[0].mxu0
  %8422 = vmatprep.mubr.bf16.mxu0 0
  %8423 = vmatmul.mubr.bf16.gmra.mrb[0].mxu0 %v8250
  %v8424 = vpop.f32.mrb[0].mxu0
  %v8425 = vadd.f32 0.0, %v8424
  %v8426 = vpop.f32.mrb[0].mxu0
  %v8427 = vpop.f32.mrb[0].mxu0
  %v8428 = vadd.f32 0.0, %v8427
  %v8429 = vpop.f32.mrb[0].mxu0
  %8430 = vmatprep.mubr.bf16.mxu0 0
  %8431 = vmatmul.mubr.bf16.gmra.mrb[0].mxu0 %v8253
  %v8432 = vpop.f32.mrb[0].mxu0
  %v8433 = vadd.f32 0.0, %v8432
  %v8434 = vpop.f32.mrb[0].mxu0
  %v8435 = vpop.f32.mrb[0].mxu0
  %v8436 = vadd.f32 0.0, %v8435
  %v8437 = vpop.f32.mrb[0].mxu0
  %8438 = vmatprep.mubr.bf16.mxu0 0
  %8439 = vmatmul.mubr.bf16.gmra.mrb[0].mxu0 %v8256
  %v8440 = vpop.f32.mrb[0].mxu0
  %v8441 = vadd.f32 0.0, %v8440
  %v8442 = vpop.f32.mrb[0].mxu0
  %v8443 = vpop.f32.mrb[0].mxu0
  %v8444 = vadd.f32 0.0, %v8443
  %v8445 = vpop.f32.mrb[0].mxu0
  %8446 = vmatprep.mubr.bf16.mxu0 0
  %8447 = vmatmul.mubr.bf16.gmra.mrb[0].mxu0 %v8259
  %v8448 = vpop.f32.mrb[0].mxu0
  %v8449 = vadd.f32 0.0, %v8448
  %v8450 = vpop.f32.mrb[0].mxu0
  %v8451 = vpop.f32.mrb[0].mxu0
  %v8452 = vadd.f32 0.0, %v8451
  %v8453 = vpop.f32.mrb[0].mxu0
  %8454 = vmatprep.mubr.bf16.mxu0 0
  %8455 = vmatmul.mubr.bf16.gmra.mrb[0].mxu0 %v8262
  %v8456 = vpop.f32.mrb[0].mxu0
  %v8457 = vadd.f32 0.0, %v8456
  %v8458 = vpop.f32.mrb[0].mxu0
  %v8459 = vpop.f32.mrb[0].mxu0
  %v8460 = vadd.f32 0.0, %v8459
  %v8461 = vpop.f32.mrb[0].mxu0
  %8462 = vmatprep.mubr.bf16.mxu0 0
  %8463 = vmatmul.mubr.bf16.gmra.mrb[0].mxu0 %v8265
  %v8464 = vpop.f32.mrb[0].mxu0
  %v8465 = vadd.f32 0.0, %v8464
  %v8466 = vpop.f32.mrb[0].mxu0
  %v8467 = vpop.f32.mrb[0].mxu0
  %v8468 = vadd.f32 0.0, %v8467
  %v8469 = vpop.f32.mrb[0].mxu0
  %8470 = vmatprep.mubr.bf16.mxu0 0
  %8471 = vmatmul.mubr.bf16.gmra.mrb[0].mxu0 %v8268
  %v8472 = vpop.f32.mrb[0].mxu0
  %v8473 = vadd.f32 0.0, %v8472
  %v8474 = vpop.f32.mrb[0].mxu0
  %v8475 = vpop.f32.mrb[0].mxu0
  %v8476 = vadd.f32 0.0, %v8475
  %v8477 = vpop.f32.mrb[0].mxu0
  %8478 = vmatprep.mubr.bf16.mxu0 0
  %8479 = vmatmul.mubr.bf16.gmra.mrb[0].mxu0 %v8271
  %v8480 = vpop.f32.mrb[0].mxu0
  %v8481 = vadd.f32 0.0, %v8480
  %v8482 = vpop.f32.mrb[0].mxu0
  %v8483 = vpop.f32.mrb[0].mxu0
  %v8484 = vadd.f32 0.0, %v8483
  %v8485 = vpop.f32.mrb[0].mxu0
  %8486 = vmatprep.mubr.bf16.mxu0 0
  %8487 = vmatmul.mubr.bf16.gmra.mrb[0].mxu0 %v8274
  %v8488 = vpop.f32.mrb[0].mxu0
  %v8489 = vadd.f32 0.0, %v8488
  %v8490 = vpop.f32.mrb[0].mxu0
  %v8491 = vpop.f32.mrb[0].mxu0
  %v8492 = vadd.f32 0.0, %v8491
  %v8493 = vpop.f32.mrb[0].mxu0
  %8494 = vmatprep.mubr.bf16.mxu0 0
  %8495 = vmatmul.mubr.bf16.gmra.mrb[0].mxu0 %v8277
  %v8496 = vpop.f32.mrb[0].mxu0
  %v8497 = vadd.f32 0.0, %v8496
  %v8498 = vpop.f32.mrb[0].mxu0
  %v8499 = vpop.f32.mrb[0].mxu0
  %v8500 = vadd.f32 0.0, %v8499
  %v8501 = vpop.f32.mrb[0].mxu0
  %8502 = vmatprep.mubr.bf16.mxu0 0
  %8503 = vmatmul.mubr.bf16.gmra.mrb[0].mxu0 %v8280
  %v8504 = vpop.f32.mrb[0].mxu0
  %v8505 = vadd.f32 0.0, %v8504
  %v8506 = vpop.f32.mrb[0].mxu0
  %v8507 = vpop.f32.mrb[0].mxu0
  %v8508 = vadd.f32 0.0, %v8507
  %v8509 = vpop.f32.mrb[0].mxu0
  %8510 = vmatprep.mubr.bf16.mxu0 0
  %8511 = vmatmul.mubr.bf16.gmra.mrb[0].mxu0 %v8283
  %v8512 = vpop.f32.mrb[0].mxu0
  %v8513 = vadd.f32 0.0, %v8512
  %v8514 = vpop.f32.mrb[0].mxu0
  %v8515 = vpop.f32.mrb[0].mxu0
  %v8516 = vadd.f32 0.0, %v8515
  %v8517 = vpop.f32.mrb[0].mxu0
  %8518 = vmatprep.mubr.bf16.mxu0 0
  %8519 = vmatmul.mubr.bf16.gmra.mrb[0].mxu0 %v8286
  %v8520 = vpop.f32.mrb[0].mxu0
  %v8521 = vadd.f32 0.0, %v8520
  %v8522 = vpop.f32.mrb[0].mxu0
  %v8523 = vpop.f32.mrb[0].mxu0
  %v8524 = vadd.f32 0.0, %v8523
  %v8525 = vpop.f32.mrb[0].mxu0
  %8526 = vmatprep.mubr.bf16.mxu0 0
  %8527 = vmatmul.mubr.bf16.gmra.mrb[0].mxu0 %v8289
  %v8528 = vpop.f32.mrb[0].mxu0
  %v8529 = vadd.f32 0.0, %v8528
  %v8530 = vpop.f32.mrb[0].mxu0
  %v8531 = vpop.f32.mrb[0].mxu0
  %v8532 = vadd.f32 0.0, %v8531
  %v8533 = vpop.f32.mrb[0].mxu0
  %8534 = vmatprep.mubr.bf16.mxu0 0
  %8535 = vmatmul.mubr.bf16.gmra.mrb[0].mxu0 %v8292
  %v8536 = vpop.f32.mrb[0].mxu0
  %v8537 = vadd.f32 0.0, %v8536
  %v8538 = vpop.f32.mrb[0].mxu0
  %v8539 = vpop.f32.mrb[0].mxu0
  %v8540 = vadd.f32 0.0, %v8539
  %v8541 = vpop.f32.mrb[0].mxu0
  %8542 = vmatprep.mubr.bf16.mxu0 0
  %8543 = vmatmul.mubr.bf16.gmra.mrb[0].mxu0 %v8295
  %v8544 = vpop.f32.mrb[0].mxu0
  %v8545 = vadd.f32 0.0, %v8544
  %v8546 = vpop.f32.mrb[0].mxu0
  %v8547 = vpop.f32.mrb[0].mxu0
  %v8548 = vadd.f32 0.0, %v8547
  %v8549 = vpop.f32.mrb[0].mxu0
  %8550 = vmatprep.mubr.bf16.mxu0 0
  %8551 = vmatmul.mubr.bf16.gmra.mrb[0].mxu0 %v8298
  %v8552 = vpop.f32.mrb[0].mxu0
  %v8553 = vadd.f32 0.0, %v8552
  %v8554 = vpop.f32.mrb[0].mxu0
  %v8555 = vpop.f32.mrb[0].mxu0
  %v8556 = vadd.f32 0.0, %v8555
  %v8557 = vpop.f32.mrb[0].mxu0
  %8558 = vmatprep.mubr.bf16.mxu0 0
  %8559 = vmatmul.mubr.bf16.gmra.mrb[0].mxu0 %v8301
  %v8560 = vpop.f32.mrb[0].mxu0
  %v8561 = vadd.f32 0.0, %v8560
  %v8562 = vpop.f32.mrb[0].mxu0
  %v8563 = vpop.f32.mrb[0].mxu0
  %v8564 = vadd.f32 0.0, %v8563
  %v8565 = vpop.f32.mrb[0].mxu0
  %8566 = vmatprep.mubr.bf16.mxu0 0
  %8567 = vmatmul.mubr.bf16.gmra.mrb[0].mxu0 %v8304
  %v8568 = vpop.f32.mrb[0].mxu0
  %v8569 = vadd.f32 0.0, %v8568
  %v8570 = vpop.f32.mrb[0].mxu0
  %v8571 = vpop.f32.mrb[0].mxu0
  %v8572 = vadd.f32 0.0, %v8571
  %v8573 = vpop.f32.mrb[0].mxu0
  %8574 = vmatprep.mubr.bf16.mxu0 0
  %8575 = vmatmul.mubr.bf16.gmra.mrb[0].mxu0 %v8307
  %v8576 = vpop.f32.mrb[0].mxu0
  %v8577 = vadd.f32 0.0, %v8576
  %v8578 = vpop.f32.mrb[0].mxu0
  %v8579 = vpop.f32.mrb[0].mxu0
  %v8580 = vadd.f32 0.0, %v8579
  %v8581 = vpop.f32.mrb[0].mxu0
  %8582 = vmatprep.mubr.bf16.mxu0 0
  %8583 = vmatmul.mubr.bf16.gmra.mrb[0].mxu0 %v8310
  %v8584 = vpop.f32.mrb[0].mxu0
  %v8585 = vadd.f32 0.0, %v8584
  %v8586 = vpop.f32.mrb[0].mxu0
  %v8587 = vpop.f32.mrb[0].mxu0
  %v8588 = vadd.f32 0.0, %v8587
  %v8589 = vpop.f32.mrb[0].mxu0
  %8590 = vmatprep.mubr.bf16.mxu0 0
  %8591 = vmatmul.mubr.bf16.gmra.mrb[0].mxu0 %v8313
  %v8592 = vpop.f32.mrb[0].mxu0
  %v8593 = vadd.f32 0.0, %v8592
  %v8594 = vpop.f32.mrb[0].mxu0
  %v8595 = vpop.f32.mrb[0].mxu0
  %v8596 = vadd.f32 0.0, %v8595
  %v8597 = vpop.f32.mrb[0].mxu0
  %8598 = vmatprep.mubr.bf16.mxu0 0
  %8599 = vmatmul.mubr.bf16.gmra.mrb[0].mxu0 %v8316
  %v8600 = vpop.f32.mrb[0].mxu0
  %v8601 = vadd.f32 0.0, %v8600
  %v8602 = vpop.f32.mrb[0].mxu0
  %v8603 = vpop.f32.mrb[0].mxu0
  %v8604 = vadd.f32 0.0, %v8603
  %v8605 = vpop.f32.mrb[0].mxu0
  %8606 = vdwg.mxu0
  %v8671 = vunpack.c.l.b16 %v7060
  %v8672 = vunpack.c.l.b16 %v7061
  %v8673 = vunpack.c.l.b16 %v7062
  %v8674 = vunpack.c.l.b16 %v7063
  %v8675 = vunpack.c.l.b16 %v7064
  %v8676 = vunpack.c.l.b16 %v7065
  %v8677 = vunpack.c.l.b16 %v7066
  %v8678 = vunpack.c.l.b16 %v7067
  %v8679 = vunpack.c.l.b16 %v7068
  %v8680 = vunpack.c.l.b16 %v7069
  %v8681 = vunpack.c.l.b16 %v7070
  %v8682 = vunpack.c.l.b16 %v7071
  %v8683 = vunpack.c.l.b16 %v7072
  %v8684 = vunpack.c.l.b16 %v7073
  %v8685 = vunpack.c.l.b16 %v7074
  %v8686 = vunpack.c.l.b16 %v7075
  %v8687 = vunpack.c.l.b16 %v7076
  %v8688 = vunpack.c.l.b16 %v7077
  %v8689 = vunpack.c.l.b16 %v7078
  %v8690 = vunpack.c.l.b16 %v7079
  %v8691 = vunpack.c.l.b16 %v7080
  %v8692 = vunpack.c.l.b16 %v7081
  %v8693 = vunpack.c.l.b16 %v7082
  %v8694 = vunpack.c.l.b16 %v7083
  %v8695 = vunpack.c.l.b16 %v7084
  %v8696 = vunpack.c.l.b16 %v7085
  %v8697 = vunpack.c.l.b16 %v7086
  %v8698 = vunpack.c.l.b16 %v7087
  %v8699 = vunpack.c.l.b16 %v7088
  %v8700 = vunpack.c.l.b16 %v7089
  %v8701 = vunpack.c.l.b16 %v7090
  %v8702 = vunpack.c.l.b16 %v7091
  %v8703 = vunpack.c.l.b16 %v7092
  %v8704 = vunpack.c.l.b16 %v7093
  %v8705 = vunpack.c.l.b16 %v7094
  %v8706 = vunpack.c.l.b16 %v7095
  %v8707 = vunpack.c.l.b16 %v7096
  %v8708 = vunpack.c.l.b16 %v7097
  %v8709 = vunpack.c.l.b16 %v7098
  %v8710 = vunpack.c.l.b16 %v7099
  %v8711 = vunpack.c.l.b16 %v7100
  %v8712 = vunpack.c.l.b16 %v7101
  %v8713 = vunpack.c.l.b16 %v7102
  %v8714 = vunpack.c.l.b16 %v7103
  %v8715 = vunpack.c.l.b16 %v7104
  %v8716 = vunpack.c.l.b16 %v7105
  %v8717 = vunpack.c.l.b16 %v7106
  %v8718 = vunpack.c.l.b16 %v7107
  %v8719 = vunpack.c.l.b16 %v7108
  %v8720 = vunpack.c.l.b16 %v7109
  %v8721 = vunpack.c.l.b16 %v7110
  %v8722 = vunpack.c.l.b16 %v7111
  %v8723 = vunpack.c.l.b16 %v7112
  %v8724 = vunpack.c.l.b16 %v7113
  %v8725 = vunpack.c.l.b16 %v7114
  %v8726 = vunpack.c.l.b16 %v7115
  %v8727 = vunpack.c.l.b16 %v7116
  %v8728 = vunpack.c.l.b16 %v7117
  %v8729 = vunpack.c.l.b16 %v7118
  %v8730 = vunpack.c.l.b16 %v7119
  %v8731 = vunpack.c.l.b16 %v7120
  %v8732 = vunpack.c.l.b16 %v7121
  %v8733 = vunpack.c.l.b16 %v7122
  %v8734 = vunpack.c.l.b16 %v7123
  %v8735 = vpack.c.b16 %v8672, %v8671
  %v8736 = vpack.c.b16 %v8674, %v8673
  %v8737 = vpack.c.b16 %v8676, %v8675
  %v8738 = vpack.c.b16 %v8678, %v8677
  %v8739 = vpack.c.b16 %v8680, %v8679
  %v8740 = vpack.c.b16 %v8682, %v8681
  %v8741 = vpack.c.b16 %v8684, %v8683
  %v8742 = vpack.c.b16 %v8686, %v8685
  %v8743 = vpack.c.b16 %v8688, %v8687
  %v8744 = vpack.c.b16 %v8690, %v8689
  %v8745 = vpack.c.b16 %v8692, %v8691
  %v8746 = vpack.c.b16 %v8694, %v8693
  %v8747 = vpack.c.b16 %v8696, %v8695
  %v8748 = vpack.c.b16 %v8698, %v8697
  %v8749 = vpack.c.b16 %v8700, %v8699
  %v8750 = vpack.c.b16 %v8702, %v8701
  %v8751 = vpack.c.b16 %v8704, %v8703
  %v8752 = vpack.c.b16 %v8706, %v8705
  %v8753 = vpack.c.b16 %v8708, %v8707
  %v8754 = vpack.c.b16 %v8710, %v8709
  %v8755 = vpack.c.b16 %v8712, %v8711
  %v8756 = vpack.c.b16 %v8714, %v8713
  %v8757 = vpack.c.b16 %v8716, %v8715
  %v8758 = vpack.c.b16 %v8718, %v8717
  %v8759 = vpack.c.b16 %v8720, %v8719
  %v8760 = vpack.c.b16 %v8722, %v8721
  %v8761 = vpack.c.b16 %v8724, %v8723
  %v8762 = vpack.c.b16 %v8726, %v8725
  %v8763 = vpack.c.b16 %v8728, %v8727
  %v8764 = vpack.c.b16 %v8730, %v8729
  %v8765 = vpack.c.b16 %v8732, %v8731
  %v8766 = vpack.c.b16 %v8734, %v8733
  %v8775 = vunpack.c.l.b16 %v7124
  %v8776 = vunpack.c.l.b16 %v7125
  %v8777 = vunpack.c.l.b16 %v7126
  %v8778 = vunpack.c.l.b16 %v7127
  %v8779 = vunpack.c.l.b16 %v7128
  %v8780 = vunpack.c.l.b16 %v7129
  %v8781 = vunpack.c.l.b16 %v7130
  %v8782 = vunpack.c.l.b16 %v7131
  %v8783 = vpack.c.b16 %v8776, %v8775
  %v8784 = vpack.c.b16 %v8778, %v8777
  %v8785 = vpack.c.b16 %v8780, %v8779
  %v8786 = vpack.c.b16 %v8782, %v8781
  %v8792 = vsel %vm8221, %v8735, 0
  %v8795 = vsel %vm8221, %v8736, 0
  %v8798 = vsel %vm8221, %v8737, 0
  %v8801 = vsel %vm8221, %v8738, 0
  %v8804 = vsel %vm8221, %v8739, 0
  %v8807 = vsel %vm8221, %v8740, 0
  %v8810 = vsel %vm8221, %v8741, 0
  %v8813 = vsel %vm8221, %v8742, 0
  %v8816 = vsel %vm8221, %v8743, 0
  %v8819 = vsel %vm8221, %v8744, 0
  %v8822 = vsel %vm8221, %v8745, 0
  %v8825 = vsel %vm8221, %v8746, 0
  %v8828 = vsel %vm8221, %v8747, 0
  %v8831 = vsel %vm8221, %v8748, 0
  %v8834 = vsel %vm8221, %v8749, 0
  %v8837 = vsel %vm8221, %v8750, 0
  %v8840 = vsel %vm8221, %v8751, 0
  %v8843 = vsel %vm8221, %v8752, 0
  %v8846 = vsel %vm8221, %v8753, 0
  %v8849 = vsel %vm8221, %v8754, 0
  %v8852 = vsel %vm8221, %v8755, 0
  %v8855 = vsel %vm8221, %v8756, 0
  %v8858 = vsel %vm8221, %v8757, 0
  %v8861 = vsel %vm8221, %v8758, 0
  %v8864 = vsel %vm8221, %v8759, 0
  %v8867 = vsel %vm8221, %v8760, 0
  %v8870 = vsel %vm8221, %v8761, 0
  %v8873 = vsel %vm8221, %v8762, 0
  %v8876 = vsel %vm8221, %v8763, 0
  %v8879 = vsel %vm8221, %v8764, 0
  %v8882 = vsel %vm8221, %v8765, 0
  %v8885 = vsel %vm8221, %v8766, 0
  %8887 = vmatprep.subr.bf16.mxu0 0
  %8888 = vmatpush1.bf16.msra.mxu0 %v8783
  %8889 = vmatprep.subr.bf16.mxu0 0
  %8890 = vmatpush1.bf16.msra.mxu0 %v8784
  %8891 = vmatprep.subr.bf16.mxu0 0
  %8892 = vmatpush1.bf16.msra.mxu0 %v8785
  %8893 = vmatprep.subr.bf16.mxu0 0
  %8894 = vmatpush1.bf16.msra.mxu0 %v8786
  %8895 = vmatprep.subr.bf16.mxu0 0
  %8896 = vmatpush1.bf16.msra.mxu0 0
  %8897 = vmatprep.subr.bf16.mxu0 0
  %8898 = vmatpush1.bf16.msra.mxu0 0
  %8899 = vmatprep.subr.bf16.mxu0 0
  %8900 = vmatpush1.bf16.msra.mxu0 0
  %8901 = vmatprep.subr.bf16.mxu0 0
  %8902 = vmatpush1.bf16.msra.mxu0 0
  %8903 = vmatprep.subr.bf16.mxu0 0
  %8904 = vmatpush1.bf16.msra.mxu0 0
  %8905 = vmatprep.subr.bf16.mxu0 0
  %8906 = vmatpush1.bf16.msra.mxu0 0
  %8907 = vmatprep.subr.bf16.mxu0 0
  %8908 = vmatpush1.bf16.msra.mxu0 0
  %8909 = vmatprep.subr.bf16.mxu0 0
  %8910 = vmatpush1.bf16.msra.mxu0 0
  %8911 = vmatprep.subr.bf16.mxu0 0
  %8912 = vmatpush1.bf16.msra.mxu0 0
  %8913 = vmatprep.subr.bf16.mxu0 0
  %8914 = vmatpush1.bf16.msra.mxu0 0
  %8915 = vmatprep.subr.bf16.mxu0 0
  %8916 = vmatpush1.bf16.msra.mxu0 0
  %8917 = vmatprep.subr.bf16.mxu0 0
  %8918 = vmatpush1.bf16.msra.mxu0 0
  %8919 = vmatprep.mubr.bf16.mxu0 0
  %8920 = vmatmul.mubr.bf16.gmra.mrb[0].mxu0 %v8792
  %v8921 = vpop.f32.mrb[0].mxu0
  %v8922 = vadd.f32 %v8353, %v8921
  %v8923 = vpop.f32.mrb[0].mxu0
  %v8924 = vpop.f32.mrb[0].mxu0
  %v8925 = vadd.f32 %v8356, %v8924
  %v8926 = vpop.f32.mrb[0].mxu0
  %8927 = vmatprep.mubr.bf16.mxu0 0
  %8928 = vmatmul.mubr.bf16.gmra.mrb[0].mxu0 %v8795
  %v8929 = vpop.f32.mrb[0].mxu0
  %v8930 = vadd.f32 %v8361, %v8929
  %v8931 = vpop.f32.mrb[0].mxu0
  %v8932 = vpop.f32.mrb[0].mxu0
  %v8933 = vadd.f32 %v8364, %v8932
  %v8934 = vpop.f32.mrb[0].mxu0
  %8935 = vmatprep.mubr.bf16.mxu0 0
  %8936 = vmatmul.mubr.bf16.gmra.mrb[0].mxu0 %v8798
  %v8937 = vpop.f32.mrb[0].mxu0
  %v8938 = vadd.f32 %v8369, %v8937
  %v8939 = vpop.f32.mrb[0].mxu0
  %v8940 = vpop.f32.mrb[0].mxu0
  %v8941 = vadd.f32 %v8372, %v8940
  %v8942 = vpop.f32.mrb[0].mxu0
  %8943 = vmatprep.mubr.bf16.mxu0 0
  %8944 = vmatmul.mubr.bf16.gmra.mrb[0].mxu0 %v8801
  %v8945 = vpop.f32.mrb[0].mxu0
  %v8946 = vadd.f32 %v8377, %v8945
  %v8947 = vpop.f32.mrb[0].mxu0
  %v8948 = vpop.f32.mrb[0].mxu0
  %v8949 = vadd.f32 %v8380, %v8948
  %v8950 = vpop.f32.mrb[0].mxu0
  %8951 = vmatprep.mubr.bf16.mxu0 0
  %8952 = vmatmul.mubr.bf16.gmra.mrb[0].mxu0 %v8804
  %v8953 = vpop.f32.mrb[0].mxu0
  %v8954 = vadd.f32 %v8385, %v8953
  %v8955 = vpop.f32.mrb[0].mxu0
  %v8956 = vpop.f32.mrb[0].mxu0
  %v8957 = vadd.f32 %v8388, %v8956
  %v8958 = vpop.f32.mrb[0].mxu0
  %8959 = vmatprep.mubr.bf16.mxu0 0
  %8960 = vmatmul.mubr.bf16.gmra.mrb[0].mxu0 %v8807
  %v8961 = vpop.f32.mrb[0].mxu0
  %v8962 = vadd.f32 %v8393, %v8961
  %v8963 = vpop.f32.mrb[0].mxu0
  %v8964 = vpop.f32.mrb[0].mxu0
  %v8965 = vadd.f32 %v8396, %v8964
  %v8966 = vpop.f32.mrb[0].mxu0
  %8967 = vmatprep.mubr.bf16.mxu0 0
  %8968 = vmatmul.mubr.bf16.gmra.mrb[0].mxu0 %v8810
  %v8969 = vpop.f32.mrb[0].mxu0
  %v8970 = vadd.f32 %v8401, %v8969
  %v8971 = vpop.f32.mrb[0].mxu0
  %v8972 = vpop.f32.mrb[0].mxu0
  %v8973 = vadd.f32 %v8404, %v8972
  %v8974 = vpop.f32.mrb[0].mxu0
  %8975 = vmatprep.mubr.bf16.mxu0 0
  %8976 = vmatmul.mubr.bf16.gmra.mrb[0].mxu0 %v8813
  %v8977 = vpop.f32.mrb[0].mxu0
  %v8978 = vadd.f32 %v8409, %v8977
  %v8979 = vpop.f32.mrb[0].mxu0
  %v8980 = vpop.f32.mrb[0].mxu0
  %v8981 = vadd.f32 %v8412, %v8980
  %v8982 = vpop.f32.mrb[0].mxu0
  %8983 = vmatprep.mubr.bf16.mxu0 0
  %8984 = vmatmul.mubr.bf16.gmra.mrb[0].mxu0 %v8816
  %v8985 = vpop.f32.mrb[0].mxu0
  %v8986 = vadd.f32 %v8417, %v8985
  %v8987 = vpop.f32.mrb[0].mxu0
  %v8988 = vpop.f32.mrb[0].mxu0
  %v8989 = vadd.f32 %v8420, %v8988
  %v8990 = vpop.f32.mrb[0].mxu0
  %8991 = vmatprep.mubr.bf16.mxu0 0
  %8992 = vmatmul.mubr.bf16.gmra.mrb[0].mxu0 %v8819
  %v8993 = vpop.f32.mrb[0].mxu0
  %v8994 = vadd.f32 %v8425, %v8993
  %v8995 = vpop.f32.mrb[0].mxu0
  %v8996 = vpop.f32.mrb[0].mxu0
  %v8997 = vadd.f32 %v8428, %v8996
  %v8998 = vpop.f32.mrb[0].mxu0
  %8999 = vmatprep.mubr.bf16.mxu0 0
  %9000 = vmatmul.mubr.bf16.gmra.mrb[0].mxu0 %v8822
  %v9001 = vpop.f32.mrb[0].mxu0
  %v9002 = vadd.f32 %v8433, %v9001
  %v9003 = vpop.f32.mrb[0].mxu0
  %v9004 = vpop.f32.mrb[0].mxu0
  %v9005 = vadd.f32 %v8436, %v9004
  %v9006 = vpop.f32.mrb[0].mxu0
  %9007 = vmatprep.mubr.bf16.mxu0 0
  %9008 = vmatmul.mubr.bf16.gmra.mrb[0].mxu0 %v8825
  %v9009 = vpop.f32.mrb[0].mxu0
  %v9010 = vadd.f32 %v8441, %v9009
  %v9011 = vpop.f32.mrb[0].mxu0
  %v9012 = vpop.f32.mrb[0].mxu0
  %v9013 = vadd.f32 %v8444, %v9012
  %v9014 = vpop.f32.mrb[0].mxu0
  %9015 = vmatprep.mubr.bf16.mxu0 0
  %9016 = vmatmul.mubr.bf16.gmra.mrb[0].mxu0 %v8828
  %v9017 = vpop.f32.mrb[0].mxu0
  %v9018 = vadd.f32 %v8449, %v9017
  %v9019 = vpop.f32.mrb[0].mxu0
  %v9020 = vpop.f32.mrb[0].mxu0
  %v9021 = vadd.f32 %v8452, %v9020
  %v9022 = vpop.f32.mrb[0].mxu0
  %9023 = vmatprep.mubr.bf16.mxu0 0
  %9024 = vmatmul.mubr.bf16.gmra.mrb[0].mxu0 %v8831
  %v9025 = vpop.f32.mrb[0].mxu0
  %v9026 = vadd.f32 %v8457, %v9025
  %v9027 = vpop.f32.mrb[0].mxu0
  %v9028 = vpop.f32.mrb[0].mxu0
  %v9029 = vadd.f32 %v8460, %v9028
  %v9030 = vpop.f32.mrb[0].mxu0
  %9031 = vmatprep.mubr.bf16.mxu0 0
  %9032 = vmatmul.mubr.bf16.gmra.mrb[0].mxu0 %v8834
  %v9033 = vpop.f32.mrb[0].mxu0
  %v9034 = vadd.f32 %v8465, %v9033
  %v9035 = vpop.f32.mrb[0].mxu0
  %v9036 = vpop.f32.mrb[0].mxu0
  %v9037 = vadd.f32 %v8468, %v9036
  %v9038 = vpop.f32.mrb[0].mxu0
  %9039 = vmatprep.mubr.bf16.mxu0 0
  %9040 = vmatmul.mubr.bf16.gmra.mrb[0].mxu0 %v8837
  %v9041 = vpop.f32.mrb[0].mxu0
  %v9042 = vadd.f32 %v8473, %v9041
  %v9043 = vpop.f32.mrb[0].mxu0
  %v9044 = vpop.f32.mrb[0].mxu0
  %v9045 = vadd.f32 %v8476, %v9044
  %v9046 = vpop.f32.mrb[0].mxu0
  %9047 = vmatprep.mubr.bf16.mxu0 0
  %9048 = vmatmul.mubr.bf16.gmra.mrb[0].mxu0 %v8840
  %v9049 = vpop.f32.mrb[0].mxu0
  %v9050 = vadd.f32 %v8481, %v9049
  %v9051 = vpop.f32.mrb[0].mxu0
  %v9052 = vpop.f32.mrb[0].mxu0
  %v9053 = vadd.f32 %v8484, %v9052
  %v9054 = vpop.f32.mrb[0].mxu0
  %9055 = vmatprep.mubr.bf16.mxu0 0
  %9056 = vmatmul.mubr.bf16.gmra.mrb[0].mxu0 %v8843
  %v9057 = vpop.f32.mrb[0].mxu0
  %v9058 = vadd.f32 %v8489, %v9057
  %v9059 = vpop.f32.mrb[0].mxu0
  %v9060 = vpop.f32.mrb[0].mxu0
  %v9061 = vadd.f32 %v8492, %v9060
  %v9062 = vpop.f32.mrb[0].mxu0
  %9063 = vmatprep.mubr.bf16.mxu0 0
  %9064 = vmatmul.mubr.bf16.gmra.mrb[0].mxu0 %v8846
  %v9065 = vpop.f32.mrb[0].mxu0
  %v9066 = vadd.f32 %v8497, %v9065
  %v9067 = vpop.f32.mrb[0].mxu0
  %v9068 = vpop.f32.mrb[0].mxu0
  %v9069 = vadd.f32 %v8500, %v9068
  %v9070 = vpop.f32.mrb[0].mxu0
  %9071 = vmatprep.mubr.bf16.mxu0 0
  %9072 = vmatmul.mubr.bf16.gmra.mrb[0].mxu0 %v8849
  %v9073 = vpop.f32.mrb[0].mxu0
  %v9074 = vadd.f32 %v8505, %v9073
  %v9075 = vpop.f32.mrb[0].mxu0
  %v9076 = vpop.f32.mrb[0].mxu0
  %v9077 = vadd.f32 %v8508, %v9076
  %v9078 = vpop.f32.mrb[0].mxu0
  %9079 = vmatprep.mubr.bf16.mxu0 0
  %9080 = vmatmul.mubr.bf16.gmra.mrb[0].mxu0 %v8852
  %v9081 = vpop.f32.mrb[0].mxu0
  %v9082 = vadd.f32 %v8513, %v9081
  %v9083 = vpop.f32.mrb[0].mxu0
  %v9084 = vpop.f32.mrb[0].mxu0
  %v9085 = vadd.f32 %v8516, %v9084
  %v9086 = vpop.f32.mrb[0].mxu0
  %9087 = vmatprep.mubr.bf16.mxu0 0
  %9088 = vmatmul.mubr.bf16.gmra.mrb[0].mxu0 %v8855
  %v9089 = vpop.f32.mrb[0].mxu0
  %v9090 = vadd.f32 %v8521, %v9089
  %v9091 = vpop.f32.mrb[0].mxu0
  %v9092 = vpop.f32.mrb[0].mxu0
  %v9093 = vadd.f32 %v8524, %v9092
  %v9094 = vpop.f32.mrb[0].mxu0
  %9095 = vmatprep.mubr.bf16.mxu0 0
  %9096 = vmatmul.mubr.bf16.gmra.mrb[0].mxu0 %v8858
  %v9097 = vpop.f32.mrb[0].mxu0
  %v9098 = vadd.f32 %v8529, %v9097
  %v9099 = vpop.f32.mrb[0].mxu0
  %v9100 = vpop.f32.mrb[0].mxu0
  %v9101 = vadd.f32 %v8532, %v9100
  %v9102 = vpop.f32.mrb[0].mxu0
  %9103 = vmatprep.mubr.bf16.mxu0 0
  %9104 = vmatmul.mubr.bf16.gmra.mrb[0].mxu0 %v8861
  %v9105 = vpop.f32.mrb[0].mxu0
  %v9106 = vadd.f32 %v8537, %v9105
  %v9107 = vpop.f32.mrb[0].mxu0
  %v9108 = vpop.f32.mrb[0].mxu0
  %v9109 = vadd.f32 %v8540, %v9108
  %v9110 = vpop.f32.mrb[0].mxu0
  %9111 = vmatprep.mubr.bf16.mxu0 0
  %9112 = vmatmul.mubr.bf16.gmra.mrb[0].mxu0 %v8864
  %v9113 = vpop.f32.mrb[0].mxu0
  %v9114 = vadd.f32 %v8545, %v9113
  %v9115 = vpop.f32.mrb[0].mxu0
  %v9116 = vpop.f32.mrb[0].mxu0
  %v9117 = vadd.f32 %v8548, %v9116
  %v9118 = vpop.f32.mrb[0].mxu0
  %9119 = vmatprep.mubr.bf16.mxu0 0
  %9120 = vmatmul.mubr.bf16.gmra.mrb[0].mxu0 %v8867
  %v9121 = vpop.f32.mrb[0].mxu0
  %v9122 = vadd.f32 %v8553, %v9121
  %v9123 = vpop.f32.mrb[0].mxu0
  %v9124 = vpop.f32.mrb[0].mxu0
  %v9125 = vadd.f32 %v8556, %v9124
  %v9126 = vpop.f32.mrb[0].mxu0
  %9127 = vmatprep.mubr.bf16.mxu0 0
  %9128 = vmatmul.mubr.bf16.gmra.mrb[0].mxu0 %v8870
  %v9129 = vpop.f32.mrb[0].mxu0
  %v9130 = vadd.f32 %v8561, %v9129
  %v9131 = vpop.f32.mrb[0].mxu0
  %v9132 = vpop.f32.mrb[0].mxu0
  %v9133 = vadd.f32 %v8564, %v9132
  %v9134 = vpop.f32.mrb[0].mxu0
  %9135 = vmatprep.mubr.bf16.mxu0 0
  %9136 = vmatmul.mubr.bf16.gmra.mrb[0].mxu0 %v8873
  %v9137 = vpop.f32.mrb[0].mxu0
  %v9138 = vadd.f32 %v8569, %v9137
  %v9139 = vpop.f32.mrb[0].mxu0
  %v9140 = vpop.f32.mrb[0].mxu0
  %v9141 = vadd.f32 %v8572, %v9140
  %v9142 = vpop.f32.mrb[0].mxu0
  %9143 = vmatprep.mubr.bf16.mxu0 0
  %9144 = vmatmul.mubr.bf16.gmra.mrb[0].mxu0 %v8876
  %v9145 = vpop.f32.mrb[0].mxu0
  %v9146 = vadd.f32 %v8577, %v9145
  %v9147 = vpop.f32.mrb[0].mxu0
  %v9148 = vpop.f32.mrb[0].mxu0
  %v9149 = vadd.f32 %v8580, %v9148
  %v9150 = vpop.f32.mrb[0].mxu0
  %9151 = vmatprep.mubr.bf16.mxu0 0
  %9152 = vmatmul.mubr.bf16.gmra.mrb[0].mxu0 %v8879
  %v9153 = vpop.f32.mrb[0].mxu0
  %v9154 = vadd.f32 %v8585, %v9153
  %v9155 = vpop.f32.mrb[0].mxu0
  %v9156 = vpop.f32.mrb[0].mxu0
  %v9157 = vadd.f32 %v8588, %v9156
  %v9158 = vpop.f32.mrb[0].mxu0
  %9159 = vmatprep.mubr.bf16.mxu0 0
  %9160 = vmatmul.mubr.bf16.gmra.mrb[0].mxu0 %v8882
  %v9161 = vpop.f32.mrb[0].mxu0
  %v9162 = vadd.f32 %v8593, %v9161
  %v9163 = vpop.f32.mrb[0].mxu0
  %v9164 = vpop.f32.mrb[0].mxu0
  %v9165 = vadd.f32 %v8596, %v9164
  %v9166 = vpop.f32.mrb[0].mxu0
  %9167 = vmatprep.mubr.bf16.mxu0 0
  %9168 = vmatmul.mubr.bf16.gmra.mrb[0].mxu0 %v8885
  %v9169 = vpop.f32.mrb[0].mxu0
  %v9170 = vadd.f32 %v8601, %v9169
  %v9171 = vpop.f32.mrb[0].mxu0
  %v9172 = vpop.f32.mrb[0].mxu0
  %v9173 = vadd.f32 %v8604, %v9172
  %v9174 = vpop.f32.mrb[0].mxu0
  %9175 = vdwg.mxu0
  %v9176 = vld [vmem:[%s6606] sm:$0xf]
  %v9177 = vld [vmem:[%s6606 + $0x8] sm:$0xf]
  %v9178 = vld [vmem:[%s6606 + $0x10] sm:$0xf]
  %v9179 = vld [vmem:[%s6606 + $0x18] sm:$0xf]
  %v9180 = vld [vmem:[%s6606 + $0x20] sm:$0xf]
  %v9181 = vld [vmem:[%s6606 + $0x28] sm:$0xf]
  %v9182 = vld [vmem:[%s6606 + $0x30] sm:$0xf]
  %v9183 = vld [vmem:[%s6606 + $0x38] sm:$0xf]
  %v9184 = vld [vmem:[%s6606 + $0x48] sm:$0xf]
  %v9185 = vld [vmem:[%s6606 + $0x50] sm:$0xf]
  %v9186 = vld [vmem:[%s6606 + $0x58] sm:$0xf]
  %v9187 = vld [vmem:[%s6606 + $0x60] sm:$0xf]
  %v9188 = vld [vmem:[%s6606 + $0x68] sm:$0xf]
  %v9189 = vld [vmem:[%s6606 + $0x70] sm:$0xf]
  %v9190 = vld [vmem:[%s6606 + $0x78] sm:$0xf]
  %v9191 = vld [vmem:[%s6606 + $0x80] sm:$0xf]
  %v9192 = vld [vmem:[%s6606 + $0x90] sm:$0xf]
  %v9193 = vld [vmem:[%s6606 + $0x98] sm:$0xf]
  %v9194 = vld [vmem:[%s6606 + $0xa0] sm:$0xf]
  %v9195 = vld [vmem:[%s6606 + $0xa8] sm:$0xf]
  %v9196 = vld [vmem:[%s6606 + $0xb0] sm:$0xf]
  %v9197 = vld [vmem:[%s6606 + $0xb8] sm:$0xf]
  %v9198 = vld [vmem:[%s6606 + $0xc0] sm:$0xf]
  %v9199 = vld [vmem:[%s6606 + $0xc8] sm:$0xf]
  %v9200 = vld [vmem:[%s6606 + $0xd8] sm:$0xf]
  %v9201 = vld [vmem:[%s6606 + $0xe0] sm:$0xf]
  %v9202 = vld [vmem:[%s6606 + $0xe8] sm:$0xf]
  %v9203 = vld [vmem:[%s6606 + $0xf0] sm:$0xf]
  %v9204 = vld [vmem:[%s6606 + $0xf8] sm:$0xf]
  %v9205 = vld [vmem:[%s6606 + $0x100] sm:$0xf]
  %v9206 = vld [vmem:[%s6606 + $0x108] sm:$0xf]
  %v9207 = vld [vmem:[%s6606 + $0x110] sm:$0xf]
  %v9208 = vld [vmem:[%s6606 + $0x120] sm:$0xf]
  %v9209 = vld [vmem:[%s6606 + $0x128] sm:$0xf]
  %v9210 = vld [vmem:[%s6606 + $0x130] sm:$0xf]
  %v9211 = vld [vmem:[%s6606 + $0x138] sm:$0xf]
  %v9212 = vld [vmem:[%s6606 + $0x140] sm:$0xf]
  %v9213 = vld [vmem:[%s6606 + $0x148] sm:$0xf]
  %v9214 = vld [vmem:[%s6606 + $0x150] sm:$0xf]
  %v9215 = vld [vmem:[%s6606 + $0x158] sm:$0xf]
  %v9216 = vld [vmem:[%s6606 + $0x168] sm:$0xf]
  %v9217 = vld [vmem:[%s6606 + $0x170] sm:$0xf]
  %v9218 = vld [vmem:[%s6606 + $0x178] sm:$0xf]
  %v9219 = vld [vmem:[%s6606 + $0x180] sm:$0xf]
  %v9220 = vld [vmem:[%s6606 + $0x188] sm:$0xf]
  %v9221 = vld [vmem:[%s6606 + $0x190] sm:$0xf]
  %v9222 = vld [vmem:[%s6606 + $0x198] sm:$0xf]
  %v9223 = vld [vmem:[%s6606 + $0x1a0] sm:$0xf]
  %v9224 = vld [vmem:[%s6606 + $0x1b0] sm:$0xf]
  %v9225 = vld [vmem:[%s6606 + $0x1b8] sm:$0xf]
  %v9226 = vld [vmem:[%s6606 + $0x1c0] sm:$0xf]
  %v9227 = vld [vmem:[%s6606 + $0x1c8] sm:$0xf]
  %v9228 = vld [vmem:[%s6606 + $0x1d0] sm:$0xf]
  %v9229 = vld [vmem:[%s6606 + $0x1d8] sm:$0xf]
  %v9230 = vld [vmem:[%s6606 + $0x1e0] sm:$0xf]
  %v9231 = vld [vmem:[%s6606 + $0x1e8] sm:$0xf]
  %v9232 = vld [vmem:[%s6606 + $0x1f8] sm:$0xf]
  %v9233 = vld [vmem:[%s6606 + $0x200] sm:$0xf]
  %v9234 = vld [vmem:[%s6606 + $0x208] sm:$0xf]
  %v9235 = vld [vmem:[%s6606 + $0x210] sm:$0xf]
  %v9236 = vld [vmem:[%s6606 + $0x218] sm:$0xf]
  %v9237 = vld [vmem:[%s6606 + $0x220] sm:$0xf]
  %v9238 = vld [vmem:[%s6606 + $0x228] sm:$0xf]
  %v9239 = vld [vmem:[%s6606 + $0x230] sm:$0xf]
  %s9240 = scalar_lea.vmem %s3, 64
  %v9241 = vld [vmem:[%s9240] sm:$0xf]
  %v9242 = vld [vmem:[%s9240 + $0x4] sm:$0xf]
  %v9243 = vld [vmem:[%s9240 + $0x8] sm:$0xf]
  %v9244 = vld [vmem:[%s9240 + $0xc] sm:$0xf]
  %v9245 = vld [vmem:[%s9240 + $0x10] sm:$0xf]
  %v9246 = vld [vmem:[%s9240 + $0x14] sm:$0xf]
  %v9247 = vld [vmem:[%s9240 + $0x18] sm:$0xf]
  %v9248 = vld [vmem:[%s9240 + $0x1c] sm:$0xf]
  %v9313 = vunpack.c.l.b16 %v9176
  %v9314 = vunpack.c.l.b16 %v9177
  %v9315 = vunpack.c.l.b16 %v9178
  %v9316 = vunpack.c.l.b16 %v9179
  %v9317 = vunpack.c.l.b16 %v9180
  %v9318 = vunpack.c.l.b16 %v9181
  %v9319 = vunpack.c.l.b16 %v9182
  %v9320 = vunpack.c.l.b16 %v9183
  %v9321 = vunpack.c.l.b16 %v9184
  %v9322 = vunpack.c.l.b16 %v9185
  %v9323 = vunpack.c.l.b16 %v9186
  %v9324 = vunpack.c.l.b16 %v9187
  %v9325 = vunpack.c.l.b16 %v9188
  %v9326 = vunpack.c.l.b16 %v9189
  %v9327 = vunpack.c.l.b16 %v9190
  %v9328 = vunpack.c.l.b16 %v9191
  %v9329 = vunpack.c.l.b16 %v9192
  %v9330 = vunpack.c.l.b16 %v9193
  %v9331 = vunpack.c.l.b16 %v9194
  %v9332 = vunpack.c.l.b16 %v9195
  %v9333 = vunpack.c.l.b16 %v9196
  %v9334 = vunpack.c.l.b16 %v9197
  %v9335 = vunpack.c.l.b16 %v9198
  %v9336 = vunpack.c.l.b16 %v9199
  %v9337 = vunpack.c.l.b16 %v9200
  %v9338 = vunpack.c.l.b16 %v9201
  %v9339 = vunpack.c.l.b16 %v9202
  %v9340 = vunpack.c.l.b16 %v9203
  %v9341 = vunpack.c.l.b16 %v9204
  %v9342 = vunpack.c.l.b16 %v9205
  %v9343 = vunpack.c.l.b16 %v9206
  %v9344 = vunpack.c.l.b16 %v9207
  %v9345 = vunpack.c.l.b16 %v9208
  %v9346 = vunpack.c.l.b16 %v9209
  %v9347 = vunpack.c.l.b16 %v9210
  %v9348 = vunpack.c.l.b16 %v9211
  %v9349 = vunpack.c.l.b16 %v9212
  %v9350 = vunpack.c.l.b16 %v9213
  %v9351 = vunpack.c.l.b16 %v9214
  %v9352 = vunpack.c.l.b16 %v9215
  %v9353 = vunpack.c.l.b16 %v9216
  %v9354 = vunpack.c.l.b16 %v9217
  %v9355 = vunpack.c.l.b16 %v9218
  %v9356 = vunpack.c.l.b16 %v9219
  %v9357 = vunpack.c.l.b16 %v9220
  %v9358 = vunpack.c.l.b16 %v9221
  %v9359 = vunpack.c.l.b16 %v9222
  %v9360 = vunpack.c.l.b16 %v9223
  %v9361 = vunpack.c.l.b16 %v9224
  %v9362 = vunpack.c.l.b16 %v9225
  %v9363 = vunpack.c.l.b16 %v9226
  %v9364 = vunpack.c.l.b16 %v9227
  %v9365 = vunpack.c.l.b16 %v9228
  %v9366 = vunpack.c.l.b16 %v9229
  %v9367 = vunpack.c.l.b16 %v9230
  %v9368 = vunpack.c.l.b16 %v9231
  %v9369 = vunpack.c.l.b16 %v9232
  %v9370 = vunpack.c.l.b16 %v9233
  %v9371 = vunpack.c.l.b16 %v9234
  %v9372 = vunpack.c.l.b16 %v9235
  %v9373 = vunpack.c.l.b16 %v9236
  %v9374 = vunpack.c.l.b16 %v9237
  %v9375 = vunpack.c.l.b16 %v9238
  %v9376 = vunpack.c.l.b16 %v9239
  %v9377 = vpack.c.b16 %v9314, %v9313
  %v9378 = vpack.c.b16 %v9316, %v9315
  %v9379 = vpack.c.b16 %v9318, %v9317
  %v9380 = vpack.c.b16 %v9320, %v9319
  %v9381 = vpack.c.b16 %v9322, %v9321
  %v9382 = vpack.c.b16 %v9324, %v9323
  %v9383 = vpack.c.b16 %v9326, %v9325
  %v9384 = vpack.c.b16 %v9328, %v9327
  %v9385 = vpack.c.b16 %v9330, %v9329
  %v9386 = vpack.c.b16 %v9332, %v9331
  %v9387 = vpack.c.b16 %v9334, %v9333
  %v9388 = vpack.c.b16 %v9336, %v9335
  %v9389 = vpack.c.b16 %v9338, %v9337
  %v9390 = vpack.c.b16 %v9340, %v9339
  %v9391 = vpack.c.b16 %v9342, %v9341
  %v9392 = vpack.c.b16 %v9344, %v9343
  %v9393 = vpack.c.b16 %v9346, %v9345
  %v9394 = vpack.c.b16 %v9348, %v9347
  %v9395 = vpack.c.b16 %v9350, %v9349
  %v9396 = vpack.c.b16 %v9352, %v9351
  %v9397 = vpack.c.b16 %v9354, %v9353
  %v9398 = vpack.c.b16 %v9356, %v9355
  %v9399 = vpack.c.b16 %v9358, %v9357
  %v9400 = vpack.c.b16 %v9360, %v9359
  %v9401 = vpack.c.b16 %v9362, %v9361
  %v9402 = vpack.c.b16 %v9364, %v9363
  %v9403 = vpack.c.b16 %v9366, %v9365
  %v9404 = vpack.c.b16 %v9368, %v9367
  %v9405 = vpack.c.b16 %v9370, %v9369
  %v9406 = vpack.c.b16 %v9372, %v9371
  %v9407 = vpack.c.b16 %v9374, %v9373
  %v9408 = vpack.c.b16 %v9376, %v9375
  %v9417 = vunpack.c.l.b16 %v9241
  %v9418 = vunpack.c.l.b16 %v9242
  %v9419 = vunpack.c.l.b16 %v9243
  %v9420 = vunpack.c.l.b16 %v9244
  %v9421 = vunpack.c.l.b16 %v9245
  %v9422 = vunpack.c.l.b16 %v9246
  %v9423 = vunpack.c.l.b16 %v9247
  %v9424 = vunpack.c.l.b16 %v9248
  %v9425 = vpack.c.b16 %v9418, %v9417
  %v9426 = vpack.c.b16 %v9420, %v9419
  %v9427 = vpack.c.b16 %v9422, %v9421
  %v9428 = vpack.c.b16 %v9424, %v9423
  %v9434 = vsel %vm8221, %v9377, 0
  %v9437 = vsel %vm8221, %v9378, 0
  %v9440 = vsel %vm8221, %v9379, 0
  %v9443 = vsel %vm8221, %v9380, 0
  %v9446 = vsel %vm8221, %v9381, 0
  %v9449 = vsel %vm8221, %v9382, 0
  %v9452 = vsel %vm8221, %v9383, 0
  %v9455 = vsel %vm8221, %v9384, 0
  %v9458 = vsel %vm8221, %v9385, 0
  %v9461 = vsel %vm8221, %v9386, 0
  %v9464 = vsel %vm8221, %v9387, 0
  %v9467 = vsel %vm8221, %v9388, 0
  %v9470 = vsel %vm8221, %v9389, 0
  %v9473 = vsel %vm8221, %v9390, 0
  %v9476 = vsel %vm8221, %v9391, 0
  %v9479 = vsel %vm8221, %v9392, 0
  %v9482 = vsel %vm8221, %v9393, 0
  %v9485 = vsel %vm8221, %v9394, 0
  %v9488 = vsel %vm8221, %v9395, 0
  %v9491 = vsel %vm8221, %v9396, 0
  %v9494 = vsel %vm8221, %v9397, 0
  %v9497 = vsel %vm8221, %v9398, 0
  %v9500 = vsel %vm8221, %v9399, 0
  %v9503 = vsel %vm8221, %v9400, 0
  %v9506 = vsel %vm8221, %v9401, 0
  %v9509 = vsel %vm8221, %v9402, 0
  %v9512 = vsel %vm8221, %v9403, 0
  %v9515 = vsel %vm8221, %v9404, 0
  %v9518 = vsel %vm8221, %v9405, 0
  %v9521 = vsel %vm8221, %v9406, 0
  %v9524 = vsel %vm8221, %v9407, 0
  %v9527 = vsel %vm8221, %v9408, 0
  %9529 = vmatprep.subr.bf16.mxu0 0
  %9530 = vmatpush1.bf16.msra.mxu0 %v9425
  %9531 = vmatprep.subr.bf16.mxu0 0
  %9532 = vmatpush1.bf16.msra.mxu0 %v9426
  %9533 = vmatprep.subr.bf16.mxu0 0
  %9534 = vmatpush1.bf16.msra.mxu0 %v9427
  %9535 = vmatprep.subr.bf16.mxu0 0
  %9536 = vmatpush1.bf16.msra.mxu0 %v9428
  %9537 = vmatprep.subr.bf16.mxu0 0
  %9538 = vmatpush1.bf16.msra.mxu0 0
  %9539 = vmatprep.subr.bf16.mxu0 0
  %9540 = vmatpush1.bf16.msra.mxu0 0
  %9541 = vmatprep.subr.bf16.mxu0 0
  %9542 = vmatpush1.bf16.msra.mxu0 0
  %9543 = vmatprep.subr.bf16.mxu0 0
  %9544 = vmatpush1.bf16.msra.mxu0 0
  %9545 = vmatprep.subr.bf16.mxu0 0
  %9546 = vmatpush1.bf16.msra.mxu0 0
  %9547 = vmatprep.subr.bf16.mxu0 0
  %9548 = vmatpush1.bf16.msra.mxu0 0
  %9549 = vmatprep.subr.bf16.mxu0 0
  %9550 = vmatpush1.bf16.msra.mxu0 0
  %9551 = vmatprep.subr.bf16.mxu0 0
  %9552 = vmatpush1.bf16.msra.mxu0 0
  %9553 = vmatprep.subr.bf16.mxu0 0
  %9554 = vmatpush1.bf16.msra.mxu0 0
  %9555 = vmatprep.subr.bf16.mxu0 0
  %9556 = vmatpush1.bf16.msra.mxu0 0
  %9557 = vmatprep.subr.bf16.mxu0 0
  %9558 = vmatpush1.bf16.msra.mxu0 0
  %9559 = vmatprep.subr.bf16.mxu0 0
  %9560 = vmatpush1.bf16.msra.mxu0 0
  %9561 = vmatprep.mubr.bf16.mxu0 0
  %9562 = vmatmul.mubr.bf16.gmra.mrb[0].mxu0 %v9434
  %v9563 = vpop.f32.mrb[0].mxu0
  %v9564 = vadd.f32 0.0, %v9563
  %v9565 = vpop.f32.mrb[0].mxu0
  %v9566 = vpop.f32.mrb[0].mxu0
  %v9567 = vadd.f32 0.0, %v9566
  %v9568 = vpop.f32.mrb[0].mxu0
  %9569 = vmatprep.mubr.bf16.mxu0 0
  %9570 = vmatmul.mubr.bf16.gmra.mrb[0].mxu0 %v9437
  %v9571 = vpop.f32.mrb[0].mxu0
  %v9572 = vadd.f32 0.0, %v9571
  %v9573 = vpop.f32.mrb[0].mxu0
  %v9574 = vpop.f32.mrb[0].mxu0
  %v9575 = vadd.f32 0.0, %v9574
  %v9576 = vpop.f32.mrb[0].mxu0
  %9577 = vmatprep.mubr.bf16.mxu0 0
  %9578 = vmatmul.mubr.bf16.gmra.mrb[0].mxu0 %v9440
  %v9579 = vpop.f32.mrb[0].mxu0
  %v9580 = vadd.f32 0.0, %v9579
  %v9581 = vpop.f32.mrb[0].mxu0
  %v9582 = vpop.f32.mrb[0].mxu0
  %v9583 = vadd.f32 0.0, %v9582
  %v9584 = vpop.f32.mrb[0].mxu0
  %9585 = vmatprep.mubr.bf16.mxu0 0
  %9586 = vmatmul.mubr.bf16.gmra.mrb[0].mxu0 %v9443
  %v9587 = vpop.f32.mrb[0].mxu0
  %v9588 = vadd.f32 0.0, %v9587
  %v9589 = vpop.f32.mrb[0].mxu0
  %v9590 = vpop.f32.mrb[0].mxu0
  %v9591 = vadd.f32 0.0, %v9590
  %v9592 = vpop.f32.mrb[0].mxu0
  %9593 = vmatprep.mubr.bf16.mxu0 0
  %9594 = vmatmul.mubr.bf16.gmra.mrb[0].mxu0 %v9446
  %v9595 = vpop.f32.mrb[0].mxu0
  %v9596 = vadd.f32 0.0, %v9595
  %v9597 = vpop.f32.mrb[0].mxu0
  %v9598 = vpop.f32.mrb[0].mxu0
  %v9599 = vadd.f32 0.0, %v9598
  %v9600 = vpop.f32.mrb[0].mxu0
  %9601 = vmatprep.mubr.bf16.mxu0 0
  %9602 = vmatmul.mubr.bf16.gmra.mrb[0].mxu0 %v9449
  %v9603 = vpop.f32.mrb[0].mxu0
  %v9604 = vadd.f32 0.0, %v9603
  %v9605 = vpop.f32.mrb[0].mxu0
  %v9606 = vpop.f32.mrb[0].mxu0
  %v9607 = vadd.f32 0.0, %v9606
  %v9608 = vpop.f32.mrb[0].mxu0
  %9609 = vmatprep.mubr.bf16.mxu0 0
  %9610 = vmatmul.mubr.bf16.gmra.mrb[0].mxu0 %v9452
  %v9611 = vpop.f32.mrb[0].mxu0
  %v9612 = vadd.f32 0.0, %v9611
  %v9613 = vpop.f32.mrb[0].mxu0
  %v9614 = vpop.f32.mrb[0].mxu0
  %v9615 = vadd.f32 0.0, %v9614
  %v9616 = vpop.f32.mrb[0].mxu0
  %9617 = vmatprep.mubr.bf16.mxu0 0
  %9618 = vmatmul.mubr.bf16.gmra.mrb[0].mxu0 %v9455
  %v9619 = vpop.f32.mrb[0].mxu0
  %v9620 = vadd.f32 0.0, %v9619
  %v9621 = vpop.f32.mrb[0].mxu0
  %v9622 = vpop.f32.mrb[0].mxu0
  %v9623 = vadd.f32 0.0, %v9622
  %v9624 = vpop.f32.mrb[0].mxu0
  %9625 = vmatprep.mubr.bf16.mxu0 0
  %9626 = vmatmul.mubr.bf16.gmra.mrb[0].mxu0 %v9458
  %v9627 = vpop.f32.mrb[0].mxu0
  %v9628 = vadd.f32 0.0, %v9627
  %v9629 = vpop.f32.mrb[0].mxu0
  %v9630 = vpop.f32.mrb[0].mxu0
  %v9631 = vadd.f32 0.0, %v9630
  %v9632 = vpop.f32.mrb[0].mxu0
  %9633 = vmatprep.mubr.bf16.mxu0 0
  %9634 = vmatmul.mubr.bf16.gmra.mrb[0].mxu0 %v9461
  %v9635 = vpop.f32.mrb[0].mxu0
  %v9636 = vadd.f32 0.0, %v9635
  %v9637 = vpop.f32.mrb[0].mxu0
  %v9638 = vpop.f32.mrb[0].mxu0
  %v9639 = vadd.f32 0.0, %v9638
  %v9640 = vpop.f32.mrb[0].mxu0
  %9641 = vmatprep.mubr.bf16.mxu0 0
  %9642 = vmatmul.mubr.bf16.gmra.mrb[0].mxu0 %v9464
  %v9643 = vpop.f32.mrb[0].mxu0
  %v9644 = vadd.f32 0.0, %v9643
  %v9645 = vpop.f32.mrb[0].mxu0
  %v9646 = vpop.f32.mrb[0].mxu0
  %v9647 = vadd.f32 0.0, %v9646
  %v9648 = vpop.f32.mrb[0].mxu0
  %9649 = vmatprep.mubr.bf16.mxu0 0
  %9650 = vmatmul.mubr.bf16.gmra.mrb[0].mxu0 %v9467
  %v9651 = vpop.f32.mrb[0].mxu0
  %v9652 = vadd.f32 0.0, %v9651
  %v9653 = vpop.f32.mrb[0].mxu0
  %v9654 = vpop.f32.mrb[0].mxu0
  %v9655 = vadd.f32 0.0, %v9654
  %v9656 = vpop.f32.mrb[0].mxu0
  %9657 = vmatprep.mubr.bf16.mxu0 0
  %9658 = vmatmul.mubr.bf16.gmra.mrb[0].mxu0 %v9470
  %v9659 = vpop.f32.mrb[0].mxu0
  %v9660 = vadd.f32 0.0, %v9659
  %v9661 = vpop.f32.mrb[0].mxu0
  %v9662 = vpop.f32.mrb[0].mxu0
  %v9663 = vadd.f32 0.0, %v9662
  %v9664 = vpop.f32.mrb[0].mxu0
  %9665 = vmatprep.mubr.bf16.mxu0 0
  %9666 = vmatmul.mubr.bf16.gmra.mrb[0].mxu0 %v9473
  %v9667 = vpop.f32.mrb[0].mxu0
  %v9668 = vadd.f32 0.0, %v9667
  %v9669 = vpop.f32.mrb[0].mxu0
  %v9670 = vpop.f32.mrb[0].mxu0
  %v9671 = vadd.f32 0.0, %v9670
  %v9672 = vpop.f32.mrb[0].mxu0
  %9673 = vmatprep.mubr.bf16.mxu0 0
  %9674 = vmatmul.mubr.bf16.gmra.mrb[0].mxu0 %v9476
  %v9675 = vpop.f32.mrb[0].mxu0
  %v9676 = vadd.f32 0.0, %v9675
  %v9677 = vpop.f32.mrb[0].mxu0
  %v9678 = vpop.f32.mrb[0].mxu0
  %v9679 = vadd.f32 0.0, %v9678
  %v9680 = vpop.f32.mrb[0].mxu0
  %9681 = vmatprep.mubr.bf16.mxu0 0
  %9682 = vmatmul.mubr.bf16.gmra.mrb[0].mxu0 %v9479
  %v9683 = vpop.f32.mrb[0].mxu0
  %v9684 = vadd.f32 0.0, %v9683
  %v9685 = vpop.f32.mrb[0].mxu0
  %v9686 = vpop.f32.mrb[0].mxu0
  %v9687 = vadd.f32 0.0, %v9686
  %v9688 = vpop.f32.mrb[0].mxu0
  %9689 = vmatprep.mubr.bf16.mxu0 0
  %9690 = vmatmul.mubr.bf16.gmra.mrb[0].mxu0 %v9482
  %v9691 = vpop.f32.mrb[0].mxu0
  %v9692 = vadd.f32 0.0, %v9691
  %v9693 = vpop.f32.mrb[0].mxu0
  %v9694 = vpop.f32.mrb[0].mxu0
  %v9695 = vadd.f32 0.0, %v9694
  %v9696 = vpop.f32.mrb[0].mxu0
  %9697 = vmatprep.mubr.bf16.mxu0 0
  %9698 = vmatmul.mubr.bf16.gmra.mrb[0].mxu0 %v9485
  %v9699 = vpop.f32.mrb[0].mxu0
  %v9700 = vadd.f32 0.0, %v9699
  %v9701 = vpop.f32.mrb[0].mxu0
  %v9702 = vpop.f32.mrb[0].mxu0
  %v9703 = vadd.f32 0.0, %v9702
  %v9704 = vpop.f32.mrb[0].mxu0
  %9705 = vmatprep.mubr.bf16.mxu0 0
  %9706 = vmatmul.mubr.bf16.gmra.mrb[0].mxu0 %v9488
  %v9707 = vpop.f32.mrb[0].mxu0
  %v9708 = vadd.f32 0.0, %v9707
  %v9709 = vpop.f32.mrb[0].mxu0
  %v9710 = vpop.f32.mrb[0].mxu0
  %v9711 = vadd.f32 0.0, %v9710
  %v9712 = vpop.f32.mrb[0].mxu0
  %9713 = vmatprep.mubr.bf16.mxu0 0
  %9714 = vmatmul.mubr.bf16.gmra.mrb[0].mxu0 %v9491
  %v9715 = vpop.f32.mrb[0].mxu0
  %v9716 = vadd.f32 0.0, %v9715
  %v9717 = vpop.f32.mrb[0].mxu0
  %v9718 = vpop.f32.mrb[0].mxu0
  %v9719 = vadd.f32 0.0, %v9718
  %v9720 = vpop.f32.mrb[0].mxu0
  %9721 = vmatprep.mubr.bf16.mxu0 0
  %9722 = vmatmul.mubr.bf16.gmra.mrb[0].mxu0 %v9494
  %v9723 = vpop.f32.mrb[0].mxu0
  %v9724 = vadd.f32 0.0, %v9723
  %v9725 = vpop.f32.mrb[0].mxu0
  %v9726 = vpop.f32.mrb[0].mxu0
  %v9727 = vadd.f32 0.0, %v9726
  %v9728 = vpop.f32.mrb[0].mxu0
  %9729 = vmatprep.mubr.bf16.mxu0 0
  %9730 = vmatmul.mubr.bf16.gmra.mrb[0].mxu0 %v9497
  %v9731 = vpop.f32.mrb[0].mxu0
  %v9732 = vadd.f32 0.0, %v9731
  %v9733 = vpop.f32.mrb[0].mxu0
  %v9734 = vpop.f32.mrb[0].mxu0
  %v9735 = vadd.f32 0.0, %v9734
  %v9736 = vpop.f32.mrb[0].mxu0
  %9737 = vmatprep.mubr.bf16.mxu0 0
  %9738 = vmatmul.mubr.bf16.gmra.mrb[0].mxu0 %v9500
  %v9739 = vpop.f32.mrb[0].mxu0
  %v9740 = vadd.f32 0.0, %v9739
  %v9741 = vpop.f32.mrb[0].mxu0
  %v9742 = vpop.f32.mrb[0].mxu0
  %v9743 = vadd.f32 0.0, %v9742
  %v9744 = vpop.f32.mrb[0].mxu0
  %9745 = vmatprep.mubr.bf16.mxu0 0
  %9746 = vmatmul.mubr.bf16.gmra.mrb[0].mxu0 %v9503
  %v9747 = vpop.f32.mrb[0].mxu0
  %v9748 = vadd.f32 0.0, %v9747
  %v9749 = vpop.f32.mrb[0].mxu0
  %v9750 = vpop.f32.mrb[0].mxu0
  %v9751 = vadd.f32 0.0, %v9750
  %v9752 = vpop.f32.mrb[0].mxu0
  %9753 = vmatprep.mubr.bf16.mxu0 0
  %9754 = vmatmul.mubr.bf16.gmra.mrb[0].mxu0 %v9506
  %v9755 = vpop.f32.mrb[0].mxu0
  %v9756 = vadd.f32 0.0, %v9755
  %v9757 = vpop.f32.mrb[0].mxu0
  %v9758 = vpop.f32.mrb[0].mxu0
  %v9759 = vadd.f32 0.0, %v9758
  %v9760 = vpop.f32.mrb[0].mxu0
  %9761 = vmatprep.mubr.bf16.mxu0 0
  %9762 = vmatmul.mubr.bf16.gmra.mrb[0].mxu0 %v9509
  %v9763 = vpop.f32.mrb[0].mxu0
  %v9764 = vadd.f32 0.0, %v9763
  %v9765 = vpop.f32.mrb[0].mxu0
  %v9766 = vpop.f32.mrb[0].mxu0
  %v9767 = vadd.f32 0.0, %v9766
  %v9768 = vpop.f32.mrb[0].mxu0
  %9769 = vmatprep.mubr.bf16.mxu0 0
  %9770 = vmatmul.mubr.bf16.gmra.mrb[0].mxu0 %v9512
  %v9771 = vpop.f32.mrb[0].mxu0
  %v9772 = vadd.f32 0.0, %v9771
  %v9773 = vpop.f32.mrb[0].mxu0
  %v9774 = vpop.f32.mrb[0].mxu0
  %v9775 = vadd.f32 0.0, %v9774
  %v9776 = vpop.f32.mrb[0].mxu0
  %9777 = vmatprep.mubr.bf16.mxu0 0
  %9778 = vmatmul.mubr.bf16.gmra.mrb[0].mxu0 %v9515
  %v9779 = vpop.f32.mrb[0].mxu0
  %v9780 = vadd.f32 0.0, %v9779
  %v9781 = vpop.f32.mrb[0].mxu0
  %v9782 = vpop.f32.mrb[0].mxu0
  %v9783 = vadd.f32 0.0, %v9782
  %v9784 = vpop.f32.mrb[0].mxu0
  %9785 = vmatprep.mubr.bf16.mxu0 0
  %9786 = vmatmul.mubr.bf16.gmra.mrb[0].mxu0 %v9518
  %v9787 = vpop.f32.mrb[0].mxu0
  %v9788 = vadd.f32 0.0, %v9787
  %v9789 = vpop.f32.mrb[0].mxu0
  %v9790 = vpop.f32.mrb[0].mxu0
  %v9791 = vadd.f32 0.0, %v9790
  %v9792 = vpop.f32.mrb[0].mxu0
  %9793 = vmatprep.mubr.bf16.mxu0 0
  %9794 = vmatmul.mubr.bf16.gmra.mrb[0].mxu0 %v9521
  %v9795 = vpop.f32.mrb[0].mxu0
  %v9796 = vadd.f32 0.0, %v9795
  %v9797 = vpop.f32.mrb[0].mxu0
  %v9798 = vpop.f32.mrb[0].mxu0
  %v9799 = vadd.f32 0.0, %v9798
  %v9800 = vpop.f32.mrb[0].mxu0
  %9801 = vmatprep.mubr.bf16.mxu0 0
  %9802 = vmatmul.mubr.bf16.gmra.mrb[0].mxu0 %v9524
  %v9803 = vpop.f32.mrb[0].mxu0
  %v9804 = vadd.f32 0.0, %v9803
  %v9805 = vpop.f32.mrb[0].mxu0
  %v9806 = vpop.f32.mrb[0].mxu0
  %v9807 = vadd.f32 0.0, %v9806
  %v9808 = vpop.f32.mrb[0].mxu0
  %9809 = vmatprep.mubr.bf16.mxu0 0
  %9810 = vmatmul.mubr.bf16.gmra.mrb[0].mxu0 %v9527
  %v9811 = vpop.f32.mrb[0].mxu0
  %v9812 = vadd.f32 0.0, %v9811
  %v9813 = vpop.f32.mrb[0].mxu0
  %v9814 = vpop.f32.mrb[0].mxu0
  %v9815 = vadd.f32 0.0, %v9814
  %v9816 = vpop.f32.mrb[0].mxu0
  %9817 = vdwg.mxu0
  %v9818 = vadd.f32 %v8922, %v9564
  %v9819 = vadd.f32 %v8925, %v9567
  %v9820 = vadd.f32 %v8930, %v9572
  %v9821 = vadd.f32 %v8933, %v9575
  %v9822 = vadd.f32 %v8938, %v9580
  %v9823 = vadd.f32 %v8941, %v9583
  %v9824 = vadd.f32 %v8946, %v9588
  %v9825 = vadd.f32 %v8949, %v9591
  %v9826 = vadd.f32 %v8954, %v9596
  %v9827 = vadd.f32 %v8957, %v9599
  %v9828 = vadd.f32 %v8962, %v9604
  %v9829 = vadd.f32 %v8965, %v9607
  %v9830 = vadd.f32 %v8970, %v9612
  %v9831 = vadd.f32 %v8973, %v9615
  %v9832 = vadd.f32 %v8978, %v9620
  %v9833 = vadd.f32 %v8981, %v9623
  %v9834 = vadd.f32 %v8986, %v9628
  %v9835 = vadd.f32 %v8989, %v9631
  %v9836 = vadd.f32 %v8994, %v9636
  %v9837 = vadd.f32 %v8997, %v9639
  %v9838 = vadd.f32 %v9002, %v9644
  %v9839 = vadd.f32 %v9005, %v9647
  %v9840 = vadd.f32 %v9010, %v9652
  %v9841 = vadd.f32 %v9013, %v9655
  %v9842 = vadd.f32 %v9018, %v9660
  %v9843 = vadd.f32 %v9021, %v9663
  %v9844 = vadd.f32 %v9026, %v9668
  %v9845 = vadd.f32 %v9029, %v9671
  %v9846 = vadd.f32 %v9034, %v9676
  %v9847 = vadd.f32 %v9037, %v9679
  %v9848 = vadd.f32 %v9042, %v9684
  %v9849 = vadd.f32 %v9045, %v9687
  %v9850 = vadd.f32 %v9050, %v9692
  %v9851 = vadd.f32 %v9053, %v9695
  %v9852 = vadd.f32 %v9058, %v9700
  %v9853 = vadd.f32 %v9061, %v9703
  %v9854 = vadd.f32 %v9066, %v9708
  %v9855 = vadd.f32 %v9069, %v9711
  %v9856 = vadd.f32 %v9074, %v9716
  %v9857 = vadd.f32 %v9077, %v9719
  %v9858 = vadd.f32 %v9082, %v9724
  %v9859 = vadd.f32 %v9085, %v9727
  %v9860 = vadd.f32 %v9090, %v9732
  %v9861 = vadd.f32 %v9093, %v9735
  %v9862 = vadd.f32 %v9098, %v9740
  %v9863 = vadd.f32 %v9101, %v9743
  %v9864 = vadd.f32 %v9106, %v9748
  %v9865 = vadd.f32 %v9109, %v9751
  %v9866 = vadd.f32 %v9114, %v9756
  %v9867 = vadd.f32 %v9117, %v9759
  %v9868 = vadd.f32 %v9122, %v9764
  %v9869 = vadd.f32 %v9125, %v9767
  %v9870 = vadd.f32 %v9130, %v9772
  %v9871 = vadd.f32 %v9133, %v9775
  %v9872 = vadd.f32 %v9138, %v9780
  %v9873 = vadd.f32 %v9141, %v9783
  %v9874 = vadd.f32 %v9146, %v9788
  %v9875 = vadd.f32 %v9149, %v9791
  %v9876 = vadd.f32 %v9154, %v9796
  %v9877 = vadd.f32 %v9157, %v9799
  %v9878 = vadd.f32 %v9162, %v9804
  %v9879 = vadd.f32 %v9165, %v9807
  %v9880 = vadd.f32 %v9170, %v9812
  %v9881 = vadd.f32 %v9173, %v9815
  %v9882 = vld [vmem:[%s6606] sm:$0xf]
  %v9883 = vld [vmem:[%s6606 + $0x4] sm:$0x1]
  %v9884 = vld [vmem:[%s6606 + $0x8] sm:$0xf]
  %v9885 = vld [vmem:[%s6606 + $0xc] sm:$0x1]
  %v9886 = vld [vmem:[%s6606 + $0x10] sm:$0xf]
  %v9887 = vld [vmem:[%s6606 + $0x14] sm:$0x1]
  %v9888 = vld [vmem:[%s6606 + $0x18] sm:$0xf]
  %v9889 = vld [vmem:[%s6606 + $0x1c] sm:$0x1]
  %v9890 = vld [vmem:[%s6606 + $0x20] sm:$0xf]
  %v9891 = vld [vmem:[%s6606 + $0x24] sm:$0x1]
  %v9892 = vld [vmem:[%s6606 + $0x28] sm:$0xf]
  %v9893 = vld [vmem:[%s6606 + $0x2c] sm:$0x1]
  %v9894 = vld [vmem:[%s6606 + $0x30] sm:$0xf]
  %v9895 = vld [vmem:[%s6606 + $0x34] sm:$0x1]
  %v9896 = vld [vmem:[%s6606 + $0x38] sm:$0xf]
  %v9897 = vld [vmem:[%s6606 + $0x3c] sm:$0x1]
  %v9898 = vld [vmem:[%s6606 + $0x48] sm:$0xf]
  %v9899 = vld [vmem:[%s6606 + $0x4c] sm:$0x1]
  %v9900 = vld [vmem:[%s6606 + $0x50] sm:$0xf]
  %v9901 = vld [vmem:[%s6606 + $0x54] sm:$0x1]
  %v9902 = vld [vmem:[%s6606 + $0x58] sm:$0xf]
  %v9903 = vld [vmem:[%s6606 + $0x5c] sm:$0x1]
  %v9904 = vld [vmem:[%s6606 + $0x60] sm:$0xf]
  %v9905 = vld [vmem:[%s6606 + $0x64] sm:$0x1]
  %v9906 = vld [vmem:[%s6606 + $0x68] sm:$0xf]
  %v9907 = vld [vmem:[%s6606 + $0x6c] sm:$0x1]
  %v9908 = vld [vmem:[%s6606 + $0x70] sm:$0xf]
  %v9909 = vld [vmem:[%s6606 + $0x74] sm:$0x1]
  %v9910 = vld [vmem:[%s6606 + $0x78] sm:$0xf]
  %v9911 = vld [vmem:[%s6606 + $0x7c] sm:$0x1]
  %v9912 = vld [vmem:[%s6606 + $0x80] sm:$0xf]
  %v9913 = vld [vmem:[%s6606 + $0x84] sm:$0x1]
  %v9914 = vld [vmem:[%s6606 + $0x90] sm:$0xf]
  %v9915 = vld [vmem:[%s6606 + $0x94] sm:$0x1]
  %v9916 = vld [vmem:[%s6606 + $0x98] sm:$0xf]
  %v9917 = vld [vmem:[%s6606 + $0x9c] sm:$0x1]
  %v9918 = vld [vmem:[%s6606 + $0xa0] sm:$0xf]
  %v9919 = vld [vmem:[%s6606 + $0xa4] sm:$0x1]
  %v9920 = vld [vmem:[%s6606 + $0xa8] sm:$0xf]
  %v9921 = vld [vmem:[%s6606 + $0xac] sm:$0x1]
  %v9922 = vld [vmem:[%s6606 + $0xb0] sm:$0xf]
  %v9923 = vld [vmem:[%s6606 + $0xb4] sm:$0x1]
  %v9924 = vld [vmem:[%s6606 + $0xb8] sm:$0xf]
  %v9925 = vld [vmem:[%s6606 + $0xbc] sm:$0x1]
  %v9926 = vld [vmem:[%s6606 + $0xc0] sm:$0xf]
  %v9927 = vld [vmem:[%s6606 + $0xc4] sm:$0x1]
  %v9928 = vld [vmem:[%s6606 + $0xc8] sm:$0xf]
  %v9929 = vld [vmem:[%s6606 + $0xcc] sm:$0x1]
  %v9930 = vld [vmem:[%s6606 + $0xd8] sm:$0xf]
  %v9931 = vld [vmem:[%s6606 + $0xdc] sm:$0x1]
  %v9932 = vld [vmem:[%s6606 + $0xe0] sm:$0xf]
  %v9933 = vld [vmem:[%s6606 + $0xe4] sm:$0x1]
  %v9934 = vld [vmem:[%s6606 + $0xe8] sm:$0xf]
  %v9935 = vld [vmem:[%s6606 + $0xec] sm:$0x1]
  %v9936 = vld [vmem:[%s6606 + $0xf0] sm:$0xf]
  %v9937 = vld [vmem:[%s6606 + $0xf4] sm:$0x1]
  %v9938 = vld [vmem:[%s6606 + $0xf8] sm:$0xf]
  %v9939 = vld [vmem:[%s6606 + $0xfc] sm:$0x1]
  %v9940 = vld [vmem:[%s6606 + $0x100] sm:$0xf]
  %v9941 = vld [vmem:[%s6606 + $0x104] sm:$0x1]
  %v9942 = vld [vmem:[%s6606 + $0x108] sm:$0xf]
  %v9943 = vld [vmem:[%s6606 + $0x10c] sm:$0x1]
  %v9944 = vld [vmem:[%s6606 + $0x110] sm:$0xf]
  %v9945 = vld [vmem:[%s6606 + $0x114] sm:$0x1]
  %v9946 = vld [vmem:[%s6606 + $0x120] sm:$0xf]
  %v9947 = vld [vmem:[%s6606 + $0x124] sm:$0x1]
  %v9948 = vld [vmem:[%s6606 + $0x128] sm:$0xf]
  %v9949 = vld [vmem:[%s6606 + $0x12c] sm:$0x1]
  %v9950 = vld [vmem:[%s6606 + $0x130] sm:$0xf]
  %v9951 = vld [vmem:[%s6606 + $0x134] sm:$0x1]
  %v9952 = vld [vmem:[%s6606 + $0x138] sm:$0xf]
  %v9953 = vld [vmem:[%s6606 + $0x13c] sm:$0x1]
  %v9954 = vld [vmem:[%s6606 + $0x140] sm:$0xf]
  %v9955 = vld [vmem:[%s6606 + $0x144] sm:$0x1]
  %v9956 = vld [vmem:[%s6606 + $0x148] sm:$0xf]
  %v9957 = vld [vmem:[%s6606 + $0x14c] sm:$0x1]
  %v9958 = vld [vmem:[%s6606 + $0x150] sm:$0xf]
  %v9959 = vld [vmem:[%s6606 + $0x154] sm:$0x1]
  %v9960 = vld [vmem:[%s6606 + $0x158] sm:$0xf]
  %v9961 = vld [vmem:[%s6606 + $0x15c] sm:$0x1]
  %v9962 = vld [vmem:[%s6606 + $0x168] sm:$0xf]
  %v9963 = vld [vmem:[%s6606 + $0x16c] sm:$0x1]
  %v9964 = vld [vmem:[%s6606 + $0x170] sm:$0xf]
  %v9965 = vld [vmem:[%s6606 + $0x174] sm:$0x1]
  %v9966 = vld [vmem:[%s6606 + $0x178] sm:$0xf]
  %v9967 = vld [vmem:[%s6606 + $0x17c] sm:$0x1]
  %v9968 = vld [vmem:[%s6606 + $0x180] sm:$0xf]
  %v9969 = vld [vmem:[%s6606 + $0x184] sm:$0x1]
  %v9970 = vld [vmem:[%s6606 + $0x188] sm:$0xf]
  %v9971 = vld [vmem:[%s6606 + $0x18c] sm:$0x1]
  %v9972 = vld [vmem:[%s6606 + $0x190] sm:$0xf]
  %v9973 = vld [vmem:[%s6606 + $0x194] sm:$0x1]
  %v9974 = vld [vmem:[%s6606 + $0x198] sm:$0xf]
  %v9975 = vld [vmem:[%s6606 + $0x19c] sm:$0x1]
  %v9976 = vld [vmem:[%s6606 + $0x1a0] sm:$0xf]
  %v9977 = vld [vmem:[%s6606 + $0x1a4] sm:$0x1]
  %v9978 = vld [vmem:[%s6606 + $0x1b0] sm:$0xf]
  %v9979 = vld [vmem:[%s6606 + $0x1b4] sm:$0x1]
  %v9980 = vld [vmem:[%s6606 + $0x1b8] sm:$0xf]
  %v9981 = vld [vmem:[%s6606 + $0x1bc] sm:$0x1]
  %v9982 = vld [vmem:[%s6606 + $0x1c0] sm:$0xf]
  %v9983 = vld [vmem:[%s6606 + $0x1c4] sm:$0x1]
  %v9984 = vld [vmem:[%s6606 + $0x1c8] sm:$0xf]
  %v9985 = vld [vmem:[%s6606 + $0x1cc] sm:$0x1]
  %v9986 = vld [vmem:[%s6606 + $0x1d0] sm:$0xf]
  %v9987 = vld [vmem:[%s6606 + $0x1d4] sm:$0x1]
  %v9988 = vld [vmem:[%s6606 + $0x1d8] sm:$0xf]
  %v9989 = vld [vmem:[%s6606 + $0x1dc] sm:$0x1]
  %v9990 = vld [vmem:[%s6606 + $0x1e0] sm:$0xf]
  %v9991 = vld [vmem:[%s6606 + $0x1e4] sm:$0x1]
  %v9992 = vld [vmem:[%s6606 + $0x1e8] sm:$0xf]
  %v9993 = vld [vmem:[%s6606 + $0x1ec] sm:$0x1]
  %v9994 = vld [vmem:[%s6606 + $0x1f8] sm:$0xf]
  %v9995 = vld [vmem:[%s6606 + $0x1fc] sm:$0x1]
  %v9996 = vld [vmem:[%s6606 + $0x200] sm:$0xf]
  %v9997 = vld [vmem:[%s6606 + $0x204] sm:$0x1]
  %v9998 = vld [vmem:[%s6606 + $0x208] sm:$0xf]
  %v9999 = vld [vmem:[%s6606 + $0x20c] sm:$0x1]
  %v10000 = vld [vmem:[%s6606 + $0x210] sm:$0xf]
  %v10001 = vld [vmem:[%s6606 + $0x214] sm:$0x1]
  %v10002 = vld [vmem:[%s6606 + $0x218] sm:$0xf]
  %v10003 = vld [vmem:[%s6606 + $0x21c] sm:$0x1]
  %v10004 = vld [vmem:[%s6606 + $0x220] sm:$0xf]
  %v10005 = vld [vmem:[%s6606 + $0x224] sm:$0x1]
  %v10006 = vld [vmem:[%s6606 + $0x228] sm:$0xf]
  %v10007 = vld [vmem:[%s6606 + $0x22c] sm:$0x1]
  %v10008 = vld [vmem:[%s6606 + $0x230] sm:$0xf]
  %v10009 = vld [vmem:[%s6606 + $0x234] sm:$0x1]
  %v10011 = vshrl.u32 %v9882, 16
  %v10013 = vrot.slane %v10011, 4
  %v10014 = vshll.u32 %v9882, 16
  %v10016 = vrot.slane %v10014, 5
  %v10017 = vor.u32 %v10013, %v10016
  %v10018 = vrot.slane %v10017, 4
  %v10020 = vshll.u32 %v9883, 16
  %v10022 = vrot.slane %v10020, 5
  %v10023 = vsel %vm151, %v10018, %v10022
  %v10025 = vshrl.u32 %v9884, 16
  %v10027 = vrot.slane %v10025, 4
  %v10028 = vshll.u32 %v9884, 16
  %v10030 = vrot.slane %v10028, 5
  %v10031 = vor.u32 %v10027, %v10030
  %v10032 = vrot.slane %v10031, 4
  %v10034 = vshll.u32 %v9885, 16
  %v10036 = vrot.slane %v10034, 5
  %v10037 = vsel %vm151, %v10032, %v10036
  %v10039 = vshrl.u32 %v9886, 16
  %v10041 = vrot.slane %v10039, 4
  %v10042 = vshll.u32 %v9886, 16
  %v10044 = vrot.slane %v10042, 5
  %v10045 = vor.u32 %v10041, %v10044
  %v10046 = vrot.slane %v10045, 4
  %v10048 = vshll.u32 %v9887, 16
  %v10050 = vrot.slane %v10048, 5
  %v10051 = vsel %vm151, %v10046, %v10050
  %v10053 = vshrl.u32 %v9888, 16
  %v10055 = vrot.slane %v10053, 4
  %v10056 = vshll.u32 %v9888, 16
  %v10058 = vrot.slane %v10056, 5
  %v10059 = vor.u32 %v10055, %v10058
  %v10060 = vrot.slane %v10059, 4
  %v10062 = vshll.u32 %v9889, 16
  %v10064 = vrot.slane %v10062, 5
  %v10065 = vsel %vm151, %v10060, %v10064
  %v10067 = vshrl.u32 %v9890, 16
  %v10069 = vrot.slane %v10067, 4
  %v10070 = vshll.u32 %v9890, 16
  %v10072 = vrot.slane %v10070, 5
  %v10073 = vor.u32 %v10069, %v10072
  %v10074 = vrot.slane %v10073, 4
  %v10076 = vshll.u32 %v9891, 16
  %v10078 = vrot.slane %v10076, 5
  %v10079 = vsel %vm151, %v10074, %v10078
  %v10081 = vshrl.u32 %v9892, 16
  %v10083 = vrot.slane %v10081, 4
  %v10084 = vshll.u32 %v9892, 16
  %v10086 = vrot.slane %v10084, 5
  %v10087 = vor.u32 %v10083, %v10086
  %v10088 = vrot.slane %v10087, 4
  %v10090 = vshll.u32 %v9893, 16
  %v10092 = vrot.slane %v10090, 5
  %v10093 = vsel %vm151, %v10088, %v10092
  %v10095 = vshrl.u32 %v9894, 16
  %v10097 = vrot.slane %v10095, 4
  %v10098 = vshll.u32 %v9894, 16
  %v10100 = vrot.slane %v10098, 5
  %v10101 = vor.u32 %v10097, %v10100
  %v10102 = vrot.slane %v10101, 4
  %v10104 = vshll.u32 %v9895, 16
  %v10106 = vrot.slane %v10104, 5
  %v10107 = vsel %vm151, %v10102, %v10106
  %v10109 = vshrl.u32 %v9896, 16
  %v10111 = vrot.slane %v10109, 4
  %v10112 = vshll.u32 %v9896, 16
  %v10114 = vrot.slane %v10112, 5
  %v10115 = vor.u32 %v10111, %v10114
  %v10116 = vrot.slane %v10115, 4
  %v10118 = vshll.u32 %v9897, 16
  %v10120 = vrot.slane %v10118, 5
  %v10121 = vsel %vm151, %v10116, %v10120
  %v10123 = vshrl.u32 %v9898, 16
  %v10125 = vrot.slane %v10123, 4
  %v10126 = vshll.u32 %v9898, 16
  %v10128 = vrot.slane %v10126, 5
  %v10129 = vor.u32 %v10125, %v10128
  %v10130 = vrot.slane %v10129, 4
  %v10132 = vshll.u32 %v9899, 16
  %v10134 = vrot.slane %v10132, 5
  %v10135 = vsel %vm151, %v10130, %v10134
  %v10137 = vshrl.u32 %v9900, 16
  %v10139 = vrot.slane %v10137, 4
  %v10140 = vshll.u32 %v9900, 16
  %v10142 = vrot.slane %v10140, 5
  %v10143 = vor.u32 %v10139, %v10142
  %v10144 = vrot.slane %v10143, 4
  %v10146 = vshll.u32 %v9901, 16
  %v10148 = vrot.slane %v10146, 5
  %v10149 = vsel %vm151, %v10144, %v10148
  %v10151 = vshrl.u32 %v9902, 16
  %v10153 = vrot.slane %v10151, 4
  %v10154 = vshll.u32 %v9902, 16
  %v10156 = vrot.slane %v10154, 5
  %v10157 = vor.u32 %v10153, %v10156
  %v10158 = vrot.slane %v10157, 4
  %v10160 = vshll.u32 %v9903, 16
  %v10162 = vrot.slane %v10160, 5
  %v10163 = vsel %vm151, %v10158, %v10162
  %v10165 = vshrl.u32 %v9904, 16
  %v10167 = vrot.slane %v10165, 4
  %v10168 = vshll.u32 %v9904, 16
  %v10170 = vrot.slane %v10168, 5
  %v10171 = vor.u32 %v10167, %v10170
  %v10172 = vrot.slane %v10171, 4
  %v10174 = vshll.u32 %v9905, 16
  %v10176 = vrot.slane %v10174, 5
  %v10177 = vsel %vm151, %v10172, %v10176
  %v10179 = vshrl.u32 %v9906, 16
  %v10181 = vrot.slane %v10179, 4
  %v10182 = vshll.u32 %v9906, 16
  %v10184 = vrot.slane %v10182, 5
  %v10185 = vor.u32 %v10181, %v10184
  %v10186 = vrot.slane %v10185, 4
  %v10188 = vshll.u32 %v9907, 16
  %v10190 = vrot.slane %v10188, 5
  %v10191 = vsel %vm151, %v10186, %v10190
  %v10193 = vshrl.u32 %v9908, 16
  %v10195 = vrot.slane %v10193, 4
  %v10196 = vshll.u32 %v9908, 16
  %v10198 = vrot.slane %v10196, 5
  %v10199 = vor.u32 %v10195, %v10198
  %v10200 = vrot.slane %v10199, 4
  %v10202 = vshll.u32 %v9909, 16
  %v10204 = vrot.slane %v10202, 5
  %v10205 = vsel %vm151, %v10200, %v10204
  %v10207 = vshrl.u32 %v9910, 16
  %v10209 = vrot.slane %v10207, 4
  %v10210 = vshll.u32 %v9910, 16
  %v10212 = vrot.slane %v10210, 5
  %v10213 = vor.u32 %v10209, %v10212
  %v10214 = vrot.slane %v10213, 4
  %v10216 = vshll.u32 %v9911, 16
  %v10218 = vrot.slane %v10216, 5
  %v10219 = vsel %vm151, %v10214, %v10218
  %v10221 = vshrl.u32 %v9912, 16
  %v10223 = vrot.slane %v10221, 4
  %v10224 = vshll.u32 %v9912, 16
  %v10226 = vrot.slane %v10224, 5
  %v10227 = vor.u32 %v10223, %v10226
  %v10228 = vrot.slane %v10227, 4
  %v10230 = vshll.u32 %v9913, 16
  %v10232 = vrot.slane %v10230, 5
  %v10233 = vsel %vm151, %v10228, %v10232
  %v10235 = vshrl.u32 %v9914, 16
  %v10237 = vrot.slane %v10235, 4
  %v10238 = vshll.u32 %v9914, 16
  %v10240 = vrot.slane %v10238, 5
  %v10241 = vor.u32 %v10237, %v10240
  %v10242 = vrot.slane %v10241, 4
  %v10244 = vshll.u32 %v9915, 16
  %v10246 = vrot.slane %v10244, 5
  %v10247 = vsel %vm151, %v10242, %v10246
  %v10249 = vshrl.u32 %v9916, 16
  %v10251 = vrot.slane %v10249, 4
  %v10252 = vshll.u32 %v9916, 16
  %v10254 = vrot.slane %v10252, 5
  %v10255 = vor.u32 %v10251, %v10254
  %v10256 = vrot.slane %v10255, 4
  %v10258 = vshll.u32 %v9917, 16
  %v10260 = vrot.slane %v10258, 5
  %v10261 = vsel %vm151, %v10256, %v10260
  %v10263 = vshrl.u32 %v9918, 16
  %v10265 = vrot.slane %v10263, 4
  %v10266 = vshll.u32 %v9918, 16
  %v10268 = vrot.slane %v10266, 5
  %v10269 = vor.u32 %v10265, %v10268
  %v10270 = vrot.slane %v10269, 4
  %v10272 = vshll.u32 %v9919, 16
  %v10274 = vrot.slane %v10272, 5
  %v10275 = vsel %vm151, %v10270, %v10274
  %v10277 = vshrl.u32 %v9920, 16
  %v10279 = vrot.slane %v10277, 4
  %v10280 = vshll.u32 %v9920, 16
  %v10282 = vrot.slane %v10280, 5
  %v10283 = vor.u32 %v10279, %v10282
  %v10284 = vrot.slane %v10283, 4
  %v10286 = vshll.u32 %v9921, 16
  %v10288 = vrot.slane %v10286, 5
  %v10289 = vsel %vm151, %v10284, %v10288
  %v10291 = vshrl.u32 %v9922, 16
  %v10293 = vrot.slane %v10291, 4
  %v10294 = vshll.u32 %v9922, 16
  %v10296 = vrot.slane %v10294, 5
  %v10297 = vor.u32 %v10293, %v10296
  %v10298 = vrot.slane %v10297, 4
  %v10300 = vshll.u32 %v9923, 16
  %v10302 = vrot.slane %v10300, 5
  %v10303 = vsel %vm151, %v10298, %v10302
  %v10305 = vshrl.u32 %v9924, 16
  %v10307 = vrot.slane %v10305, 4
  %v10308 = vshll.u32 %v9924, 16
  %v10310 = vrot.slane %v10308, 5
  %v10311 = vor.u32 %v10307, %v10310
  %v10312 = vrot.slane %v10311, 4
  %v10314 = vshll.u32 %v9925, 16
  %v10316 = vrot.slane %v10314, 5
  %v10317 = vsel %vm151, %v10312, %v10316
  %v10319 = vshrl.u32 %v9926, 16
  %v10321 = vrot.slane %v10319, 4
  %v10322 = vshll.u32 %v9926, 16
  %v10324 = vrot.slane %v10322, 5
  %v10325 = vor.u32 %v10321, %v10324
  %v10326 = vrot.slane %v10325, 4
  %v10328 = vshll.u32 %v9927, 16
  %v10330 = vrot.slane %v10328, 5
  %v10331 = vsel %vm151, %v10326, %v10330
  %v10333 = vshrl.u32 %v9928, 16
  %v10335 = vrot.slane %v10333, 4
  %v10336 = vshll.u32 %v9928, 16
  %v10338 = vrot.slane %v10336, 5
  %v10339 = vor.u32 %v10335, %v10338
  %v10340 = vrot.slane %v10339, 4
  %v10342 = vshll.u32 %v9929, 16
  %v10344 = vrot.slane %v10342, 5
  %v10345 = vsel %vm151, %v10340, %v10344
  %v10347 = vshrl.u32 %v9930, 16
  %v10349 = vrot.slane %v10347, 4
  %v10350 = vshll.u32 %v9930, 16
  %v10352 = vrot.slane %v10350, 5
  %v10353 = vor.u32 %v10349, %v10352
  %v10354 = vrot.slane %v10353, 4
  %v10356 = vshll.u32 %v9931, 16
  %v10358 = vrot.slane %v10356, 5
  %v10359 = vsel %vm151, %v10354, %v10358
  %v10361 = vshrl.u32 %v9932, 16
  %v10363 = vrot.slane %v10361, 4
  %v10364 = vshll.u32 %v9932, 16
  %v10366 = vrot.slane %v10364, 5
  %v10367 = vor.u32 %v10363, %v10366
  %v10368 = vrot.slane %v10367, 4
  %v10370 = vshll.u32 %v9933, 16
  %v10372 = vrot.slane %v10370, 5
  %v10373 = vsel %vm151, %v10368, %v10372
  %v10375 = vshrl.u32 %v9934, 16
  %v10377 = vrot.slane %v10375, 4
  %v10378 = vshll.u32 %v9934, 16
  %v10380 = vrot.slane %v10378, 5
  %v10381 = vor.u32 %v10377, %v10380
  %v10382 = vrot.slane %v10381, 4
  %v10384 = vshll.u32 %v9935, 16
  %v10386 = vrot.slane %v10384, 5
  %v10387 = vsel %vm151, %v10382, %v10386
  %v10389 = vshrl.u32 %v9936, 16
  %v10391 = vrot.slane %v10389, 4
  %v10392 = vshll.u32 %v9936, 16
  %v10394 = vrot.slane %v10392, 5
  %v10395 = vor.u32 %v10391, %v10394
  %v10396 = vrot.slane %v10395, 4
  %v10398 = vshll.u32 %v9937, 16
  %v10400 = vrot.slane %v10398, 5
  %v10401 = vsel %vm151, %v10396, %v10400
  %v10403 = vshrl.u32 %v9938, 16
  %v10405 = vrot.slane %v10403, 4
  %v10406 = vshll.u32 %v9938, 16
  %v10408 = vrot.slane %v10406, 5
  %v10409 = vor.u32 %v10405, %v10408
  %v10410 = vrot.slane %v10409, 4
  %v10412 = vshll.u32 %v9939, 16
  %v10414 = vrot.slane %v10412, 5
  %v10415 = vsel %vm151, %v10410, %v10414
  %v10417 = vshrl.u32 %v9940, 16
  %v10419 = vrot.slane %v10417, 4
  %v10420 = vshll.u32 %v9940, 16
  %v10422 = vrot.slane %v10420, 5
  %v10423 = vor.u32 %v10419, %v10422
  %v10424 = vrot.slane %v10423, 4
  %v10426 = vshll.u32 %v9941, 16
  %v10428 = vrot.slane %v10426, 5
  %v10429 = vsel %vm151, %v10424, %v10428
  %v10431 = vshrl.u32 %v9942, 16
  %v10433 = vrot.slane %v10431, 4
  %v10434 = vshll.u32 %v9942, 16
  %v10436 = vrot.slane %v10434, 5
  %v10437 = vor.u32 %v10433, %v10436
  %v10438 = vrot.slane %v10437, 4
  %v10440 = vshll.u32 %v9943, 16
  %v10442 = vrot.slane %v10440, 5
  %v10443 = vsel %vm151, %v10438, %v10442
  %v10445 = vshrl.u32 %v9944, 16
  %v10447 = vrot.slane %v10445, 4
  %v10448 = vshll.u32 %v9944, 16
  %v10450 = vrot.slane %v10448, 5
  %v10451 = vor.u32 %v10447, %v10450
  %v10452 = vrot.slane %v10451, 4
  %v10454 = vshll.u32 %v9945, 16
  %v10456 = vrot.slane %v10454, 5
  %v10457 = vsel %vm151, %v10452, %v10456
  %v10459 = vshrl.u32 %v9946, 16
  %v10461 = vrot.slane %v10459, 4
  %v10462 = vshll.u32 %v9946, 16
  %v10464 = vrot.slane %v10462, 5
  %v10465 = vor.u32 %v10461, %v10464
  %v10466 = vrot.slane %v10465, 4
  %v10468 = vshll.u32 %v9947, 16
  %v10470 = vrot.slane %v10468, 5
  %v10471 = vsel %vm151, %v10466, %v10470
  %v10473 = vshrl.u32 %v9948, 16
  %v10475 = vrot.slane %v10473, 4
  %v10476 = vshll.u32 %v9948, 16
  %v10478 = vrot.slane %v10476, 5
  %v10479 = vor.u32 %v10475, %v10478
  %v10480 = vrot.slane %v10479, 4
  %v10482 = vshll.u32 %v9949, 16
  %v10484 = vrot.slane %v10482, 5
  %v10485 = vsel %vm151, %v10480, %v10484
  %v10487 = vshrl.u32 %v9950, 16
  %v10489 = vrot.slane %v10487, 4
  %v10490 = vshll.u32 %v9950, 16
  %v10492 = vrot.slane %v10490, 5
  %v10493 = vor.u32 %v10489, %v10492
  %v10494 = vrot.slane %v10493, 4
  %v10496 = vshll.u32 %v9951, 16
  %v10498 = vrot.slane %v10496, 5
  %v10499 = vsel %vm151, %v10494, %v10498
  %v10501 = vshrl.u32 %v9952, 16
  %v10503 = vrot.slane %v10501, 4
  %v10504 = vshll.u32 %v9952, 16
  %v10506 = vrot.slane %v10504, 5
  %v10507 = vor.u32 %v10503, %v10506
  %v10508 = vrot.slane %v10507, 4
  %v10510 = vshll.u32 %v9953, 16
  %v10512 = vrot.slane %v10510, 5
  %v10513 = vsel %vm151, %v10508, %v10512
  %v10515 = vshrl.u32 %v9954, 16
  %v10517 = vrot.slane %v10515, 4
  %v10518 = vshll.u32 %v9954, 16
  %v10520 = vrot.slane %v10518, 5
  %v10521 = vor.u32 %v10517, %v10520
  %v10522 = vrot.slane %v10521, 4
  %v10524 = vshll.u32 %v9955, 16
  %v10526 = vrot.slane %v10524, 5
  %v10527 = vsel %vm151, %v10522, %v10526
  %v10529 = vshrl.u32 %v9956, 16
  %v10531 = vrot.slane %v10529, 4
  %v10532 = vshll.u32 %v9956, 16
  %v10534 = vrot.slane %v10532, 5
  %v10535 = vor.u32 %v10531, %v10534
  %v10536 = vrot.slane %v10535, 4
  %v10538 = vshll.u32 %v9957, 16
  %v10540 = vrot.slane %v10538, 5
  %v10541 = vsel %vm151, %v10536, %v10540
  %v10543 = vshrl.u32 %v9958, 16
  %v10545 = vrot.slane %v10543, 4
  %v10546 = vshll.u32 %v9958, 16
  %v10548 = vrot.slane %v10546, 5
  %v10549 = vor.u32 %v10545, %v10548
  %v10550 = vrot.slane %v10549, 4
  %v10552 = vshll.u32 %v9959, 16
  %v10554 = vrot.slane %v10552, 5
  %v10555 = vsel %vm151, %v10550, %v10554
  %v10557 = vshrl.u32 %v9960, 16
  %v10559 = vrot.slane %v10557, 4
  %v10560 = vshll.u32 %v9960, 16
  %v10562 = vrot.slane %v10560, 5
  %v10563 = vor.u32 %v10559, %v10562
  %v10564 = vrot.slane %v10563, 4
  %v10566 = vshll.u32 %v9961, 16
  %v10568 = vrot.slane %v10566, 5
  %v10569 = vsel %vm151, %v10564, %v10568
  %v10571 = vshrl.u32 %v9962, 16
  %v10573 = vrot.slane %v10571, 4
  %v10574 = vshll.u32 %v9962, 16
  %v10576 = vrot.slane %v10574, 5
  %v10577 = vor.u32 %v10573, %v10576
  %v10578 = vrot.slane %v10577, 4
  %v10580 = vshll.u32 %v9963, 16
  %v10582 = vrot.slane %v10580, 5
  %v10583 = vsel %vm151, %v10578, %v10582
  %v10585 = vshrl.u32 %v9964, 16
  %v10587 = vrot.slane %v10585, 4
  %v10588 = vshll.u32 %v9964, 16
  %v10590 = vrot.slane %v10588, 5
  %v10591 = vor.u32 %v10587, %v10590
  %v10592 = vrot.slane %v10591, 4
  %v10594 = vshll.u32 %v9965, 16
  %v10596 = vrot.slane %v10594, 5
  %v10597 = vsel %vm151, %v10592, %v10596
  %v10599 = vshrl.u32 %v9966, 16
  %v10601 = vrot.slane %v10599, 4
  %v10602 = vshll.u32 %v9966, 16
  %v10604 = vrot.slane %v10602, 5
  %v10605 = vor.u32 %v10601, %v10604
  %v10606 = vrot.slane %v10605, 4
  %v10608 = vshll.u32 %v9967, 16
  %v10610 = vrot.slane %v10608, 5
  %v10611 = vsel %vm151, %v10606, %v10610
  %v10613 = vshrl.u32 %v9968, 16
  %v10615 = vrot.slane %v10613, 4
  %v10616 = vshll.u32 %v9968, 16
  %v10618 = vrot.slane %v10616, 5
  %v10619 = vor.u32 %v10615, %v10618
  %v10620 = vrot.slane %v10619, 4
  %v10622 = vshll.u32 %v9969, 16
  %v10624 = vrot.slane %v10622, 5
  %v10625 = vsel %vm151, %v10620, %v10624
  %v10627 = vshrl.u32 %v9970, 16
  %v10629 = vrot.slane %v10627, 4
  %v10630 = vshll.u32 %v9970, 16
  %v10632 = vrot.slane %v10630, 5
  %v10633 = vor.u32 %v10629, %v10632
  %v10634 = vrot.slane %v10633, 4
  %v10636 = vshll.u32 %v9971, 16
  %v10638 = vrot.slane %v10636, 5
  %v10639 = vsel %vm151, %v10634, %v10638
  %v10641 = vshrl.u32 %v9972, 16
  %v10643 = vrot.slane %v10641, 4
  %v10644 = vshll.u32 %v9972, 16
  %v10646 = vrot.slane %v10644, 5
  %v10647 = vor.u32 %v10643, %v10646
  %v10648 = vrot.slane %v10647, 4
  %v10650 = vshll.u32 %v9973, 16
  %v10652 = vrot.slane %v10650, 5
  %v10653 = vsel %vm151, %v10648, %v10652
  %v10655 = vshrl.u32 %v9974, 16
  %v10657 = vrot.slane %v10655, 4
  %v10658 = vshll.u32 %v9974, 16
  %v10660 = vrot.slane %v10658, 5
  %v10661 = vor.u32 %v10657, %v10660
  %v10662 = vrot.slane %v10661, 4
  %v10664 = vshll.u32 %v9975, 16
  %v10666 = vrot.slane %v10664, 5
  %v10667 = vsel %vm151, %v10662, %v10666
  %v10669 = vshrl.u32 %v9976, 16
  %v10671 = vrot.slane %v10669, 4
  %v10672 = vshll.u32 %v9976, 16
  %v10674 = vrot.slane %v10672, 5
  %v10675 = vor.u32 %v10671, %v10674
  %v10676 = vrot.slane %v10675, 4
  %v10678 = vshll.u32 %v9977, 16
  %v10680 = vrot.slane %v10678, 5
  %v10681 = vsel %vm151, %v10676, %v10680
  %v10683 = vshrl.u32 %v9978, 16
  %v10685 = vrot.slane %v10683, 4
  %v10686 = vshll.u32 %v9978, 16
  %v10688 = vrot.slane %v10686, 5
  %v10689 = vor.u32 %v10685, %v10688
  %v10690 = vrot.slane %v10689, 4
  %v10692 = vshll.u32 %v9979, 16
  %v10694 = vrot.slane %v10692, 5
  %v10695 = vsel %vm151, %v10690, %v10694
  %v10697 = vshrl.u32 %v9980, 16
  %v10699 = vrot.slane %v10697, 4
  %v10700 = vshll.u32 %v9980, 16
  %v10702 = vrot.slane %v10700, 5
  %v10703 = vor.u32 %v10699, %v10702
  %v10704 = vrot.slane %v10703, 4
  %v10706 = vshll.u32 %v9981, 16
  %v10708 = vrot.slane %v10706, 5
  %v10709 = vsel %vm151, %v10704, %v10708
  %v10711 = vshrl.u32 %v9982, 16
  %v10713 = vrot.slane %v10711, 4
  %v10714 = vshll.u32 %v9982, 16
  %v10716 = vrot.slane %v10714, 5
  %v10717 = vor.u32 %v10713, %v10716
  %v10718 = vrot.slane %v10717, 4
  %v10720 = vshll.u32 %v9983, 16
  %v10722 = vrot.slane %v10720, 5
  %v10723 = vsel %vm151, %v10718, %v10722
  %v10725 = vshrl.u32 %v9984, 16
  %v10727 = vrot.slane %v10725, 4
  %v10728 = vshll.u32 %v9984, 16
  %v10730 = vrot.slane %v10728, 5
  %v10731 = vor.u32 %v10727, %v10730
  %v10732 = vrot.slane %v10731, 4
  %v10734 = vshll.u32 %v9985, 16
  %v10736 = vrot.slane %v10734, 5
  %v10737 = vsel %vm151, %v10732, %v10736
  %v10739 = vshrl.u32 %v9986, 16
  %v10741 = vrot.slane %v10739, 4
  %v10742 = vshll.u32 %v9986, 16
  %v10744 = vrot.slane %v10742, 5
  %v10745 = vor.u32 %v10741, %v10744
  %v10746 = vrot.slane %v10745, 4
  %v10748 = vshll.u32 %v9987, 16
  %v10750 = vrot.slane %v10748, 5
  %v10751 = vsel %vm151, %v10746, %v10750
  %v10753 = vshrl.u32 %v9988, 16
  %v10755 = vrot.slane %v10753, 4
  %v10756 = vshll.u32 %v9988, 16
  %v10758 = vrot.slane %v10756, 5
  %v10759 = vor.u32 %v10755, %v10758
  %v10760 = vrot.slane %v10759, 4
  %v10762 = vshll.u32 %v9989, 16
  %v10764 = vrot.slane %v10762, 5
  %v10765 = vsel %vm151, %v10760, %v10764
  %v10767 = vshrl.u32 %v9990, 16
  %v10769 = vrot.slane %v10767, 4
  %v10770 = vshll.u32 %v9990, 16
  %v10772 = vrot.slane %v10770, 5
  %v10773 = vor.u32 %v10769, %v10772
  %v10774 = vrot.slane %v10773, 4
  %v10776 = vshll.u32 %v9991, 16
  %v10778 = vrot.slane %v10776, 5
  %v10779 = vsel %vm151, %v10774, %v10778
  %v10781 = vshrl.u32 %v9992, 16
  %v10783 = vrot.slane %v10781, 4
  %v10784 = vshll.u32 %v9992, 16
  %v10786 = vrot.slane %v10784, 5
  %v10787 = vor.u32 %v10783, %v10786
  %v10788 = vrot.slane %v10787, 4
  %v10790 = vshll.u32 %v9993, 16
  %v10792 = vrot.slane %v10790, 5
  %v10793 = vsel %vm151, %v10788, %v10792
  %v10795 = vshrl.u32 %v9994, 16
  %v10797 = vrot.slane %v10795, 4
  %v10798 = vshll.u32 %v9994, 16
  %v10800 = vrot.slane %v10798, 5
  %v10801 = vor.u32 %v10797, %v10800
  %v10802 = vrot.slane %v10801, 4
  %v10804 = vshll.u32 %v9995, 16
  %v10806 = vrot.slane %v10804, 5
  %v10807 = vsel %vm151, %v10802, %v10806
  %v10809 = vshrl.u32 %v9996, 16
  %v10811 = vrot.slane %v10809, 4
  %v10812 = vshll.u32 %v9996, 16
  %v10814 = vrot.slane %v10812, 5
  %v10815 = vor.u32 %v10811, %v10814
  %v10816 = vrot.slane %v10815, 4
  %v10818 = vshll.u32 %v9997, 16
  %v10820 = vrot.slane %v10818, 5
  %v10821 = vsel %vm151, %v10816, %v10820
  %v10823 = vshrl.u32 %v9998, 16
  %v10825 = vrot.slane %v10823, 4
  %v10826 = vshll.u32 %v9998, 16
  %v10828 = vrot.slane %v10826, 5
  %v10829 = vor.u32 %v10825, %v10828
  %v10830 = vrot.slane %v10829, 4
  %v10832 = vshll.u32 %v9999, 16
  %v10834 = vrot.slane %v10832, 5
  %v10835 = vsel %vm151, %v10830, %v10834
  %v10837 = vshrl.u32 %v10000, 16
  %v10839 = vrot.slane %v10837, 4
  %v10840 = vshll.u32 %v10000, 16
  %v10842 = vrot.slane %v10840, 5
  %v10843 = vor.u32 %v10839, %v10842
  %v10844 = vrot.slane %v10843, 4
  %v10846 = vshll.u32 %v10001, 16
  %v10848 = vrot.slane %v10846, 5
  %v10849 = vsel %vm151, %v10844, %v10848
  %v10851 = vshrl.u32 %v10002, 16
  %v10853 = vrot.slane %v10851, 4
  %v10854 = vshll.u32 %v10002, 16
  %v10856 = vrot.slane %v10854, 5
  %v10857 = vor.u32 %v10853, %v10856
  %v10858 = vrot.slane %v10857, 4
  %v10860 = vshll.u32 %v10003, 16
  %v10862 = vrot.slane %v10860, 5
  %v10863 = vsel %vm151, %v10858, %v10862
  %v10865 = vshrl.u32 %v10004, 16
  %v10867 = vrot.slane %v10865, 4
  %v10868 = vshll.u32 %v10004, 16
  %v10870 = vrot.slane %v10868, 5
  %v10871 = vor.u32 %v10867, %v10870
  %v10872 = vrot.slane %v10871, 4
  %v10874 = vshll.u32 %v10005, 16
  %v10876 = vrot.slane %v10874, 5
  %v10877 = vsel %vm151, %v10872, %v10876
  %v10879 = vshrl.u32 %v10006, 16
  %v10881 = vrot.slane %v10879, 4
  %v10882 = vshll.u32 %v10006, 16
  %v10884 = vrot.slane %v10882, 5
  %v10885 = vor.u32 %v10881, %v10884
  %v10886 = vrot.slane %v10885, 4
  %v10888 = vshll.u32 %v10007, 16
  %v10890 = vrot.slane %v10888, 5
  %v10891 = vsel %vm151, %v10886, %v10890
  %v10893 = vshrl.u32 %v10008, 16
  %v10895 = vrot.slane %v10893, 4
  %v10896 = vshll.u32 %v10008, 16
  %v10898 = vrot.slane %v10896, 5
  %v10899 = vor.u32 %v10895, %v10898
  %v10900 = vrot.slane %v10899, 4
  %v10902 = vshll.u32 %v10009, 16
  %v10904 = vrot.slane %v10902, 5
  %v10905 = vsel %vm151, %v10900, %v10904
  %s10906 = scalar_lea.vmem %s3, 96
  %v10907 = vld [vmem:[%s10906] sm:$0xf]
  %v10908 = vld [vmem:[%s10906 + $0x4] sm:$0xf]
  %v10909 = vld [vmem:[%s10906 + $0x8] sm:$0xf]
  %v10910 = vld [vmem:[%s10906 + $0xc] sm:$0xf]
  %v10911 = vld [vmem:[%s10906 + $0x10] sm:$0xf]
  %v10912 = vld [vmem:[%s10906 + $0x14] sm:$0xf]
  %v10913 = vld [vmem:[%s10906 + $0x18] sm:$0xf]
  %v10914 = vld [vmem:[%s10906 + $0x1c] sm:$0xf]
  %v10915 = vunpack.c.l.b16 %v10023
  %v10916 = vunpack.c.l.b16 %v10037
  %v10917 = vunpack.c.l.b16 %v10051
  %v10918 = vunpack.c.l.b16 %v10065
  %v10919 = vunpack.c.l.b16 %v10079
  %v10920 = vunpack.c.l.b16 %v10093
  %v10921 = vunpack.c.l.b16 %v10107
  %v10922 = vunpack.c.l.b16 %v10121
  %v10923 = vunpack.c.l.b16 %v10135
  %v10924 = vunpack.c.l.b16 %v10149
  %v10925 = vunpack.c.l.b16 %v10163
  %v10926 = vunpack.c.l.b16 %v10177
  %v10927 = vunpack.c.l.b16 %v10191
  %v10928 = vunpack.c.l.b16 %v10205
  %v10929 = vunpack.c.l.b16 %v10219
  %v10930 = vunpack.c.l.b16 %v10233
  %v10931 = vunpack.c.l.b16 %v10247
  %v10932 = vunpack.c.l.b16 %v10261
  %v10933 = vunpack.c.l.b16 %v10275
  %v10934 = vunpack.c.l.b16 %v10289
  %v10935 = vunpack.c.l.b16 %v10303
  %v10936 = vunpack.c.l.b16 %v10317
  %v10937 = vunpack.c.l.b16 %v10331
  %v10938 = vunpack.c.l.b16 %v10345
  %v10939 = vunpack.c.l.b16 %v10359
  %v10940 = vunpack.c.l.b16 %v10373
  %v10941 = vunpack.c.l.b16 %v10387
  %v10942 = vunpack.c.l.b16 %v10401
  %v10943 = vunpack.c.l.b16 %v10415
  %v10944 = vunpack.c.l.b16 %v10429
  %v10945 = vunpack.c.l.b16 %v10443
  %v10946 = vunpack.c.l.b16 %v10457
  %v10947 = vunpack.c.l.b16 %v10471
  %v10948 = vunpack.c.l.b16 %v10485
  %v10949 = vunpack.c.l.b16 %v10499
  %v10950 = vunpack.c.l.b16 %v10513
  %v10951 = vunpack.c.l.b16 %v10527
  %v10952 = vunpack.c.l.b16 %v10541
  %v10953 = vunpack.c.l.b16 %v10555
  %v10954 = vunpack.c.l.b16 %v10569
  %v10955 = vunpack.c.l.b16 %v10583
  %v10956 = vunpack.c.l.b16 %v10597
  %v10957 = vunpack.c.l.b16 %v10611
  %v10958 = vunpack.c.l.b16 %v10625
  %v10959 = vunpack.c.l.b16 %v10639
  %v10960 = vunpack.c.l.b16 %v10653
  %v10961 = vunpack.c.l.b16 %v10667
  %v10962 = vunpack.c.l.b16 %v10681
  %v10963 = vunpack.c.l.b16 %v10695
  %v10964 = vunpack.c.l.b16 %v10709
  %v10965 = vunpack.c.l.b16 %v10723
  %v10966 = vunpack.c.l.b16 %v10737
  %v10967 = vunpack.c.l.b16 %v10751
  %v10968 = vunpack.c.l.b16 %v10765
  %v10969 = vunpack.c.l.b16 %v10779
  %v10970 = vunpack.c.l.b16 %v10793
  %v10971 = vunpack.c.l.b16 %v10807
  %v10972 = vunpack.c.l.b16 %v10821
  %v10973 = vunpack.c.l.b16 %v10835
  %v10974 = vunpack.c.l.b16 %v10849
  %v10975 = vunpack.c.l.b16 %v10863
  %v10976 = vunpack.c.l.b16 %v10877
  %v10977 = vunpack.c.l.b16 %v10891
  %v10978 = vunpack.c.l.b16 %v10905
  %v10979 = vpack.c.b16 %v10916, %v10915
  %v10980 = vpack.c.b16 %v10918, %v10917
  %v10981 = vpack.c.b16 %v10920, %v10919
  %v10982 = vpack.c.b16 %v10922, %v10921
  %v10983 = vpack.c.b16 %v10924, %v10923
  %v10984 = vpack.c.b16 %v10926, %v10925
  %v10985 = vpack.c.b16 %v10928, %v10927
  %v10986 = vpack.c.b16 %v10930, %v10929
  %v10987 = vpack.c.b16 %v10932, %v10931
  %v10988 = vpack.c.b16 %v10934, %v10933
  %v10989 = vpack.c.b16 %v10936, %v10935
  %v10990 = vpack.c.b16 %v10938, %v10937
  %v10991 = vpack.c.b16 %v10940, %v10939
  %v10992 = vpack.c.b16 %v10942, %v10941
  %v10993 = vpack.c.b16 %v10944, %v10943
  %v10994 = vpack.c.b16 %v10946, %v10945
  %v10995 = vpack.c.b16 %v10948, %v10947
  %v10996 = vpack.c.b16 %v10950, %v10949
  %v10997 = vpack.c.b16 %v10952, %v10951
  %v10998 = vpack.c.b16 %v10954, %v10953
  %v10999 = vpack.c.b16 %v10956, %v10955
  %v11000 = vpack.c.b16 %v10958, %v10957
  %v11001 = vpack.c.b16 %v10960, %v10959
  %v11002 = vpack.c.b16 %v10962, %v10961
  %v11003 = vpack.c.b16 %v10964, %v10963
  %v11004 = vpack.c.b16 %v10966, %v10965
  %v11005 = vpack.c.b16 %v10968, %v10967
  %v11006 = vpack.c.b16 %v10970, %v10969
  %v11007 = vpack.c.b16 %v10972, %v10971
  %v11008 = vpack.c.b16 %v10974, %v10973
  %v11009 = vpack.c.b16 %v10976, %v10975
  %v11010 = vpack.c.b16 %v10978, %v10977
  %v11019 = vunpack.c.l.b16 %v10907
  %v11020 = vunpack.c.l.b16 %v10908
  %v11021 = vunpack.c.l.b16 %v10909
  %v11022 = vunpack.c.l.b16 %v10910
  %v11023 = vunpack.c.l.b16 %v10911
  %v11024 = vunpack.c.l.b16 %v10912
  %v11025 = vunpack.c.l.b16 %v10913
  %v11026 = vunpack.c.l.b16 %v10914
  %v11027 = vpack.c.b16 %v11020, %v11019
  %v11028 = vpack.c.b16 %v11022, %v11021
  %v11029 = vpack.c.b16 %v11024, %v11023
  %v11030 = vpack.c.b16 %v11026, %v11025
  %v11036 = vsel %vm8221, %v10979, 0
  %v11039 = vsel %vm8221, %v10980, 0
  %v11042 = vsel %vm8221, %v10981, 0
  %v11045 = vsel %vm8221, %v10982, 0
  %v11048 = vsel %vm8221, %v10983, 0
  %v11051 = vsel %vm8221, %v10984, 0
  %v11054 = vsel %vm8221, %v10985, 0
  %v11057 = vsel %vm8221, %v10986, 0
  %v11060 = vsel %vm8221, %v10987, 0
  %v11063 = vsel %vm8221, %v10988, 0
  %v11066 = vsel %vm8221, %v10989, 0
  %v11069 = vsel %vm8221, %v10990, 0
  %v11072 = vsel %vm8221, %v10991, 0
  %v11075 = vsel %vm8221, %v10992, 0
  %v11078 = vsel %vm8221, %v10993, 0
  %v11081 = vsel %vm8221, %v10994, 0
  %v11084 = vsel %vm8221, %v10995, 0
  %v11087 = vsel %vm8221, %v10996, 0
  %v11090 = vsel %vm8221, %v10997, 0
  %v11093 = vsel %vm8221, %v10998, 0
  %v11096 = vsel %vm8221, %v10999, 0
  %v11099 = vsel %vm8221, %v11000, 0
  %v11102 = vsel %vm8221, %v11001, 0
  %v11105 = vsel %vm8221, %v11002, 0
  %v11108 = vsel %vm8221, %v11003, 0
  %v11111 = vsel %vm8221, %v11004, 0
  %v11114 = vsel %vm8221, %v11005, 0
  %v11117 = vsel %vm8221, %v11006, 0
  %v11120 = vsel %vm8221, %v11007, 0
  %v11123 = vsel %vm8221, %v11008, 0
  %v11126 = vsel %vm8221, %v11009, 0
  %v11129 = vsel %vm8221, %v11010, 0
  %11131 = vmatprep.subr.bf16.mxu0 0
  %11132 = vmatpush1.bf16.msra.mxu0 %v11027
  %11133 = vmatprep.subr.bf16.mxu0 0
  %11134 = vmatpush1.bf16.msra.mxu0 %v11028
  %11135 = vmatprep.subr.bf16.mxu0 0
  %11136 = vmatpush1.bf16.msra.mxu0 %v11029
  %11137 = vmatprep.subr.bf16.mxu0 0
  %11138 = vmatpush1.bf16.msra.mxu0 %v11030
  %11139 = vmatprep.subr.bf16.mxu0 0
  %11140 = vmatpush1.bf16.msra.mxu0 0
  %11141 = vmatprep.subr.bf16.mxu0 0
  %11142 = vmatpush1.bf16.msra.mxu0 0
  %11143 = vmatprep.subr.bf16.mxu0 0
  %11144 = vmatpush1.bf16.msra.mxu0 0
  %11145 = vmatprep.subr.bf16.mxu0 0
  %11146 = vmatpush1.bf16.msra.mxu0 0
  %11147 = vmatprep.subr.bf16.mxu0 0
  %11148 = vmatpush1.bf16.msra.mxu0 0
  %11149 = vmatprep.subr.bf16.mxu0 0
  %11150 = vmatpush1.bf16.msra.mxu0 0
  %11151 = vmatprep.subr.bf16.mxu0 0
  %11152 = vmatpush1.bf16.msra.mxu0 0
  %11153 = vmatprep.subr.bf16.mxu0 0
  %11154 = vmatpush1.bf16.msra.mxu0 0
  %11155 = vmatprep.subr.bf16.mxu0 0
  %11156 = vmatpush1.bf16.msra.mxu0 0
  %11157 = vmatprep.subr.bf16.mxu0 0
  %11158 = vmatpush1.bf16.msra.mxu0 0
  %11159 = vmatprep.subr.bf16.mxu0 0
  %11160 = vmatpush1.bf16.msra.mxu0 0
  %11161 = vmatprep.subr.bf16.mxu0 0
  %11162 = vmatpush1.bf16.msra.mxu0 0
  %11163 = vmatprep.mubr.bf16.mxu0 0
  %11164 = vmatmul.mubr.bf16.gmra.mrb[0].mxu0 %v11036
  %v11165 = vpop.f32.mrb[0].mxu0
  %v11166 = vadd.f32 0.0, %v11165
  %v11167 = vpop.f32.mrb[0].mxu0
  %v11168 = vpop.f32.mrb[0].mxu0
  %v11169 = vadd.f32 0.0, %v11168
  %v11170 = vpop.f32.mrb[0].mxu0
  %11171 = vmatprep.mubr.bf16.mxu0 0
  %11172 = vmatmul.mubr.bf16.gmra.mrb[0].mxu0 %v11039
  %v11173 = vpop.f32.mrb[0].mxu0
  %v11174 = vadd.f32 0.0, %v11173
  %v11175 = vpop.f32.mrb[0].mxu0
  %v11176 = vpop.f32.mrb[0].mxu0
  %v11177 = vadd.f32 0.0, %v11176
  %v11178 = vpop.f32.mrb[0].mxu0
  %11179 = vmatprep.mubr.bf16.mxu0 0
  %11180 = vmatmul.mubr.bf16.gmra.mrb[0].mxu0 %v11042
  %v11181 = vpop.f32.mrb[0].mxu0
  %v11182 = vadd.f32 0.0, %v11181
  %v11183 = vpop.f32.mrb[0].mxu0
  %v11184 = vpop.f32.mrb[0].mxu0
  %v11185 = vadd.f32 0.0, %v11184
  %v11186 = vpop.f32.mrb[0].mxu0
  %11187 = vmatprep.mubr.bf16.mxu0 0
  %11188 = vmatmul.mubr.bf16.gmra.mrb[0].mxu0 %v11045
  %v11189 = vpop.f32.mrb[0].mxu0
  %v11190 = vadd.f32 0.0, %v11189
  %v11191 = vpop.f32.mrb[0].mxu0
  %v11192 = vpop.f32.mrb[0].mxu0
  %v11193 = vadd.f32 0.0, %v11192
  %v11194 = vpop.f32.mrb[0].mxu0
  %11195 = vmatprep.mubr.bf16.mxu0 0
  %11196 = vmatmul.mubr.bf16.gmra.mrb[0].mxu0 %v11048
  %v11197 = vpop.f32.mrb[0].mxu0
  %v11198 = vadd.f32 0.0, %v11197
  %v11199 = vpop.f32.mrb[0].mxu0
  %v11200 = vpop.f32.mrb[0].mxu0
  %v11201 = vadd.f32 0.0, %v11200
  %v11202 = vpop.f32.mrb[0].mxu0
  %11203 = vmatprep.mubr.bf16.mxu0 0
  %11204 = vmatmul.mubr.bf16.gmra.mrb[0].mxu0 %v11051
  %v11205 = vpop.f32.mrb[0].mxu0
  %v11206 = vadd.f32 0.0, %v11205
  %v11207 = vpop.f32.mrb[0].mxu0
  %v11208 = vpop.f32.mrb[0].mxu0
  %v11209 = vadd.f32 0.0, %v11208
  %v11210 = vpop.f32.mrb[0].mxu0
  %11211 = vmatprep.mubr.bf16.mxu0 0
  %11212 = vmatmul.mubr.bf16.gmra.mrb[0].mxu0 %v11054
  %v11213 = vpop.f32.mrb[0].mxu0
  %v11214 = vadd.f32 0.0, %v11213
  %v11215 = vpop.f32.mrb[0].mxu0
  %v11216 = vpop.f32.mrb[0].mxu0
  %v11217 = vadd.f32 0.0, %v11216
  %v11218 = vpop.f32.mrb[0].mxu0
  %11219 = vmatprep.mubr.bf16.mxu0 0
  %11220 = vmatmul.mubr.bf16.gmra.mrb[0].mxu0 %v11057
  %v11221 = vpop.f32.mrb[0].mxu0
  %v11222 = vadd.f32 0.0, %v11221
  %v11223 = vpop.f32.mrb[0].mxu0
  %v11224 = vpop.f32.mrb[0].mxu0
  %v11225 = vadd.f32 0.0, %v11224
  %v11226 = vpop.f32.mrb[0].mxu0
  %11227 = vmatprep.mubr.bf16.mxu0 0
  %11228 = vmatmul.mubr.bf16.gmra.mrb[0].mxu0 %v11060
  %v11229 = vpop.f32.mrb[0].mxu0
  %v11230 = vadd.f32 0.0, %v11229
  %v11231 = vpop.f32.mrb[0].mxu0
  %v11232 = vpop.f32.mrb[0].mxu0
  %v11233 = vadd.f32 0.0, %v11232
  %v11234 = vpop.f32.mrb[0].mxu0
  %11235 = vmatprep.mubr.bf16.mxu0 0
  %11236 = vmatmul.mubr.bf16.gmra.mrb[0].mxu0 %v11063
  %v11237 = vpop.f32.mrb[0].mxu0
  %v11238 = vadd.f32 0.0, %v11237
  %v11239 = vpop.f32.mrb[0].mxu0
  %v11240 = vpop.f32.mrb[0].mxu0
  %v11241 = vadd.f32 0.0, %v11240
  %v11242 = vpop.f32.mrb[0].mxu0
  %11243 = vmatprep.mubr.bf16.mxu0 0
  %11244 = vmatmul.mubr.bf16.gmra.mrb[0].mxu0 %v11066
  %v11245 = vpop.f32.mrb[0].mxu0
  %v11246 = vadd.f32 0.0, %v11245
  %v11247 = vpop.f32.mrb[0].mxu0
  %v11248 = vpop.f32.mrb[0].mxu0
  %v11249 = vadd.f32 0.0, %v11248
  %v11250 = vpop.f32.mrb[0].mxu0
  %11251 = vmatprep.mubr.bf16.mxu0 0
  %11252 = vmatmul.mubr.bf16.gmra.mrb[0].mxu0 %v11069
  %v11253 = vpop.f32.mrb[0].mxu0
  %v11254 = vadd.f32 0.0, %v11253
  %v11255 = vpop.f32.mrb[0].mxu0
  %v11256 = vpop.f32.mrb[0].mxu0
  %v11257 = vadd.f32 0.0, %v11256
  %v11258 = vpop.f32.mrb[0].mxu0
  %11259 = vmatprep.mubr.bf16.mxu0 0
  %11260 = vmatmul.mubr.bf16.gmra.mrb[0].mxu0 %v11072
  %v11261 = vpop.f32.mrb[0].mxu0
  %v11262 = vadd.f32 0.0, %v11261
  %v11263 = vpop.f32.mrb[0].mxu0
  %v11264 = vpop.f32.mrb[0].mxu0
  %v11265 = vadd.f32 0.0, %v11264
  %v11266 = vpop.f32.mrb[0].mxu0
  %11267 = vmatprep.mubr.bf16.mxu0 0
  %11268 = vmatmul.mubr.bf16.gmra.mrb[0].mxu0 %v11075
  %v11269 = vpop.f32.mrb[0].mxu0
  %v11270 = vadd.f32 0.0, %v11269
  %v11271 = vpop.f32.mrb[0].mxu0
  %v11272 = vpop.f32.mrb[0].mxu0
  %v11273 = vadd.f32 0.0, %v11272
  %v11274 = vpop.f32.mrb[0].mxu0
  %11275 = vmatprep.mubr.bf16.mxu0 0
  %11276 = vmatmul.mubr.bf16.gmra.mrb[0].mxu0 %v11078
  %v11277 = vpop.f32.mrb[0].mxu0
  %v11278 = vadd.f32 0.0, %v11277
  %v11279 = vpop.f32.mrb[0].mxu0
  %v11280 = vpop.f32.mrb[0].mxu0
  %v11281 = vadd.f32 0.0, %v11280
  %v11282 = vpop.f32.mrb[0].mxu0
  %11283 = vmatprep.mubr.bf16.mxu0 0
  %11284 = vmatmul.mubr.bf16.gmra.mrb[0].mxu0 %v11081
  %v11285 = vpop.f32.mrb[0].mxu0
  %v11286 = vadd.f32 0.0, %v11285
  %v11287 = vpop.f32.mrb[0].mxu0
  %v11288 = vpop.f32.mrb[0].mxu0
  %v11289 = vadd.f32 0.0, %v11288
  %v11290 = vpop.f32.mrb[0].mxu0
  %11291 = vmatprep.mubr.bf16.mxu0 0
  %11292 = vmatmul.mubr.bf16.gmra.mrb[0].mxu0 %v11084
  %v11293 = vpop.f32.mrb[0].mxu0
  %v11294 = vadd.f32 0.0, %v11293
  %v11295 = vpop.f32.mrb[0].mxu0
  %v11296 = vpop.f32.mrb[0].mxu0
  %v11297 = vadd.f32 0.0, %v11296
  %v11298 = vpop.f32.mrb[0].mxu0
  %11299 = vmatprep.mubr.bf16.mxu0 0
  %11300 = vmatmul.mubr.bf16.gmra.mrb[0].mxu0 %v11087
  %v11301 = vpop.f32.mrb[0].mxu0
  %v11302 = vadd.f32 0.0, %v11301
  %v11303 = vpop.f32.mrb[0].mxu0
  %v11304 = vpop.f32.mrb[0].mxu0
  %v11305 = vadd.f32 0.0, %v11304
  %v11306 = vpop.f32.mrb[0].mxu0
  %11307 = vmatprep.mubr.bf16.mxu0 0
  %11308 = vmatmul.mubr.bf16.gmra.mrb[0].mxu0 %v11090
  %v11309 = vpop.f32.mrb[0].mxu0
  %v11310 = vadd.f32 0.0, %v11309
  %v11311 = vpop.f32.mrb[0].mxu0
  %v11312 = vpop.f32.mrb[0].mxu0
  %v11313 = vadd.f32 0.0, %v11312
  %v11314 = vpop.f32.mrb[0].mxu0
  %11315 = vmatprep.mubr.bf16.mxu0 0
  %11316 = vmatmul.mubr.bf16.gmra.mrb[0].mxu0 %v11093
  %v11317 = vpop.f32.mrb[0].mxu0
  %v11318 = vadd.f32 0.0, %v11317
  %v11319 = vpop.f32.mrb[0].mxu0
  %v11320 = vpop.f32.mrb[0].mxu0
  %v11321 = vadd.f32 0.0, %v11320
  %v11322 = vpop.f32.mrb[0].mxu0
  %11323 = vmatprep.mubr.bf16.mxu0 0
  %11324 = vmatmul.mubr.bf16.gmra.mrb[0].mxu0 %v11096
  %v11325 = vpop.f32.mrb[0].mxu0
  %v11326 = vadd.f32 0.0, %v11325
  %v11327 = vpop.f32.mrb[0].mxu0
  %v11328 = vpop.f32.mrb[0].mxu0
  %v11329 = vadd.f32 0.0, %v11328
  %v11330 = vpop.f32.mrb[0].mxu0
  %11331 = vmatprep.mubr.bf16.mxu0 0
  %11332 = vmatmul.mubr.bf16.gmra.mrb[0].mxu0 %v11099
  %v11333 = vpop.f32.mrb[0].mxu0
  %v11334 = vadd.f32 0.0, %v11333
  %v11335 = vpop.f32.mrb[0].mxu0
  %v11336 = vpop.f32.mrb[0].mxu0
  %v11337 = vadd.f32 0.0, %v11336
  %v11338 = vpop.f32.mrb[0].mxu0
  %11339 = vmatprep.mubr.bf16.mxu0 0
  %11340 = vmatmul.mubr.bf16.gmra.mrb[0].mxu0 %v11102
  %v11341 = vpop.f32.mrb[0].mxu0
  %v11342 = vadd.f32 0.0, %v11341
  %v11343 = vpop.f32.mrb[0].mxu0
  %v11344 = vpop.f32.mrb[0].mxu0
  %v11345 = vadd.f32 0.0, %v11344
  %v11346 = vpop.f32.mrb[0].mxu0
  %11347 = vmatprep.mubr.bf16.mxu0 0
  %11348 = vmatmul.mubr.bf16.gmra.mrb[0].mxu0 %v11105
  %v11349 = vpop.f32.mrb[0].mxu0
  %v11350 = vadd.f32 0.0, %v11349
  %v11351 = vpop.f32.mrb[0].mxu0
  %v11352 = vpop.f32.mrb[0].mxu0
  %v11353 = vadd.f32 0.0, %v11352
  %v11354 = vpop.f32.mrb[0].mxu0
  %11355 = vmatprep.mubr.bf16.mxu0 0
  %11356 = vmatmul.mubr.bf16.gmra.mrb[0].mxu0 %v11108
  %v11357 = vpop.f32.mrb[0].mxu0
  %v11358 = vadd.f32 0.0, %v11357
  %v11359 = vpop.f32.mrb[0].mxu0
  %v11360 = vpop.f32.mrb[0].mxu0
  %v11361 = vadd.f32 0.0, %v11360
  %v11362 = vpop.f32.mrb[0].mxu0
  %11363 = vmatprep.mubr.bf16.mxu0 0
  %11364 = vmatmul.mubr.bf16.gmra.mrb[0].mxu0 %v11111
  %v11365 = vpop.f32.mrb[0].mxu0
  %v11366 = vadd.f32 0.0, %v11365
  %v11367 = vpop.f32.mrb[0].mxu0
  %v11368 = vpop.f32.mrb[0].mxu0
  %v11369 = vadd.f32 0.0, %v11368
  %v11370 = vpop.f32.mrb[0].mxu0
  %11371 = vmatprep.mubr.bf16.mxu0 0
  %11372 = vmatmul.mubr.bf16.gmra.mrb[0].mxu0 %v11114
  %v11373 = vpop.f32.mrb[0].mxu0
  %v11374 = vadd.f32 0.0, %v11373
  %v11375 = vpop.f32.mrb[0].mxu0
  %v11376 = vpop.f32.mrb[0].mxu0
  %v11377 = vadd.f32 0.0, %v11376
  %v11378 = vpop.f32.mrb[0].mxu0
  %11379 = vmatprep.mubr.bf16.mxu0 0
  %11380 = vmatmul.mubr.bf16.gmra.mrb[0].mxu0 %v11117
  %v11381 = vpop.f32.mrb[0].mxu0
  %v11382 = vadd.f32 0.0, %v11381
  %v11383 = vpop.f32.mrb[0].mxu0
  %v11384 = vpop.f32.mrb[0].mxu0
  %v11385 = vadd.f32 0.0, %v11384
  %v11386 = vpop.f32.mrb[0].mxu0
  %11387 = vmatprep.mubr.bf16.mxu0 0
  %11388 = vmatmul.mubr.bf16.gmra.mrb[0].mxu0 %v11120
  %v11389 = vpop.f32.mrb[0].mxu0
  %v11390 = vadd.f32 0.0, %v11389
  %v11391 = vpop.f32.mrb[0].mxu0
  %v11392 = vpop.f32.mrb[0].mxu0
  %v11393 = vadd.f32 0.0, %v11392
  %v11394 = vpop.f32.mrb[0].mxu0
  %11395 = vmatprep.mubr.bf16.mxu0 0
  %11396 = vmatmul.mubr.bf16.gmra.mrb[0].mxu0 %v11123
  %v11397 = vpop.f32.mrb[0].mxu0
  %v11398 = vadd.f32 0.0, %v11397
  %v11399 = vpop.f32.mrb[0].mxu0
  %v11400 = vpop.f32.mrb[0].mxu0
  %v11401 = vadd.f32 0.0, %v11400
  %v11402 = vpop.f32.mrb[0].mxu0
  %11403 = vmatprep.mubr.bf16.mxu0 0
  %11404 = vmatmul.mubr.bf16.gmra.mrb[0].mxu0 %v11126
  %v11405 = vpop.f32.mrb[0].mxu0
  %v11406 = vadd.f32 0.0, %v11405
  %v11407 = vpop.f32.mrb[0].mxu0
  %v11408 = vpop.f32.mrb[0].mxu0
  %v11409 = vadd.f32 0.0, %v11408
  %v11410 = vpop.f32.mrb[0].mxu0
  %11411 = vmatprep.mubr.bf16.mxu0 0
  %11412 = vmatmul.mubr.bf16.gmra.mrb[0].mxu0 %v11129
  %v11413 = vpop.f32.mrb[0].mxu0
  %v11414 = vadd.f32 0.0, %v11413
  %v11415 = vpop.f32.mrb[0].mxu0
  %v11416 = vpop.f32.mrb[0].mxu0
  %v11417 = vadd.f32 0.0, %v11416
  %v11418 = vpop.f32.mrb[0].mxu0
  %11419 = vdwg.mxu0
  %v11420 = vadd.f32 %v9818, %v11166
  %v11421 = vadd.f32 %v9819, %v11169
  %v11422 = vadd.f32 %v9820, %v11174
  %v11423 = vadd.f32 %v9821, %v11177
  %v11424 = vadd.f32 %v9822, %v11182
  %v11425 = vadd.f32 %v9823, %v11185
  %v11426 = vadd.f32 %v9824, %v11190
  %v11427 = vadd.f32 %v9825, %v11193
  %v11428 = vadd.f32 %v9826, %v11198
  %v11429 = vadd.f32 %v9827, %v11201
  %v11430 = vadd.f32 %v9828, %v11206
  %v11431 = vadd.f32 %v9829, %v11209
  %v11432 = vadd.f32 %v9830, %v11214
  %v11433 = vadd.f32 %v9831, %v11217
  %v11434 = vadd.f32 %v9832, %v11222
  %v11435 = vadd.f32 %v9833, %v11225
  %v11436 = vadd.f32 %v9834, %v11230
  %v11437 = vadd.f32 %v9835, %v11233
  %v11438 = vadd.f32 %v9836, %v11238
  %v11439 = vadd.f32 %v9837, %v11241
  %v11440 = vadd.f32 %v9838, %v11246
  %v11441 = vadd.f32 %v9839, %v11249
  %v11442 = vadd.f32 %v9840, %v11254
  %v11443 = vadd.f32 %v9841, %v11257
  %v11444 = vadd.f32 %v9842, %v11262
  %v11445 = vadd.f32 %v9843, %v11265
  %v11446 = vadd.f32 %v9844, %v11270
  %v11447 = vadd.f32 %v9845, %v11273
  %v11448 = vadd.f32 %v9846, %v11278
  %v11449 = vadd.f32 %v9847, %v11281
  %v11450 = vadd.f32 %v9848, %v11286
  %v11451 = vadd.f32 %v9849, %v11289
  %v11452 = vadd.f32 %v9850, %v11294
  %v11453 = vadd.f32 %v9851, %v11297
  %v11454 = vadd.f32 %v9852, %v11302
  %v11455 = vadd.f32 %v9853, %v11305
  %v11456 = vadd.f32 %v9854, %v11310
  %v11457 = vadd.f32 %v9855, %v11313
  %v11458 = vadd.f32 %v9856, %v11318
  %v11459 = vadd.f32 %v9857, %v11321
  %v11460 = vadd.f32 %v9858, %v11326
  %v11461 = vadd.f32 %v9859, %v11329
  %v11462 = vadd.f32 %v9860, %v11334
  %v11463 = vadd.f32 %v9861, %v11337
  %v11464 = vadd.f32 %v9862, %v11342
  %v11465 = vadd.f32 %v9863, %v11345
  %v11466 = vadd.f32 %v9864, %v11350
  %v11467 = vadd.f32 %v9865, %v11353
  %v11468 = vadd.f32 %v9866, %v11358
  %v11469 = vadd.f32 %v9867, %v11361
  %v11470 = vadd.f32 %v9868, %v11366
  %v11471 = vadd.f32 %v9869, %v11369
  %v11472 = vadd.f32 %v9870, %v11374
  %v11473 = vadd.f32 %v9871, %v11377
  %v11474 = vadd.f32 %v9872, %v11382
  %v11475 = vadd.f32 %v9873, %v11385
  %v11476 = vadd.f32 %v9874, %v11390
  %v11477 = vadd.f32 %v9875, %v11393
  %v11478 = vadd.f32 %v9876, %v11398
  %v11479 = vadd.f32 %v9877, %v11401
  %v11480 = vadd.f32 %v9878, %v11406
  %v11481 = vadd.f32 %v9879, %v11409
  %v11482 = vadd.f32 %v9880, %v11414
  %v11483 = vadd.f32 %v9881, %v11417
  %v11484 = vld [vmem:[%s4] sm:$0x1]
  %v11486 = vlaneseq
  %v11487 = vshrl.u32 %v11486, 7
  %v11488 = vsub.s32 0, %v11487
  %v11489 = vrot.slane %v11484, %v11488
  %v11491 = vadd.f32 %v11420, %v11489
  %v11492 = vadd.f32 %v11421, %v11489
  %v11493 = vadd.f32 %v11422, %v11489
  %v11494 = vadd.f32 %v11423, %v11489
  %v11495 = vadd.f32 %v11424, %v11489
  %v11496 = vadd.f32 %v11425, %v11489
  %v11497 = vadd.f32 %v11426, %v11489
  %v11498 = vadd.f32 %v11427, %v11489
  %v11499 = vadd.f32 %v11428, %v11489
  %v11500 = vadd.f32 %v11429, %v11489
  %v11501 = vadd.f32 %v11430, %v11489
  %v11502 = vadd.f32 %v11431, %v11489
  %v11503 = vadd.f32 %v11432, %v11489
  %v11504 = vadd.f32 %v11433, %v11489
  %v11505 = vadd.f32 %v11434, %v11489
  %v11506 = vadd.f32 %v11435, %v11489
  %v11507 = vadd.f32 %v11436, %v11489
  %v11508 = vadd.f32 %v11437, %v11489
  %v11509 = vadd.f32 %v11438, %v11489
  %v11510 = vadd.f32 %v11439, %v11489
  %v11511 = vadd.f32 %v11440, %v11489
  %v11512 = vadd.f32 %v11441, %v11489
  %v11513 = vadd.f32 %v11442, %v11489
  %v11514 = vadd.f32 %v11443, %v11489
  %v11515 = vadd.f32 %v11444, %v11489
  %v11516 = vadd.f32 %v11445, %v11489
  %v11517 = vadd.f32 %v11446, %v11489
  %v11518 = vadd.f32 %v11447, %v11489
  %v11519 = vadd.f32 %v11448, %v11489
  %v11520 = vadd.f32 %v11449, %v11489
  %v11521 = vadd.f32 %v11450, %v11489
  %v11522 = vadd.f32 %v11451, %v11489
  %v11523 = vadd.f32 %v11452, %v11489
  %v11524 = vadd.f32 %v11453, %v11489
  %v11525 = vadd.f32 %v11454, %v11489
  %v11526 = vadd.f32 %v11455, %v11489
  %v11527 = vadd.f32 %v11456, %v11489
  %v11528 = vadd.f32 %v11457, %v11489
  %v11529 = vadd.f32 %v11458, %v11489
  %v11530 = vadd.f32 %v11459, %v11489
  %v11531 = vadd.f32 %v11460, %v11489
  %v11532 = vadd.f32 %v11461, %v11489
  %v11533 = vadd.f32 %v11462, %v11489
  %v11534 = vadd.f32 %v11463, %v11489
  %v11535 = vadd.f32 %v11464, %v11489
  %v11536 = vadd.f32 %v11465, %v11489
  %v11537 = vadd.f32 %v11466, %v11489
  %v11538 = vadd.f32 %v11467, %v11489
  %v11539 = vadd.f32 %v11468, %v11489
  %v11540 = vadd.f32 %v11469, %v11489
  %v11541 = vadd.f32 %v11470, %v11489
  %v11542 = vadd.f32 %v11471, %v11489
  %v11543 = vadd.f32 %v11472, %v11489
  %v11544 = vadd.f32 %v11473, %v11489
  %v11545 = vadd.f32 %v11474, %v11489
  %v11546 = vadd.f32 %v11475, %v11489
  %v11547 = vadd.f32 %v11476, %v11489
  %v11548 = vadd.f32 %v11477, %v11489
  %v11549 = vadd.f32 %v11478, %v11489
  %v11550 = vadd.f32 %v11479, %v11489
  %v11551 = vadd.f32 %v11480, %v11489
  %v11552 = vadd.f32 %v11481, %v11489
  %v11553 = vadd.f32 %v11482, %v11489
  %v11554 = vadd.f32 %v11483, %v11489
  %v11555 = vmax.f32 %v11491, 0.0
  %v11556 = vmax.f32 %v11492, 0.0
  %v11557 = vmax.f32 %v11493, 0.0
  %v11558 = vmax.f32 %v11494, 0.0
  %v11559 = vmax.f32 %v11495, 0.0
  %v11560 = vmax.f32 %v11496, 0.0
  %v11561 = vmax.f32 %v11497, 0.0
  %v11562 = vmax.f32 %v11498, 0.0
  %v11563 = vmax.f32 %v11499, 0.0
  %v11564 = vmax.f32 %v11500, 0.0
  %v11565 = vmax.f32 %v11501, 0.0
  %v11566 = vmax.f32 %v11502, 0.0
  %v11567 = vmax.f32 %v11503, 0.0
  %v11568 = vmax.f32 %v11504, 0.0
  %v11569 = vmax.f32 %v11505, 0.0
  %v11570 = vmax.f32 %v11506, 0.0
  %v11571 = vmax.f32 %v11507, 0.0
  %v11572 = vmax.f32 %v11508, 0.0
  %v11573 = vmax.f32 %v11509, 0.0
  %v11574 = vmax.f32 %v11510, 0.0
  %v11575 = vmax.f32 %v11511, 0.0
  %v11576 = vmax.f32 %v11512, 0.0
  %v11577 = vmax.f32 %v11513, 0.0
  %v11578 = vmax.f32 %v11514, 0.0
  %v11579 = vmax.f32 %v11515, 0.0
  %v11580 = vmax.f32 %v11516, 0.0
  %v11581 = vmax.f32 %v11517, 0.0
  %v11582 = vmax.f32 %v11518, 0.0
  %v11583 = vmax.f32 %v11519, 0.0
  %v11584 = vmax.f32 %v11520, 0.0
  %v11585 = vmax.f32 %v11521, 0.0
  %v11586 = vmax.f32 %v11522, 0.0
  %v11587 = vmax.f32 %v11523, 0.0
  %v11588 = vmax.f32 %v11524, 0.0
  %v11589 = vmax.f32 %v11525, 0.0
  %v11590 = vmax.f32 %v11526, 0.0
  %v11591 = vmax.f32 %v11527, 0.0
  %v11592 = vmax.f32 %v11528, 0.0
  %v11593 = vmax.f32 %v11529, 0.0
  %v11594 = vmax.f32 %v11530, 0.0
  %v11595 = vmax.f32 %v11531, 0.0
  %v11596 = vmax.f32 %v11532, 0.0
  %v11597 = vmax.f32 %v11533, 0.0
  %v11598 = vmax.f32 %v11534, 0.0
  %v11599 = vmax.f32 %v11535, 0.0
  %v11600 = vmax.f32 %v11536, 0.0
  %v11601 = vmax.f32 %v11537, 0.0
  %v11602 = vmax.f32 %v11538, 0.0
  %v11603 = vmax.f32 %v11539, 0.0
  %v11604 = vmax.f32 %v11540, 0.0
  %v11605 = vmax.f32 %v11541, 0.0
  %v11606 = vmax.f32 %v11542, 0.0
  %v11607 = vmax.f32 %v11543, 0.0
  %v11608 = vmax.f32 %v11544, 0.0
  %v11609 = vmax.f32 %v11545, 0.0
  %v11610 = vmax.f32 %v11546, 0.0
  %v11611 = vmax.f32 %v11547, 0.0
  %v11612 = vmax.f32 %v11548, 0.0
  %v11613 = vmax.f32 %v11549, 0.0
  %v11614 = vmax.f32 %v11550, 0.0
  %v11615 = vmax.f32 %v11551, 0.0
  %v11616 = vmax.f32 %v11552, 0.0
  %v11617 = vmax.f32 %v11553, 0.0
  %v11618 = vmax.f32 %v11554, 0.0
  %v11619 = vpack.c.bf16 %v11556, %v11555
  %v11620 = vpack.c.bf16 %v11558, %v11557
  %v11621 = vpack.c.bf16 %v11560, %v11559
  %v11622 = vpack.c.bf16 %v11562, %v11561
  %v11623 = vpack.c.bf16 %v11564, %v11563
  %v11624 = vpack.c.bf16 %v11566, %v11565
  %v11625 = vpack.c.bf16 %v11568, %v11567
  %v11626 = vpack.c.bf16 %v11570, %v11569
  %v11627 = vpack.c.bf16 %v11572, %v11571
  %v11628 = vpack.c.bf16 %v11574, %v11573
  %v11629 = vpack.c.bf16 %v11576, %v11575
  %v11630 = vpack.c.bf16 %v11578, %v11577
  %v11631 = vpack.c.bf16 %v11580, %v11579
  %v11632 = vpack.c.bf16 %v11582, %v11581
  %v11633 = vpack.c.bf16 %v11584, %v11583
  %v11634 = vpack.c.bf16 %v11586, %v11585
  %v11635 = vpack.c.bf16 %v11588, %v11587
  %v11636 = vpack.c.bf16 %v11590, %v11589
  %v11637 = vpack.c.bf16 %v11592, %v11591
  %v11638 = vpack.c.bf16 %v11594, %v11593
  %v11639 = vpack.c.bf16 %v11596, %v11595
  %v11640 = vpack.c.bf16 %v11598, %v11597
  %v11641 = vpack.c.bf16 %v11600, %v11599
  %v11642 = vpack.c.bf16 %v11602, %v11601
  %v11643 = vpack.c.bf16 %v11604, %v11603
  %v11644 = vpack.c.bf16 %v11606, %v11605
  %v11645 = vpack.c.bf16 %v11608, %v11607
  %v11646 = vpack.c.bf16 %v11610, %v11609
  %v11647 = vpack.c.bf16 %v11612, %v11611
  %v11648 = vpack.c.bf16 %v11614, %v11613
  %v11649 = vpack.c.bf16 %v11616, %v11615
  %v11650 = vpack.c.bf16 %v11618, %v11617
  %v11683 = vunpack.c.l.b16 %v11619
  %v11684 = vunpack.c.h.b16 %v11619
  %v11685 = vunpack.c.l.b16 %v11620
  %v11686 = vunpack.c.h.b16 %v11620
  %v11687 = vunpack.c.l.b16 %v11621
  %v11688 = vunpack.c.h.b16 %v11621
  %v11689 = vunpack.c.l.b16 %v11622
  %v11690 = vunpack.c.h.b16 %v11622
  %v11691 = vunpack.c.l.b16 %v11623
  %v11692 = vunpack.c.h.b16 %v11623
  %v11693 = vunpack.c.l.b16 %v11624
  %v11694 = vunpack.c.h.b16 %v11624
  %v11695 = vunpack.c.l.b16 %v11625
  %v11696 = vunpack.c.h.b16 %v11625
  %v11697 = vunpack.c.l.b16 %v11626
  %v11698 = vunpack.c.h.b16 %v11626
  %v11699 = vunpack.c.l.b16 %v11627
  %v11700 = vunpack.c.h.b16 %v11627
  %v11701 = vunpack.c.l.b16 %v11628
  %v11702 = vunpack.c.h.b16 %v11628
  %v11703 = vunpack.c.l.b16 %v11629
  %v11704 = vunpack.c.h.b16 %v11629
  %v11705 = vunpack.c.l.b16 %v11630
  %v11706 = vunpack.c.h.b16 %v11630
  %v11707 = vunpack.c.l.b16 %v11631
  %v11708 = vunpack.c.h.b16 %v11631
  %v11709 = vunpack.c.l.b16 %v11632
  %v11710 = vunpack.c.h.b16 %v11632
  %v11711 = vunpack.c.l.b16 %v11633
  %v11712 = vunpack.c.h.b16 %v11633
  %v11713 = vunpack.c.l.b16 %v11634
  %v11714 = vunpack.c.h.b16 %v11634
  %v11715 = vunpack.c.l.b16 %v11635
  %v11716 = vunpack.c.h.b16 %v11635
  %v11717 = vunpack.c.l.b16 %v11636
  %v11718 = vunpack.c.h.b16 %v11636
  %v11719 = vunpack.c.l.b16 %v11637
  %v11720 = vunpack.c.h.b16 %v11637
  %v11721 = vunpack.c.l.b16 %v11638
  %v11722 = vunpack.c.h.b16 %v11638
  %v11723 = vunpack.c.l.b16 %v11639
  %v11724 = vunpack.c.h.b16 %v11639
  %v11725 = vunpack.c.l.b16 %v11640
  %v11726 = vunpack.c.h.b16 %v11640
  %v11727 = vunpack.c.l.b16 %v11641
  %v11728 = vunpack.c.h.b16 %v11641
  %v11729 = vunpack.c.l.b16 %v11642
  %v11730 = vunpack.c.h.b16 %v11642
  %v11731 = vunpack.c.l.b16 %v11643
  %v11732 = vunpack.c.h.b16 %v11643
  %v11733 = vunpack.c.l.b16 %v11644
  %v11734 = vunpack.c.h.b16 %v11644
  %v11735 = vunpack.c.l.b16 %v11645
  %v11736 = vunpack.c.h.b16 %v11645
  %v11737 = vunpack.c.l.b16 %v11646
  %v11738 = vunpack.c.h.b16 %v11646
  %v11739 = vunpack.c.l.b16 %v11647
  %v11740 = vunpack.c.h.b16 %v11647
  %v11741 = vunpack.c.l.b16 %v11648
  %v11742 = vunpack.c.h.b16 %v11648
  %v11743 = vunpack.c.l.b16 %v11649
  %v11744 = vunpack.c.h.b16 %v11649
  %v11745 = vunpack.c.l.b16 %v11650
  %v11746 = vunpack.c.h.b16 %v11650
  %v11747 = vpack.c.b16 %v11683, %v11683
  %v11748 = vpack.c.b16 %v11684, %v11684
  %v11749 = vpack.c.b16 %v11685, %v11685
  %v11750 = vpack.c.b16 %v11686, %v11686
  %v11751 = vpack.c.b16 %v11687, %v11687
  %v11752 = vpack.c.b16 %v11688, %v11688
  %v11753 = vpack.c.b16 %v11689, %v11689
  %v11754 = vpack.c.b16 %v11690, %v11690
  %v11755 = vpack.c.b16 %v11691, %v11691
  %v11756 = vpack.c.b16 %v11692, %v11692
  %v11757 = vpack.c.b16 %v11693, %v11693
  %v11758 = vpack.c.b16 %v11694, %v11694
  %v11759 = vpack.c.b16 %v11695, %v11695
  %v11760 = vpack.c.b16 %v11696, %v11696
  %v11761 = vpack.c.b16 %v11697, %v11697
  %v11762 = vpack.c.b16 %v11698, %v11698
  %v11763 = vpack.c.b16 %v11699, %v11699
  %v11764 = vpack.c.b16 %v11700, %v11700
  %v11765 = vpack.c.b16 %v11701, %v11701
  %v11766 = vpack.c.b16 %v11702, %v11702
  %v11767 = vpack.c.b16 %v11703, %v11703
  %v11768 = vpack.c.b16 %v11704, %v11704
  %v11769 = vpack.c.b16 %v11705, %v11705
  %v11770 = vpack.c.b16 %v11706, %v11706
  %v11771 = vpack.c.b16 %v11707, %v11707
  %v11772 = vpack.c.b16 %v11708, %v11708
  %v11773 = vpack.c.b16 %v11709, %v11709
  %v11774 = vpack.c.b16 %v11710, %v11710
  %v11775 = vpack.c.b16 %v11711, %v11711
  %v11776 = vpack.c.b16 %v11712, %v11712
  %v11777 = vpack.c.b16 %v11713, %v11713
  %v11778 = vpack.c.b16 %v11714, %v11714
  %v11779 = vpack.c.b16 %v11715, %v11715
  %v11780 = vpack.c.b16 %v11716, %v11716
  %v11781 = vpack.c.b16 %v11717, %v11717
  %v11782 = vpack.c.b16 %v11718, %v11718
  %v11783 = vpack.c.b16 %v11719, %v11719
  %v11784 = vpack.c.b16 %v11720, %v11720
  %v11785 = vpack.c.b16 %v11721, %v11721
  %v11786 = vpack.c.b16 %v11722, %v11722
  %v11787 = vpack.c.b16 %v11723, %v11723
  %v11788 = vpack.c.b16 %v11724, %v11724
  %v11789 = vpack.c.b16 %v11725, %v11725
  %v11790 = vpack.c.b16 %v11726, %v11726
  %v11791 = vpack.c.b16 %v11727, %v11727
  %v11792 = vpack.c.b16 %v11728, %v11728
  %v11793 = vpack.c.b16 %v11729, %v11729
  %v11794 = vpack.c.b16 %v11730, %v11730
  %v11795 = vpack.c.b16 %v11731, %v11731
  %v11796 = vpack.c.b16 %v11732, %v11732
  %v11797 = vpack.c.b16 %v11733, %v11733
  %v11798 = vpack.c.b16 %v11734, %v11734
  %v11799 = vpack.c.b16 %v11735, %v11735
  %v11800 = vpack.c.b16 %v11736, %v11736
  %v11801 = vpack.c.b16 %v11737, %v11737
  %v11802 = vpack.c.b16 %v11738, %v11738
  %v11803 = vpack.c.b16 %v11739, %v11739
  %v11804 = vpack.c.b16 %v11740, %v11740
  %v11805 = vpack.c.b16 %v11741, %v11741
  %v11806 = vpack.c.b16 %v11742, %v11742
  %v11807 = vpack.c.b16 %v11743, %v11743
  %v11808 = vpack.c.b16 %v11744, %v11744
  %v11809 = vpack.c.b16 %v11745, %v11745
  %v11810 = vpack.c.b16 %v11746, %v11746
  %vm11875 = vcmask 257024
  %11876 = vst.msk [vmem:[%s5] sm:$0xf] %vm11875, %v11747
  %11877 = vst.msk [vmem:[%s5 + $0x4] sm:$0xf] %vm11875, %v11748
  %11878 = vst.msk [vmem:[%s5 + $0x8] sm:$0xf] %vm11875, %v11749
  %11879 = vst.msk [vmem:[%s5 + $0xc] sm:$0xf] %vm11875, %v11750
  %11880 = vst.msk [vmem:[%s5 + $0x10] sm:$0xf] %vm11875, %v11751
  %11881 = vst.msk [vmem:[%s5 + $0x14] sm:$0xf] %vm11875, %v11752
  %11882 = vst.msk [vmem:[%s5 + $0x18] sm:$0xf] %vm11875, %v11753
  %11883 = vst.msk [vmem:[%s5 + $0x1c] sm:$0xf] %vm11875, %v11754
  %11884 = vst.msk [vmem:[%s5 + $0x20] sm:$0xf] %vm11875, %v11755
  %11885 = vst.msk [vmem:[%s5 + $0x24] sm:$0xf] %vm11875, %v11756
  %11886 = vst.msk [vmem:[%s5 + $0x28] sm:$0xf] %vm11875, %v11757
  %11887 = vst.msk [vmem:[%s5 + $0x2c] sm:$0xf] %vm11875, %v11758
  %11888 = vst.msk [vmem:[%s5 + $0x30] sm:$0xf] %vm11875, %v11759
  %11889 = vst.msk [vmem:[%s5 + $0x34] sm:$0xf] %vm11875, %v11760
  %11890 = vst.msk [vmem:[%s5 + $0x38] sm:$0xf] %vm11875, %v11761
  %11891 = vst.msk [vmem:[%s5 + $0x3c] sm:$0xf] %vm11875, %v11762
  %11892 = vst.msk [vmem:[%s5 + $0x40] sm:$0xf] %vm11875, %v11763
  %11893 = vst.msk [vmem:[%s5 + $0x44] sm:$0xf] %vm11875, %v11764
  %11894 = vst.msk [vmem:[%s5 + $0x48] sm:$0xf] %vm11875, %v11765
  %11895 = vst.msk [vmem:[%s5 + $0x4c] sm:$0xf] %vm11875, %v11766
  %11896 = vst.msk [vmem:[%s5 + $0x50] sm:$0xf] %vm11875, %v11767
  %11897 = vst.msk [vmem:[%s5 + $0x54] sm:$0xf] %vm11875, %v11768
  %11898 = vst.msk [vmem:[%s5 + $0x58] sm:$0xf] %vm11875, %v11769
  %11899 = vst.msk [vmem:[%s5 + $0x5c] sm:$0xf] %vm11875, %v11770
  %11900 = vst.msk [vmem:[%s5 + $0x60] sm:$0xf] %vm11875, %v11771
  %11901 = vst.msk [vmem:[%s5 + $0x64] sm:$0xf] %vm11875, %v11772
  %11902 = vst.msk [vmem:[%s5 + $0x68] sm:$0xf] %vm11875, %v11773
  %11903 = vst.msk [vmem:[%s5 + $0x6c] sm:$0xf] %vm11875, %v11774
  %11904 = vst.msk [vmem:[%s5 + $0x70] sm:$0xf] %vm11875, %v11775
  %11905 = vst.msk [vmem:[%s5 + $0x74] sm:$0xf] %vm11875, %v11776
  %11906 = vst.msk [vmem:[%s5 + $0x78] sm:$0xf] %vm11875, %v11777
  %11907 = vst.msk [vmem:[%s5 + $0x7c] sm:$0xf] %vm11875, %v11778
  %11908 = vst.msk [vmem:[%s5 + $0x80] sm:$0xf] %vm11875, %v11779
  %11909 = vst.msk [vmem:[%s5 + $0x84] sm:$0xf] %vm11875, %v11780
  %11910 = vst.msk [vmem:[%s5 + $0x88] sm:$0xf] %vm11875, %v11781
  %11911 = vst.msk [vmem:[%s5 + $0x8c] sm:$0xf] %vm11875, %v11782
  %11912 = vst.msk [vmem:[%s5 + $0x90] sm:$0xf] %vm11875, %v11783
  %11913 = vst.msk [vmem:[%s5 + $0x94] sm:$0xf] %vm11875, %v11784
  %11914 = vst.msk [vmem:[%s5 + $0x98] sm:$0xf] %vm11875, %v11785
  %11915 = vst.msk [vmem:[%s5 + $0x9c] sm:$0xf] %vm11875, %v11786
  %11916 = vst.msk [vmem:[%s5 + $0xa0] sm:$0xf] %vm11875, %v11787
  %11917 = vst.msk [vmem:[%s5 + $0xa4] sm:$0xf] %vm11875, %v11788
  %11918 = vst.msk [vmem:[%s5 + $0xa8] sm:$0xf] %vm11875, %v11789
  %11919 = vst.msk [vmem:[%s5 + $0xac] sm:$0xf] %vm11875, %v11790
  %11920 = vst.msk [vmem:[%s5 + $0xb0] sm:$0xf] %vm11875, %v11791
  %11921 = vst.msk [vmem:[%s5 + $0xb4] sm:$0xf] %vm11875, %v11792
  %11922 = vst.msk [vmem:[%s5 + $0xb8] sm:$0xf] %vm11875, %v11793
  %11923 = vst.msk [vmem:[%s5 + $0xbc] sm:$0xf] %vm11875, %v11794
  %11924 = vst.msk [vmem:[%s5 + $0xc0] sm:$0xf] %vm11875, %v11795
  %11925 = vst.msk [vmem:[%s5 + $0xc4] sm:$0xf] %vm11875, %v11796
  %11926 = vst.msk [vmem:[%s5 + $0xc8] sm:$0xf] %vm11875, %v11797
  %11927 = vst.msk [vmem:[%s5 + $0xcc] sm:$0xf] %vm11875, %v11798
  %11928 = vst.msk [vmem:[%s5 + $0xd0] sm:$0xf] %vm11875, %v11799
  %11929 = vst.msk [vmem:[%s5 + $0xd4] sm:$0xf] %vm11875, %v11800
  %11930 = vst.msk [vmem:[%s5 + $0xd8] sm:$0xf] %vm11875, %v11801
  %11931 = vst.msk [vmem:[%s5 + $0xdc] sm:$0xf] %vm11875, %v11802
  %11932 = vst.msk [vmem:[%s5 + $0xe0] sm:$0xf] %vm11875, %v11803
  %11933 = vst.msk [vmem:[%s5 + $0xe4] sm:$0xf] %vm11875, %v11804
  %11934 = vst.msk [vmem:[%s5 + $0xe8] sm:$0xf] %vm11875, %v11805
  %11935 = vst.msk [vmem:[%s5 + $0xec] sm:$0xf] %vm11875, %v11806
  %11936 = vst.msk [vmem:[%s5 + $0xf0] sm:$0xf] %vm11875, %v11807
  %11937 = vst.msk [vmem:[%s5 + $0xf4] sm:$0xf] %vm11875, %v11808
  %11938 = vst.msk [vmem:[%s5 + $0xf8] sm:$0xf] %vm11875, %v11809
  %11939 = vst.msk [vmem:[%s5 + $0xfc] sm:$0xf] %vm11875, %v11810
  // Predicated region
  $region22: #{policy_act.2} parent=0 // pred_check
    _
  $region23: #{policy_act.2} parent=0 // pred_check_branch
    %11941 = sbr.rel (0) target = $region25
  $region24: #{policy_act.2} parent=0 // pred_region
    _
  $region25: #{policy_act.2} parent=0 // pred_fallthru
    _
  // Predicated region
  $region26: #{policy_act.2} parent=0 // pred_check
    _
  $region27: #{policy_act.2} parent=0 // pred_check_branch
    %11943 = sbr.rel (0) target = $region29
  $region28: #{policy_act.2} parent=0 // pred_region
    _
  $region29: #{policy_act.2} parent=0 // pred_fallthru
    _

</llo_original>
